<compile_context>
chip_gen: v6e
topology: v6e:2x2x1
jax: 0.10.0
libtpu: 0.0.40
codegen_flags: <defaults>
</compile_context>

<pallas_src>
import functools

import numpy as np
import jax
import jax.numpy as jnp
from jax.experimental import pallas as pl
from jax.experimental.pallas import tpu as pltpu

LANE = 128  # TPU lane width; all channel axes are padded to this


def se_basic_block_kernel(x_ref, w1_ref, w2_ref, g1_ref, b1_ref, g2_ref,
                          b2_ref, fc1_ref, fc2_ref, out_ref,
                          pad_ref, col_ref, *, c_real):
    N, H, W, C = x_ref.shape          # C == LANE (padded lane width)
    P = N * H * W
    CG = c_real                       # real channels per tap (3*CG <= C)
    eps = 1e-5
    inv_p = 1.0 / P
    inv_hw = 1.0 / (H * W)

    # ---- zero the halo ring of the padded activation scratch (once) ----
    pad_ref[:, 0:1, :, :] = jnp.zeros((N, 1, W + 2, C), jnp.float32)
    pad_ref[:, H + 1:H + 2, :, :] = jnp.zeros((N, 1, W + 2, C), jnp.float32)
    pad_ref[:, :, 0:1, :] = jnp.zeros((N, H + 2, 1, C), jnp.float32)
    pad_ref[:, :, W + 1:W + 2, :] = jnp.zeros((N, H + 2, 1, C), jnp.float32)

    tail = C - 3 * CG
    zpad = jnp.zeros((N, H, W, tail), jnp.float32) if tail else None

    def build_col():
        # Compact-K im2col (K = 3*128 instead of 9*128): group g == kh holds
        # the three kw taps' real channels packed at lanes [kw*CG,(kw+1)*CG);
        # the group is assembled as one 128-lane slab so each col store is a
        # full, aligned 128-lane store, cast to bf16 for the MXU.
        for dh in range(3):
            taps = [pad_ref[:, dh:dh + H, dw:dw + W, 0:CG] for dw in range(3)]
            if zpad is not None:
                taps = taps + [zpad]
            grp = jnp.concatenate(taps, axis=-1)                  # (N,H,W,C)
            col_ref[:, dh * C:(dh + 1) * C] = (
                grp.reshape(P, C).astype(jnp.bfloat16))

    def bn_scale_shift(h2d, g_ref, b_ref):
        # Training-mode batch statistics (biased var, eps=1e-5); two-pass
        # centered variance to avoid E[x^2] - mean^2 cancellation.
        mean = jnp.sum(h2d, axis=0, keepdims=True) * inv_p
        d = h2d - mean
        var = jnp.sum(d * d, axis=0, keepdims=True) * inv_p
        scale = g_ref[...] * jax.lax.rsqrt(var + eps)
        shift = b_ref[...] - mean * scale
        return scale, shift

    # ---- conv1 -> bn1 -> relu (BN+ReLU fused into a single interior store) --
    pad_ref[:, 1:H + 1, 1:W + 1, :] = x_ref[...]
    build_col()
    h1 = jnp.dot(col_ref[...], w1_ref[...], preferred_element_type=jnp.float32)
    scale1, shift1 = bn_scale_shift(h1, g1_ref, b1_ref)
    pad_ref[:, 1:H + 1, 1:W + 1, :] = jnp.maximum(
        h1 * scale1 + shift1, 0.0).reshape(N, H, W, C)

    # ---- conv2 -> bn2 (bn2 apply folded into SE pool and the epilogue) ------
    build_col()
    h2 = jnp.dot(col_ref[...], w2_ref[...], preferred_element_type=jnp.float32)
    scale2, shift2 = bn_scale_shift(h2, g2_ref, b2_ref)

    # ---- SE: global avg pool -> fc1 -> relu -> fc2 -> sigmoid ---------------
    # mean_hw(bn2(h2)) == scale2 * mean_hw(h2) + shift2, so BN2 is applied to
    # the tiny pooled vector instead of the full activation.
    pooled = jnp.sum(h2.reshape(N, H * W, C), axis=1) * inv_hw        # (N, C)
    pooled = pooled * scale2 + shift2
    # SE FC matmuls stay f32: negligible FLOPs, keeps the gate math f32.
    y = jnp.maximum(jnp.dot(pooled, fc1_ref[...],
                            preferred_element_type=jnp.float32), 0.0)
    y = jax.nn.sigmoid(jnp.dot(y, fc2_ref[...],
                               preferred_element_type=jnp.float32))

    # ---- bn2-apply * SE gate + identity residual + relu, one dense store ----
    sy = (y * scale2)[:, None, None, :]                               # (N,1,1,C)
    sh = (y * shift2)[:, None, None, :]
    out_ref[...] = jnp.maximum(
        h2.reshape(N, H, W, C) * sy + (sh + x_ref[...]), 0.0)


def prepare_params(params, c_pad=LANE):
    """One-time (per-model) layout prep: pad channel axes to the lane width,
    pre-reshape conv weights for the compact-K im2col matmul and pre-cast them
    to bf16.  Done outside the per-call path."""
    w1, w2, g1, b1, g2, b2, fc1_w, fc2_w = params
    C = w1.shape[0]
    Cr = fc1_w.shape[0]
    assert 3 * C <= c_pad, "compact-K packing requires 3 * channels <= 128"

    def prep_conv(w_oihw):
        # (O, I, 3, 3) -> rows r = kh*128 + kw*C + cin, cols = cout (padded).
        w = jnp.transpose(w_oihw, (2, 3, 1, 0))                 # (3, 3, C, O)
        w = w.reshape(3, 3 * C, C)                              # (kh, kw*C+ci, O)
        w = jnp.pad(w, ((0, 0), (0, c_pad - 3 * C), (0, c_pad - C)))
        return w.reshape(3 * c_pad, c_pad).astype(jnp.bfloat16)  # (384, 128)

    def prep_vec(v):
        return jnp.pad(v, (0, c_pad - C)).reshape(1, c_pad)

    w1r, w2r = prep_conv(w1), prep_conv(w2)
    g1v, b1v, g2v, b2v = (prep_vec(v) for v in (g1, b1, g2, b2))
    fc1t = jnp.pad(jnp.transpose(fc1_w), ((0, c_pad - C), (0, c_pad - Cr)))
    fc2t = jnp.pad(jnp.transpose(fc2_w), ((0, c_pad - Cr), (0, c_pad - C)))
    return (w1r, w2r, g1v, b1v, g2v, b2v, fc1t, fc2t)


def _vmem_limit_bytes():
    # Per-generation VMEM budget (v7x has only 64 MiB per TensorCore).  This
    # kernel needs ~2 MiB, so the limit only has to be valid for the part.
    try:
        kind = jax.devices()[0].device_kind.lower()
    except Exception:
        kind = ""
    if "v7" in kind or "7x" in kind:
        return 48 * 1024 * 1024
    if "v5" in kind or "v6" in kind:
        return 96 * 1024 * 1024
    return 32 * 1024 * 1024


def se_basic_block_padded(x_pad, prepped, c_real):
    """x_pad: (N, H, W, LANE) float32, NHWC with channels zero-padded to LANE."""
    N, H, W, Cp = x_pad.shape
    vmem = lambda: pl.BlockSpec(memory_space=pltpu.MemorySpace.VMEM)
    kernel = functools.partial(se_basic_block_kernel, c_real=c_real)
    return pl.pallas_call(
        kernel,
        out_shape=jax.ShapeDtypeStruct((N, H, W, Cp), jnp.float32),
        in_specs=[vmem() for _ in range(9)],
        out_specs=vmem(),
        scratch_shapes=[
            pltpu.VMEM((N, H + 2, W + 2, Cp), jnp.float32),  # zero-halo acts
            pltpu.VMEM((N * H * W, 3 * Cp), jnp.bfloat16),   # compact-K im2col
        ],
        compiler_params=pltpu.CompilerParams(
            vmem_limit_bytes=_vmem_limit_bytes()),
    )(x_pad, *prepped)


def se_basic_block(x_nchw, prepped):
    """x_nchw: (N, C, H, W) float32 (PyTorch layout).  In a chained SEResNet
    the NCHW<->padded-NHWC conversion happens once at network entry/exit, not
    per block; it is kept here only because this script runs a single block."""
    N, C, H, W = x_nchw.shape
    x = jnp.transpose(x_nchw, (0, 2, 3, 1))                       # NCHW -> NHWC
    x = jnp.pad(x, ((0, 0), (0, 0), (0, 0), (0, LANE - C)))       # lane-dense
    out = se_basic_block_padded(x, prepped, c_real=C)
    return jnp.transpose(out[..., :C], (0, 3, 1, 2))              # NHWC -> NCHW


def reference_forward(x_nchw, params):
    """Pure-JAX (f32) reference mirroring the PyTorch SEBasicBlock forward."""
    w1, w2, g1, b1, g2, b2, fc1_w, fc2_w = params
    x = jnp.transpose(x_nchw, (0, 2, 3, 1))

    def conv(h, w_oihw):
        w_hwio = jnp.transpose(w_oihw, (2, 3, 1, 0))
        return jax.lax.conv_general_dilated(
            h, w_hwio, window_strides=(1, 1), padding="SAME",
            dimension_numbers=("NHWC", "HWIO", "NHWC"))

    def bn(h, g, b, eps=1e-5):
        mean = jnp.mean(h, axis=(0, 1, 2), keepdims=True)
        var = jnp.mean((h - mean) ** 2, axis=(0, 1, 2), keepdims=True)
        return (h - mean) * jax.lax.rsqrt(var + eps) * g + b

    out = jax.nn.relu(bn(conv(x, w1), g1, b1))
    out = bn(conv(out, w2), g2, b2)
    y = jnp.mean(out, axis=(1, 2))
    y = jax.nn.relu(y @ fc1_w.T)
    y = jax.nn.sigmoid(y @ fc2_w.T)
    out = out * y[:, None, None, :]
    out = jax.nn.relu(out + x)
    return jnp.transpose(out, (0, 3, 1, 2))


if __name__ == "__main__":
    N, C, H, W = 2, 32, 16, 16       # inplanes == planes == 32, stride == 1
    reduction = 16
    Cr = C // reduction

    key = jax.random.PRNGKey(0)
    k = jax.random.split(key, 8)
    x = jax.random.normal(k[0], (N, C, H, W), jnp.float32)

    w1 = 0.1 * jax.random.normal(k[1], (C, C, 3, 3), jnp.float32)   # conv1 (OIHW)
    w2 = 0.1 * jax.random.normal(k[2], (C, C, 3, 3), jnp.float32)   # conv2 (OIHW)
    g1 = 1.0 + 0.1 * jax.random.normal(k[3], (C,), jnp.float32)     # bn1 weight
    b1 = 0.1 * jax.random.normal(k[4], (C,), jnp.float32)           # bn1 bias
    g2 = 1.0 + 0.1 * jax.random.normal(k[5], (C,), jnp.float32)     # bn2 weight
    b2 = 0.1 * jax.random.normal(k[6], (C,), jnp.float32)           # bn2 bias
    kf1, kf2 = jax.random.split(k[7])
    fc1_w = 0.2 * jax.random.normal(kf1, (Cr, C), jnp.float32)      # Linear(C, C//r)
    fc2_w = 0.2 * jax.random.normal(kf2, (C, Cr), jnp.float32)      # Linear(C//r, C)

    params = (w1, w2, g1, b1, g2, b2, fc1_w, fc2_w)
    prepped = prepare_params(params)

    out = jax.block_until_ready(se_basic_block(x, prepped))
    ref = jax.block_until_ready(reference_forward(x, params))

    # bf16 MXU operands (with f32 accumulation) vs. the pure-f32 reference:
    # expected max abs error is a few 1e-3, so compare at 1e-2.
    np.testing.assert_allclose(np.asarray(out), np.asarray(ref),
                               rtol=1e-2, atol=1e-2)

    print("KERNEL_OK")
</pallas_src>

<mosaic_0001>
module attributes {stable_mosaic.version = 11 : i64} {
  func.func @se_basic_block_kernel(%arg0: memref<2x16x16x128xf32, #tpu.memory_space<vmem>>, %arg1: memref<384x128xbf16, #tpu.memory_space<vmem>>, %arg2: memref<384x128xbf16, #tpu.memory_space<vmem>>, %arg3: memref<1x128xf32, #tpu.memory_space<vmem>>, %arg4: memref<1x128xf32, #tpu.memory_space<vmem>>, %arg5: memref<1x128xf32, #tpu.memory_space<vmem>>, %arg6: memref<1x128xf32, #tpu.memory_space<vmem>>, %arg7: memref<128x128xf32, #tpu.memory_space<vmem>>, %arg8: memref<128x128xf32, #tpu.memory_space<vmem>>, %arg9: memref<2x16x16x128xf32, #tpu.memory_space<vmem>>, %arg10: memref<2x18x18x128xf32, #tpu.memory_space<vmem>>, %arg11: memref<512x384xbf16, #tpu.memory_space<vmem>>) attributes {dimension_semantics = [], scalar_prefetch = 0 : i64, scratch_operands = 2 : i64, tpu.core_type = #tpu.core_type<tc>} {
    %cst = arith.constant 0.000000e+00 : f32
    %0 = vector.broadcast %cst : f32 to vector<2x1x18x128xf32>
    %c0 = arith.constant 0 : index
    %c0_0 = arith.constant 0 : index
    %c0_1 = arith.constant 0 : index
    %c0_2 = arith.constant 0 : index
    %1 = vector.load %arg10[%c0, %c0_0, %c0_1, %c0_2] : memref<2x18x18x128xf32, #tpu.memory_space<vmem>>, vector<2x1x18x128xf32>
    tpu.vector_store %arg10[%c0, %c0_0, %c0_1, %c0_2], %0 {strides = array<i32>} : memref<2x18x18x128xf32, #tpu.memory_space<vmem>>, vector<2x1x18x128xf32>,
    %cst_3 = arith.constant 0.000000e+00 : f32
    %2 = vector.broadcast %cst_3 : f32 to vector<2x1x18x128xf32>
    %c0_4 = arith.constant 0 : index
    %c17 = arith.constant 17 : index
    %c0_5 = arith.constant 0 : index
    %c0_6 = arith.constant 0 : index
    %3 = vector.load %arg10[%c0_4, %c17, %c0_5, %c0_6] : memref<2x18x18x128xf32, #tpu.memory_space<vmem>>, vector<2x1x18x128xf32>
    tpu.vector_store %arg10[%c0_4, %c17, %c0_5, %c0_6], %2 {strides = array<i32>} : memref<2x18x18x128xf32, #tpu.memory_space<vmem>>, vector<2x1x18x128xf32>,
    %cst_7 = arith.constant 0.000000e+00 : f32
    %4 = vector.broadcast %cst_7 : f32 to vector<2x18x1x128xf32>
    %c0_8 = arith.constant 0 : index
    %c0_9 = arith.constant 0 : index
    %c0_10 = arith.constant 0 : index
    %c0_11 = arith.constant 0 : index
    %5 = vector.load %arg10[%c0_8, %c0_9, %c0_10, %c0_11] : memref<2x18x18x128xf32, #tpu.memory_space<vmem>>, vector<2x18x1x128xf32>
    tpu.vector_store %arg10[%c0_8, %c0_9, %c0_10, %c0_11], %4 {strides = array<i32>} : memref<2x18x18x128xf32, #tpu.memory_space<vmem>>, vector<2x18x1x128xf32>,
    %cst_12 = arith.constant 0.000000e+00 : f32
    %6 = vector.broadcast %cst_12 : f32 to vector<2x18x1x128xf32>
    %c0_13 = arith.constant 0 : index
    %c0_14 = arith.constant 0 : index
    %c17_15 = arith.constant 17 : index
    %c0_16 = arith.constant 0 : index
    %7 = vector.load %arg10[%c0_13, %c0_14, %c17_15, %c0_16] : memref<2x18x18x128xf32, #tpu.memory_space<vmem>>, vector<2x18x1x128xf32>
    tpu.vector_store %arg10[%c0_13, %c0_14, %c17_15, %c0_16], %6 {strides = array<i32>} : memref<2x18x18x128xf32, #tpu.memory_space<vmem>>, vector<2x18x1x128xf32>,
    %cst_17 = arith.constant 0.000000e+00 : f32
    %8 = vector.broadcast %cst_17 : f32 to vector<2x16x16x32xf32>
    %c0_18 = arith.constant 0 : index
    %c0_19 = arith.constant 0 : index
    %c0_20 = arith.constant 0 : index
    %c0_21 = arith.constant 0 : index
    %9 = vector.load %arg0[%c0_18, %c0_19, %c0_20, %c0_21] : memref<2x16x16x128xf32, #tpu.memory_space<vmem>>, vector<2x16x16x128xf32>
    %c0_22 = arith.constant 0 : index
    %c1 = arith.constant 1 : index
    %c1_23 = arith.constant 1 : index
    %c0_24 = arith.constant 0 : index
    %10 = vector.load %arg10[%c0_22, %c1, %c1_23, %c0_24] : memref<2x18x18x128xf32, #tpu.memory_space<vmem>>, vector<2x16x16x128xf32>
    tpu.vector_store %arg10[%c0_22, %c1, %c1_23, %c0_24], %9 {strides = array<i32>} : memref<2x18x18x128xf32, #tpu.memory_space<vmem>>, vector<2x16x16x128xf32>,
    %c0_25 = arith.constant 0 : index
    %c0_26 = arith.constant 0 : index
    %c0_27 = arith.constant 0 : index
    %c0_28 = arith.constant 0 : index
    %11 = vector.load %arg10[%c0_25, %c0_26, %c0_27, %c0_28] : memref<2x18x18x128xf32, #tpu.memory_space<vmem>>, vector<2x16x16x32xf32>
    %c0_29 = arith.constant 0 : index
    %c0_30 = arith.constant 0 : index
    %c1_31 = arith.constant 1 : index
    %c0_32 = arith.constant 0 : index
    %12 = vector.load %arg10[%c0_29, %c0_30, %c1_31, %c0_32] : memref<2x18x18x128xf32, #tpu.memory_space<vmem>>, vector<2x16x16x32xf32>
    %c0_33 = arith.constant 0 : index
    %c0_34 = arith.constant 0 : index
    %c2 = arith.constant 2 : index
    %c0_35 = arith.constant 0 : index
    %13 = vector.load %arg10[%c0_33, %c0_34, %c2, %c0_35] : memref<2x18x18x128xf32, #tpu.memory_space<vmem>>, vector<2x16x16x32xf32>
    %14 = tpu.concatenate %11, %12, %13, %8 in 3 : vector<2x16x16x32xf32>, vector<2x16x16x32xf32>, vector<2x16x16x32xf32>, vector<2x16x16x32xf32> -> vector<2x16x16x128xf32>
    %15 = vector.shape_cast %14 : vector<2x16x16x128xf32> to vector<512x128xf32>
    %16 = arith.truncf %15 : vector<512x128xf32> to vector<512x128xbf16>
    %c0_36 = arith.constant 0 : index
    %c0_37 = arith.constant 0 : index
    %17 = vector.load %arg11[%c0_36, %c0_37] : memref<512x384xbf16, #tpu.memory_space<vmem>>, vector<512x128xbf16>
    tpu.vector_store %arg11[%c0_36, %c0_37], %16 {strides = array<i32>} : memref<512x384xbf16, #tpu.memory_space<vmem>>, vector<512x128xbf16>,
    %c0_38 = arith.constant 0 : index
    %c1_39 = arith.constant 1 : index
    %c0_40 = arith.constant 0 : index
    %c0_41 = arith.constant 0 : index
    %18 = vector.load %arg10[%c0_38, %c1_39, %c0_40, %c0_41] : memref<2x18x18x128xf32, #tpu.memory_space<vmem>>, vector<2x16x16x32xf32>
    %c0_42 = arith.constant 0 : index
    %c1_43 = arith.constant 1 : index
    %c1_44 = arith.constant 1 : index
    %c0_45 = arith.constant 0 : index
    %19 = vector.load %arg10[%c0_42, %c1_43, %c1_44, %c0_45] : memref<2x18x18x128xf32, #tpu.memory_space<vmem>>, vector<2x16x16x32xf32>
    %c0_46 = arith.constant 0 : index
    %c1_47 = arith.constant 1 : index
    %c2_48 = arith.constant 2 : index
    %c0_49 = arith.constant 0 : index
    %20 = vector.load %arg10[%c0_46, %c1_47, %c2_48, %c0_49] : memref<2x18x18x128xf32, #tpu.memory_space<vmem>>, vector<2x16x16x32xf32>
    %21 = tpu.concatenate %18, %19, %20, %8 in 3 : vector<2x16x16x32xf32>, vector<2x16x16x32xf32>, vector<2x16x16x32xf32>, vector<2x16x16x32xf32> -> vector<2x16x16x128xf32>
    %22 = vector.shape_cast %21 : vector<2x16x16x128xf32> to vector<512x128xf32>
    %23 = arith.truncf %22 : vector<512x128xf32> to vector<512x128xbf16>
    %c0_50 = arith.constant 0 : index
    %c128 = arith.constant 128 : index
    %24 = vector.load %arg11[%c0_50, %c128] : memref<512x384xbf16, #tpu.memory_space<vmem>>, vector<512x128xbf16>
    tpu.vector_store %arg11[%c0_50, %c128], %23 {strides = array<i32>} : memref<512x384xbf16, #tpu.memory_space<vmem>>, vector<512x128xbf16>,
    %c0_51 = arith.constant 0 : index
    %c2_52 = arith.constant 2 : index
    %c0_53 = arith.constant 0 : index
    %c0_54 = arith.constant 0 : index
    %25 = vector.load %arg10[%c0_51, %c2_52, %c0_53, %c0_54] : memref<2x18x18x128xf32, #tpu.memory_space<vmem>>, vector<2x16x16x32xf32>
    %c0_55 = arith.constant 0 : index
    %c2_56 = arith.constant 2 : index
    %c1_57 = arith.constant 1 : index
    %c0_58 = arith.constant 0 : index
    %26 = vector.load %arg10[%c0_55, %c2_56, %c1_57, %c0_58] : memref<2x18x18x128xf32, #tpu.memory_space<vmem>>, vector<2x16x16x32xf32>
    %c0_59 = arith.constant 0 : index
    %c2_60 = arith.constant 2 : index
    %c2_61 = arith.constant 2 : index
    %c0_62 = arith.constant 0 : index
    %27 = vector.load %arg10[%c0_59, %c2_60, %c2_61, %c0_62] : memref<2x18x18x128xf32, #tpu.memory_space<vmem>>, vector<2x16x16x32xf32>
    %28 = tpu.concatenate %25, %26, %27, %8 in 3 : vector<2x16x16x32xf32>, vector<2x16x16x32xf32>, vector<2x16x16x32xf32>, vector<2x16x16x32xf32> -> vector<2x16x16x128xf32>
    %29 = vector.shape_cast %28 : vector<2x16x16x128xf32> to vector<512x128xf32>
    %30 = arith.truncf %29 : vector<512x128xf32> to vector<512x128xbf16>
    %c0_63 = arith.constant 0 : index
    %c256 = arith.constant 256 : index
    %31 = vector.load %arg11[%c0_63, %c256] : memref<512x384xbf16, #tpu.memory_space<vmem>>, vector<512x128xbf16>
    tpu.vector_store %arg11[%c0_63, %c256], %30 {strides = array<i32>} : memref<512x384xbf16, #tpu.memory_space<vmem>>, vector<512x128xbf16>,
    %c0_64 = arith.constant 0 : index
    %c0_65 = arith.constant 0 : index
    %32 = vector.load %arg11[%c0_64, %c0_65] : memref<512x384xbf16, #tpu.memory_space<vmem>>, vector<512x384xbf16>
    %c0_66 = arith.constant 0 : index
    %c0_67 = arith.constant 0 : index
    %33 = vector.load %arg1[%c0_66, %c0_67] : memref<384x128xbf16, #tpu.memory_space<vmem>>, vector<384x128xbf16>
    %cst_68 = arith.constant dense<0.000000e+00> : vector<512x128xf32>
    %34 = tpu.matmul %32, %33, %cst_68 {dimension_numbers = #tpu.dot_dimension_numbers<[1], [0], [0], [1], [0, 0, 1, 1], [], []>} : vector<512x384xbf16>, vector<384x128xbf16>, vector<512x128xf32> -> vector<512x128xf32>
    %cst_69 = arith.constant dense<0.000000e+00> : vector<128xf32>
    %35 = vector.multi_reduction <add>, %34, %cst_69 [0] : vector<512x128xf32> to vector<128xf32>
    %36 = vector.shape_cast %35 : vector<128xf32> to vector<1x128xf32>
    %cst_70 = arith.constant 0.001953125 : f32
    %37 = vector.broadcast %cst_70 : f32 to vector<1x128xf32>
    %38 = arith.mulf %36, %37 : vector<1x128xf32>
    %39 = vector.broadcast %38 : vector<1x128xf32> to vector<512x128xf32>
    %40 = arith.subf %34, %39 : vector<512x128xf32>
    %41 = arith.mulf %40, %40 : vector<512x128xf32>
    %cst_71 = arith.constant dense<0.000000e+00> : vector<128xf32>
    %42 = vector.multi_reduction <add>, %41, %cst_71 [0] : vector<512x128xf32> to vector<128xf32>
    %43 = vector.shape_cast %42 : vector<128xf32> to vector<1x128xf32>
    %cst_72 = arith.constant 0.001953125 : f32
    %44 = vector.broadcast %cst_72 : f32 to vector<1x128xf32>
    %45 = arith.mulf %43, %44 : vector<1x128xf32>
    %c0_73 = arith.constant 0 : index
    %c0_74 = arith.constant 0 : index
    %46 = vector.load %arg3[%c0_73, %c0_74] : memref<1x128xf32, #tpu.memory_space<vmem>>, vector<1x128xf32>
    %cst_75 = arith.constant 9.99999974E-6 : f32
    %47 = vector.broadcast %cst_75 : f32 to vector<1x128xf32>
    %48 = arith.addf %45, %47 : vector<1x128xf32>
    %49 = math.rsqrt %48 : vector<1x128xf32>
    %50 = arith.mulf %46, %49 : vector<1x128xf32>
    %c0_76 = arith.constant 0 : index
    %c0_77 = arith.constant 0 : index
    %51 = vector.load %arg4[%c0_76, %c0_77] : memref<1x128xf32, #tpu.memory_space<vmem>>, vector<1x128xf32>
    %52 = arith.mulf %38, %50 : vector<1x128xf32>
    %53 = arith.subf %51, %52 : vector<1x128xf32>
    %54 = vector.broadcast %50 : vector<1x128xf32> to vector<512x128xf32>
    %55 = arith.mulf %34, %54 : vector<512x128xf32>
    %56 = vector.broadcast %53 : vector<1x128xf32> to vector<512x128xf32>
    %57 = arith.addf %55, %56 : vector<512x128xf32>
    %cst_78 = arith.constant 0.000000e+00 : f32
    %58 = vector.broadcast %cst_78 : f32 to vector<512x128xf32>
    %59 = arith.maximumf %57, %58 : vector<512x128xf32>
    %60 = vector.shape_cast %59 : vector<512x128xf32> to vector<2x16x16x128xf32>
    %c0_79 = arith.constant 0 : index
    %c1_80 = arith.constant 1 : index
    %c1_81 = arith.constant 1 : index
    %c0_82 = arith.constant 0 : index
    %61 = vector.load %arg10[%c0_79, %c1_80, %c1_81, %c0_82] : memref<2x18x18x128xf32, #tpu.memory_space<vmem>>, vector<2x16x16x128xf32>
    tpu.vector_store %arg10[%c0_79, %c1_80, %c1_81, %c0_82], %60 {strides = array<i32>} : memref<2x18x18x128xf32, #tpu.memory_space<vmem>>, vector<2x16x16x128xf32>,
    %c0_83 = arith.constant 0 : index
    %c0_84 = arith.constant 0 : index
    %c0_85 = arith.constant 0 : index
    %c0_86 = arith.constant 0 : index
    %62 = vector.load %arg10[%c0_83, %c0_84, %c0_85, %c0_86] : memref<2x18x18x128xf32, #tpu.memory_space<vmem>>, vector<2x16x16x32xf32>
    %c0_87 = arith.constant 0 : index
    %c0_88 = arith.constant 0 : index
    %c1_89 = arith.constant 1 : index
    %c0_90 = arith.constant 0 : index
    %63 = vector.load %arg10[%c0_87, %c0_88, %c1_89, %c0_90] : memref<2x18x18x128xf32, #tpu.memory_space<vmem>>, vector<2x16x16x32xf32>
    %c0_91 = arith.constant 0 : index
    %c0_92 = arith.constant 0 : index
    %c2_93 = arith.constant 2 : index
    %c0_94 = arith.constant 0 : index
    %64 = vector.load %arg10[%c0_91, %c0_92, %c2_93, %c0_94] : memref<2x18x18x128xf32, #tpu.memory_space<vmem>>, vector<2x16x16x32xf32>
    %65 = tpu.concatenate %62, %63, %64, %8 in 3 : vector<2x16x16x32xf32>, vector<2x16x16x32xf32>, vector<2x16x16x32xf32>, vector<2x16x16x32xf32> -> vector<2x16x16x128xf32>
    %66 = vector.shape_cast %65 : vector<2x16x16x128xf32> to vector<512x128xf32>
    %67 = arith.truncf %66 : vector<512x128xf32> to vector<512x128xbf16>
    %c0_95 = arith.constant 0 : index
    %c0_96 = arith.constant 0 : index
    %68 = vector.load %arg11[%c0_95, %c0_96] : memref<512x384xbf16, #tpu.memory_space<vmem>>, vector<512x128xbf16>
    tpu.vector_store %arg11[%c0_95, %c0_96], %67 {strides = array<i32>} : memref<512x384xbf16, #tpu.memory_space<vmem>>, vector<512x128xbf16>,
    %c0_97 = arith.constant 0 : index
    %c1_98 = arith.constant 1 : index
    %c0_99 = arith.constant 0 : index
    %c0_100 = arith.constant 0 : index
    %69 = vector.load %arg10[%c0_97, %c1_98, %c0_99, %c0_100] : memref<2x18x18x128xf32, #tpu.memory_space<vmem>>, vector<2x16x16x32xf32>
    %c0_101 = arith.constant 0 : index
    %c1_102 = arith.constant 1 : index
    %c1_103 = arith.constant 1 : index
    %c0_104 = arith.constant 0 : index
    %70 = vector.load %arg10[%c0_101, %c1_102, %c1_103, %c0_104] : memref<2x18x18x128xf32, #tpu.memory_space<vmem>>, vector<2x16x16x32xf32>
    %c0_105 = arith.constant 0 : index
    %c1_106 = arith.constant 1 : index
    %c2_107 = arith.constant 2 : index
    %c0_108 = arith.constant 0 : index
    %71 = vector.load %arg10[%c0_105, %c1_106, %c2_107, %c0_108] : memref<2x18x18x128xf32, #tpu.memory_space<vmem>>, vector<2x16x16x32xf32>
    %72 = tpu.concatenate %69, %70, %71, %8 in 3 : vector<2x16x16x32xf32>, vector<2x16x16x32xf32>, vector<2x16x16x32xf32>, vector<2x16x16x32xf32> -> vector<2x16x16x128xf32>
    %73 = vector.shape_cast %72 : vector<2x16x16x128xf32> to vector<512x128xf32>
    %74 = arith.truncf %73 : vector<512x128xf32> to vector<512x128xbf16>
    %c0_109 = arith.constant 0 : index
    %c128_110 = arith.constant 128 : index
    %75 = vector.load %arg11[%c0_109, %c128_110] : memref<512x384xbf16, #tpu.memory_space<vmem>>, vector<512x128xbf16>
    tpu.vector_store %arg11[%c0_109, %c128_110], %74 {strides = array<i32>} : memref<512x384xbf16, #tpu.memory_space<vmem>>, vector<512x128xbf16>,
    %c0_111 = arith.constant 0 : index
    %c2_112 = arith.constant 2 : index
    %c0_113 = arith.constant 0 : index
    %c0_114 = arith.constant 0 : index
    %76 = vector.load %arg10[%c0_111, %c2_112, %c0_113, %c0_114] : memref<2x18x18x128xf32, #tpu.memory_space<vmem>>, vector<2x16x16x32xf32>
    %c0_115 = arith.constant 0 : index
    %c2_116 = arith.constant 2 : index
    %c1_117 = arith.constant 1 : index
    %c0_118 = arith.constant 0 : index
    %77 = vector.load %arg10[%c0_115, %c2_116, %c1_117, %c0_118] : memref<2x18x18x128xf32, #tpu.memory_space<vmem>>, vector<2x16x16x32xf32>
    %c0_119 = arith.constant 0 : index
    %c2_120 = arith.constant 2 : index
    %c2_121 = arith.constant 2 : index
    %c0_122 = arith.constant 0 : index
    %78 = vector.load %arg10[%c0_119, %c2_120, %c2_121, %c0_122] : memref<2x18x18x128xf32, #tpu.memory_space<vmem>>, vector<2x16x16x32xf32>
    %79 = tpu.concatenate %76, %77, %78, %8 in 3 : vector<2x16x16x32xf32>, vector<2x16x16x32xf32>, vector<2x16x16x32xf32>, vector<2x16x16x32xf32> -> vector<2x16x16x128xf32>
    %80 = vector.shape_cast %79 : vector<2x16x16x128xf32> to vector<512x128xf32>
    %81 = arith.truncf %80 : vector<512x128xf32> to vector<512x128xbf16>
    %c0_123 = arith.constant 0 : index
    %c256_124 = arith.constant 256 : index
    %82 = vector.load %arg11[%c0_123, %c256_124] : memref<512x384xbf16, #tpu.memory_space<vmem>>, vector<512x128xbf16>
    tpu.vector_store %arg11[%c0_123, %c256_124], %81 {strides = array<i32>} : memref<512x384xbf16, #tpu.memory_space<vmem>>, vector<512x128xbf16>,
    %c0_125 = arith.constant 0 : index
    %c0_126 = arith.constant 0 : index
    %83 = vector.load %arg11[%c0_125, %c0_126] : memref<512x384xbf16, #tpu.memory_space<vmem>>, vector<512x384xbf16>
    %c0_127 = arith.constant 0 : index
    %c0_128 = arith.constant 0 : index
    %84 = vector.load %arg2[%c0_127, %c0_128] : memref<384x128xbf16, #tpu.memory_space<vmem>>, vector<384x128xbf16>
    %cst_129 = arith.constant dense<0.000000e+00> : vector<512x128xf32>
    %85 = tpu.matmul %83, %84, %cst_129 {dimension_numbers = #tpu.dot_dimension_numbers<[1], [0], [0], [1], [0, 0, 1, 1], [], []>} : vector<512x384xbf16>, vector<384x128xbf16>, vector<512x128xf32> -> vector<512x128xf32>
    %cst_130 = arith.constant dense<0.000000e+00> : vector<128xf32>
    %86 = vector.multi_reduction <add>, %85, %cst_130 [0] : vector<512x128xf32> to vector<128xf32>
    %87 = vector.shape_cast %86 : vector<128xf32> to vector<1x128xf32>
    %cst_131 = arith.constant 0.001953125 : f32
    %88 = vector.broadcast %cst_131 : f32 to vector<1x128xf32>
    %89 = arith.mulf %87, %88 : vector<1x128xf32>
    %90 = vector.broadcast %89 : vector<1x128xf32> to vector<512x128xf32>
    %91 = arith.subf %85, %90 : vector<512x128xf32>
    %92 = arith.mulf %91, %91 : vector<512x128xf32>
    %cst_132 = arith.constant dense<0.000000e+00> : vector<128xf32>
    %93 = vector.multi_reduction <add>, %92, %cst_132 [0] : vector<512x128xf32> to vector<128xf32>
    %94 = vector.shape_cast %93 : vector<128xf32> to vector<1x128xf32>
    %cst_133 = arith.constant 0.001953125 : f32
    %95 = vector.broadcast %cst_133 : f32 to vector<1x128xf32>
    %96 = arith.mulf %94, %95 : vector<1x128xf32>
    %c0_134 = arith.constant 0 : index
    %c0_135 = arith.constant 0 : index
    %97 = vector.load %arg5[%c0_134, %c0_135] : memref<1x128xf32, #tpu.memory_space<vmem>>, vector<1x128xf32>
    %cst_136 = arith.constant 9.99999974E-6 : f32
    %98 = vector.broadcast %cst_136 : f32 to vector<1x128xf32>
    %99 = arith.addf %96, %98 : vector<1x128xf32>
    %100 = math.rsqrt %99 : vector<1x128xf32>
    %101 = arith.mulf %97, %100 : vector<1x128xf32>
    %c0_137 = arith.constant 0 : index
    %c0_138 = arith.constant 0 : index
    %102 = vector.load %arg6[%c0_137, %c0_138] : memref<1x128xf32, #tpu.memory_space<vmem>>, vector<1x128xf32>
    %103 = arith.mulf %89, %101 : vector<1x128xf32>
    %104 = arith.subf %102, %103 : vector<1x128xf32>
    %105 = vector.shape_cast %85 : vector<512x128xf32> to vector<2x256x128xf32>
    %cst_139 = arith.constant dense<0.000000e+00> : vector<2x128xf32>
    %106 = vector.multi_reduction <add>, %105, %cst_139 [1] : vector<2x256x128xf32> to vector<2x128xf32>
    %cst_140 = arith.constant 3.906250e-03 : f32
    %107 = vector.broadcast %cst_140 : f32 to vector<2x128xf32>
    %108 = arith.mulf %106, %107 : vector<2x128xf32>
    %109 = vector.broadcast %101 : vector<1x128xf32> to vector<2x128xf32>
    %110 = arith.mulf %108, %109 : vector<2x128xf32>
    %111 = vector.broadcast %104 : vector<1x128xf32> to vector<2x128xf32>
    %112 = arith.addf %110, %111 : vector<2x128xf32>
    %c0_141 = arith.constant 0 : index
    %c0_142 = arith.constant 0 : index
    %113 = vector.load %arg7[%c0_141, %c0_142] : memref<128x128xf32, #tpu.memory_space<vmem>>, vector<128x128xf32>
    %cst_143 = arith.constant dense<0.000000e+00> : vector<2x128xf32>
    %114 = tpu.matmul %112, %113, %cst_143 {dimension_numbers = #tpu.dot_dimension_numbers<[1], [0], [0], [1], [0, 0, 1, 1], [], []>} : vector<2x128xf32>, vector<128x128xf32>, vector<2x128xf32> -> vector<2x128xf32>
    %cst_144 = arith.constant 0.000000e+00 : f32
    %115 = vector.broadcast %cst_144 : f32 to vector<2x128xf32>
    %116 = arith.maximumf %114, %115 : vector<2x128xf32>
    %c0_145 = arith.constant 0 : index
    %c0_146 = arith.constant 0 : index
    %117 = vector.load %arg8[%c0_145, %c0_146] : memref<128x128xf32, #tpu.memory_space<vmem>>, vector<128x128xf32>
    %cst_147 = arith.constant dense<0.000000e+00> : vector<2x128xf32>
    %118 = tpu.matmul %116, %117, %cst_147 {dimension_numbers = #tpu.dot_dimension_numbers<[1], [0], [0], [1], [0, 0, 1, 1], [], []>} : vector<2x128xf32>, vector<128x128xf32>, vector<2x128xf32> -> vector<2x128xf32>
    %119 = arith.negf %118 : vector<2x128xf32>
    %120 = math.exp %119 : vector<2x128xf32>
    %cst_148 = arith.constant 1.000000e+00 : f32
    %121 = vector.broadcast %cst_148 : f32 to vector<2x128xf32>
    %122 = arith.addf %121, %120 : vector<2x128xf32>
    %123 = arith.divf %121, %122 : vector<2x128xf32>
    %124 = vector.broadcast %101 : vector<1x128xf32> to vector<2x128xf32>
    %125 = arith.mulf %123, %124 : vector<2x128xf32>
    %126 = vector.shape_cast %125 : vector<2x128xf32> to vector<2x1x1x128xf32>
    %127 = vector.broadcast %104 : vector<1x128xf32> to vector<2x128xf32>
    %128 = arith.mulf %123, %127 : vector<2x128xf32>
    %129 = vector.shape_cast %128 : vector<2x128xf32> to vector<2x1x1x128xf32>
    %130 = vector.shape_cast %85 : vector<512x128xf32> to vector<2x16x16x128xf32>
    %131 = vector.broadcast %126 : vector<2x1x1x128xf32> to vector<2x16x16x128xf32>
    %132 = arith.mulf %130, %131 : vector<2x16x16x128xf32>
    %c0_149 = arith.constant 0 : index
    %c0_150 = arith.constant 0 : index
    %c0_151 = arith.constant 0 : index
    %c0_152 = arith.constant 0 : index
    %133 = vector.load %arg0[%c0_149, %c0_150, %c0_151, %c0_152] : memref<2x16x16x128xf32, #tpu.memory_space<vmem>>, vector<2x16x16x128xf32>
    %134 = vector.broadcast %129 : vector<2x1x1x128xf32> to vector<2x16x16x128xf32>
    %135 = arith.addf %134, %133 : vector<2x16x16x128xf32>
    %136 = arith.addf %132, %135 : vector<2x16x16x128xf32>
    %cst_153 = arith.constant 0.000000e+00 : f32
    %137 = vector.broadcast %cst_153 : f32 to vector<2x16x16x128xf32>
    %138 = arith.maximumf %136, %137 : vector<2x16x16x128xf32>
    %c0_154 = arith.constant 0 : index
    %c0_155 = arith.constant 0 : index
    %c0_156 = arith.constant 0 : index
    %c0_157 = arith.constant 0 : index
    %139 = vector.load %arg9[%c0_154, %c0_155, %c0_156, %c0_157] : memref<2x16x16x128xf32, #tpu.memory_space<vmem>>, vector<2x16x16x128xf32>
    tpu.vector_store %arg9[%c0_154, %c0_155, %c0_156, %c0_157], %138 {strides = array<i32>} : memref<2x16x16x128xf32, #tpu.memory_space<vmem>>, vector<2x16x16x128xf32>,
    return
  }
}

</mosaic_0001>

<llo_original>
// kernel: tpu_custom_call.1
$region0: #{tpu_custom_call.1}
  #allocation0 [shape = 'u32[]', space=smem, size = 0x4, offset = 0x4, fixed_abs, tag = 'smem constant byte address 0x4 - core index']
  #allocation1 [shape = 'u32[144,128]{1,0:T(1,128)}', space=vmem, size = 0x12000, scoped, tag = 'internal scratch']
  #allocation2 [shape = 'f32[2,18,18,128]{3,2,1,0:T(8,128)}', space=vmem, size = 0x6c000, scoped, tag = 'scratch operand']
  #allocation3 [shape = 'bf16[512,384]{1,0:T(8,128)(2,1)}', space=vmem, size = 0x60000, scoped, tag = 'scratch operand']
  %s0 = inlined_call_operand.hbm [shape: f32[2,16,16,128], index: 0, kind: input, shape index: {}]
  %s1 = inlined_call_operand.hbm [shape: bf16[384,128], index: 1, kind: input, shape index: {}]
  %s2 = inlined_call_operand.hbm [shape: bf16[384,128], index: 2, kind: input, shape index: {}]
  %s3 = inlined_call_operand.vmem [shape: f32[1,128], index: 3, kind: input, shape index: {}]
  %s4 = inlined_call_operand.vmem [shape: f32[1,128], index: 4, kind: input, shape index: {}]
  %s5 = inlined_call_operand.vmem [shape: f32[1,128], index: 5, kind: input, shape index: {}]
  %s6 = inlined_call_operand.vmem [shape: f32[1,128], index: 6, kind: input, shape index: {}]
  %s7 = inlined_call_operand.hbm [shape: f32[128,128], index: 7, kind: input, shape index: {}]
  %s8 = inlined_call_operand.hbm [shape: f32[128,128], index: 8, kind: input, shape index: {}]
  %s9 = inlined_call_operand.hbm [shape: f32[2,16,16,128], index: 9, kind: output, shape index: {}]
  %s10 = sld [smem:[#allocation0]]
  $region66: #{tpu_custom_call.1} parent=0
    _
  %s12 = ssub.s32 1, %s10
  %s13 = scalar_select 0, %s12, %s10
  $region1: #{tpu_custom_call.1} parent=0
    #allocation4 [shape = 'u8[262144]{0}', space=vmem, size = 0x40000, scoped, tag = 'input window, operand 0, single buffered']
    #allocation5 [shape = 's32[1]{0}', space=sflag, size = 0x4, scoped, tag = 'scoped memory for tpu_custom_call.1']
    #allocation6 [shape = 's32[1]{0}', space=sflag, size = 0x4, scoped, tag = 'scoped memory for tpu_custom_call.1']
    #allocation7 [shape = 'u8[98304]{0}', space=vmem, size = 0x18000, scoped, tag = 'input window, operand 1, single buffered']
    #allocation8 [shape = 's32[1]{0}', space=sflag, size = 0x4, scoped, tag = 'scoped memory for tpu_custom_call.1']
    #allocation9 [shape = 'u8[98304]{0}', space=vmem, size = 0x18000, scoped, tag = 'input window, operand 2, single buffered']
    #allocation10 [shape = 'u8[65536]{0}', space=vmem, size = 0x10000, scoped, tag = 'input window, operand 7, single buffered']
    #allocation11 [shape = 's32[1]{0}', space=sflag, size = 0x4, scoped, tag = 'scoped memory for tpu_custom_call.1']
    #allocation12 [shape = 'u8[65536]{0}', space=vmem, size = 0x10000, scoped, tag = 'input window, operand 8, single buffered']
    #allocation13 [shape = 'u8[262144]{0}', space=vmem, size = 0x40000, scoped, tag = 'output window, operand 0, single buffered']
    %14 = vsyncpa [#allocation5], 0
    %15 = vsyncpa [#allocation8], 0
    %16 = vsyncpa [#allocation11], 0
    %17 = vsyncpa [#allocation6], 0
    // Predicated region
    $region2: #{tpu_custom_call.1} parent=1 // pred_check
      _
    $region3: #{tpu_custom_call.1} parent=1 // pred_check_branch
      %19 = sbr.rel (0) target = $region5
    $region4: #{tpu_custom_call.1} parent=1 // pred_region
      %s21 = ssub.s32 8192, 8192
      %22 = vsyncadd [#allocation5], %s21
      %s23 = sshll.u32 [#allocation4], 4
      %s24 = int_to_ptr.vmem [resolvable:$true] %s23
      %29 = dma.hbm_to_vmem [thread:$0]  %s0, 8192, %s24, [#allocation5], 128, 128, 8
    $region5: #{tpu_custom_call.1} parent=1 // pred_fallthru
      _
    // Predicated region
    $region6: #{tpu_custom_call.1} parent=1 // pred_check
      _
    $region7: #{tpu_custom_call.1} parent=1 // pred_check_branch
      %31 = sbr.rel (0) target = $region9
    $region8: #{tpu_custom_call.1} parent=1 // pred_region
      %s33 = ssub.s32 3072, 3072
      %34 = vsyncadd [#allocation8], %s33
      %s35 = sshll.u32 [#allocation7], 4
      %s36 = int_to_ptr.vmem [resolvable:$true] %s35
      %41 = dma.hbm_to_vmem [thread:$0]  %s1, 3072, %s36, [#allocation8], 64, 64, 4
    $region9: #{tpu_custom_call.1} parent=1 // pred_fallthru
      _
    // Predicated region
    $region10: #{tpu_custom_call.1} parent=1 // pred_check
      _
    $region11: #{tpu_custom_call.1} parent=1 // pred_check_branch
      %43 = sbr.rel (0) target = $region13
    $region12: #{tpu_custom_call.1} parent=1 // pred_region
      %s45 = ssub.s32 3072, 3072
      %46 = vsyncadd [#allocation8], %s45
      %s47 = sshll.u32 [#allocation9], 4
      %s48 = int_to_ptr.vmem [resolvable:$true] %s47
      %53 = dma.hbm_to_vmem [thread:$0]  %s2, 3072, %s48, [#allocation8], 64, 64, 4
    $region13: #{tpu_custom_call.1} parent=1 // pred_fallthru
      _
    // Predicated region
    $region14: #{tpu_custom_call.1} parent=1 // pred_check
      _
    $region15: #{tpu_custom_call.1} parent=1 // pred_check_branch
      %55 = sbr.rel (0) target = $region17
    $region16: #{tpu_custom_call.1} parent=1 // pred_region
      _
    $region17: #{tpu_custom_call.1} parent=1 // pred_fallthru
      _
    // Predicated region
    $region18: #{tpu_custom_call.1} parent=1 // pred_check
      _
    $region19: #{tpu_custom_call.1} parent=1 // pred_check_branch
      %57 = sbr.rel (0) target = $region21
    $region20: #{tpu_custom_call.1} parent=1 // pred_region
      _
    $region21: #{tpu_custom_call.1} parent=1 // pred_fallthru
      _
    // Predicated region
    $region22: #{tpu_custom_call.1} parent=1 // pred_check
      _
    $region23: #{tpu_custom_call.1} parent=1 // pred_check_branch
      %59 = sbr.rel (0) target = $region25
    $region24: #{tpu_custom_call.1} parent=1 // pred_region
      _
    $region25: #{tpu_custom_call.1} parent=1 // pred_fallthru
      _
    // Predicated region
    $region26: #{tpu_custom_call.1} parent=1 // pred_check
      _
    $region27: #{tpu_custom_call.1} parent=1 // pred_check_branch
      %61 = sbr.rel (0) target = $region29
    $region28: #{tpu_custom_call.1} parent=1 // pred_region
      _
    $region29: #{tpu_custom_call.1} parent=1 // pred_fallthru
      _
    // Predicated region
    $region30: #{tpu_custom_call.1} parent=1 // pred_check
      _
    $region31: #{tpu_custom_call.1} parent=1 // pred_check_branch
      %63 = sbr.rel (0) target = $region33
    $region32: #{tpu_custom_call.1} parent=1 // pred_region
      %s65 = ssub.s32 2048, 2048
      %66 = vsyncadd [#allocation11], %s65
      %s67 = sshll.u32 [#allocation10], 4
      %s68 = int_to_ptr.vmem [resolvable:$true] %s67
      %73 = dma.hbm_to_vmem [thread:$0]  %s7, 2048, %s68, [#allocation11], 128, 128, 8
    $region33: #{tpu_custom_call.1} parent=1 // pred_fallthru
      _
    // Predicated region
    $region34: #{tpu_custom_call.1} parent=1 // pred_check
      _
    $region35: #{tpu_custom_call.1} parent=1 // pred_check_branch
      %75 = sbr.rel (0) target = $region37
    $region36: #{tpu_custom_call.1} parent=1 // pred_region
      %s77 = ssub.s32 2048, 2048
      %78 = vsyncadd [#allocation11], %s77
      %s79 = sshll.u32 [#allocation12], 4
      %s80 = int_to_ptr.vmem [resolvable:$true] %s79
      %85 = dma.hbm_to_vmem [thread:$0]  %s8, 2048, %s80, [#allocation11], 128, 128, 8
    $region37: #{tpu_custom_call.1} parent=1 // pred_fallthru
      _
    // Predicated region
    $region38: #{tpu_custom_call.1} parent=1 // pred_check
      _
    $region39: #{tpu_custom_call.1} parent=1 // pred_check_branch
      %87 = sbr.rel (0) target = $region41
    $region40: #{tpu_custom_call.1} parent=1 // pred_region
      %88 = dma.done [#allocation5], 8192
    $region41: #{tpu_custom_call.1} parent=1 // pred_fallthru
      _
    // Predicated region
    $region42: #{tpu_custom_call.1} parent=1 // pred_check
      _
    $region43: #{tpu_custom_call.1} parent=1 // pred_check_branch
      %90 = sbr.rel (0) target = $region45
    $region44: #{tpu_custom_call.1} parent=1 // pred_region
      %91 = dma.done [#allocation8], 3072
    $region45: #{tpu_custom_call.1} parent=1 // pred_fallthru
      _
    // Predicated region
    $region46: #{tpu_custom_call.1} parent=1 // pred_check
      _
    $region47: #{tpu_custom_call.1} parent=1 // pred_check_branch
      %93 = sbr.rel (0) target = $region49
    $region48: #{tpu_custom_call.1} parent=1 // pred_region
      %94 = dma.done [#allocation8], 3072
    $region49: #{tpu_custom_call.1} parent=1 // pred_fallthru
      _
    // Predicated region
    $region50: #{tpu_custom_call.1} parent=1 // pred_check
      _
    $region51: #{tpu_custom_call.1} parent=1 // pred_check_branch
      %96 = sbr.rel (0) target = $region53
    $region52: #{tpu_custom_call.1} parent=1 // pred_region
      %97 = dma.done [#allocation11], 2048
    $region53: #{tpu_custom_call.1} parent=1 // pred_fallthru
      _
    // Predicated region
    $region54: #{tpu_custom_call.1} parent=1 // pred_check
      _
    $region55: #{tpu_custom_call.1} parent=1 // pred_check_branch
      %99 = sbr.rel (0) target = $region57
    $region56: #{tpu_custom_call.1} parent=1 // pred_region
      %100 = dma.done [#allocation11], 2048
    $region57: #{tpu_custom_call.1} parent=1 // pred_fallthru
      _
    %102 = vst [vmem:[#allocation2] sm:$0xff] 0.0
    %103 = vst [vmem:[#allocation2 + $0x8] sm:$0xff] 0.0
    %104 = vst [vmem:[#allocation2 + $0x10] sm:$0x3] 0.0
    %105 = vst [vmem:[#allocation2 + $0x1b0] sm:$0xff] 0.0
    %106 = vst [vmem:[#allocation2 + $0x1b8] sm:$0xff] 0.0
    %107 = vst [vmem:[#allocation2 + $0x1c0] sm:$0x3] 0.0
    %s108 = scalar_lea.vmem [#allocation2], 408
    %109 = vst [vmem:[%s108] sm:$0xff] 0.0
    %110 = vst [vmem:[%s108 + $0x8] sm:$0xff] 0.0
    %111 = vst [vmem:[%s108 + $0x10] sm:$0x3] 0.0
    %112 = vst [vmem:[%s108 + $0x1b0] sm:$0xff] 0.0
    %113 = vst [vmem:[%s108 + $0x1b8] sm:$0xff] 0.0
    %114 = vst [vmem:[%s108 + $0x1c0] sm:$0x3] 0.0
    %115 = vst [vmem:[#allocation2] sm:$0x1] 0.0
    %116 = vst [vmem:[#allocation2 + $0x18] sm:$0x1] 0.0
    %117 = vst [vmem:[#allocation2 + $0x30] sm:$0x1] 0.0
    %118 = vst [vmem:[#allocation2 + $0x48] sm:$0x1] 0.0
    %119 = vst [vmem:[#allocation2 + $0x60] sm:$0x1] 0.0
    %120 = vst [vmem:[#allocation2 + $0x78] sm:$0x1] 0.0
    %121 = vst [vmem:[#allocation2 + $0x90] sm:$0x1] 0.0
    %122 = vst [vmem:[#allocation2 + $0xa8] sm:$0x1] 0.0
    %123 = vst [vmem:[#allocation2 + $0xc0] sm:$0x1] 0.0
    %124 = vst [vmem:[#allocation2 + $0xd8] sm:$0x1] 0.0
    %125 = vst [vmem:[#allocation2 + $0xf0] sm:$0x1] 0.0
    %126 = vst [vmem:[#allocation2 + $0x108] sm:$0x1] 0.0
    %127 = vst [vmem:[#allocation2 + $0x120] sm:$0x1] 0.0
    %128 = vst [vmem:[#allocation2 + $0x138] sm:$0x1] 0.0
    %129 = vst [vmem:[#allocation2 + $0x150] sm:$0x1] 0.0
    %130 = vst [vmem:[#allocation2 + $0x168] sm:$0x1] 0.0
    %131 = vst [vmem:[#allocation2 + $0x180] sm:$0x1] 0.0
    %132 = vst [vmem:[#allocation2 + $0x198] sm:$0x1] 0.0
    %133 = vst [vmem:[#allocation2 + $0x1b0] sm:$0x1] 0.0
    %134 = vst [vmem:[#allocation2 + $0x1c8] sm:$0x1] 0.0
    %135 = vst [vmem:[#allocation2 + $0x1e0] sm:$0x1] 0.0
    %136 = vst [vmem:[#allocation2 + $0x1f8] sm:$0x1] 0.0
    %137 = vst [vmem:[#allocation2 + $0x210] sm:$0x1] 0.0
    %138 = vst [vmem:[#allocation2 + $0x228] sm:$0x1] 0.0
    %139 = vst [vmem:[#allocation2 + $0x240] sm:$0x1] 0.0
    %140 = vst [vmem:[#allocation2 + $0x258] sm:$0x1] 0.0
    %141 = vst [vmem:[#allocation2 + $0x270] sm:$0x1] 0.0
    %142 = vst [vmem:[#allocation2 + $0x288] sm:$0x1] 0.0
    %143 = vst [vmem:[#allocation2 + $0x2a0] sm:$0x1] 0.0
    %144 = vst [vmem:[#allocation2 + $0x2b8] sm:$0x1] 0.0
    %145 = vst [vmem:[#allocation2 + $0x2d0] sm:$0x1] 0.0
    %146 = vst [vmem:[#allocation2 + $0x2e8] sm:$0x1] 0.0
    %147 = vst [vmem:[#allocation2 + $0x300] sm:$0x1] 0.0
    %148 = vst [vmem:[#allocation2 + $0x318] sm:$0x1] 0.0
    %149 = vst [vmem:[#allocation2 + $0x330] sm:$0x1] 0.0
    %150 = vst [vmem:[#allocation2 + $0x348] sm:$0x1] 0.0
    %151 = vst [vmem:[#allocation2 + $0x11] sm:$0x1] 0.0
    %152 = vst [vmem:[#allocation2 + $0x29] sm:$0x1] 0.0
    %153 = vst [vmem:[#allocation2 + $0x41] sm:$0x1] 0.0
    %154 = vst [vmem:[#allocation2 + $0x59] sm:$0x1] 0.0
    %155 = vst [vmem:[#allocation2 + $0x71] sm:$0x1] 0.0
    %156 = vst [vmem:[#allocation2 + $0x89] sm:$0x1] 0.0
    %157 = vst [vmem:[#allocation2 + $0xa1] sm:$0x1] 0.0
    %158 = vst [vmem:[#allocation2 + $0xb9] sm:$0x1] 0.0
    %159 = vst [vmem:[#allocation2 + $0xd1] sm:$0x1] 0.0
    %160 = vst [vmem:[#allocation2 + $0xe9] sm:$0x1] 0.0
    %161 = vst [vmem:[#allocation2 + $0x101] sm:$0x1] 0.0
    %162 = vst [vmem:[#allocation2 + $0x119] sm:$0x1] 0.0
    %163 = vst [vmem:[#allocation2 + $0x131] sm:$0x1] 0.0
    %164 = vst [vmem:[#allocation2 + $0x149] sm:$0x1] 0.0
    %165 = vst [vmem:[#allocation2 + $0x161] sm:$0x1] 0.0
    %166 = vst [vmem:[#allocation2 + $0x179] sm:$0x1] 0.0
    %167 = vst [vmem:[#allocation2 + $0x191] sm:$0x1] 0.0
    %168 = vst [vmem:[#allocation2 + $0x1a9] sm:$0x1] 0.0
    %169 = vst [vmem:[#allocation2 + $0x1c1] sm:$0x1] 0.0
    %170 = vst [vmem:[#allocation2 + $0x1d9] sm:$0x1] 0.0
    %171 = vst [vmem:[#allocation2 + $0x1f1] sm:$0x1] 0.0
    %172 = vst [vmem:[#allocation2 + $0x209] sm:$0x1] 0.0
    %173 = vst [vmem:[#allocation2 + $0x221] sm:$0x1] 0.0
    %174 = vst [vmem:[#allocation2 + $0x239] sm:$0x1] 0.0
    %175 = vst [vmem:[#allocation2 + $0x251] sm:$0x1] 0.0
    %176 = vst [vmem:[#allocation2 + $0x269] sm:$0x1] 0.0
    %177 = vst [vmem:[#allocation2 + $0x281] sm:$0x1] 0.0
    %178 = vst [vmem:[#allocation2 + $0x299] sm:$0x1] 0.0
    %179 = vst [vmem:[#allocation2 + $0x2b1] sm:$0x1] 0.0
    %180 = vst [vmem:[#allocation2 + $0x2c9] sm:$0x1] 0.0
    %181 = vst [vmem:[#allocation2 + $0x2e1] sm:$0x1] 0.0
    %182 = vst [vmem:[#allocation2 + $0x2f9] sm:$0x1] 0.0
    %183 = vst [vmem:[#allocation2 + $0x311] sm:$0x1] 0.0
    %184 = vst [vmem:[#allocation2 + $0x329] sm:$0x1] 0.0
    %185 = vst [vmem:[#allocation2 + $0x341] sm:$0x1] 0.0
    %186 = vst [vmem:[#allocation2 + $0x359] sm:$0x1] 0.0
    %v187 = vld [vmem:[#allocation4] sm:$0xff]
    %v188 = vld [vmem:[#allocation4 + $0x8] sm:$0xff]
    %v189 = vld [vmem:[#allocation4 + $0x10] sm:$0xff]
    %v190 = vld [vmem:[#allocation4 + $0x18] sm:$0xff]
    %v191 = vld [vmem:[#allocation4 + $0x20] sm:$0xff]
    %v192 = vld [vmem:[#allocation4 + $0x28] sm:$0xff]
    %v193 = vld [vmem:[#allocation4 + $0x30] sm:$0xff]
    %v194 = vld [vmem:[#allocation4 + $0x38] sm:$0xff]
    %v195 = vld [vmem:[#allocation4 + $0x40] sm:$0xff]
    %v196 = vld [vmem:[#allocation4 + $0x48] sm:$0xff]
    %v197 = vld [vmem:[#allocation4 + $0x50] sm:$0xff]
    %v198 = vld [vmem:[#allocation4 + $0x58] sm:$0xff]
    %v199 = vld [vmem:[#allocation4 + $0x60] sm:$0xff]
    %v200 = vld [vmem:[#allocation4 + $0x68] sm:$0xff]
    %v201 = vld [vmem:[#allocation4 + $0x70] sm:$0xff]
    %v202 = vld [vmem:[#allocation4 + $0x78] sm:$0xff]
    %v203 = vld [vmem:[#allocation4 + $0x80] sm:$0xff]
    %v204 = vld [vmem:[#allocation4 + $0x88] sm:$0xff]
    %v205 = vld [vmem:[#allocation4 + $0x90] sm:$0xff]
    %v206 = vld [vmem:[#allocation4 + $0x98] sm:$0xff]
    %v207 = vld [vmem:[#allocation4 + $0xa0] sm:$0xff]
    %v208 = vld [vmem:[#allocation4 + $0xa8] sm:$0xff]
    %v209 = vld [vmem:[#allocation4 + $0xb0] sm:$0xff]
    %v210 = vld [vmem:[#allocation4 + $0xb8] sm:$0xff]
    %v211 = vld [vmem:[#allocation4 + $0xc0] sm:$0xff]
    %v212 = vld [vmem:[#allocation4 + $0xc8] sm:$0xff]
    %v213 = vld [vmem:[#allocation4 + $0xd0] sm:$0xff]
    %v214 = vld [vmem:[#allocation4 + $0xd8] sm:$0xff]
    %v215 = vld [vmem:[#allocation4 + $0xe0] sm:$0xff]
    %v216 = vld [vmem:[#allocation4 + $0xe8] sm:$0xff]
    %v217 = vld [vmem:[#allocation4 + $0xf0] sm:$0xff]
    %v218 = vld [vmem:[#allocation4 + $0xf8] sm:$0xff]
    %v219 = vld [vmem:[#allocation4 + $0x100] sm:$0xff]
    %v220 = vld [vmem:[#allocation4 + $0x108] sm:$0xff]
    %v221 = vld [vmem:[#allocation4 + $0x110] sm:$0xff]
    %v222 = vld [vmem:[#allocation4 + $0x118] sm:$0xff]
    %v223 = vld [vmem:[#allocation4 + $0x120] sm:$0xff]
    %v224 = vld [vmem:[#allocation4 + $0x128] sm:$0xff]
    %v225 = vld [vmem:[#allocation4 + $0x130] sm:$0xff]
    %v226 = vld [vmem:[#allocation4 + $0x138] sm:$0xff]
    %v227 = vld [vmem:[#allocation4 + $0x140] sm:$0xff]
    %v228 = vld [vmem:[#allocation4 + $0x148] sm:$0xff]
    %v229 = vld [vmem:[#allocation4 + $0x150] sm:$0xff]
    %v230 = vld [vmem:[#allocation4 + $0x158] sm:$0xff]
    %v231 = vld [vmem:[#allocation4 + $0x160] sm:$0xff]
    %v232 = vld [vmem:[#allocation4 + $0x168] sm:$0xff]
    %v233 = vld [vmem:[#allocation4 + $0x170] sm:$0xff]
    %v234 = vld [vmem:[#allocation4 + $0x178] sm:$0xff]
    %v235 = vld [vmem:[#allocation4 + $0x180] sm:$0xff]
    %v236 = vld [vmem:[#allocation4 + $0x188] sm:$0xff]
    %v237 = vld [vmem:[#allocation4 + $0x190] sm:$0xff]
    %v238 = vld [vmem:[#allocation4 + $0x198] sm:$0xff]
    %v239 = vld [vmem:[#allocation4 + $0x1a0] sm:$0xff]
    %v240 = vld [vmem:[#allocation4 + $0x1a8] sm:$0xff]
    %v241 = vld [vmem:[#allocation4 + $0x1b0] sm:$0xff]
    %v242 = vld [vmem:[#allocation4 + $0x1b8] sm:$0xff]
    %v243 = vld [vmem:[#allocation4 + $0x1c0] sm:$0xff]
    %v244 = vld [vmem:[#allocation4 + $0x1c8] sm:$0xff]
    %v245 = vld [vmem:[#allocation4 + $0x1d0] sm:$0xff]
    %v246 = vld [vmem:[#allocation4 + $0x1d8] sm:$0xff]
    %v247 = vld [vmem:[#allocation4 + $0x1e0] sm:$0xff]
    %v248 = vld [vmem:[#allocation4 + $0x1e8] sm:$0xff]
    %v249 = vld [vmem:[#allocation4 + $0x1f0] sm:$0xff]
    %v250 = vld [vmem:[#allocation4 + $0x1f8] sm:$0xff]
    %s251 = scalar_lea.vmem [#allocation2], 24
    %252 = vst [vmem:[%s251 + $0x1] sm:$0xff] %v187
    %253 = vst [vmem:[%s251 + $0x9] sm:$0xff] %v188
    %254 = vst [vmem:[%s251 + $0x19] sm:$0xff] %v189
    %255 = vst [vmem:[%s251 + $0x21] sm:$0xff] %v190
    %256 = vst [vmem:[%s251 + $0x31] sm:$0xff] %v191
    %257 = vst [vmem:[%s251 + $0x39] sm:$0xff] %v192
    %258 = vst [vmem:[%s251 + $0x49] sm:$0xff] %v193
    %259 = vst [vmem:[%s251 + $0x51] sm:$0xff] %v194
    %260 = vst [vmem:[%s251 + $0x61] sm:$0xff] %v195
    %261 = vst [vmem:[%s251 + $0x69] sm:$0xff] %v196
    %262 = vst [vmem:[%s251 + $0x79] sm:$0xff] %v197
    %263 = vst [vmem:[%s251 + $0x81] sm:$0xff] %v198
    %264 = vst [vmem:[%s251 + $0x91] sm:$0xff] %v199
    %265 = vst [vmem:[%s251 + $0x99] sm:$0xff] %v200
    %266 = vst [vmem:[%s251 + $0xa9] sm:$0xff] %v201
    %267 = vst [vmem:[%s251 + $0xb1] sm:$0xff] %v202
    %268 = vst [vmem:[%s251 + $0xc1] sm:$0xff] %v203
    %269 = vst [vmem:[%s251 + $0xc9] sm:$0xff] %v204
    %270 = vst [vmem:[%s251 + $0xd9] sm:$0xff] %v205
    %271 = vst [vmem:[%s251 + $0xe1] sm:$0xff] %v206
    %272 = vst [vmem:[%s251 + $0xf1] sm:$0xff] %v207
    %273 = vst [vmem:[%s251 + $0xf9] sm:$0xff] %v208
    %274 = vst [vmem:[%s251 + $0x109] sm:$0xff] %v209
    %275 = vst [vmem:[%s251 + $0x111] sm:$0xff] %v210
    %276 = vst [vmem:[%s251 + $0x121] sm:$0xff] %v211
    %277 = vst [vmem:[%s251 + $0x129] sm:$0xff] %v212
    %278 = vst [vmem:[%s251 + $0x139] sm:$0xff] %v213
    %279 = vst [vmem:[%s251 + $0x141] sm:$0xff] %v214
    %280 = vst [vmem:[%s251 + $0x151] sm:$0xff] %v215
    %281 = vst [vmem:[%s251 + $0x159] sm:$0xff] %v216
    %282 = vst [vmem:[%s251 + $0x169] sm:$0xff] %v217
    %283 = vst [vmem:[%s251 + $0x171] sm:$0xff] %v218
    %284 = vst [vmem:[%s251 + $0x1b1] sm:$0xff] %v219
    %285 = vst [vmem:[%s251 + $0x1b9] sm:$0xff] %v220
    %286 = vst [vmem:[%s251 + $0x1c9] sm:$0xff] %v221
    %287 = vst [vmem:[%s251 + $0x1d1] sm:$0xff] %v222
    %288 = vst [vmem:[%s251 + $0x1e1] sm:$0xff] %v223
    %289 = vst [vmem:[%s251 + $0x1e9] sm:$0xff] %v224
    %290 = vst [vmem:[%s251 + $0x1f9] sm:$0xff] %v225
    %291 = vst [vmem:[%s251 + $0x201] sm:$0xff] %v226
    %292 = vst [vmem:[%s251 + $0x211] sm:$0xff] %v227
    %293 = vst [vmem:[%s251 + $0x219] sm:$0xff] %v228
    %294 = vst [vmem:[%s251 + $0x229] sm:$0xff] %v229
    %295 = vst [vmem:[%s251 + $0x231] sm:$0xff] %v230
    %296 = vst [vmem:[%s251 + $0x241] sm:$0xff] %v231
    %297 = vst [vmem:[%s251 + $0x249] sm:$0xff] %v232
    %298 = vst [vmem:[%s251 + $0x259] sm:$0xff] %v233
    %299 = vst [vmem:[%s251 + $0x261] sm:$0xff] %v234
    %300 = vst [vmem:[%s251 + $0x271] sm:$0xff] %v235
    %301 = vst [vmem:[%s251 + $0x279] sm:$0xff] %v236
    %302 = vst [vmem:[%s251 + $0x289] sm:$0xff] %v237
    %303 = vst [vmem:[%s251 + $0x291] sm:$0xff] %v238
    %304 = vst [vmem:[%s251 + $0x2a1] sm:$0xff] %v239
    %305 = vst [vmem:[%s251 + $0x2a9] sm:$0xff] %v240
    %306 = vst [vmem:[%s251 + $0x2b9] sm:$0xff] %v241
    %307 = vst [vmem:[%s251 + $0x2c1] sm:$0xff] %v242
    %308 = vst [vmem:[%s251 + $0x2d1] sm:$0xff] %v243
    %309 = vst [vmem:[%s251 + $0x2d9] sm:$0xff] %v244
    %310 = vst [vmem:[%s251 + $0x2e9] sm:$0xff] %v245
    %311 = vst [vmem:[%s251 + $0x2f1] sm:$0xff] %v246
    %312 = vst [vmem:[%s251 + $0x301] sm:$0xff] %v247
    %313 = vst [vmem:[%s251 + $0x309] sm:$0xff] %v248
    %314 = vst [vmem:[%s251 + $0x319] sm:$0xff] %v249
    %315 = vst [vmem:[%s251 + $0x321] sm:$0xff] %v250
    %v316 = vld [vmem:[#allocation2] sm:$0xff]
    %v317 = vld [vmem:[#allocation2 + $0x8] sm:$0xff]
    %v318 = vld [vmem:[#allocation2 + $0x18] sm:$0xff]
    %v319 = vld [vmem:[#allocation2 + $0x20] sm:$0xff]
    %v320 = vld [vmem:[#allocation2 + $0x30] sm:$0xff]
    %v321 = vld [vmem:[#allocation2 + $0x38] sm:$0xff]
    %v322 = vld [vmem:[#allocation2 + $0x48] sm:$0xff]
    %v323 = vld [vmem:[#allocation2 + $0x50] sm:$0xff]
    %v324 = vld [vmem:[#allocation2 + $0x60] sm:$0xff]
    %v325 = vld [vmem:[#allocation2 + $0x68] sm:$0xff]
    %v326 = vld [vmem:[#allocation2 + $0x78] sm:$0xff]
    %v327 = vld [vmem:[#allocation2 + $0x80] sm:$0xff]
    %v328 = vld [vmem:[#allocation2 + $0x90] sm:$0xff]
    %v329 = vld [vmem:[#allocation2 + $0x98] sm:$0xff]
    %v330 = vld [vmem:[#allocation2 + $0xa8] sm:$0xff]
    %v331 = vld [vmem:[#allocation2 + $0xb0] sm:$0xff]
    %v332 = vld [vmem:[#allocation2 + $0xc0] sm:$0xff]
    %v333 = vld [vmem:[#allocation2 + $0xc8] sm:$0xff]
    %v334 = vld [vmem:[#allocation2 + $0xd8] sm:$0xff]
    %v335 = vld [vmem:[#allocation2 + $0xe0] sm:$0xff]
    %v336 = vld [vmem:[#allocation2 + $0xf0] sm:$0xff]
    %v337 = vld [vmem:[#allocation2 + $0xf8] sm:$0xff]
    %v338 = vld [vmem:[#allocation2 + $0x108] sm:$0xff]
    %v339 = vld [vmem:[#allocation2 + $0x110] sm:$0xff]
    %v340 = vld [vmem:[#allocation2 + $0x120] sm:$0xff]
    %v341 = vld [vmem:[#allocation2 + $0x128] sm:$0xff]
    %v342 = vld [vmem:[#allocation2 + $0x138] sm:$0xff]
    %v343 = vld [vmem:[#allocation2 + $0x140] sm:$0xff]
    %v344 = vld [vmem:[#allocation2 + $0x150] sm:$0xff]
    %v345 = vld [vmem:[#allocation2 + $0x158] sm:$0xff]
    %v346 = vld [vmem:[#allocation2 + $0x168] sm:$0xff]
    %v347 = vld [vmem:[#allocation2 + $0x170] sm:$0xff]
    %v348 = vld [vmem:[#allocation2 + $0x1b0] sm:$0xff]
    %v349 = vld [vmem:[#allocation2 + $0x1b8] sm:$0xff]
    %v350 = vld [vmem:[#allocation2 + $0x1c8] sm:$0xff]
    %v351 = vld [vmem:[#allocation2 + $0x1d0] sm:$0xff]
    %v352 = vld [vmem:[#allocation2 + $0x1e0] sm:$0xff]
    %v353 = vld [vmem:[#allocation2 + $0x1e8] sm:$0xff]
    %v354 = vld [vmem:[#allocation2 + $0x1f8] sm:$0xff]
    %v355 = vld [vmem:[#allocation2 + $0x200] sm:$0xff]
    %v356 = vld [vmem:[#allocation2 + $0x210] sm:$0xff]
    %v357 = vld [vmem:[#allocation2 + $0x218] sm:$0xff]
    %v358 = vld [vmem:[#allocation2 + $0x228] sm:$0xff]
    %v359 = vld [vmem:[#allocation2 + $0x230] sm:$0xff]
    %v360 = vld [vmem:[#allocation2 + $0x240] sm:$0xff]
    %v361 = vld [vmem:[#allocation2 + $0x248] sm:$0xff]
    %v362 = vld [vmem:[#allocation2 + $0x258] sm:$0xff]
    %v363 = vld [vmem:[#allocation2 + $0x260] sm:$0xff]
    %v364 = vld [vmem:[#allocation2 + $0x270] sm:$0xff]
    %v365 = vld [vmem:[#allocation2 + $0x278] sm:$0xff]
    %v366 = vld [vmem:[#allocation2 + $0x288] sm:$0xff]
    %v367 = vld [vmem:[#allocation2 + $0x290] sm:$0xff]
    %v368 = vld [vmem:[#allocation2 + $0x2a0] sm:$0xff]
    %v369 = vld [vmem:[#allocation2 + $0x2a8] sm:$0xff]
    %v370 = vld [vmem:[#allocation2 + $0x2b8] sm:$0xff]
    %v371 = vld [vmem:[#allocation2 + $0x2c0] sm:$0xff]
    %v372 = vld [vmem:[#allocation2 + $0x2d0] sm:$0xff]
    %v373 = vld [vmem:[#allocation2 + $0x2d8] sm:$0xff]
    %v374 = vld [vmem:[#allocation2 + $0x2e8] sm:$0xff]
    %v375 = vld [vmem:[#allocation2 + $0x2f0] sm:$0xff]
    %v376 = vld [vmem:[#allocation2 + $0x300] sm:$0xff]
    %v377 = vld [vmem:[#allocation2 + $0x308] sm:$0xff]
    %v378 = vld [vmem:[#allocation2 + $0x318] sm:$0xff]
    %v379 = vld [vmem:[#allocation2 + $0x320] sm:$0xff]
    %v380 = vld [vmem:[#allocation2 + $0x1] sm:$0xff]
    %v381 = vld [vmem:[#allocation2 + $0x9] sm:$0xff]
    %v382 = vld [vmem:[#allocation2 + $0x19] sm:$0xff]
    %v383 = vld [vmem:[#allocation2 + $0x21] sm:$0xff]
    %v384 = vld [vmem:[#allocation2 + $0x31] sm:$0xff]
    %v385 = vld [vmem:[#allocation2 + $0x39] sm:$0xff]
    %v386 = vld [vmem:[#allocation2 + $0x49] sm:$0xff]
    %v387 = vld [vmem:[#allocation2 + $0x51] sm:$0xff]
    %v388 = vld [vmem:[#allocation2 + $0x61] sm:$0xff]
    %v389 = vld [vmem:[#allocation2 + $0x69] sm:$0xff]
    %v390 = vld [vmem:[#allocation2 + $0x79] sm:$0xff]
    %v391 = vld [vmem:[#allocation2 + $0x81] sm:$0xff]
    %v392 = vld [vmem:[#allocation2 + $0x91] sm:$0xff]
    %v393 = vld [vmem:[#allocation2 + $0x99] sm:$0xff]
    %v394 = vld [vmem:[#allocation2 + $0xa9] sm:$0xff]
    %v395 = vld [vmem:[#allocation2 + $0xb1] sm:$0xff]
    %v396 = vld [vmem:[#allocation2 + $0xc1] sm:$0xff]
    %v397 = vld [vmem:[#allocation2 + $0xc9] sm:$0xff]
    %v398 = vld [vmem:[#allocation2 + $0xd9] sm:$0xff]
    %v399 = vld [vmem:[#allocation2 + $0xe1] sm:$0xff]
    %v400 = vld [vmem:[#allocation2 + $0xf1] sm:$0xff]
    %v401 = vld [vmem:[#allocation2 + $0xf9] sm:$0xff]
    %v402 = vld [vmem:[#allocation2 + $0x109] sm:$0xff]
    %v403 = vld [vmem:[#allocation2 + $0x111] sm:$0xff]
    %v404 = vld [vmem:[#allocation2 + $0x121] sm:$0xff]
    %v405 = vld [vmem:[#allocation2 + $0x129] sm:$0xff]
    %v406 = vld [vmem:[#allocation2 + $0x139] sm:$0xff]
    %v407 = vld [vmem:[#allocation2 + $0x141] sm:$0xff]
    %v408 = vld [vmem:[#allocation2 + $0x151] sm:$0xff]
    %v409 = vld [vmem:[#allocation2 + $0x159] sm:$0xff]
    %v410 = vld [vmem:[#allocation2 + $0x169] sm:$0xff]
    %v411 = vld [vmem:[#allocation2 + $0x171] sm:$0xff]
    %v412 = vld [vmem:[#allocation2 + $0x1b1] sm:$0xff]
    %v413 = vld [vmem:[#allocation2 + $0x1b9] sm:$0xff]
    %v414 = vld [vmem:[#allocation2 + $0x1c9] sm:$0xff]
    %v415 = vld [vmem:[#allocation2 + $0x1d1] sm:$0xff]
    %v416 = vld [vmem:[#allocation2 + $0x1e1] sm:$0xff]
    %v417 = vld [vmem:[#allocation2 + $0x1e9] sm:$0xff]
    %v418 = vld [vmem:[#allocation2 + $0x1f9] sm:$0xff]
    %v419 = vld [vmem:[#allocation2 + $0x201] sm:$0xff]
    %v420 = vld [vmem:[#allocation2 + $0x211] sm:$0xff]
    %v421 = vld [vmem:[#allocation2 + $0x219] sm:$0xff]
    %v422 = vld [vmem:[#allocation2 + $0x229] sm:$0xff]
    %v423 = vld [vmem:[#allocation2 + $0x231] sm:$0xff]
    %v424 = vld [vmem:[#allocation2 + $0x241] sm:$0xff]
    %v425 = vld [vmem:[#allocation2 + $0x249] sm:$0xff]
    %v426 = vld [vmem:[#allocation2 + $0x259] sm:$0xff]
    %v427 = vld [vmem:[#allocation2 + $0x261] sm:$0xff]
    %v428 = vld [vmem:[#allocation2 + $0x271] sm:$0xff]
    %v429 = vld [vmem:[#allocation2 + $0x279] sm:$0xff]
    %v430 = vld [vmem:[#allocation2 + $0x289] sm:$0xff]
    %v431 = vld [vmem:[#allocation2 + $0x291] sm:$0xff]
    %v432 = vld [vmem:[#allocation2 + $0x2a1] sm:$0xff]
    %v433 = vld [vmem:[#allocation2 + $0x2a9] sm:$0xff]
    %v434 = vld [vmem:[#allocation2 + $0x2b9] sm:$0xff]
    %v435 = vld [vmem:[#allocation2 + $0x2c1] sm:$0xff]
    %v436 = vld [vmem:[#allocation2 + $0x2d1] sm:$0xff]
    %v437 = vld [vmem:[#allocation2 + $0x2d9] sm:$0xff]
    %v438 = vld [vmem:[#allocation2 + $0x2e9] sm:$0xff]
    %v439 = vld [vmem:[#allocation2 + $0x2f1] sm:$0xff]
    %v440 = vld [vmem:[#allocation2 + $0x301] sm:$0xff]
    %v441 = vld [vmem:[#allocation2 + $0x309] sm:$0xff]
    %v442 = vld [vmem:[#allocation2 + $0x319] sm:$0xff]
    %v443 = vld [vmem:[#allocation2 + $0x321] sm:$0xff]
    %v444 = vld [vmem:[#allocation2 + $0x2] sm:$0xff]
    %v445 = vld [vmem:[#allocation2 + $0xa] sm:$0xff]
    %v446 = vld [vmem:[#allocation2 + $0x1a] sm:$0xff]
    %v447 = vld [vmem:[#allocation2 + $0x22] sm:$0xff]
    %v448 = vld [vmem:[#allocation2 + $0x32] sm:$0xff]
    %v449 = vld [vmem:[#allocation2 + $0x3a] sm:$0xff]
    %v450 = vld [vmem:[#allocation2 + $0x4a] sm:$0xff]
    %v451 = vld [vmem:[#allocation2 + $0x52] sm:$0xff]
    %v452 = vld [vmem:[#allocation2 + $0x62] sm:$0xff]
    %v453 = vld [vmem:[#allocation2 + $0x6a] sm:$0xff]
    %v454 = vld [vmem:[#allocation2 + $0x7a] sm:$0xff]
    %v455 = vld [vmem:[#allocation2 + $0x82] sm:$0xff]
    %v456 = vld [vmem:[#allocation2 + $0x92] sm:$0xff]
    %v457 = vld [vmem:[#allocation2 + $0x9a] sm:$0xff]
    %v458 = vld [vmem:[#allocation2 + $0xaa] sm:$0xff]
    %v459 = vld [vmem:[#allocation2 + $0xb2] sm:$0xff]
    %v460 = vld [vmem:[#allocation2 + $0xc2] sm:$0xff]
    %v461 = vld [vmem:[#allocation2 + $0xca] sm:$0xff]
    %v462 = vld [vmem:[#allocation2 + $0xda] sm:$0xff]
    %v463 = vld [vmem:[#allocation2 + $0xe2] sm:$0xff]
    %v464 = vld [vmem:[#allocation2 + $0xf2] sm:$0xff]
    %v465 = vld [vmem:[#allocation2 + $0xfa] sm:$0xff]
    %v466 = vld [vmem:[#allocation2 + $0x10a] sm:$0xff]
    %v467 = vld [vmem:[#allocation2 + $0x112] sm:$0xff]
    %v468 = vld [vmem:[#allocation2 + $0x122] sm:$0xff]
    %v469 = vld [vmem:[#allocation2 + $0x12a] sm:$0xff]
    %v470 = vld [vmem:[#allocation2 + $0x13a] sm:$0xff]
    %v471 = vld [vmem:[#allocation2 + $0x142] sm:$0xff]
    %v472 = vld [vmem:[#allocation2 + $0x152] sm:$0xff]
    %v473 = vld [vmem:[#allocation2 + $0x15a] sm:$0xff]
    %v474 = vld [vmem:[#allocation2 + $0x16a] sm:$0xff]
    %v475 = vld [vmem:[#allocation2 + $0x172] sm:$0xff]
    %v476 = vld [vmem:[#allocation2 + $0x1b2] sm:$0xff]
    %v477 = vld [vmem:[#allocation2 + $0x1ba] sm:$0xff]
    %v478 = vld [vmem:[#allocation2 + $0x1ca] sm:$0xff]
    %v479 = vld [vmem:[#allocation2 + $0x1d2] sm:$0xff]
    %v480 = vld [vmem:[#allocation2 + $0x1e2] sm:$0xff]
    %v481 = vld [vmem:[#allocation2 + $0x1ea] sm:$0xff]
    %v482 = vld [vmem:[#allocation2 + $0x1fa] sm:$0xff]
    %v483 = vld [vmem:[#allocation2 + $0x202] sm:$0xff]
    %v484 = vld [vmem:[#allocation2 + $0x212] sm:$0xff]
    %v485 = vld [vmem:[#allocation2 + $0x21a] sm:$0xff]
    %v486 = vld [vmem:[#allocation2 + $0x22a] sm:$0xff]
    %v487 = vld [vmem:[#allocation2 + $0x232] sm:$0xff]
    %v488 = vld [vmem:[#allocation2 + $0x242] sm:$0xff]
    %v489 = vld [vmem:[#allocation2 + $0x24a] sm:$0xff]
    %v490 = vld [vmem:[#allocation2 + $0x25a] sm:$0xff]
    %v491 = vld [vmem:[#allocation2 + $0x262] sm:$0xff]
    %v492 = vld [vmem:[#allocation2 + $0x272] sm:$0xff]
    %v493 = vld [vmem:[#allocation2 + $0x27a] sm:$0xff]
    %v494 = vld [vmem:[#allocation2 + $0x28a] sm:$0xff]
    %v495 = vld [vmem:[#allocation2 + $0x292] sm:$0xff]
    %v496 = vld [vmem:[#allocation2 + $0x2a2] sm:$0xff]
    %v497 = vld [vmem:[#allocation2 + $0x2aa] sm:$0xff]
    %v498 = vld [vmem:[#allocation2 + $0x2ba] sm:$0xff]
    %v499 = vld [vmem:[#allocation2 + $0x2c2] sm:$0xff]
    %v500 = vld [vmem:[#allocation2 + $0x2d2] sm:$0xff]
    %v501 = vld [vmem:[#allocation2 + $0x2da] sm:$0xff]
    %v502 = vld [vmem:[#allocation2 + $0x2ea] sm:$0xff]
    %v503 = vld [vmem:[#allocation2 + $0x2f2] sm:$0xff]
    %v504 = vld [vmem:[#allocation2 + $0x302] sm:$0xff]
    %v505 = vld [vmem:[#allocation2 + $0x30a] sm:$0xff]
    %v506 = vld [vmem:[#allocation2 + $0x31a] sm:$0xff]
    %v507 = vld [vmem:[#allocation2 + $0x322] sm:$0xff]
    %572 = vrot.lane.b32.xlu0 %v380, 32
    %v573 = vpop.permute.xlu0 %572
    %574 = vrot.lane.b32.xlu0 %v381, 32
    %v575 = vpop.permute.xlu0 %574
    %576 = vrot.lane.b32.xlu0 %v382, 32
    %v577 = vpop.permute.xlu0 %576
    %578 = vrot.lane.b32.xlu0 %v383, 32
    %v579 = vpop.permute.xlu0 %578
    %580 = vrot.lane.b32.xlu0 %v384, 32
    %v581 = vpop.permute.xlu0 %580
    %582 = vrot.lane.b32.xlu0 %v385, 32
    %v583 = vpop.permute.xlu0 %582
    %584 = vrot.lane.b32.xlu0 %v386, 32
    %v585 = vpop.permute.xlu0 %584
    %586 = vrot.lane.b32.xlu0 %v387, 32
    %v587 = vpop.permute.xlu0 %586
    %588 = vrot.lane.b32.xlu0 %v388, 32
    %v589 = vpop.permute.xlu0 %588
    %590 = vrot.lane.b32.xlu0 %v389, 32
    %v591 = vpop.permute.xlu0 %590
    %592 = vrot.lane.b32.xlu0 %v390, 32
    %v593 = vpop.permute.xlu0 %592
    %594 = vrot.lane.b32.xlu0 %v391, 32
    %v595 = vpop.permute.xlu0 %594
    %596 = vrot.lane.b32.xlu0 %v392, 32
    %v597 = vpop.permute.xlu0 %596
    %598 = vrot.lane.b32.xlu0 %v393, 32
    %v599 = vpop.permute.xlu0 %598
    %600 = vrot.lane.b32.xlu0 %v394, 32
    %v601 = vpop.permute.xlu0 %600
    %602 = vrot.lane.b32.xlu0 %v395, 32
    %v603 = vpop.permute.xlu0 %602
    %604 = vrot.lane.b32.xlu0 %v396, 32
    %v605 = vpop.permute.xlu0 %604
    %606 = vrot.lane.b32.xlu0 %v397, 32
    %v607 = vpop.permute.xlu0 %606
    %608 = vrot.lane.b32.xlu0 %v398, 32
    %v609 = vpop.permute.xlu0 %608
    %610 = vrot.lane.b32.xlu0 %v399, 32
    %v611 = vpop.permute.xlu0 %610
    %612 = vrot.lane.b32.xlu0 %v400, 32
    %v613 = vpop.permute.xlu0 %612
    %614 = vrot.lane.b32.xlu0 %v401, 32
    %v615 = vpop.permute.xlu0 %614
    %616 = vrot.lane.b32.xlu0 %v402, 32
    %v617 = vpop.permute.xlu0 %616
    %618 = vrot.lane.b32.xlu0 %v403, 32
    %v619 = vpop.permute.xlu0 %618
    %620 = vrot.lane.b32.xlu0 %v404, 32
    %v621 = vpop.permute.xlu0 %620
    %622 = vrot.lane.b32.xlu0 %v405, 32
    %v623 = vpop.permute.xlu0 %622
    %624 = vrot.lane.b32.xlu0 %v406, 32
    %v625 = vpop.permute.xlu0 %624
    %626 = vrot.lane.b32.xlu0 %v407, 32
    %v627 = vpop.permute.xlu0 %626
    %628 = vrot.lane.b32.xlu0 %v408, 32
    %v629 = vpop.permute.xlu0 %628
    %630 = vrot.lane.b32.xlu0 %v409, 32
    %v631 = vpop.permute.xlu0 %630
    %632 = vrot.lane.b32.xlu0 %v410, 32
    %v633 = vpop.permute.xlu0 %632
    %634 = vrot.lane.b32.xlu0 %v411, 32
    %v635 = vpop.permute.xlu0 %634
    %636 = vrot.lane.b32.xlu0 %v412, 32
    %v637 = vpop.permute.xlu0 %636
    %638 = vrot.lane.b32.xlu0 %v413, 32
    %v639 = vpop.permute.xlu0 %638
    %640 = vrot.lane.b32.xlu0 %v414, 32
    %v641 = vpop.permute.xlu0 %640
    %642 = vrot.lane.b32.xlu0 %v415, 32
    %v643 = vpop.permute.xlu0 %642
    %644 = vrot.lane.b32.xlu0 %v416, 32
    %v645 = vpop.permute.xlu0 %644
    %646 = vrot.lane.b32.xlu0 %v417, 32
    %v647 = vpop.permute.xlu0 %646
    %648 = vrot.lane.b32.xlu0 %v418, 32
    %v649 = vpop.permute.xlu0 %648
    %650 = vrot.lane.b32.xlu0 %v419, 32
    %v651 = vpop.permute.xlu0 %650
    %652 = vrot.lane.b32.xlu0 %v420, 32
    %v653 = vpop.permute.xlu0 %652
    %654 = vrot.lane.b32.xlu0 %v421, 32
    %v655 = vpop.permute.xlu0 %654
    %656 = vrot.lane.b32.xlu0 %v422, 32
    %v657 = vpop.permute.xlu0 %656
    %658 = vrot.lane.b32.xlu0 %v423, 32
    %v659 = vpop.permute.xlu0 %658
    %660 = vrot.lane.b32.xlu0 %v424, 32
    %v661 = vpop.permute.xlu0 %660
    %662 = vrot.lane.b32.xlu0 %v425, 32
    %v663 = vpop.permute.xlu0 %662
    %664 = vrot.lane.b32.xlu0 %v426, 32
    %v665 = vpop.permute.xlu0 %664
    %666 = vrot.lane.b32.xlu0 %v427, 32
    %v667 = vpop.permute.xlu0 %666
    %668 = vrot.lane.b32.xlu0 %v428, 32
    %v669 = vpop.permute.xlu0 %668
    %670 = vrot.lane.b32.xlu0 %v429, 32
    %v671 = vpop.permute.xlu0 %670
    %672 = vrot.lane.b32.xlu0 %v430, 32
    %v673 = vpop.permute.xlu0 %672
    %674 = vrot.lane.b32.xlu0 %v431, 32
    %v675 = vpop.permute.xlu0 %674
    %676 = vrot.lane.b32.xlu0 %v432, 32
    %v677 = vpop.permute.xlu0 %676
    %678 = vrot.lane.b32.xlu0 %v433, 32
    %v679 = vpop.permute.xlu0 %678
    %680 = vrot.lane.b32.xlu0 %v434, 32
    %v681 = vpop.permute.xlu0 %680
    %682 = vrot.lane.b32.xlu0 %v435, 32
    %v683 = vpop.permute.xlu0 %682
    %684 = vrot.lane.b32.xlu0 %v436, 32
    %v685 = vpop.permute.xlu0 %684
    %686 = vrot.lane.b32.xlu0 %v437, 32
    %v687 = vpop.permute.xlu0 %686
    %688 = vrot.lane.b32.xlu0 %v438, 32
    %v689 = vpop.permute.xlu0 %688
    %690 = vrot.lane.b32.xlu0 %v439, 32
    %v691 = vpop.permute.xlu0 %690
    %692 = vrot.lane.b32.xlu0 %v440, 32
    %v693 = vpop.permute.xlu0 %692
    %694 = vrot.lane.b32.xlu0 %v441, 32
    %v695 = vpop.permute.xlu0 %694
    %696 = vrot.lane.b32.xlu0 %v442, 32
    %v697 = vpop.permute.xlu0 %696
    %698 = vrot.lane.b32.xlu0 %v443, 32
    %v699 = vpop.permute.xlu0 %698
    %828 = vrot.lane.b32.xlu0 %v444, 64
    %v829 = vpop.permute.xlu0 %828
    %830 = vrot.lane.b32.xlu0 %v445, 64
    %v831 = vpop.permute.xlu0 %830
    %832 = vrot.lane.b32.xlu0 %v446, 64
    %v833 = vpop.permute.xlu0 %832
    %834 = vrot.lane.b32.xlu0 %v447, 64
    %v835 = vpop.permute.xlu0 %834
    %836 = vrot.lane.b32.xlu0 %v448, 64
    %v837 = vpop.permute.xlu0 %836
    %838 = vrot.lane.b32.xlu0 %v449, 64
    %v839 = vpop.permute.xlu0 %838
    %840 = vrot.lane.b32.xlu0 %v450, 64
    %v841 = vpop.permute.xlu0 %840
    %842 = vrot.lane.b32.xlu0 %v451, 64
    %v843 = vpop.permute.xlu0 %842
    %844 = vrot.lane.b32.xlu0 %v452, 64
    %v845 = vpop.permute.xlu0 %844
    %846 = vrot.lane.b32.xlu0 %v453, 64
    %v847 = vpop.permute.xlu0 %846
    %848 = vrot.lane.b32.xlu0 %v454, 64
    %v849 = vpop.permute.xlu0 %848
    %850 = vrot.lane.b32.xlu0 %v455, 64
    %v851 = vpop.permute.xlu0 %850
    %852 = vrot.lane.b32.xlu0 %v456, 64
    %v853 = vpop.permute.xlu0 %852
    %854 = vrot.lane.b32.xlu0 %v457, 64
    %v855 = vpop.permute.xlu0 %854
    %856 = vrot.lane.b32.xlu0 %v458, 64
    %v857 = vpop.permute.xlu0 %856
    %858 = vrot.lane.b32.xlu0 %v459, 64
    %v859 = vpop.permute.xlu0 %858
    %860 = vrot.lane.b32.xlu0 %v460, 64
    %v861 = vpop.permute.xlu0 %860
    %862 = vrot.lane.b32.xlu0 %v461, 64
    %v863 = vpop.permute.xlu0 %862
    %864 = vrot.lane.b32.xlu0 %v462, 64
    %v865 = vpop.permute.xlu0 %864
    %866 = vrot.lane.b32.xlu0 %v463, 64
    %v867 = vpop.permute.xlu0 %866
    %868 = vrot.lane.b32.xlu0 %v464, 64
    %v869 = vpop.permute.xlu0 %868
    %870 = vrot.lane.b32.xlu0 %v465, 64
    %v871 = vpop.permute.xlu0 %870
    %872 = vrot.lane.b32.xlu0 %v466, 64
    %v873 = vpop.permute.xlu0 %872
    %874 = vrot.lane.b32.xlu0 %v467, 64
    %v875 = vpop.permute.xlu0 %874
    %876 = vrot.lane.b32.xlu0 %v468, 64
    %v877 = vpop.permute.xlu0 %876
    %878 = vrot.lane.b32.xlu0 %v469, 64
    %v879 = vpop.permute.xlu0 %878
    %880 = vrot.lane.b32.xlu0 %v470, 64
    %v881 = vpop.permute.xlu0 %880
    %882 = vrot.lane.b32.xlu0 %v471, 64
    %v883 = vpop.permute.xlu0 %882
    %884 = vrot.lane.b32.xlu0 %v472, 64
    %v885 = vpop.permute.xlu0 %884
    %886 = vrot.lane.b32.xlu0 %v473, 64
    %v887 = vpop.permute.xlu0 %886
    %888 = vrot.lane.b32.xlu0 %v474, 64
    %v889 = vpop.permute.xlu0 %888
    %890 = vrot.lane.b32.xlu0 %v475, 64
    %v891 = vpop.permute.xlu0 %890
    %892 = vrot.lane.b32.xlu0 %v476, 64
    %v893 = vpop.permute.xlu0 %892
    %894 = vrot.lane.b32.xlu0 %v477, 64
    %v895 = vpop.permute.xlu0 %894
    %896 = vrot.lane.b32.xlu0 %v478, 64
    %v897 = vpop.permute.xlu0 %896
    %898 = vrot.lane.b32.xlu0 %v479, 64
    %v899 = vpop.permute.xlu0 %898
    %900 = vrot.lane.b32.xlu0 %v480, 64
    %v901 = vpop.permute.xlu0 %900
    %902 = vrot.lane.b32.xlu0 %v481, 64
    %v903 = vpop.permute.xlu0 %902
    %904 = vrot.lane.b32.xlu0 %v482, 64
    %v905 = vpop.permute.xlu0 %904
    %906 = vrot.lane.b32.xlu0 %v483, 64
    %v907 = vpop.permute.xlu0 %906
    %908 = vrot.lane.b32.xlu0 %v484, 64
    %v909 = vpop.permute.xlu0 %908
    %910 = vrot.lane.b32.xlu0 %v485, 64
    %v911 = vpop.permute.xlu0 %910
    %912 = vrot.lane.b32.xlu0 %v486, 64
    %v913 = vpop.permute.xlu0 %912
    %914 = vrot.lane.b32.xlu0 %v487, 64
    %v915 = vpop.permute.xlu0 %914
    %916 = vrot.lane.b32.xlu0 %v488, 64
    %v917 = vpop.permute.xlu0 %916
    %918 = vrot.lane.b32.xlu0 %v489, 64
    %v919 = vpop.permute.xlu0 %918
    %920 = vrot.lane.b32.xlu0 %v490, 64
    %v921 = vpop.permute.xlu0 %920
    %922 = vrot.lane.b32.xlu0 %v491, 64
    %v923 = vpop.permute.xlu0 %922
    %924 = vrot.lane.b32.xlu0 %v492, 64
    %v925 = vpop.permute.xlu0 %924
    %926 = vrot.lane.b32.xlu0 %v493, 64
    %v927 = vpop.permute.xlu0 %926
    %928 = vrot.lane.b32.xlu0 %v494, 64
    %v929 = vpop.permute.xlu0 %928
    %930 = vrot.lane.b32.xlu0 %v495, 64
    %v931 = vpop.permute.xlu0 %930
    %932 = vrot.lane.b32.xlu0 %v496, 64
    %v933 = vpop.permute.xlu0 %932
    %934 = vrot.lane.b32.xlu0 %v497, 64
    %v935 = vpop.permute.xlu0 %934
    %936 = vrot.lane.b32.xlu0 %v498, 64
    %v937 = vpop.permute.xlu0 %936
    %938 = vrot.lane.b32.xlu0 %v499, 64
    %v939 = vpop.permute.xlu0 %938
    %940 = vrot.lane.b32.xlu0 %v500, 64
    %v941 = vpop.permute.xlu0 %940
    %942 = vrot.lane.b32.xlu0 %v501, 64
    %v943 = vpop.permute.xlu0 %942
    %944 = vrot.lane.b32.xlu0 %v502, 64
    %v945 = vpop.permute.xlu0 %944
    %946 = vrot.lane.b32.xlu0 %v503, 64
    %v947 = vpop.permute.xlu0 %946
    %948 = vrot.lane.b32.xlu0 %v504, 64
    %v949 = vpop.permute.xlu0 %948
    %950 = vrot.lane.b32.xlu0 %v505, 64
    %v951 = vpop.permute.xlu0 %950
    %952 = vrot.lane.b32.xlu0 %v506, 64
    %v953 = vpop.permute.xlu0 %952
    %954 = vrot.lane.b32.xlu0 %v507, 64
    %v955 = vpop.permute.xlu0 %954
    %vm1020 = vcmask 261120
    %v1021 = vsel %vm1020, %v316, %v573
    %v1022 = vsel %vm1020, %v317, %v575
    %v1023 = vsel %vm1020, %v318, %v577
    %v1024 = vsel %vm1020, %v319, %v579
    %v1025 = vsel %vm1020, %v320, %v581
    %v1026 = vsel %vm1020, %v321, %v583
    %v1027 = vsel %vm1020, %v322, %v585
    %v1028 = vsel %vm1020, %v323, %v587
    %v1029 = vsel %vm1020, %v324, %v589
    %v1030 = vsel %vm1020, %v325, %v591
    %v1031 = vsel %vm1020, %v326, %v593
    %v1032 = vsel %vm1020, %v327, %v595
    %v1033 = vsel %vm1020, %v328, %v597
    %v1034 = vsel %vm1020, %v329, %v599
    %v1035 = vsel %vm1020, %v330, %v601
    %v1036 = vsel %vm1020, %v331, %v603
    %v1037 = vsel %vm1020, %v332, %v605
    %v1038 = vsel %vm1020, %v333, %v607
    %v1039 = vsel %vm1020, %v334, %v609
    %v1040 = vsel %vm1020, %v335, %v611
    %v1041 = vsel %vm1020, %v336, %v613
    %v1042 = vsel %vm1020, %v337, %v615
    %v1043 = vsel %vm1020, %v338, %v617
    %v1044 = vsel %vm1020, %v339, %v619
    %v1045 = vsel %vm1020, %v340, %v621
    %v1046 = vsel %vm1020, %v341, %v623
    %v1047 = vsel %vm1020, %v342, %v625
    %v1048 = vsel %vm1020, %v343, %v627
    %v1049 = vsel %vm1020, %v344, %v629
    %v1050 = vsel %vm1020, %v345, %v631
    %v1051 = vsel %vm1020, %v346, %v633
    %v1052 = vsel %vm1020, %v347, %v635
    %v1053 = vsel %vm1020, %v348, %v637
    %v1054 = vsel %vm1020, %v349, %v639
    %v1055 = vsel %vm1020, %v350, %v641
    %v1056 = vsel %vm1020, %v351, %v643
    %v1057 = vsel %vm1020, %v352, %v645
    %v1058 = vsel %vm1020, %v353, %v647
    %v1059 = vsel %vm1020, %v354, %v649
    %v1060 = vsel %vm1020, %v355, %v651
    %v1061 = vsel %vm1020, %v356, %v653
    %v1062 = vsel %vm1020, %v357, %v655
    %v1063 = vsel %vm1020, %v358, %v657
    %v1064 = vsel %vm1020, %v359, %v659
    %v1065 = vsel %vm1020, %v360, %v661
    %v1066 = vsel %vm1020, %v361, %v663
    %v1067 = vsel %vm1020, %v362, %v665
    %v1068 = vsel %vm1020, %v363, %v667
    %v1069 = vsel %vm1020, %v364, %v669
    %v1070 = vsel %vm1020, %v365, %v671
    %v1071 = vsel %vm1020, %v366, %v673
    %v1072 = vsel %vm1020, %v367, %v675
    %v1073 = vsel %vm1020, %v368, %v677
    %v1074 = vsel %vm1020, %v369, %v679
    %v1075 = vsel %vm1020, %v370, %v681
    %v1076 = vsel %vm1020, %v371, %v683
    %v1077 = vsel %vm1020, %v372, %v685
    %v1078 = vsel %vm1020, %v373, %v687
    %v1079 = vsel %vm1020, %v374, %v689
    %v1080 = vsel %vm1020, %v375, %v691
    %v1081 = vsel %vm1020, %v376, %v693
    %v1082 = vsel %vm1020, %v377, %v695
    %v1083 = vsel %vm1020, %v378, %v697
    %v1084 = vsel %vm1020, %v379, %v699
    %vm1085 = vcmask 523264
    %v1086 = vsel %vm1085, %v1021, %v829
    %v1087 = vsel %vm1085, %v1022, %v831
    %v1088 = vsel %vm1085, %v1023, %v833
    %v1089 = vsel %vm1085, %v1024, %v835
    %v1090 = vsel %vm1085, %v1025, %v837
    %v1091 = vsel %vm1085, %v1026, %v839
    %v1092 = vsel %vm1085, %v1027, %v841
    %v1093 = vsel %vm1085, %v1028, %v843
    %v1094 = vsel %vm1085, %v1029, %v845
    %v1095 = vsel %vm1085, %v1030, %v847
    %v1096 = vsel %vm1085, %v1031, %v849
    %v1097 = vsel %vm1085, %v1032, %v851
    %v1098 = vsel %vm1085, %v1033, %v853
    %v1099 = vsel %vm1085, %v1034, %v855
    %v1100 = vsel %vm1085, %v1035, %v857
    %v1101 = vsel %vm1085, %v1036, %v859
    %v1102 = vsel %vm1085, %v1037, %v861
    %v1103 = vsel %vm1085, %v1038, %v863
    %v1104 = vsel %vm1085, %v1039, %v865
    %v1105 = vsel %vm1085, %v1040, %v867
    %v1106 = vsel %vm1085, %v1041, %v869
    %v1107 = vsel %vm1085, %v1042, %v871
    %v1108 = vsel %vm1085, %v1043, %v873
    %v1109 = vsel %vm1085, %v1044, %v875
    %v1110 = vsel %vm1085, %v1045, %v877
    %v1111 = vsel %vm1085, %v1046, %v879
    %v1112 = vsel %vm1085, %v1047, %v881
    %v1113 = vsel %vm1085, %v1048, %v883
    %v1114 = vsel %vm1085, %v1049, %v885
    %v1115 = vsel %vm1085, %v1050, %v887
    %v1116 = vsel %vm1085, %v1051, %v889
    %v1117 = vsel %vm1085, %v1052, %v891
    %v1118 = vsel %vm1085, %v1053, %v893
    %v1119 = vsel %vm1085, %v1054, %v895
    %v1120 = vsel %vm1085, %v1055, %v897
    %v1121 = vsel %vm1085, %v1056, %v899
    %v1122 = vsel %vm1085, %v1057, %v901
    %v1123 = vsel %vm1085, %v1058, %v903
    %v1124 = vsel %vm1085, %v1059, %v905
    %v1125 = vsel %vm1085, %v1060, %v907
    %v1126 = vsel %vm1085, %v1061, %v909
    %v1127 = vsel %vm1085, %v1062, %v911
    %v1128 = vsel %vm1085, %v1063, %v913
    %v1129 = vsel %vm1085, %v1064, %v915
    %v1130 = vsel %vm1085, %v1065, %v917
    %v1131 = vsel %vm1085, %v1066, %v919
    %v1132 = vsel %vm1085, %v1067, %v921
    %v1133 = vsel %vm1085, %v1068, %v923
    %v1134 = vsel %vm1085, %v1069, %v925
    %v1135 = vsel %vm1085, %v1070, %v927
    %v1136 = vsel %vm1085, %v1071, %v929
    %v1137 = vsel %vm1085, %v1072, %v931
    %v1138 = vsel %vm1085, %v1073, %v933
    %v1139 = vsel %vm1085, %v1074, %v935
    %v1140 = vsel %vm1085, %v1075, %v937
    %v1141 = vsel %vm1085, %v1076, %v939
    %v1142 = vsel %vm1085, %v1077, %v941
    %v1143 = vsel %vm1085, %v1078, %v943
    %v1144 = vsel %vm1085, %v1079, %v945
    %v1145 = vsel %vm1085, %v1080, %v947
    %v1146 = vsel %vm1085, %v1081, %v949
    %v1147 = vsel %vm1085, %v1082, %v951
    %v1148 = vsel %vm1085, %v1083, %v953
    %v1149 = vsel %vm1085, %v1084, %v955
    %vm1150 = vcmask 785408
    %v1151 = vsel %vm1150, %v1086, 0.0
    %v1152 = vsel %vm1150, %v1087, 0.0
    %v1153 = vsel %vm1150, %v1088, 0.0
    %v1154 = vsel %vm1150, %v1089, 0.0
    %v1155 = vsel %vm1150, %v1090, 0.0
    %v1156 = vsel %vm1150, %v1091, 0.0
    %v1157 = vsel %vm1150, %v1092, 0.0
    %v1158 = vsel %vm1150, %v1093, 0.0
    %v1159 = vsel %vm1150, %v1094, 0.0
    %v1160 = vsel %vm1150, %v1095, 0.0
    %v1161 = vsel %vm1150, %v1096, 0.0
    %v1162 = vsel %vm1150, %v1097, 0.0
    %v1163 = vsel %vm1150, %v1098, 0.0
    %v1164 = vsel %vm1150, %v1099, 0.0
    %v1165 = vsel %vm1150, %v1100, 0.0
    %v1166 = vsel %vm1150, %v1101, 0.0
    %v1167 = vsel %vm1150, %v1102, 0.0
    %v1168 = vsel %vm1150, %v1103, 0.0
    %v1169 = vsel %vm1150, %v1104, 0.0
    %v1170 = vsel %vm1150, %v1105, 0.0
    %v1171 = vsel %vm1150, %v1106, 0.0
    %v1172 = vsel %vm1150, %v1107, 0.0
    %v1173 = vsel %vm1150, %v1108, 0.0
    %v1174 = vsel %vm1150, %v1109, 0.0
    %v1175 = vsel %vm1150, %v1110, 0.0
    %v1176 = vsel %vm1150, %v1111, 0.0
    %v1177 = vsel %vm1150, %v1112, 0.0
    %v1178 = vsel %vm1150, %v1113, 0.0
    %v1179 = vsel %vm1150, %v1114, 0.0
    %v1180 = vsel %vm1150, %v1115, 0.0
    %v1181 = vsel %vm1150, %v1116, 0.0
    %v1182 = vsel %vm1150, %v1117, 0.0
    %v1183 = vsel %vm1150, %v1118, 0.0
    %v1184 = vsel %vm1150, %v1119, 0.0
    %v1185 = vsel %vm1150, %v1120, 0.0
    %v1186 = vsel %vm1150, %v1121, 0.0
    %v1187 = vsel %vm1150, %v1122, 0.0
    %v1188 = vsel %vm1150, %v1123, 0.0
    %v1189 = vsel %vm1150, %v1124, 0.0
    %v1190 = vsel %vm1150, %v1125, 0.0
    %v1191 = vsel %vm1150, %v1126, 0.0
    %v1192 = vsel %vm1150, %v1127, 0.0
    %v1193 = vsel %vm1150, %v1128, 0.0
    %v1194 = vsel %vm1150, %v1129, 0.0
    %v1195 = vsel %vm1150, %v1130, 0.0
    %v1196 = vsel %vm1150, %v1131, 0.0
    %v1197 = vsel %vm1150, %v1132, 0.0
    %v1198 = vsel %vm1150, %v1133, 0.0
    %v1199 = vsel %vm1150, %v1134, 0.0
    %v1200 = vsel %vm1150, %v1135, 0.0
    %v1201 = vsel %vm1150, %v1136, 0.0
    %v1202 = vsel %vm1150, %v1137, 0.0
    %v1203 = vsel %vm1150, %v1138, 0.0
    %v1204 = vsel %vm1150, %v1139, 0.0
    %v1205 = vsel %vm1150, %v1140, 0.0
    %v1206 = vsel %vm1150, %v1141, 0.0
    %v1207 = vsel %vm1150, %v1142, 0.0
    %v1208 = vsel %vm1150, %v1143, 0.0
    %v1209 = vsel %vm1150, %v1144, 0.0
    %v1210 = vsel %vm1150, %v1145, 0.0
    %v1211 = vsel %vm1150, %v1146, 0.0
    %v1212 = vsel %vm1150, %v1147, 0.0
    %v1213 = vsel %vm1150, %v1148, 0.0
    %v1214 = vsel %vm1150, %v1149, 0.0
    %v1215 = vpack.c.bf16 %v1152, %v1151
    %v1216 = vpack.c.bf16 %v1154, %v1153
    %v1217 = vpack.c.bf16 %v1156, %v1155
    %v1218 = vpack.c.bf16 %v1158, %v1157
    %v1219 = vpack.c.bf16 %v1160, %v1159
    %v1220 = vpack.c.bf16 %v1162, %v1161
    %v1221 = vpack.c.bf16 %v1164, %v1163
    %v1222 = vpack.c.bf16 %v1166, %v1165
    %v1223 = vpack.c.bf16 %v1168, %v1167
    %v1224 = vpack.c.bf16 %v1170, %v1169
    %v1225 = vpack.c.bf16 %v1172, %v1171
    %v1226 = vpack.c.bf16 %v1174, %v1173
    %v1227 = vpack.c.bf16 %v1176, %v1175
    %v1228 = vpack.c.bf16 %v1178, %v1177
    %v1229 = vpack.c.bf16 %v1180, %v1179
    %v1230 = vpack.c.bf16 %v1182, %v1181
    %v1231 = vpack.c.bf16 %v1184, %v1183
    %v1232 = vpack.c.bf16 %v1186, %v1185
    %v1233 = vpack.c.bf16 %v1188, %v1187
    %v1234 = vpack.c.bf16 %v1190, %v1189
    %v1235 = vpack.c.bf16 %v1192, %v1191
    %v1236 = vpack.c.bf16 %v1194, %v1193
    %v1237 = vpack.c.bf16 %v1196, %v1195
    %v1238 = vpack.c.bf16 %v1198, %v1197
    %v1239 = vpack.c.bf16 %v1200, %v1199
    %v1240 = vpack.c.bf16 %v1202, %v1201
    %v1241 = vpack.c.bf16 %v1204, %v1203
    %v1242 = vpack.c.bf16 %v1206, %v1205
    %v1243 = vpack.c.bf16 %v1208, %v1207
    %v1244 = vpack.c.bf16 %v1210, %v1209
    %v1245 = vpack.c.bf16 %v1212, %v1211
    %v1246 = vpack.c.bf16 %v1214, %v1213
    %v1279 = vunpack.c.l.b16 %v1215
    %v1280 = vunpack.c.h.b16 %v1215
    %v1281 = vunpack.c.l.b16 %v1216
    %v1282 = vunpack.c.h.b16 %v1216
    %v1283 = vunpack.c.l.b16 %v1217
    %v1284 = vunpack.c.h.b16 %v1217
    %v1285 = vunpack.c.l.b16 %v1218
    %v1286 = vunpack.c.h.b16 %v1218
    %v1287 = vunpack.c.l.b16 %v1219
    %v1288 = vunpack.c.h.b16 %v1219
    %v1289 = vunpack.c.l.b16 %v1220
    %v1290 = vunpack.c.h.b16 %v1220
    %v1291 = vunpack.c.l.b16 %v1221
    %v1292 = vunpack.c.h.b16 %v1221
    %v1293 = vunpack.c.l.b16 %v1222
    %v1294 = vunpack.c.h.b16 %v1222
    %v1295 = vunpack.c.l.b16 %v1223
    %v1296 = vunpack.c.h.b16 %v1223
    %v1297 = vunpack.c.l.b16 %v1224
    %v1298 = vunpack.c.h.b16 %v1224
    %v1299 = vunpack.c.l.b16 %v1225
    %v1300 = vunpack.c.h.b16 %v1225
    %v1301 = vunpack.c.l.b16 %v1226
    %v1302 = vunpack.c.h.b16 %v1226
    %v1303 = vunpack.c.l.b16 %v1227
    %v1304 = vunpack.c.h.b16 %v1227
    %v1305 = vunpack.c.l.b16 %v1228
    %v1306 = vunpack.c.h.b16 %v1228
    %v1307 = vunpack.c.l.b16 %v1229
    %v1308 = vunpack.c.h.b16 %v1229
    %v1309 = vunpack.c.l.b16 %v1230
    %v1310 = vunpack.c.h.b16 %v1230
    %v1311 = vunpack.c.l.b16 %v1231
    %v1312 = vunpack.c.h.b16 %v1231
    %v1313 = vunpack.c.l.b16 %v1232
    %v1314 = vunpack.c.h.b16 %v1232
    %v1315 = vunpack.c.l.b16 %v1233
    %v1316 = vunpack.c.h.b16 %v1233
    %v1317 = vunpack.c.l.b16 %v1234
    %v1318 = vunpack.c.h.b16 %v1234
    %v1319 = vunpack.c.l.b16 %v1235
    %v1320 = vunpack.c.h.b16 %v1235
    %v1321 = vunpack.c.l.b16 %v1236
    %v1322 = vunpack.c.h.b16 %v1236
    %v1323 = vunpack.c.l.b16 %v1237
    %v1324 = vunpack.c.h.b16 %v1237
    %v1325 = vunpack.c.l.b16 %v1238
    %v1326 = vunpack.c.h.b16 %v1238
    %v1327 = vunpack.c.l.b16 %v1239
    %v1328 = vunpack.c.h.b16 %v1239
    %v1329 = vunpack.c.l.b16 %v1240
    %v1330 = vunpack.c.h.b16 %v1240
    %v1331 = vunpack.c.l.b16 %v1241
    %v1332 = vunpack.c.h.b16 %v1241
    %v1333 = vunpack.c.l.b16 %v1242
    %v1334 = vunpack.c.h.b16 %v1242
    %v1335 = vunpack.c.l.b16 %v1243
    %v1336 = vunpack.c.h.b16 %v1243
    %v1337 = vunpack.c.l.b16 %v1244
    %v1338 = vunpack.c.h.b16 %v1244
    %v1339 = vunpack.c.l.b16 %v1245
    %v1340 = vunpack.c.h.b16 %v1245
    %v1341 = vunpack.c.l.b16 %v1246
    %v1342 = vunpack.c.h.b16 %v1246
    %v1343 = vpack.c.b16 %v1279, %v1279
    %v1344 = vpack.c.b16 %v1280, %v1280
    %v1345 = vpack.c.b16 %v1281, %v1281
    %v1346 = vpack.c.b16 %v1282, %v1282
    %v1347 = vpack.c.b16 %v1283, %v1283
    %v1348 = vpack.c.b16 %v1284, %v1284
    %v1349 = vpack.c.b16 %v1285, %v1285
    %v1350 = vpack.c.b16 %v1286, %v1286
    %v1351 = vpack.c.b16 %v1287, %v1287
    %v1352 = vpack.c.b16 %v1288, %v1288
    %v1353 = vpack.c.b16 %v1289, %v1289
    %v1354 = vpack.c.b16 %v1290, %v1290
    %v1355 = vpack.c.b16 %v1291, %v1291
    %v1356 = vpack.c.b16 %v1292, %v1292
    %v1357 = vpack.c.b16 %v1293, %v1293
    %v1358 = vpack.c.b16 %v1294, %v1294
    %v1359 = vpack.c.b16 %v1295, %v1295
    %v1360 = vpack.c.b16 %v1296, %v1296
    %v1361 = vpack.c.b16 %v1297, %v1297
    %v1362 = vpack.c.b16 %v1298, %v1298
    %v1363 = vpack.c.b16 %v1299, %v1299
    %v1364 = vpack.c.b16 %v1300, %v1300
    %v1365 = vpack.c.b16 %v1301, %v1301
    %v1366 = vpack.c.b16 %v1302, %v1302
    %v1367 = vpack.c.b16 %v1303, %v1303
    %v1368 = vpack.c.b16 %v1304, %v1304
    %v1369 = vpack.c.b16 %v1305, %v1305
    %v1370 = vpack.c.b16 %v1306, %v1306
    %v1371 = vpack.c.b16 %v1307, %v1307
    %v1372 = vpack.c.b16 %v1308, %v1308
    %v1373 = vpack.c.b16 %v1309, %v1309
    %v1374 = vpack.c.b16 %v1310, %v1310
    %v1375 = vpack.c.b16 %v1311, %v1311
    %v1376 = vpack.c.b16 %v1312, %v1312
    %v1377 = vpack.c.b16 %v1313, %v1313
    %v1378 = vpack.c.b16 %v1314, %v1314
    %v1379 = vpack.c.b16 %v1315, %v1315
    %v1380 = vpack.c.b16 %v1316, %v1316
    %v1381 = vpack.c.b16 %v1317, %v1317
    %v1382 = vpack.c.b16 %v1318, %v1318
    %v1383 = vpack.c.b16 %v1319, %v1319
    %v1384 = vpack.c.b16 %v1320, %v1320
    %v1385 = vpack.c.b16 %v1321, %v1321
    %v1386 = vpack.c.b16 %v1322, %v1322
    %v1387 = vpack.c.b16 %v1323, %v1323
    %v1388 = vpack.c.b16 %v1324, %v1324
    %v1389 = vpack.c.b16 %v1325, %v1325
    %v1390 = vpack.c.b16 %v1326, %v1326
    %v1391 = vpack.c.b16 %v1327, %v1327
    %v1392 = vpack.c.b16 %v1328, %v1328
    %v1393 = vpack.c.b16 %v1329, %v1329
    %v1394 = vpack.c.b16 %v1330, %v1330
    %v1395 = vpack.c.b16 %v1331, %v1331
    %v1396 = vpack.c.b16 %v1332, %v1332
    %v1397 = vpack.c.b16 %v1333, %v1333
    %v1398 = vpack.c.b16 %v1334, %v1334
    %v1399 = vpack.c.b16 %v1335, %v1335
    %v1400 = vpack.c.b16 %v1336, %v1336
    %v1401 = vpack.c.b16 %v1337, %v1337
    %v1402 = vpack.c.b16 %v1338, %v1338
    %v1403 = vpack.c.b16 %v1339, %v1339
    %v1404 = vpack.c.b16 %v1340, %v1340
    %v1405 = vpack.c.b16 %v1341, %v1341
    %v1406 = vpack.c.b16 %v1342, %v1342
    %1471 = vst [vmem:[#allocation3] sm:$0xf] %v1343
    %1472 = vst [vmem:[#allocation3 + $0xc] sm:$0xf] %v1344
    %1473 = vst [vmem:[#allocation3 + $0x18] sm:$0xf] %v1345
    %1474 = vst [vmem:[#allocation3 + $0x24] sm:$0xf] %v1346
    %1475 = vst [vmem:[#allocation3 + $0x30] sm:$0xf] %v1347
    %1476 = vst [vmem:[#allocation3 + $0x3c] sm:$0xf] %v1348
    %1477 = vst [vmem:[#allocation3 + $0x48] sm:$0xf] %v1349
    %1478 = vst [vmem:[#allocation3 + $0x54] sm:$0xf] %v1350
    %1479 = vst [vmem:[#allocation3 + $0x60] sm:$0xf] %v1351
    %1480 = vst [vmem:[#allocation3 + $0x6c] sm:$0xf] %v1352
    %1481 = vst [vmem:[#allocation3 + $0x78] sm:$0xf] %v1353
    %1482 = vst [vmem:[#allocation3 + $0x84] sm:$0xf] %v1354
    %1483 = vst [vmem:[#allocation3 + $0x90] sm:$0xf] %v1355
    %1484 = vst [vmem:[#allocation3 + $0x9c] sm:$0xf] %v1356
    %1485 = vst [vmem:[#allocation3 + $0xa8] sm:$0xf] %v1357
    %1486 = vst [vmem:[#allocation3 + $0xb4] sm:$0xf] %v1358
    %1487 = vst [vmem:[#allocation3 + $0xc0] sm:$0xf] %v1359
    %1488 = vst [vmem:[#allocation3 + $0xcc] sm:$0xf] %v1360
    %1489 = vst [vmem:[#allocation3 + $0xd8] sm:$0xf] %v1361
    %1490 = vst [vmem:[#allocation3 + $0xe4] sm:$0xf] %v1362
    %1491 = vst [vmem:[#allocation3 + $0xf0] sm:$0xf] %v1363
    %1492 = vst [vmem:[#allocation3 + $0xfc] sm:$0xf] %v1364
    %1493 = vst [vmem:[#allocation3 + $0x108] sm:$0xf] %v1365
    %1494 = vst [vmem:[#allocation3 + $0x114] sm:$0xf] %v1366
    %1495 = vst [vmem:[#allocation3 + $0x120] sm:$0xf] %v1367
    %1496 = vst [vmem:[#allocation3 + $0x12c] sm:$0xf] %v1368
    %1497 = vst [vmem:[#allocation3 + $0x138] sm:$0xf] %v1369
    %1498 = vst [vmem:[#allocation3 + $0x144] sm:$0xf] %v1370
    %1499 = vst [vmem:[#allocation3 + $0x150] sm:$0xf] %v1371
    %1500 = vst [vmem:[#allocation3 + $0x15c] sm:$0xf] %v1372
    %1501 = vst [vmem:[#allocation3 + $0x168] sm:$0xf] %v1373
    %1502 = vst [vmem:[#allocation3 + $0x174] sm:$0xf] %v1374
    %1503 = vst [vmem:[#allocation3 + $0x180] sm:$0xf] %v1375
    %1504 = vst [vmem:[#allocation3 + $0x18c] sm:$0xf] %v1376
    %1505 = vst [vmem:[#allocation3 + $0x198] sm:$0xf] %v1377
    %1506 = vst [vmem:[#allocation3 + $0x1a4] sm:$0xf] %v1378
    %1507 = vst [vmem:[#allocation3 + $0x1b0] sm:$0xf] %v1379
    %1508 = vst [vmem:[#allocation3 + $0x1bc] sm:$0xf] %v1380
    %1509 = vst [vmem:[#allocation3 + $0x1c8] sm:$0xf] %v1381
    %1510 = vst [vmem:[#allocation3 + $0x1d4] sm:$0xf] %v1382
    %1511 = vst [vmem:[#allocation3 + $0x1e0] sm:$0xf] %v1383
    %1512 = vst [vmem:[#allocation3 + $0x1ec] sm:$0xf] %v1384
    %1513 = vst [vmem:[#allocation3 + $0x1f8] sm:$0xf] %v1385
    %1514 = vst [vmem:[#allocation3 + $0x204] sm:$0xf] %v1386
    %1515 = vst [vmem:[#allocation3 + $0x210] sm:$0xf] %v1387
    %1516 = vst [vmem:[#allocation3 + $0x21c] sm:$0xf] %v1388
    %1517 = vst [vmem:[#allocation3 + $0x228] sm:$0xf] %v1389
    %1518 = vst [vmem:[#allocation3 + $0x234] sm:$0xf] %v1390
    %1519 = vst [vmem:[#allocation3 + $0x240] sm:$0xf] %v1391
    %1520 = vst [vmem:[#allocation3 + $0x24c] sm:$0xf] %v1392
    %1521 = vst [vmem:[#allocation3 + $0x258] sm:$0xf] %v1393
    %1522 = vst [vmem:[#allocation3 + $0x264] sm:$0xf] %v1394
    %1523 = vst [vmem:[#allocation3 + $0x270] sm:$0xf] %v1395
    %1524 = vst [vmem:[#allocation3 + $0x27c] sm:$0xf] %v1396
    %1525 = vst [vmem:[#allocation3 + $0x288] sm:$0xf] %v1397
    %1526 = vst [vmem:[#allocation3 + $0x294] sm:$0xf] %v1398
    %1527 = vst [vmem:[#allocation3 + $0x2a0] sm:$0xf] %v1399
    %1528 = vst [vmem:[#allocation3 + $0x2ac] sm:$0xf] %v1400
    %1529 = vst [vmem:[#allocation3 + $0x2b8] sm:$0xf] %v1401
    %1530 = vst [vmem:[#allocation3 + $0x2c4] sm:$0xf] %v1402
    %1531 = vst [vmem:[#allocation3 + $0x2d0] sm:$0xf] %v1403
    %1532 = vst [vmem:[#allocation3 + $0x2dc] sm:$0xf] %v1404
    %1533 = vst [vmem:[#allocation3 + $0x2e8] sm:$0xf] %v1405
    %1534 = vst [vmem:[#allocation3 + $0x2f4] sm:$0xf] %v1406
    %v1535 = vld [vmem:[%s251] sm:$0xff]
    %v1536 = vld [vmem:[%s251 + $0x8] sm:$0xff]
    %v1537 = vld [vmem:[%s251 + $0x18] sm:$0xff]
    %v1538 = vld [vmem:[%s251 + $0x20] sm:$0xff]
    %v1539 = vld [vmem:[%s251 + $0x30] sm:$0xff]
    %v1540 = vld [vmem:[%s251 + $0x38] sm:$0xff]
    %v1541 = vld [vmem:[%s251 + $0x48] sm:$0xff]
    %v1542 = vld [vmem:[%s251 + $0x50] sm:$0xff]
    %v1543 = vld [vmem:[%s251 + $0x60] sm:$0xff]
    %v1544 = vld [vmem:[%s251 + $0x68] sm:$0xff]
    %v1545 = vld [vmem:[%s251 + $0x78] sm:$0xff]
    %v1546 = vld [vmem:[%s251 + $0x80] sm:$0xff]
    %v1547 = vld [vmem:[%s251 + $0x90] sm:$0xff]
    %v1548 = vld [vmem:[%s251 + $0x98] sm:$0xff]
    %v1549 = vld [vmem:[%s251 + $0xa8] sm:$0xff]
    %v1550 = vld [vmem:[%s251 + $0xb0] sm:$0xff]
    %v1551 = vld [vmem:[%s251 + $0xc0] sm:$0xff]
    %v1552 = vld [vmem:[%s251 + $0xc8] sm:$0xff]
    %v1553 = vld [vmem:[%s251 + $0xd8] sm:$0xff]
    %v1554 = vld [vmem:[%s251 + $0xe0] sm:$0xff]
    %v1555 = vld [vmem:[%s251 + $0xf0] sm:$0xff]
    %v1556 = vld [vmem:[%s251 + $0xf8] sm:$0xff]
    %v1557 = vld [vmem:[%s251 + $0x108] sm:$0xff]
    %v1558 = vld [vmem:[%s251 + $0x110] sm:$0xff]
    %v1559 = vld [vmem:[%s251 + $0x120] sm:$0xff]
    %v1560 = vld [vmem:[%s251 + $0x128] sm:$0xff]
    %v1561 = vld [vmem:[%s251 + $0x138] sm:$0xff]
    %v1562 = vld [vmem:[%s251 + $0x140] sm:$0xff]
    %v1563 = vld [vmem:[%s251 + $0x150] sm:$0xff]
    %v1564 = vld [vmem:[%s251 + $0x158] sm:$0xff]
    %v1565 = vld [vmem:[%s251 + $0x168] sm:$0xff]
    %v1566 = vld [vmem:[%s251 + $0x170] sm:$0xff]
    %v1567 = vld [vmem:[%s251 + $0x1b0] sm:$0xff]
    %v1568 = vld [vmem:[%s251 + $0x1b8] sm:$0xff]
    %v1569 = vld [vmem:[%s251 + $0x1c8] sm:$0xff]
    %v1570 = vld [vmem:[%s251 + $0x1d0] sm:$0xff]
    %v1571 = vld [vmem:[%s251 + $0x1e0] sm:$0xff]
    %v1572 = vld [vmem:[%s251 + $0x1e8] sm:$0xff]
    %v1573 = vld [vmem:[%s251 + $0x1f8] sm:$0xff]
    %v1574 = vld [vmem:[%s251 + $0x200] sm:$0xff]
    %v1575 = vld [vmem:[%s251 + $0x210] sm:$0xff]
    %v1576 = vld [vmem:[%s251 + $0x218] sm:$0xff]
    %v1577 = vld [vmem:[%s251 + $0x228] sm:$0xff]
    %v1578 = vld [vmem:[%s251 + $0x230] sm:$0xff]
    %v1579 = vld [vmem:[%s251 + $0x240] sm:$0xff]
    %v1580 = vld [vmem:[%s251 + $0x248] sm:$0xff]
    %v1581 = vld [vmem:[%s251 + $0x258] sm:$0xff]
    %v1582 = vld [vmem:[%s251 + $0x260] sm:$0xff]
    %v1583 = vld [vmem:[%s251 + $0x270] sm:$0xff]
    %v1584 = vld [vmem:[%s251 + $0x278] sm:$0xff]
    %v1585 = vld [vmem:[%s251 + $0x288] sm:$0xff]
    %v1586 = vld [vmem:[%s251 + $0x290] sm:$0xff]
    %v1587 = vld [vmem:[%s251 + $0x2a0] sm:$0xff]
    %v1588 = vld [vmem:[%s251 + $0x2a8] sm:$0xff]
    %v1589 = vld [vmem:[%s251 + $0x2b8] sm:$0xff]
    %v1590 = vld [vmem:[%s251 + $0x2c0] sm:$0xff]
    %v1591 = vld [vmem:[%s251 + $0x2d0] sm:$0xff]
    %v1592 = vld [vmem:[%s251 + $0x2d8] sm:$0xff]
    %v1593 = vld [vmem:[%s251 + $0x2e8] sm:$0xff]
    %v1594 = vld [vmem:[%s251 + $0x2f0] sm:$0xff]
    %v1595 = vld [vmem:[%s251 + $0x300] sm:$0xff]
    %v1596 = vld [vmem:[%s251 + $0x308] sm:$0xff]
    %v1597 = vld [vmem:[%s251 + $0x318] sm:$0xff]
    %v1598 = vld [vmem:[%s251 + $0x320] sm:$0xff]
    %v1599 = vld [vmem:[%s251 + $0x1] sm:$0xff]
    %v1600 = vld [vmem:[%s251 + $0x9] sm:$0xff]
    %v1601 = vld [vmem:[%s251 + $0x19] sm:$0xff]
    %v1602 = vld [vmem:[%s251 + $0x21] sm:$0xff]
    %v1603 = vld [vmem:[%s251 + $0x31] sm:$0xff]
    %v1604 = vld [vmem:[%s251 + $0x39] sm:$0xff]
    %v1605 = vld [vmem:[%s251 + $0x49] sm:$0xff]
    %v1606 = vld [vmem:[%s251 + $0x51] sm:$0xff]
    %v1607 = vld [vmem:[%s251 + $0x61] sm:$0xff]
    %v1608 = vld [vmem:[%s251 + $0x69] sm:$0xff]
    %v1609 = vld [vmem:[%s251 + $0x79] sm:$0xff]
    %v1610 = vld [vmem:[%s251 + $0x81] sm:$0xff]
    %v1611 = vld [vmem:[%s251 + $0x91] sm:$0xff]
    %v1612 = vld [vmem:[%s251 + $0x99] sm:$0xff]
    %v1613 = vld [vmem:[%s251 + $0xa9] sm:$0xff]
    %v1614 = vld [vmem:[%s251 + $0xb1] sm:$0xff]
    %v1615 = vld [vmem:[%s251 + $0xc1] sm:$0xff]
    %v1616 = vld [vmem:[%s251 + $0xc9] sm:$0xff]
    %v1617 = vld [vmem:[%s251 + $0xd9] sm:$0xff]
    %v1618 = vld [vmem:[%s251 + $0xe1] sm:$0xff]
    %v1619 = vld [vmem:[%s251 + $0xf1] sm:$0xff]
    %v1620 = vld [vmem:[%s251 + $0xf9] sm:$0xff]
    %v1621 = vld [vmem:[%s251 + $0x109] sm:$0xff]
    %v1622 = vld [vmem:[%s251 + $0x111] sm:$0xff]
    %v1623 = vld [vmem:[%s251 + $0x121] sm:$0xff]
    %v1624 = vld [vmem:[%s251 + $0x129] sm:$0xff]
    %v1625 = vld [vmem:[%s251 + $0x139] sm:$0xff]
    %v1626 = vld [vmem:[%s251 + $0x141] sm:$0xff]
    %v1627 = vld [vmem:[%s251 + $0x151] sm:$0xff]
    %v1628 = vld [vmem:[%s251 + $0x159] sm:$0xff]
    %v1629 = vld [vmem:[%s251 + $0x169] sm:$0xff]
    %v1630 = vld [vmem:[%s251 + $0x171] sm:$0xff]
    %v1631 = vld [vmem:[%s251 + $0x1b1] sm:$0xff]
    %v1632 = vld [vmem:[%s251 + $0x1b9] sm:$0xff]
    %v1633 = vld [vmem:[%s251 + $0x1c9] sm:$0xff]
    %v1634 = vld [vmem:[%s251 + $0x1d1] sm:$0xff]
    %v1635 = vld [vmem:[%s251 + $0x1e1] sm:$0xff]
    %v1636 = vld [vmem:[%s251 + $0x1e9] sm:$0xff]
    %v1637 = vld [vmem:[%s251 + $0x1f9] sm:$0xff]
    %v1638 = vld [vmem:[%s251 + $0x201] sm:$0xff]
    %v1639 = vld [vmem:[%s251 + $0x211] sm:$0xff]
    %v1640 = vld [vmem:[%s251 + $0x219] sm:$0xff]
    %v1641 = vld [vmem:[%s251 + $0x229] sm:$0xff]
    %v1642 = vld [vmem:[%s251 + $0x231] sm:$0xff]
    %v1643 = vld [vmem:[%s251 + $0x241] sm:$0xff]
    %v1644 = vld [vmem:[%s251 + $0x249] sm:$0xff]
    %v1645 = vld [vmem:[%s251 + $0x259] sm:$0xff]
    %v1646 = vld [vmem:[%s251 + $0x261] sm:$0xff]
    %v1647 = vld [vmem:[%s251 + $0x271] sm:$0xff]
    %v1648 = vld [vmem:[%s251 + $0x279] sm:$0xff]
    %v1649 = vld [vmem:[%s251 + $0x289] sm:$0xff]
    %v1650 = vld [vmem:[%s251 + $0x291] sm:$0xff]
    %v1651 = vld [vmem:[%s251 + $0x2a1] sm:$0xff]
    %v1652 = vld [vmem:[%s251 + $0x2a9] sm:$0xff]
    %v1653 = vld [vmem:[%s251 + $0x2b9] sm:$0xff]
    %v1654 = vld [vmem:[%s251 + $0x2c1] sm:$0xff]
    %v1655 = vld [vmem:[%s251 + $0x2d1] sm:$0xff]
    %v1656 = vld [vmem:[%s251 + $0x2d9] sm:$0xff]
    %v1657 = vld [vmem:[%s251 + $0x2e9] sm:$0xff]
    %v1658 = vld [vmem:[%s251 + $0x2f1] sm:$0xff]
    %v1659 = vld [vmem:[%s251 + $0x301] sm:$0xff]
    %v1660 = vld [vmem:[%s251 + $0x309] sm:$0xff]
    %v1661 = vld [vmem:[%s251 + $0x319] sm:$0xff]
    %v1662 = vld [vmem:[%s251 + $0x321] sm:$0xff]
    %v1663 = vld [vmem:[%s251 + $0x2] sm:$0xff]
    %v1664 = vld [vmem:[%s251 + $0xa] sm:$0xff]
    %v1665 = vld [vmem:[%s251 + $0x1a] sm:$0xff]
    %v1666 = vld [vmem:[%s251 + $0x22] sm:$0xff]
    %v1667 = vld [vmem:[%s251 + $0x32] sm:$0xff]
    %v1668 = vld [vmem:[%s251 + $0x3a] sm:$0xff]
    %v1669 = vld [vmem:[%s251 + $0x4a] sm:$0xff]
    %v1670 = vld [vmem:[%s251 + $0x52] sm:$0xff]
    %v1671 = vld [vmem:[%s251 + $0x62] sm:$0xff]
    %v1672 = vld [vmem:[%s251 + $0x6a] sm:$0xff]
    %v1673 = vld [vmem:[%s251 + $0x7a] sm:$0xff]
    %v1674 = vld [vmem:[%s251 + $0x82] sm:$0xff]
    %v1675 = vld [vmem:[%s251 + $0x92] sm:$0xff]
    %v1676 = vld [vmem:[%s251 + $0x9a] sm:$0xff]
    %v1677 = vld [vmem:[%s251 + $0xaa] sm:$0xff]
    %v1678 = vld [vmem:[%s251 + $0xb2] sm:$0xff]
    %v1679 = vld [vmem:[%s251 + $0xc2] sm:$0xff]
    %v1680 = vld [vmem:[%s251 + $0xca] sm:$0xff]
    %v1681 = vld [vmem:[%s251 + $0xda] sm:$0xff]
    %v1682 = vld [vmem:[%s251 + $0xe2] sm:$0xff]
    %v1683 = vld [vmem:[%s251 + $0xf2] sm:$0xff]
    %v1684 = vld [vmem:[%s251 + $0xfa] sm:$0xff]
    %v1685 = vld [vmem:[%s251 + $0x10a] sm:$0xff]
    %v1686 = vld [vmem:[%s251 + $0x112] sm:$0xff]
    %v1687 = vld [vmem:[%s251 + $0x122] sm:$0xff]
    %v1688 = vld [vmem:[%s251 + $0x12a] sm:$0xff]
    %v1689 = vld [vmem:[%s251 + $0x13a] sm:$0xff]
    %v1690 = vld [vmem:[%s251 + $0x142] sm:$0xff]
    %v1691 = vld [vmem:[%s251 + $0x152] sm:$0xff]
    %v1692 = vld [vmem:[%s251 + $0x15a] sm:$0xff]
    %v1693 = vld [vmem:[%s251 + $0x16a] sm:$0xff]
    %v1694 = vld [vmem:[%s251 + $0x172] sm:$0xff]
    %v1695 = vld [vmem:[%s251 + $0x1b2] sm:$0xff]
    %v1696 = vld [vmem:[%s251 + $0x1ba] sm:$0xff]
    %v1697 = vld [vmem:[%s251 + $0x1ca] sm:$0xff]
    %v1698 = vld [vmem:[%s251 + $0x1d2] sm:$0xff]
    %v1699 = vld [vmem:[%s251 + $0x1e2] sm:$0xff]
    %v1700 = vld [vmem:[%s251 + $0x1ea] sm:$0xff]
    %v1701 = vld [vmem:[%s251 + $0x1fa] sm:$0xff]
    %v1702 = vld [vmem:[%s251 + $0x202] sm:$0xff]
    %v1703 = vld [vmem:[%s251 + $0x212] sm:$0xff]
    %v1704 = vld [vmem:[%s251 + $0x21a] sm:$0xff]
    %v1705 = vld [vmem:[%s251 + $0x22a] sm:$0xff]
    %v1706 = vld [vmem:[%s251 + $0x232] sm:$0xff]
    %v1707 = vld [vmem:[%s251 + $0x242] sm:$0xff]
    %v1708 = vld [vmem:[%s251 + $0x24a] sm:$0xff]
    %v1709 = vld [vmem:[%s251 + $0x25a] sm:$0xff]
    %v1710 = vld [vmem:[%s251 + $0x262] sm:$0xff]
    %v1711 = vld [vmem:[%s251 + $0x272] sm:$0xff]
    %v1712 = vld [vmem:[%s251 + $0x27a] sm:$0xff]
    %v1713 = vld [vmem:[%s251 + $0x28a] sm:$0xff]
    %v1714 = vld [vmem:[%s251 + $0x292] sm:$0xff]
    %v1715 = vld [vmem:[%s251 + $0x2a2] sm:$0xff]
    %v1716 = vld [vmem:[%s251 + $0x2aa] sm:$0xff]
    %v1717 = vld [vmem:[%s251 + $0x2ba] sm:$0xff]
    %v1718 = vld [vmem:[%s251 + $0x2c2] sm:$0xff]
    %v1719 = vld [vmem:[%s251 + $0x2d2] sm:$0xff]
    %v1720 = vld [vmem:[%s251 + $0x2da] sm:$0xff]
    %v1721 = vld [vmem:[%s251 + $0x2ea] sm:$0xff]
    %v1722 = vld [vmem:[%s251 + $0x2f2] sm:$0xff]
    %v1723 = vld [vmem:[%s251 + $0x302] sm:$0xff]
    %v1724 = vld [vmem:[%s251 + $0x30a] sm:$0xff]
    %v1725 = vld [vmem:[%s251 + $0x31a] sm:$0xff]
    %v1726 = vld [vmem:[%s251 + $0x322] sm:$0xff]
    %1791 = vrot.lane.b32.xlu0 %v1599, 32
    %v1792 = vpop.permute.xlu0 %1791
    %1793 = vrot.lane.b32.xlu0 %v1600, 32
    %v1794 = vpop.permute.xlu0 %1793
    %1795 = vrot.lane.b32.xlu0 %v1601, 32
    %v1796 = vpop.permute.xlu0 %1795
    %1797 = vrot.lane.b32.xlu0 %v1602, 32
    %v1798 = vpop.permute.xlu0 %1797
    %1799 = vrot.lane.b32.xlu0 %v1603, 32
    %v1800 = vpop.permute.xlu0 %1799
    %1801 = vrot.lane.b32.xlu0 %v1604, 32
    %v1802 = vpop.permute.xlu0 %1801
    %1803 = vrot.lane.b32.xlu0 %v1605, 32
    %v1804 = vpop.permute.xlu0 %1803
    %1805 = vrot.lane.b32.xlu0 %v1606, 32
    %v1806 = vpop.permute.xlu0 %1805
    %1807 = vrot.lane.b32.xlu0 %v1607, 32
    %v1808 = vpop.permute.xlu0 %1807
    %1809 = vrot.lane.b32.xlu0 %v1608, 32
    %v1810 = vpop.permute.xlu0 %1809
    %1811 = vrot.lane.b32.xlu0 %v1609, 32
    %v1812 = vpop.permute.xlu0 %1811
    %1813 = vrot.lane.b32.xlu0 %v1610, 32
    %v1814 = vpop.permute.xlu0 %1813
    %1815 = vrot.lane.b32.xlu0 %v1611, 32
    %v1816 = vpop.permute.xlu0 %1815
    %1817 = vrot.lane.b32.xlu0 %v1612, 32
    %v1818 = vpop.permute.xlu0 %1817
    %1819 = vrot.lane.b32.xlu0 %v1613, 32
    %v1820 = vpop.permute.xlu0 %1819
    %1821 = vrot.lane.b32.xlu0 %v1614, 32
    %v1822 = vpop.permute.xlu0 %1821
    %1823 = vrot.lane.b32.xlu0 %v1615, 32
    %v1824 = vpop.permute.xlu0 %1823
    %1825 = vrot.lane.b32.xlu0 %v1616, 32
    %v1826 = vpop.permute.xlu0 %1825
    %1827 = vrot.lane.b32.xlu0 %v1617, 32
    %v1828 = vpop.permute.xlu0 %1827
    %1829 = vrot.lane.b32.xlu0 %v1618, 32
    %v1830 = vpop.permute.xlu0 %1829
    %1831 = vrot.lane.b32.xlu0 %v1619, 32
    %v1832 = vpop.permute.xlu0 %1831
    %1833 = vrot.lane.b32.xlu0 %v1620, 32
    %v1834 = vpop.permute.xlu0 %1833
    %1835 = vrot.lane.b32.xlu0 %v1621, 32
    %v1836 = vpop.permute.xlu0 %1835
    %1837 = vrot.lane.b32.xlu0 %v1622, 32
    %v1838 = vpop.permute.xlu0 %1837
    %1839 = vrot.lane.b32.xlu0 %v1623, 32
    %v1840 = vpop.permute.xlu0 %1839
    %1841 = vrot.lane.b32.xlu0 %v1624, 32
    %v1842 = vpop.permute.xlu0 %1841
    %1843 = vrot.lane.b32.xlu0 %v1625, 32
    %v1844 = vpop.permute.xlu0 %1843
    %1845 = vrot.lane.b32.xlu0 %v1626, 32
    %v1846 = vpop.permute.xlu0 %1845
    %1847 = vrot.lane.b32.xlu0 %v1627, 32
    %v1848 = vpop.permute.xlu0 %1847
    %1849 = vrot.lane.b32.xlu0 %v1628, 32
    %v1850 = vpop.permute.xlu0 %1849
    %1851 = vrot.lane.b32.xlu0 %v1629, 32
    %v1852 = vpop.permute.xlu0 %1851
    %1853 = vrot.lane.b32.xlu0 %v1630, 32
    %v1854 = vpop.permute.xlu0 %1853
    %1855 = vrot.lane.b32.xlu0 %v1631, 32
    %v1856 = vpop.permute.xlu0 %1855
    %1857 = vrot.lane.b32.xlu0 %v1632, 32
    %v1858 = vpop.permute.xlu0 %1857
    %1859 = vrot.lane.b32.xlu0 %v1633, 32
    %v1860 = vpop.permute.xlu0 %1859
    %1861 = vrot.lane.b32.xlu0 %v1634, 32
    %v1862 = vpop.permute.xlu0 %1861
    %1863 = vrot.lane.b32.xlu0 %v1635, 32
    %v1864 = vpop.permute.xlu0 %1863
    %1865 = vrot.lane.b32.xlu0 %v1636, 32
    %v1866 = vpop.permute.xlu0 %1865
    %1867 = vrot.lane.b32.xlu0 %v1637, 32
    %v1868 = vpop.permute.xlu0 %1867
    %1869 = vrot.lane.b32.xlu0 %v1638, 32
    %v1870 = vpop.permute.xlu0 %1869
    %1871 = vrot.lane.b32.xlu0 %v1639, 32
    %v1872 = vpop.permute.xlu0 %1871
    %1873 = vrot.lane.b32.xlu0 %v1640, 32
    %v1874 = vpop.permute.xlu0 %1873
    %1875 = vrot.lane.b32.xlu0 %v1641, 32
    %v1876 = vpop.permute.xlu0 %1875
    %1877 = vrot.lane.b32.xlu0 %v1642, 32
    %v1878 = vpop.permute.xlu0 %1877
    %1879 = vrot.lane.b32.xlu0 %v1643, 32
    %v1880 = vpop.permute.xlu0 %1879
    %1881 = vrot.lane.b32.xlu0 %v1644, 32
    %v1882 = vpop.permute.xlu0 %1881
    %1883 = vrot.lane.b32.xlu0 %v1645, 32
    %v1884 = vpop.permute.xlu0 %1883
    %1885 = vrot.lane.b32.xlu0 %v1646, 32
    %v1886 = vpop.permute.xlu0 %1885
    %1887 = vrot.lane.b32.xlu0 %v1647, 32
    %v1888 = vpop.permute.xlu0 %1887
    %1889 = vrot.lane.b32.xlu0 %v1648, 32
    %v1890 = vpop.permute.xlu0 %1889
    %1891 = vrot.lane.b32.xlu0 %v1649, 32
    %v1892 = vpop.permute.xlu0 %1891
    %1893 = vrot.lane.b32.xlu0 %v1650, 32
    %v1894 = vpop.permute.xlu0 %1893
    %1895 = vrot.lane.b32.xlu0 %v1651, 32
    %v1896 = vpop.permute.xlu0 %1895
    %1897 = vrot.lane.b32.xlu0 %v1652, 32
    %v1898 = vpop.permute.xlu0 %1897
    %1899 = vrot.lane.b32.xlu0 %v1653, 32
    %v1900 = vpop.permute.xlu0 %1899
    %1901 = vrot.lane.b32.xlu0 %v1654, 32
    %v1902 = vpop.permute.xlu0 %1901
    %1903 = vrot.lane.b32.xlu0 %v1655, 32
    %v1904 = vpop.permute.xlu0 %1903
    %1905 = vrot.lane.b32.xlu0 %v1656, 32
    %v1906 = vpop.permute.xlu0 %1905
    %1907 = vrot.lane.b32.xlu0 %v1657, 32
    %v1908 = vpop.permute.xlu0 %1907
    %1909 = vrot.lane.b32.xlu0 %v1658, 32
    %v1910 = vpop.permute.xlu0 %1909
    %1911 = vrot.lane.b32.xlu0 %v1659, 32
    %v1912 = vpop.permute.xlu0 %1911
    %1913 = vrot.lane.b32.xlu0 %v1660, 32
    %v1914 = vpop.permute.xlu0 %1913
    %1915 = vrot.lane.b32.xlu0 %v1661, 32
    %v1916 = vpop.permute.xlu0 %1915
    %1917 = vrot.lane.b32.xlu0 %v1662, 32
    %v1918 = vpop.permute.xlu0 %1917
    %2047 = vrot.lane.b32.xlu0 %v1663, 64
    %v2048 = vpop.permute.xlu0 %2047
    %2049 = vrot.lane.b32.xlu0 %v1664, 64
    %v2050 = vpop.permute.xlu0 %2049
    %2051 = vrot.lane.b32.xlu0 %v1665, 64
    %v2052 = vpop.permute.xlu0 %2051
    %2053 = vrot.lane.b32.xlu0 %v1666, 64
    %v2054 = vpop.permute.xlu0 %2053
    %2055 = vrot.lane.b32.xlu0 %v1667, 64
    %v2056 = vpop.permute.xlu0 %2055
    %2057 = vrot.lane.b32.xlu0 %v1668, 64
    %v2058 = vpop.permute.xlu0 %2057
    %2059 = vrot.lane.b32.xlu0 %v1669, 64
    %v2060 = vpop.permute.xlu0 %2059
    %2061 = vrot.lane.b32.xlu0 %v1670, 64
    %v2062 = vpop.permute.xlu0 %2061
    %2063 = vrot.lane.b32.xlu0 %v1671, 64
    %v2064 = vpop.permute.xlu0 %2063
    %2065 = vrot.lane.b32.xlu0 %v1672, 64
    %v2066 = vpop.permute.xlu0 %2065
    %2067 = vrot.lane.b32.xlu0 %v1673, 64
    %v2068 = vpop.permute.xlu0 %2067
    %2069 = vrot.lane.b32.xlu0 %v1674, 64
    %v2070 = vpop.permute.xlu0 %2069
    %2071 = vrot.lane.b32.xlu0 %v1675, 64
    %v2072 = vpop.permute.xlu0 %2071
    %2073 = vrot.lane.b32.xlu0 %v1676, 64
    %v2074 = vpop.permute.xlu0 %2073
    %2075 = vrot.lane.b32.xlu0 %v1677, 64
    %v2076 = vpop.permute.xlu0 %2075
    %2077 = vrot.lane.b32.xlu0 %v1678, 64
    %v2078 = vpop.permute.xlu0 %2077
    %2079 = vrot.lane.b32.xlu0 %v1679, 64
    %v2080 = vpop.permute.xlu0 %2079
    %2081 = vrot.lane.b32.xlu0 %v1680, 64
    %v2082 = vpop.permute.xlu0 %2081
    %2083 = vrot.lane.b32.xlu0 %v1681, 64
    %v2084 = vpop.permute.xlu0 %2083
    %2085 = vrot.lane.b32.xlu0 %v1682, 64
    %v2086 = vpop.permute.xlu0 %2085
    %2087 = vrot.lane.b32.xlu0 %v1683, 64
    %v2088 = vpop.permute.xlu0 %2087
    %2089 = vrot.lane.b32.xlu0 %v1684, 64
    %v2090 = vpop.permute.xlu0 %2089
    %2091 = vrot.lane.b32.xlu0 %v1685, 64
    %v2092 = vpop.permute.xlu0 %2091
    %2093 = vrot.lane.b32.xlu0 %v1686, 64
    %v2094 = vpop.permute.xlu0 %2093
    %2095 = vrot.lane.b32.xlu0 %v1687, 64
    %v2096 = vpop.permute.xlu0 %2095
    %2097 = vrot.lane.b32.xlu0 %v1688, 64
    %v2098 = vpop.permute.xlu0 %2097
    %2099 = vrot.lane.b32.xlu0 %v1689, 64
    %v2100 = vpop.permute.xlu0 %2099
    %2101 = vrot.lane.b32.xlu0 %v1690, 64
    %v2102 = vpop.permute.xlu0 %2101
    %2103 = vrot.lane.b32.xlu0 %v1691, 64
    %v2104 = vpop.permute.xlu0 %2103
    %2105 = vrot.lane.b32.xlu0 %v1692, 64
    %v2106 = vpop.permute.xlu0 %2105
    %2107 = vrot.lane.b32.xlu0 %v1693, 64
    %v2108 = vpop.permute.xlu0 %2107
    %2109 = vrot.lane.b32.xlu0 %v1694, 64
    %v2110 = vpop.permute.xlu0 %2109
    %2111 = vrot.lane.b32.xlu0 %v1695, 64
    %v2112 = vpop.permute.xlu0 %2111
    %2113 = vrot.lane.b32.xlu0 %v1696, 64
    %v2114 = vpop.permute.xlu0 %2113
    %2115 = vrot.lane.b32.xlu0 %v1697, 64
    %v2116 = vpop.permute.xlu0 %2115
    %2117 = vrot.lane.b32.xlu0 %v1698, 64
    %v2118 = vpop.permute.xlu0 %2117
    %2119 = vrot.lane.b32.xlu0 %v1699, 64
    %v2120 = vpop.permute.xlu0 %2119
    %2121 = vrot.lane.b32.xlu0 %v1700, 64
    %v2122 = vpop.permute.xlu0 %2121
    %2123 = vrot.lane.b32.xlu0 %v1701, 64
    %v2124 = vpop.permute.xlu0 %2123
    %2125 = vrot.lane.b32.xlu0 %v1702, 64
    %v2126 = vpop.permute.xlu0 %2125
    %2127 = vrot.lane.b32.xlu0 %v1703, 64
    %v2128 = vpop.permute.xlu0 %2127
    %2129 = vrot.lane.b32.xlu0 %v1704, 64
    %v2130 = vpop.permute.xlu0 %2129
    %2131 = vrot.lane.b32.xlu0 %v1705, 64
    %v2132 = vpop.permute.xlu0 %2131
    %2133 = vrot.lane.b32.xlu0 %v1706, 64
    %v2134 = vpop.permute.xlu0 %2133
    %2135 = vrot.lane.b32.xlu0 %v1707, 64
    %v2136 = vpop.permute.xlu0 %2135
    %2137 = vrot.lane.b32.xlu0 %v1708, 64
    %v2138 = vpop.permute.xlu0 %2137
    %2139 = vrot.lane.b32.xlu0 %v1709, 64
    %v2140 = vpop.permute.xlu0 %2139
    %2141 = vrot.lane.b32.xlu0 %v1710, 64
    %v2142 = vpop.permute.xlu0 %2141
    %2143 = vrot.lane.b32.xlu0 %v1711, 64
    %v2144 = vpop.permute.xlu0 %2143
    %2145 = vrot.lane.b32.xlu0 %v1712, 64
    %v2146 = vpop.permute.xlu0 %2145
    %2147 = vrot.lane.b32.xlu0 %v1713, 64
    %v2148 = vpop.permute.xlu0 %2147
    %2149 = vrot.lane.b32.xlu0 %v1714, 64
    %v2150 = vpop.permute.xlu0 %2149
    %2151 = vrot.lane.b32.xlu0 %v1715, 64
    %v2152 = vpop.permute.xlu0 %2151
    %2153 = vrot.lane.b32.xlu0 %v1716, 64
    %v2154 = vpop.permute.xlu0 %2153
    %2155 = vrot.lane.b32.xlu0 %v1717, 64
    %v2156 = vpop.permute.xlu0 %2155
    %2157 = vrot.lane.b32.xlu0 %v1718, 64
    %v2158 = vpop.permute.xlu0 %2157
    %2159 = vrot.lane.b32.xlu0 %v1719, 64
    %v2160 = vpop.permute.xlu0 %2159
    %2161 = vrot.lane.b32.xlu0 %v1720, 64
    %v2162 = vpop.permute.xlu0 %2161
    %2163 = vrot.lane.b32.xlu0 %v1721, 64
    %v2164 = vpop.permute.xlu0 %2163
    %2165 = vrot.lane.b32.xlu0 %v1722, 64
    %v2166 = vpop.permute.xlu0 %2165
    %2167 = vrot.lane.b32.xlu0 %v1723, 64
    %v2168 = vpop.permute.xlu0 %2167
    %2169 = vrot.lane.b32.xlu0 %v1724, 64
    %v2170 = vpop.permute.xlu0 %2169
    %2171 = vrot.lane.b32.xlu0 %v1725, 64
    %v2172 = vpop.permute.xlu0 %2171
    %2173 = vrot.lane.b32.xlu0 %v1726, 64
    %v2174 = vpop.permute.xlu0 %2173
    %v2239 = vsel %vm1020, %v1535, %v1792
    %v2240 = vsel %vm1020, %v1536, %v1794
    %v2241 = vsel %vm1020, %v1537, %v1796
    %v2242 = vsel %vm1020, %v1538, %v1798
    %v2243 = vsel %vm1020, %v1539, %v1800
    %v2244 = vsel %vm1020, %v1540, %v1802
    %v2245 = vsel %vm1020, %v1541, %v1804
    %v2246 = vsel %vm1020, %v1542, %v1806
    %v2247 = vsel %vm1020, %v1543, %v1808
    %v2248 = vsel %vm1020, %v1544, %v1810
    %v2249 = vsel %vm1020, %v1545, %v1812
    %v2250 = vsel %vm1020, %v1546, %v1814
    %v2251 = vsel %vm1020, %v1547, %v1816
    %v2252 = vsel %vm1020, %v1548, %v1818
    %v2253 = vsel %vm1020, %v1549, %v1820
    %v2254 = vsel %vm1020, %v1550, %v1822
    %v2255 = vsel %vm1020, %v1551, %v1824
    %v2256 = vsel %vm1020, %v1552, %v1826
    %v2257 = vsel %vm1020, %v1553, %v1828
    %v2258 = vsel %vm1020, %v1554, %v1830
    %v2259 = vsel %vm1020, %v1555, %v1832
    %v2260 = vsel %vm1020, %v1556, %v1834
    %v2261 = vsel %vm1020, %v1557, %v1836
    %v2262 = vsel %vm1020, %v1558, %v1838
    %v2263 = vsel %vm1020, %v1559, %v1840
    %v2264 = vsel %vm1020, %v1560, %v1842
    %v2265 = vsel %vm1020, %v1561, %v1844
    %v2266 = vsel %vm1020, %v1562, %v1846
    %v2267 = vsel %vm1020, %v1563, %v1848
    %v2268 = vsel %vm1020, %v1564, %v1850
    %v2269 = vsel %vm1020, %v1565, %v1852
    %v2270 = vsel %vm1020, %v1566, %v1854
    %v2271 = vsel %vm1020, %v1567, %v1856
    %v2272 = vsel %vm1020, %v1568, %v1858
    %v2273 = vsel %vm1020, %v1569, %v1860
    %v2274 = vsel %vm1020, %v1570, %v1862
    %v2275 = vsel %vm1020, %v1571, %v1864
    %v2276 = vsel %vm1020, %v1572, %v1866
    %v2277 = vsel %vm1020, %v1573, %v1868
    %v2278 = vsel %vm1020, %v1574, %v1870
    %v2279 = vsel %vm1020, %v1575, %v1872
    %v2280 = vsel %vm1020, %v1576, %v1874
    %v2281 = vsel %vm1020, %v1577, %v1876
    %v2282 = vsel %vm1020, %v1578, %v1878
    %v2283 = vsel %vm1020, %v1579, %v1880
    %v2284 = vsel %vm1020, %v1580, %v1882
    %v2285 = vsel %vm1020, %v1581, %v1884
    %v2286 = vsel %vm1020, %v1582, %v1886
    %v2287 = vsel %vm1020, %v1583, %v1888
    %v2288 = vsel %vm1020, %v1584, %v1890
    %v2289 = vsel %vm1020, %v1585, %v1892
    %v2290 = vsel %vm1020, %v1586, %v1894
    %v2291 = vsel %vm1020, %v1587, %v1896
    %v2292 = vsel %vm1020, %v1588, %v1898
    %v2293 = vsel %vm1020, %v1589, %v1900
    %v2294 = vsel %vm1020, %v1590, %v1902
    %v2295 = vsel %vm1020, %v1591, %v1904
    %v2296 = vsel %vm1020, %v1592, %v1906
    %v2297 = vsel %vm1020, %v1593, %v1908
    %v2298 = vsel %vm1020, %v1594, %v1910
    %v2299 = vsel %vm1020, %v1595, %v1912
    %v2300 = vsel %vm1020, %v1596, %v1914
    %v2301 = vsel %vm1020, %v1597, %v1916
    %v2302 = vsel %vm1020, %v1598, %v1918
    %v2303 = vsel %vm1085, %v2239, %v2048
    %v2304 = vsel %vm1085, %v2240, %v2050
    %v2305 = vsel %vm1085, %v2241, %v2052
    %v2306 = vsel %vm1085, %v2242, %v2054
    %v2307 = vsel %vm1085, %v2243, %v2056
    %v2308 = vsel %vm1085, %v2244, %v2058
    %v2309 = vsel %vm1085, %v2245, %v2060
    %v2310 = vsel %vm1085, %v2246, %v2062
    %v2311 = vsel %vm1085, %v2247, %v2064
    %v2312 = vsel %vm1085, %v2248, %v2066
    %v2313 = vsel %vm1085, %v2249, %v2068
    %v2314 = vsel %vm1085, %v2250, %v2070
    %v2315 = vsel %vm1085, %v2251, %v2072
    %v2316 = vsel %vm1085, %v2252, %v2074
    %v2317 = vsel %vm1085, %v2253, %v2076
    %v2318 = vsel %vm1085, %v2254, %v2078
    %v2319 = vsel %vm1085, %v2255, %v2080
    %v2320 = vsel %vm1085, %v2256, %v2082
    %v2321 = vsel %vm1085, %v2257, %v2084
    %v2322 = vsel %vm1085, %v2258, %v2086
    %v2323 = vsel %vm1085, %v2259, %v2088
    %v2324 = vsel %vm1085, %v2260, %v2090
    %v2325 = vsel %vm1085, %v2261, %v2092
    %v2326 = vsel %vm1085, %v2262, %v2094
    %v2327 = vsel %vm1085, %v2263, %v2096
    %v2328 = vsel %vm1085, %v2264, %v2098
    %v2329 = vsel %vm1085, %v2265, %v2100
    %v2330 = vsel %vm1085, %v2266, %v2102
    %v2331 = vsel %vm1085, %v2267, %v2104
    %v2332 = vsel %vm1085, %v2268, %v2106
    %v2333 = vsel %vm1085, %v2269, %v2108
    %v2334 = vsel %vm1085, %v2270, %v2110
    %v2335 = vsel %vm1085, %v2271, %v2112
    %v2336 = vsel %vm1085, %v2272, %v2114
    %v2337 = vsel %vm1085, %v2273, %v2116
    %v2338 = vsel %vm1085, %v2274, %v2118
    %v2339 = vsel %vm1085, %v2275, %v2120
    %v2340 = vsel %vm1085, %v2276, %v2122
    %v2341 = vsel %vm1085, %v2277, %v2124
    %v2342 = vsel %vm1085, %v2278, %v2126
    %v2343 = vsel %vm1085, %v2279, %v2128
    %v2344 = vsel %vm1085, %v2280, %v2130
    %v2345 = vsel %vm1085, %v2281, %v2132
    %v2346 = vsel %vm1085, %v2282, %v2134
    %v2347 = vsel %vm1085, %v2283, %v2136
    %v2348 = vsel %vm1085, %v2284, %v2138
    %v2349 = vsel %vm1085, %v2285, %v2140
    %v2350 = vsel %vm1085, %v2286, %v2142
    %v2351 = vsel %vm1085, %v2287, %v2144
    %v2352 = vsel %vm1085, %v2288, %v2146
    %v2353 = vsel %vm1085, %v2289, %v2148
    %v2354 = vsel %vm1085, %v2290, %v2150
    %v2355 = vsel %vm1085, %v2291, %v2152
    %v2356 = vsel %vm1085, %v2292, %v2154
    %v2357 = vsel %vm1085, %v2293, %v2156
    %v2358 = vsel %vm1085, %v2294, %v2158
    %v2359 = vsel %vm1085, %v2295, %v2160
    %v2360 = vsel %vm1085, %v2296, %v2162
    %v2361 = vsel %vm1085, %v2297, %v2164
    %v2362 = vsel %vm1085, %v2298, %v2166
    %v2363 = vsel %vm1085, %v2299, %v2168
    %v2364 = vsel %vm1085, %v2300, %v2170
    %v2365 = vsel %vm1085, %v2301, %v2172
    %v2366 = vsel %vm1085, %v2302, %v2174
    %v2367 = vsel %vm1150, %v2303, 0.0
    %v2368 = vsel %vm1150, %v2304, 0.0
    %v2369 = vsel %vm1150, %v2305, 0.0
    %v2370 = vsel %vm1150, %v2306, 0.0
    %v2371 = vsel %vm1150, %v2307, 0.0
    %v2372 = vsel %vm1150, %v2308, 0.0
    %v2373 = vsel %vm1150, %v2309, 0.0
    %v2374 = vsel %vm1150, %v2310, 0.0
    %v2375 = vsel %vm1150, %v2311, 0.0
    %v2376 = vsel %vm1150, %v2312, 0.0
    %v2377 = vsel %vm1150, %v2313, 0.0
    %v2378 = vsel %vm1150, %v2314, 0.0
    %v2379 = vsel %vm1150, %v2315, 0.0
    %v2380 = vsel %vm1150, %v2316, 0.0
    %v2381 = vsel %vm1150, %v2317, 0.0
    %v2382 = vsel %vm1150, %v2318, 0.0
    %v2383 = vsel %vm1150, %v2319, 0.0
    %v2384 = vsel %vm1150, %v2320, 0.0
    %v2385 = vsel %vm1150, %v2321, 0.0
    %v2386 = vsel %vm1150, %v2322, 0.0
    %v2387 = vsel %vm1150, %v2323, 0.0
    %v2388 = vsel %vm1150, %v2324, 0.0
    %v2389 = vsel %vm1150, %v2325, 0.0
    %v2390 = vsel %vm1150, %v2326, 0.0
    %v2391 = vsel %vm1150, %v2327, 0.0
    %v2392 = vsel %vm1150, %v2328, 0.0
    %v2393 = vsel %vm1150, %v2329, 0.0
    %v2394 = vsel %vm1150, %v2330, 0.0
    %v2395 = vsel %vm1150, %v2331, 0.0
    %v2396 = vsel %vm1150, %v2332, 0.0
    %v2397 = vsel %vm1150, %v2333, 0.0
    %v2398 = vsel %vm1150, %v2334, 0.0
    %v2399 = vsel %vm1150, %v2335, 0.0
    %v2400 = vsel %vm1150, %v2336, 0.0
    %v2401 = vsel %vm1150, %v2337, 0.0
    %v2402 = vsel %vm1150, %v2338, 0.0
    %v2403 = vsel %vm1150, %v2339, 0.0
    %v2404 = vsel %vm1150, %v2340, 0.0
    %v2405 = vsel %vm1150, %v2341, 0.0
    %v2406 = vsel %vm1150, %v2342, 0.0
    %v2407 = vsel %vm1150, %v2343, 0.0
    %v2408 = vsel %vm1150, %v2344, 0.0
    %v2409 = vsel %vm1150, %v2345, 0.0
    %v2410 = vsel %vm1150, %v2346, 0.0
    %v2411 = vsel %vm1150, %v2347, 0.0
    %v2412 = vsel %vm1150, %v2348, 0.0
    %v2413 = vsel %vm1150, %v2349, 0.0
    %v2414 = vsel %vm1150, %v2350, 0.0
    %v2415 = vsel %vm1150, %v2351, 0.0
    %v2416 = vsel %vm1150, %v2352, 0.0
    %v2417 = vsel %vm1150, %v2353, 0.0
    %v2418 = vsel %vm1150, %v2354, 0.0
    %v2419 = vsel %vm1150, %v2355, 0.0
    %v2420 = vsel %vm1150, %v2356, 0.0
    %v2421 = vsel %vm1150, %v2357, 0.0
    %v2422 = vsel %vm1150, %v2358, 0.0
    %v2423 = vsel %vm1150, %v2359, 0.0
    %v2424 = vsel %vm1150, %v2360, 0.0
    %v2425 = vsel %vm1150, %v2361, 0.0
    %v2426 = vsel %vm1150, %v2362, 0.0
    %v2427 = vsel %vm1150, %v2363, 0.0
    %v2428 = vsel %vm1150, %v2364, 0.0
    %v2429 = vsel %vm1150, %v2365, 0.0
    %v2430 = vsel %vm1150, %v2366, 0.0
    %v2431 = vpack.c.bf16 %v2368, %v2367
    %v2432 = vpack.c.bf16 %v2370, %v2369
    %v2433 = vpack.c.bf16 %v2372, %v2371
    %v2434 = vpack.c.bf16 %v2374, %v2373
    %v2435 = vpack.c.bf16 %v2376, %v2375
    %v2436 = vpack.c.bf16 %v2378, %v2377
    %v2437 = vpack.c.bf16 %v2380, %v2379
    %v2438 = vpack.c.bf16 %v2382, %v2381
    %v2439 = vpack.c.bf16 %v2384, %v2383
    %v2440 = vpack.c.bf16 %v2386, %v2385
    %v2441 = vpack.c.bf16 %v2388, %v2387
    %v2442 = vpack.c.bf16 %v2390, %v2389
    %v2443 = vpack.c.bf16 %v2392, %v2391
    %v2444 = vpack.c.bf16 %v2394, %v2393
    %v2445 = vpack.c.bf16 %v2396, %v2395
    %v2446 = vpack.c.bf16 %v2398, %v2397
    %v2447 = vpack.c.bf16 %v2400, %v2399
    %v2448 = vpack.c.bf16 %v2402, %v2401
    %v2449 = vpack.c.bf16 %v2404, %v2403
    %v2450 = vpack.c.bf16 %v2406, %v2405
    %v2451 = vpack.c.bf16 %v2408, %v2407
    %v2452 = vpack.c.bf16 %v2410, %v2409
    %v2453 = vpack.c.bf16 %v2412, %v2411
    %v2454 = vpack.c.bf16 %v2414, %v2413
    %v2455 = vpack.c.bf16 %v2416, %v2415
    %v2456 = vpack.c.bf16 %v2418, %v2417
    %v2457 = vpack.c.bf16 %v2420, %v2419
    %v2458 = vpack.c.bf16 %v2422, %v2421
    %v2459 = vpack.c.bf16 %v2424, %v2423
    %v2460 = vpack.c.bf16 %v2426, %v2425
    %v2461 = vpack.c.bf16 %v2428, %v2427
    %v2462 = vpack.c.bf16 %v2430, %v2429
    %v2495 = vunpack.c.l.b16 %v2431
    %v2496 = vunpack.c.h.b16 %v2431
    %v2497 = vunpack.c.l.b16 %v2432
    %v2498 = vunpack.c.h.b16 %v2432
    %v2499 = vunpack.c.l.b16 %v2433
    %v2500 = vunpack.c.h.b16 %v2433
    %v2501 = vunpack.c.l.b16 %v2434
    %v2502 = vunpack.c.h.b16 %v2434
    %v2503 = vunpack.c.l.b16 %v2435
    %v2504 = vunpack.c.h.b16 %v2435
    %v2505 = vunpack.c.l.b16 %v2436
    %v2506 = vunpack.c.h.b16 %v2436
    %v2507 = vunpack.c.l.b16 %v2437
    %v2508 = vunpack.c.h.b16 %v2437
    %v2509 = vunpack.c.l.b16 %v2438
    %v2510 = vunpack.c.h.b16 %v2438
    %v2511 = vunpack.c.l.b16 %v2439
    %v2512 = vunpack.c.h.b16 %v2439
    %v2513 = vunpack.c.l.b16 %v2440
    %v2514 = vunpack.c.h.b16 %v2440
    %v2515 = vunpack.c.l.b16 %v2441
    %v2516 = vunpack.c.h.b16 %v2441
    %v2517 = vunpack.c.l.b16 %v2442
    %v2518 = vunpack.c.h.b16 %v2442
    %v2519 = vunpack.c.l.b16 %v2443
    %v2520 = vunpack.c.h.b16 %v2443
    %v2521 = vunpack.c.l.b16 %v2444
    %v2522 = vunpack.c.h.b16 %v2444
    %v2523 = vunpack.c.l.b16 %v2445
    %v2524 = vunpack.c.h.b16 %v2445
    %v2525 = vunpack.c.l.b16 %v2446
    %v2526 = vunpack.c.h.b16 %v2446
    %v2527 = vunpack.c.l.b16 %v2447
    %v2528 = vunpack.c.h.b16 %v2447
    %v2529 = vunpack.c.l.b16 %v2448
    %v2530 = vunpack.c.h.b16 %v2448
    %v2531 = vunpack.c.l.b16 %v2449
    %v2532 = vunpack.c.h.b16 %v2449
    %v2533 = vunpack.c.l.b16 %v2450
    %v2534 = vunpack.c.h.b16 %v2450
    %v2535 = vunpack.c.l.b16 %v2451
    %v2536 = vunpack.c.h.b16 %v2451
    %v2537 = vunpack.c.l.b16 %v2452
    %v2538 = vunpack.c.h.b16 %v2452
    %v2539 = vunpack.c.l.b16 %v2453
    %v2540 = vunpack.c.h.b16 %v2453
    %v2541 = vunpack.c.l.b16 %v2454
    %v2542 = vunpack.c.h.b16 %v2454
    %v2543 = vunpack.c.l.b16 %v2455
    %v2544 = vunpack.c.h.b16 %v2455
    %v2545 = vunpack.c.l.b16 %v2456
    %v2546 = vunpack.c.h.b16 %v2456
    %v2547 = vunpack.c.l.b16 %v2457
    %v2548 = vunpack.c.h.b16 %v2457
    %v2549 = vunpack.c.l.b16 %v2458
    %v2550 = vunpack.c.h.b16 %v2458
    %v2551 = vunpack.c.l.b16 %v2459
    %v2552 = vunpack.c.h.b16 %v2459
    %v2553 = vunpack.c.l.b16 %v2460
    %v2554 = vunpack.c.h.b16 %v2460
    %v2555 = vunpack.c.l.b16 %v2461
    %v2556 = vunpack.c.h.b16 %v2461
    %v2557 = vunpack.c.l.b16 %v2462
    %v2558 = vunpack.c.h.b16 %v2462
    %v2559 = vpack.c.b16 %v2495, %v2495
    %v2560 = vpack.c.b16 %v2496, %v2496
    %v2561 = vpack.c.b16 %v2497, %v2497
    %v2562 = vpack.c.b16 %v2498, %v2498
    %v2563 = vpack.c.b16 %v2499, %v2499
    %v2564 = vpack.c.b16 %v2500, %v2500
    %v2565 = vpack.c.b16 %v2501, %v2501
    %v2566 = vpack.c.b16 %v2502, %v2502
    %v2567 = vpack.c.b16 %v2503, %v2503
    %v2568 = vpack.c.b16 %v2504, %v2504
    %v2569 = vpack.c.b16 %v2505, %v2505
    %v2570 = vpack.c.b16 %v2506, %v2506
    %v2571 = vpack.c.b16 %v2507, %v2507
    %v2572 = vpack.c.b16 %v2508, %v2508
    %v2573 = vpack.c.b16 %v2509, %v2509
    %v2574 = vpack.c.b16 %v2510, %v2510
    %v2575 = vpack.c.b16 %v2511, %v2511
    %v2576 = vpack.c.b16 %v2512, %v2512
    %v2577 = vpack.c.b16 %v2513, %v2513
    %v2578 = vpack.c.b16 %v2514, %v2514
    %v2579 = vpack.c.b16 %v2515, %v2515
    %v2580 = vpack.c.b16 %v2516, %v2516
    %v2581 = vpack.c.b16 %v2517, %v2517
    %v2582 = vpack.c.b16 %v2518, %v2518
    %v2583 = vpack.c.b16 %v2519, %v2519
    %v2584 = vpack.c.b16 %v2520, %v2520
    %v2585 = vpack.c.b16 %v2521, %v2521
    %v2586 = vpack.c.b16 %v2522, %v2522
    %v2587 = vpack.c.b16 %v2523, %v2523
    %v2588 = vpack.c.b16 %v2524, %v2524
    %v2589 = vpack.c.b16 %v2525, %v2525
    %v2590 = vpack.c.b16 %v2526, %v2526
    %v2591 = vpack.c.b16 %v2527, %v2527
    %v2592 = vpack.c.b16 %v2528, %v2528
    %v2593 = vpack.c.b16 %v2529, %v2529
    %v2594 = vpack.c.b16 %v2530, %v2530
    %v2595 = vpack.c.b16 %v2531, %v2531
    %v2596 = vpack.c.b16 %v2532, %v2532
    %v2597 = vpack.c.b16 %v2533, %v2533
    %v2598 = vpack.c.b16 %v2534, %v2534
    %v2599 = vpack.c.b16 %v2535, %v2535
    %v2600 = vpack.c.b16 %v2536, %v2536
    %v2601 = vpack.c.b16 %v2537, %v2537
    %v2602 = vpack.c.b16 %v2538, %v2538
    %v2603 = vpack.c.b16 %v2539, %v2539
    %v2604 = vpack.c.b16 %v2540, %v2540
    %v2605 = vpack.c.b16 %v2541, %v2541
    %v2606 = vpack.c.b16 %v2542, %v2542
    %v2607 = vpack.c.b16 %v2543, %v2543
    %v2608 = vpack.c.b16 %v2544, %v2544
    %v2609 = vpack.c.b16 %v2545, %v2545
    %v2610 = vpack.c.b16 %v2546, %v2546
    %v2611 = vpack.c.b16 %v2547, %v2547
    %v2612 = vpack.c.b16 %v2548, %v2548
    %v2613 = vpack.c.b16 %v2549, %v2549
    %v2614 = vpack.c.b16 %v2550, %v2550
    %v2615 = vpack.c.b16 %v2551, %v2551
    %v2616 = vpack.c.b16 %v2552, %v2552
    %v2617 = vpack.c.b16 %v2553, %v2553
    %v2618 = vpack.c.b16 %v2554, %v2554
    %v2619 = vpack.c.b16 %v2555, %v2555
    %v2620 = vpack.c.b16 %v2556, %v2556
    %v2621 = vpack.c.b16 %v2557, %v2557
    %v2622 = vpack.c.b16 %v2558, %v2558
    %2687 = vst [vmem:[#allocation3 + $0x4] sm:$0xf] %v2559
    %2688 = vst [vmem:[#allocation3 + $0x10] sm:$0xf] %v2560
    %2689 = vst [vmem:[#allocation3 + $0x1c] sm:$0xf] %v2561
    %2690 = vst [vmem:[#allocation3 + $0x28] sm:$0xf] %v2562
    %2691 = vst [vmem:[#allocation3 + $0x34] sm:$0xf] %v2563
    %2692 = vst [vmem:[#allocation3 + $0x40] sm:$0xf] %v2564
    %2693 = vst [vmem:[#allocation3 + $0x4c] sm:$0xf] %v2565
    %2694 = vst [vmem:[#allocation3 + $0x58] sm:$0xf] %v2566
    %2695 = vst [vmem:[#allocation3 + $0x64] sm:$0xf] %v2567
    %2696 = vst [vmem:[#allocation3 + $0x70] sm:$0xf] %v2568
    %2697 = vst [vmem:[#allocation3 + $0x7c] sm:$0xf] %v2569
    %2698 = vst [vmem:[#allocation3 + $0x88] sm:$0xf] %v2570
    %2699 = vst [vmem:[#allocation3 + $0x94] sm:$0xf] %v2571
    %2700 = vst [vmem:[#allocation3 + $0xa0] sm:$0xf] %v2572
    %2701 = vst [vmem:[#allocation3 + $0xac] sm:$0xf] %v2573
    %2702 = vst [vmem:[#allocation3 + $0xb8] sm:$0xf] %v2574
    %2703 = vst [vmem:[#allocation3 + $0xc4] sm:$0xf] %v2575
    %2704 = vst [vmem:[#allocation3 + $0xd0] sm:$0xf] %v2576
    %2705 = vst [vmem:[#allocation3 + $0xdc] sm:$0xf] %v2577
    %2706 = vst [vmem:[#allocation3 + $0xe8] sm:$0xf] %v2578
    %2707 = vst [vmem:[#allocation3 + $0xf4] sm:$0xf] %v2579
    %2708 = vst [vmem:[#allocation3 + $0x100] sm:$0xf] %v2580
    %2709 = vst [vmem:[#allocation3 + $0x10c] sm:$0xf] %v2581
    %2710 = vst [vmem:[#allocation3 + $0x118] sm:$0xf] %v2582
    %2711 = vst [vmem:[#allocation3 + $0x124] sm:$0xf] %v2583
    %2712 = vst [vmem:[#allocation3 + $0x130] sm:$0xf] %v2584
    %2713 = vst [vmem:[#allocation3 + $0x13c] sm:$0xf] %v2585
    %2714 = vst [vmem:[#allocation3 + $0x148] sm:$0xf] %v2586
    %2715 = vst [vmem:[#allocation3 + $0x154] sm:$0xf] %v2587
    %2716 = vst [vmem:[#allocation3 + $0x160] sm:$0xf] %v2588
    %2717 = vst [vmem:[#allocation3 + $0x16c] sm:$0xf] %v2589
    %2718 = vst [vmem:[#allocation3 + $0x178] sm:$0xf] %v2590
    %2719 = vst [vmem:[#allocation3 + $0x184] sm:$0xf] %v2591
    %2720 = vst [vmem:[#allocation3 + $0x190] sm:$0xf] %v2592
    %2721 = vst [vmem:[#allocation3 + $0x19c] sm:$0xf] %v2593
    %2722 = vst [vmem:[#allocation3 + $0x1a8] sm:$0xf] %v2594
    %2723 = vst [vmem:[#allocation3 + $0x1b4] sm:$0xf] %v2595
    %2724 = vst [vmem:[#allocation3 + $0x1c0] sm:$0xf] %v2596
    %2725 = vst [vmem:[#allocation3 + $0x1cc] sm:$0xf] %v2597
    %2726 = vst [vmem:[#allocation3 + $0x1d8] sm:$0xf] %v2598
    %2727 = vst [vmem:[#allocation3 + $0x1e4] sm:$0xf] %v2599
    %2728 = vst [vmem:[#allocation3 + $0x1f0] sm:$0xf] %v2600
    %2729 = vst [vmem:[#allocation3 + $0x1fc] sm:$0xf] %v2601
    %2730 = vst [vmem:[#allocation3 + $0x208] sm:$0xf] %v2602
    %2731 = vst [vmem:[#allocation3 + $0x214] sm:$0xf] %v2603
    %2732 = vst [vmem:[#allocation3 + $0x220] sm:$0xf] %v2604
    %2733 = vst [vmem:[#allocation3 + $0x22c] sm:$0xf] %v2605
    %2734 = vst [vmem:[#allocation3 + $0x238] sm:$0xf] %v2606
    %2735 = vst [vmem:[#allocation3 + $0x244] sm:$0xf] %v2607
    %2736 = vst [vmem:[#allocation3 + $0x250] sm:$0xf] %v2608
    %2737 = vst [vmem:[#allocation3 + $0x25c] sm:$0xf] %v2609
    %2738 = vst [vmem:[#allocation3 + $0x268] sm:$0xf] %v2610
    %2739 = vst [vmem:[#allocation3 + $0x274] sm:$0xf] %v2611
    %2740 = vst [vmem:[#allocation3 + $0x280] sm:$0xf] %v2612
    %2741 = vst [vmem:[#allocation3 + $0x28c] sm:$0xf] %v2613
    %2742 = vst [vmem:[#allocation3 + $0x298] sm:$0xf] %v2614
    %2743 = vst [vmem:[#allocation3 + $0x2a4] sm:$0xf] %v2615
    %2744 = vst [vmem:[#allocation3 + $0x2b0] sm:$0xf] %v2616
    %2745 = vst [vmem:[#allocation3 + $0x2bc] sm:$0xf] %v2617
    %2746 = vst [vmem:[#allocation3 + $0x2c8] sm:$0xf] %v2618
    %2747 = vst [vmem:[#allocation3 + $0x2d4] sm:$0xf] %v2619
    %2748 = vst [vmem:[#allocation3 + $0x2e0] sm:$0xf] %v2620
    %2749 = vst [vmem:[#allocation3 + $0x2ec] sm:$0xf] %v2621
    %2750 = vst [vmem:[#allocation3 + $0x2f8] sm:$0xf] %v2622
    %s2751 = scalar_lea.vmem [#allocation2], 48
    %v2752 = vld [vmem:[%s2751] sm:$0xff]
    %v2753 = vld [vmem:[%s2751 + $0x8] sm:$0xff]
    %v2754 = vld [vmem:[%s2751 + $0x18] sm:$0xff]
    %v2755 = vld [vmem:[%s2751 + $0x20] sm:$0xff]
    %v2756 = vld [vmem:[%s2751 + $0x30] sm:$0xff]
    %v2757 = vld [vmem:[%s2751 + $0x38] sm:$0xff]
    %v2758 = vld [vmem:[%s2751 + $0x48] sm:$0xff]
    %v2759 = vld [vmem:[%s2751 + $0x50] sm:$0xff]
    %v2760 = vld [vmem:[%s2751 + $0x60] sm:$0xff]
    %v2761 = vld [vmem:[%s2751 + $0x68] sm:$0xff]
    %v2762 = vld [vmem:[%s2751 + $0x78] sm:$0xff]
    %v2763 = vld [vmem:[%s2751 + $0x80] sm:$0xff]
    %v2764 = vld [vmem:[%s2751 + $0x90] sm:$0xff]
    %v2765 = vld [vmem:[%s2751 + $0x98] sm:$0xff]
    %v2766 = vld [vmem:[%s2751 + $0xa8] sm:$0xff]
    %v2767 = vld [vmem:[%s2751 + $0xb0] sm:$0xff]
    %v2768 = vld [vmem:[%s2751 + $0xc0] sm:$0xff]
    %v2769 = vld [vmem:[%s2751 + $0xc8] sm:$0xff]
    %v2770 = vld [vmem:[%s2751 + $0xd8] sm:$0xff]
    %v2771 = vld [vmem:[%s2751 + $0xe0] sm:$0xff]
    %v2772 = vld [vmem:[%s2751 + $0xf0] sm:$0xff]
    %v2773 = vld [vmem:[%s2751 + $0xf8] sm:$0xff]
    %v2774 = vld [vmem:[%s2751 + $0x108] sm:$0xff]
    %v2775 = vld [vmem:[%s2751 + $0x110] sm:$0xff]
    %v2776 = vld [vmem:[%s2751 + $0x120] sm:$0xff]
    %v2777 = vld [vmem:[%s2751 + $0x128] sm:$0xff]
    %v2778 = vld [vmem:[%s2751 + $0x138] sm:$0xff]
    %v2779 = vld [vmem:[%s2751 + $0x140] sm:$0xff]
    %v2780 = vld [vmem:[%s2751 + $0x150] sm:$0xff]
    %v2781 = vld [vmem:[%s2751 + $0x158] sm:$0xff]
    %v2782 = vld [vmem:[%s2751 + $0x168] sm:$0xff]
    %v2783 = vld [vmem:[%s2751 + $0x170] sm:$0xff]
    %v2784 = vld [vmem:[%s2751 + $0x1b0] sm:$0xff]
    %v2785 = vld [vmem:[%s2751 + $0x1b8] sm:$0xff]
    %v2786 = vld [vmem:[%s2751 + $0x1c8] sm:$0xff]
    %v2787 = vld [vmem:[%s2751 + $0x1d0] sm:$0xff]
    %v2788 = vld [vmem:[%s2751 + $0x1e0] sm:$0xff]
    %v2789 = vld [vmem:[%s2751 + $0x1e8] sm:$0xff]
    %v2790 = vld [vmem:[%s2751 + $0x1f8] sm:$0xff]
    %v2791 = vld [vmem:[%s2751 + $0x200] sm:$0xff]
    %v2792 = vld [vmem:[%s2751 + $0x210] sm:$0xff]
    %v2793 = vld [vmem:[%s2751 + $0x218] sm:$0xff]
    %v2794 = vld [vmem:[%s2751 + $0x228] sm:$0xff]
    %v2795 = vld [vmem:[%s2751 + $0x230] sm:$0xff]
    %v2796 = vld [vmem:[%s2751 + $0x240] sm:$0xff]
    %v2797 = vld [vmem:[%s2751 + $0x248] sm:$0xff]
    %v2798 = vld [vmem:[%s2751 + $0x258] sm:$0xff]
    %v2799 = vld [vmem:[%s2751 + $0x260] sm:$0xff]
    %v2800 = vld [vmem:[%s2751 + $0x270] sm:$0xff]
    %v2801 = vld [vmem:[%s2751 + $0x278] sm:$0xff]
    %v2802 = vld [vmem:[%s2751 + $0x288] sm:$0xff]
    %v2803 = vld [vmem:[%s2751 + $0x290] sm:$0xff]
    %v2804 = vld [vmem:[%s2751 + $0x2a0] sm:$0xff]
    %v2805 = vld [vmem:[%s2751 + $0x2a8] sm:$0xff]
    %v2806 = vld [vmem:[%s2751 + $0x2b8] sm:$0xff]
    %v2807 = vld [vmem:[%s2751 + $0x2c0] sm:$0xff]
    %v2808 = vld [vmem:[%s2751 + $0x2d0] sm:$0xff]
    %v2809 = vld [vmem:[%s2751 + $0x2d8] sm:$0xff]
    %v2810 = vld [vmem:[%s2751 + $0x2e8] sm:$0xff]
    %v2811 = vld [vmem:[%s2751 + $0x2f0] sm:$0xff]
    %v2812 = vld [vmem:[%s2751 + $0x300] sm:$0xff]
    %v2813 = vld [vmem:[%s2751 + $0x308] sm:$0xff]
    %v2814 = vld [vmem:[%s2751 + $0x318] sm:$0xff]
    %v2815 = vld [vmem:[%s2751 + $0x320] sm:$0xff]
    %v2816 = vld [vmem:[%s2751 + $0x1] sm:$0xff]
    %v2817 = vld [vmem:[%s2751 + $0x9] sm:$0xff]
    %v2818 = vld [vmem:[%s2751 + $0x19] sm:$0xff]
    %v2819 = vld [vmem:[%s2751 + $0x21] sm:$0xff]
    %v2820 = vld [vmem:[%s2751 + $0x31] sm:$0xff]
    %v2821 = vld [vmem:[%s2751 + $0x39] sm:$0xff]
    %v2822 = vld [vmem:[%s2751 + $0x49] sm:$0xff]
    %v2823 = vld [vmem:[%s2751 + $0x51] sm:$0xff]
    %v2824 = vld [vmem:[%s2751 + $0x61] sm:$0xff]
    %v2825 = vld [vmem:[%s2751 + $0x69] sm:$0xff]
    %v2826 = vld [vmem:[%s2751 + $0x79] sm:$0xff]
    %v2827 = vld [vmem:[%s2751 + $0x81] sm:$0xff]
    %v2828 = vld [vmem:[%s2751 + $0x91] sm:$0xff]
    %v2829 = vld [vmem:[%s2751 + $0x99] sm:$0xff]
    %v2830 = vld [vmem:[%s2751 + $0xa9] sm:$0xff]
    %v2831 = vld [vmem:[%s2751 + $0xb1] sm:$0xff]
    %v2832 = vld [vmem:[%s2751 + $0xc1] sm:$0xff]
    %v2833 = vld [vmem:[%s2751 + $0xc9] sm:$0xff]
    %v2834 = vld [vmem:[%s2751 + $0xd9] sm:$0xff]
    %v2835 = vld [vmem:[%s2751 + $0xe1] sm:$0xff]
    %v2836 = vld [vmem:[%s2751 + $0xf1] sm:$0xff]
    %v2837 = vld [vmem:[%s2751 + $0xf9] sm:$0xff]
    %v2838 = vld [vmem:[%s2751 + $0x109] sm:$0xff]
    %v2839 = vld [vmem:[%s2751 + $0x111] sm:$0xff]
    %v2840 = vld [vmem:[%s2751 + $0x121] sm:$0xff]
    %v2841 = vld [vmem:[%s2751 + $0x129] sm:$0xff]
    %v2842 = vld [vmem:[%s2751 + $0x139] sm:$0xff]
    %v2843 = vld [vmem:[%s2751 + $0x141] sm:$0xff]
    %v2844 = vld [vmem:[%s2751 + $0x151] sm:$0xff]
    %v2845 = vld [vmem:[%s2751 + $0x159] sm:$0xff]
    %v2846 = vld [vmem:[%s2751 + $0x169] sm:$0xff]
    %v2847 = vld [vmem:[%s2751 + $0x171] sm:$0xff]
    %v2848 = vld [vmem:[%s2751 + $0x1b1] sm:$0xff]
    %v2849 = vld [vmem:[%s2751 + $0x1b9] sm:$0xff]
    %v2850 = vld [vmem:[%s2751 + $0x1c9] sm:$0xff]
    %v2851 = vld [vmem:[%s2751 + $0x1d1] sm:$0xff]
    %v2852 = vld [vmem:[%s2751 + $0x1e1] sm:$0xff]
    %v2853 = vld [vmem:[%s2751 + $0x1e9] sm:$0xff]
    %v2854 = vld [vmem:[%s2751 + $0x1f9] sm:$0xff]
    %v2855 = vld [vmem:[%s2751 + $0x201] sm:$0xff]
    %v2856 = vld [vmem:[%s2751 + $0x211] sm:$0xff]
    %v2857 = vld [vmem:[%s2751 + $0x219] sm:$0xff]
    %v2858 = vld [vmem:[%s2751 + $0x229] sm:$0xff]
    %v2859 = vld [vmem:[%s2751 + $0x231] sm:$0xff]
    %v2860 = vld [vmem:[%s2751 + $0x241] sm:$0xff]
    %v2861 = vld [vmem:[%s2751 + $0x249] sm:$0xff]
    %v2862 = vld [vmem:[%s2751 + $0x259] sm:$0xff]
    %v2863 = vld [vmem:[%s2751 + $0x261] sm:$0xff]
    %v2864 = vld [vmem:[%s2751 + $0x271] sm:$0xff]
    %v2865 = vld [vmem:[%s2751 + $0x279] sm:$0xff]
    %v2866 = vld [vmem:[%s2751 + $0x289] sm:$0xff]
    %v2867 = vld [vmem:[%s2751 + $0x291] sm:$0xff]
    %v2868 = vld [vmem:[%s2751 + $0x2a1] sm:$0xff]
    %v2869 = vld [vmem:[%s2751 + $0x2a9] sm:$0xff]
    %v2870 = vld [vmem:[%s2751 + $0x2b9] sm:$0xff]
    %v2871 = vld [vmem:[%s2751 + $0x2c1] sm:$0xff]
    %v2872 = vld [vmem:[%s2751 + $0x2d1] sm:$0xff]
    %v2873 = vld [vmem:[%s2751 + $0x2d9] sm:$0xff]
    %v2874 = vld [vmem:[%s2751 + $0x2e9] sm:$0xff]
    %v2875 = vld [vmem:[%s2751 + $0x2f1] sm:$0xff]
    %v2876 = vld [vmem:[%s2751 + $0x301] sm:$0xff]
    %v2877 = vld [vmem:[%s2751 + $0x309] sm:$0xff]
    %v2878 = vld [vmem:[%s2751 + $0x319] sm:$0xff]
    %v2879 = vld [vmem:[%s2751 + $0x321] sm:$0xff]
    %v2880 = vld [vmem:[%s2751 + $0x2] sm:$0xff]
    %v2881 = vld [vmem:[%s2751 + $0xa] sm:$0xff]
    %v2882 = vld [vmem:[%s2751 + $0x1a] sm:$0xff]
    %v2883 = vld [vmem:[%s2751 + $0x22] sm:$0xff]
    %v2884 = vld [vmem:[%s2751 + $0x32] sm:$0xff]
    %v2885 = vld [vmem:[%s2751 + $0x3a] sm:$0xff]
    %v2886 = vld [vmem:[%s2751 + $0x4a] sm:$0xff]
    %v2887 = vld [vmem:[%s2751 + $0x52] sm:$0xff]
    %v2888 = vld [vmem:[%s2751 + $0x62] sm:$0xff]
    %v2889 = vld [vmem:[%s2751 + $0x6a] sm:$0xff]
    %v2890 = vld [vmem:[%s2751 + $0x7a] sm:$0xff]
    %v2891 = vld [vmem:[%s2751 + $0x82] sm:$0xff]
    %v2892 = vld [vmem:[%s2751 + $0x92] sm:$0xff]
    %v2893 = vld [vmem:[%s2751 + $0x9a] sm:$0xff]
    %v2894 = vld [vmem:[%s2751 + $0xaa] sm:$0xff]
    %v2895 = vld [vmem:[%s2751 + $0xb2] sm:$0xff]
    %v2896 = vld [vmem:[%s2751 + $0xc2] sm:$0xff]
    %v2897 = vld [vmem:[%s2751 + $0xca] sm:$0xff]
    %v2898 = vld [vmem:[%s2751 + $0xda] sm:$0xff]
    %v2899 = vld [vmem:[%s2751 + $0xe2] sm:$0xff]
    %v2900 = vld [vmem:[%s2751 + $0xf2] sm:$0xff]
    %v2901 = vld [vmem:[%s2751 + $0xfa] sm:$0xff]
    %v2902 = vld [vmem:[%s2751 + $0x10a] sm:$0xff]
    %v2903 = vld [vmem:[%s2751 + $0x112] sm:$0xff]
    %v2904 = vld [vmem:[%s2751 + $0x122] sm:$0xff]
    %v2905 = vld [vmem:[%s2751 + $0x12a] sm:$0xff]
    %v2906 = vld [vmem:[%s2751 + $0x13a] sm:$0xff]
    %v2907 = vld [vmem:[%s2751 + $0x142] sm:$0xff]
    %v2908 = vld [vmem:[%s2751 + $0x152] sm:$0xff]
    %v2909 = vld [vmem:[%s2751 + $0x15a] sm:$0xff]
    %v2910 = vld [vmem:[%s2751 + $0x16a] sm:$0xff]
    %v2911 = vld [vmem:[%s2751 + $0x172] sm:$0xff]
    %v2912 = vld [vmem:[%s2751 + $0x1b2] sm:$0xff]
    %v2913 = vld [vmem:[%s2751 + $0x1ba] sm:$0xff]
    %v2914 = vld [vmem:[%s2751 + $0x1ca] sm:$0xff]
    %v2915 = vld [vmem:[%s2751 + $0x1d2] sm:$0xff]
    %v2916 = vld [vmem:[%s2751 + $0x1e2] sm:$0xff]
    %v2917 = vld [vmem:[%s2751 + $0x1ea] sm:$0xff]
    %v2918 = vld [vmem:[%s2751 + $0x1fa] sm:$0xff]
    %v2919 = vld [vmem:[%s2751 + $0x202] sm:$0xff]
    %v2920 = vld [vmem:[%s2751 + $0x212] sm:$0xff]
    %v2921 = vld [vmem:[%s2751 + $0x21a] sm:$0xff]
    %v2922 = vld [vmem:[%s2751 + $0x22a] sm:$0xff]
    %v2923 = vld [vmem:[%s2751 + $0x232] sm:$0xff]
    %v2924 = vld [vmem:[%s2751 + $0x242] sm:$0xff]
    %v2925 = vld [vmem:[%s2751 + $0x24a] sm:$0xff]
    %v2926 = vld [vmem:[%s2751 + $0x25a] sm:$0xff]
    %v2927 = vld [vmem:[%s2751 + $0x262] sm:$0xff]
    %v2928 = vld [vmem:[%s2751 + $0x272] sm:$0xff]
    %v2929 = vld [vmem:[%s2751 + $0x27a] sm:$0xff]
    %v2930 = vld [vmem:[%s2751 + $0x28a] sm:$0xff]
    %v2931 = vld [vmem:[%s2751 + $0x292] sm:$0xff]
    %v2932 = vld [vmem:[%s2751 + $0x2a2] sm:$0xff]
    %v2933 = vld [vmem:[%s2751 + $0x2aa] sm:$0xff]
    %v2934 = vld [vmem:[%s2751 + $0x2ba] sm:$0xff]
    %v2935 = vld [vmem:[%s2751 + $0x2c2] sm:$0xff]
    %v2936 = vld [vmem:[%s2751 + $0x2d2] sm:$0xff]
    %v2937 = vld [vmem:[%s2751 + $0x2da] sm:$0xff]
    %v2938 = vld [vmem:[%s2751 + $0x2ea] sm:$0xff]
    %v2939 = vld [vmem:[%s2751 + $0x2f2] sm:$0xff]
    %v2940 = vld [vmem:[%s2751 + $0x302] sm:$0xff]
    %v2941 = vld [vmem:[%s2751 + $0x30a] sm:$0xff]
    %v2942 = vld [vmem:[%s2751 + $0x31a] sm:$0xff]
    %v2943 = vld [vmem:[%s2751 + $0x322] sm:$0xff]
    %3008 = vrot.lane.b32.xlu0 %v2816, 32
    %v3009 = vpop.permute.xlu0 %3008
    %3010 = vrot.lane.b32.xlu0 %v2817, 32
    %v3011 = vpop.permute.xlu0 %3010
    %3012 = vrot.lane.b32.xlu0 %v2818, 32
    %v3013 = vpop.permute.xlu0 %3012
    %3014 = vrot.lane.b32.xlu0 %v2819, 32
    %v3015 = vpop.permute.xlu0 %3014
    %3016 = vrot.lane.b32.xlu0 %v2820, 32
    %v3017 = vpop.permute.xlu0 %3016
    %3018 = vrot.lane.b32.xlu0 %v2821, 32
    %v3019 = vpop.permute.xlu0 %3018
    %3020 = vrot.lane.b32.xlu0 %v2822, 32
    %v3021 = vpop.permute.xlu0 %3020
    %3022 = vrot.lane.b32.xlu0 %v2823, 32
    %v3023 = vpop.permute.xlu0 %3022
    %3024 = vrot.lane.b32.xlu0 %v2824, 32
    %v3025 = vpop.permute.xlu0 %3024
    %3026 = vrot.lane.b32.xlu0 %v2825, 32
    %v3027 = vpop.permute.xlu0 %3026
    %3028 = vrot.lane.b32.xlu0 %v2826, 32
    %v3029 = vpop.permute.xlu0 %3028
    %3030 = vrot.lane.b32.xlu0 %v2827, 32
    %v3031 = vpop.permute.xlu0 %3030
    %3032 = vrot.lane.b32.xlu0 %v2828, 32
    %v3033 = vpop.permute.xlu0 %3032
    %3034 = vrot.lane.b32.xlu0 %v2829, 32
    %v3035 = vpop.permute.xlu0 %3034
    %3036 = vrot.lane.b32.xlu0 %v2830, 32
    %v3037 = vpop.permute.xlu0 %3036
    %3038 = vrot.lane.b32.xlu0 %v2831, 32
    %v3039 = vpop.permute.xlu0 %3038
    %3040 = vrot.lane.b32.xlu0 %v2832, 32
    %v3041 = vpop.permute.xlu0 %3040
    %3042 = vrot.lane.b32.xlu0 %v2833, 32
    %v3043 = vpop.permute.xlu0 %3042
    %3044 = vrot.lane.b32.xlu0 %v2834, 32
    %v3045 = vpop.permute.xlu0 %3044
    %3046 = vrot.lane.b32.xlu0 %v2835, 32
    %v3047 = vpop.permute.xlu0 %3046
    %3048 = vrot.lane.b32.xlu0 %v2836, 32
    %v3049 = vpop.permute.xlu0 %3048
    %3050 = vrot.lane.b32.xlu0 %v2837, 32
    %v3051 = vpop.permute.xlu0 %3050
    %3052 = vrot.lane.b32.xlu0 %v2838, 32
    %v3053 = vpop.permute.xlu0 %3052
    %3054 = vrot.lane.b32.xlu0 %v2839, 32
    %v3055 = vpop.permute.xlu0 %3054
    %3056 = vrot.lane.b32.xlu0 %v2840, 32
    %v3057 = vpop.permute.xlu0 %3056
    %3058 = vrot.lane.b32.xlu0 %v2841, 32
    %v3059 = vpop.permute.xlu0 %3058
    %3060 = vrot.lane.b32.xlu0 %v2842, 32
    %v3061 = vpop.permute.xlu0 %3060
    %3062 = vrot.lane.b32.xlu0 %v2843, 32
    %v3063 = vpop.permute.xlu0 %3062
    %3064 = vrot.lane.b32.xlu0 %v2844, 32
    %v3065 = vpop.permute.xlu0 %3064
    %3066 = vrot.lane.b32.xlu0 %v2845, 32
    %v3067 = vpop.permute.xlu0 %3066
    %3068 = vrot.lane.b32.xlu0 %v2846, 32
    %v3069 = vpop.permute.xlu0 %3068
    %3070 = vrot.lane.b32.xlu0 %v2847, 32
    %v3071 = vpop.permute.xlu0 %3070
    %3072 = vrot.lane.b32.xlu0 %v2848, 32
    %v3073 = vpop.permute.xlu0 %3072
    %3074 = vrot.lane.b32.xlu0 %v2849, 32
    %v3075 = vpop.permute.xlu0 %3074
    %3076 = vrot.lane.b32.xlu0 %v2850, 32
    %v3077 = vpop.permute.xlu0 %3076
    %3078 = vrot.lane.b32.xlu0 %v2851, 32
    %v3079 = vpop.permute.xlu0 %3078
    %3080 = vrot.lane.b32.xlu0 %v2852, 32
    %v3081 = vpop.permute.xlu0 %3080
    %3082 = vrot.lane.b32.xlu0 %v2853, 32
    %v3083 = vpop.permute.xlu0 %3082
    %3084 = vrot.lane.b32.xlu0 %v2854, 32
    %v3085 = vpop.permute.xlu0 %3084
    %3086 = vrot.lane.b32.xlu0 %v2855, 32
    %v3087 = vpop.permute.xlu0 %3086
    %3088 = vrot.lane.b32.xlu0 %v2856, 32
    %v3089 = vpop.permute.xlu0 %3088
    %3090 = vrot.lane.b32.xlu0 %v2857, 32
    %v3091 = vpop.permute.xlu0 %3090
    %3092 = vrot.lane.b32.xlu0 %v2858, 32
    %v3093 = vpop.permute.xlu0 %3092
    %3094 = vrot.lane.b32.xlu0 %v2859, 32
    %v3095 = vpop.permute.xlu0 %3094
    %3096 = vrot.lane.b32.xlu0 %v2860, 32
    %v3097 = vpop.permute.xlu0 %3096
    %3098 = vrot.lane.b32.xlu0 %v2861, 32
    %v3099 = vpop.permute.xlu0 %3098
    %3100 = vrot.lane.b32.xlu0 %v2862, 32
    %v3101 = vpop.permute.xlu0 %3100
    %3102 = vrot.lane.b32.xlu0 %v2863, 32
    %v3103 = vpop.permute.xlu0 %3102
    %3104 = vrot.lane.b32.xlu0 %v2864, 32
    %v3105 = vpop.permute.xlu0 %3104
    %3106 = vrot.lane.b32.xlu0 %v2865, 32
    %v3107 = vpop.permute.xlu0 %3106
    %3108 = vrot.lane.b32.xlu0 %v2866, 32
    %v3109 = vpop.permute.xlu0 %3108
    %3110 = vrot.lane.b32.xlu0 %v2867, 32
    %v3111 = vpop.permute.xlu0 %3110
    %3112 = vrot.lane.b32.xlu0 %v2868, 32
    %v3113 = vpop.permute.xlu0 %3112
    %3114 = vrot.lane.b32.xlu0 %v2869, 32
    %v3115 = vpop.permute.xlu0 %3114
    %3116 = vrot.lane.b32.xlu0 %v2870, 32
    %v3117 = vpop.permute.xlu0 %3116
    %3118 = vrot.lane.b32.xlu0 %v2871, 32
    %v3119 = vpop.permute.xlu0 %3118
    %3120 = vrot.lane.b32.xlu0 %v2872, 32
    %v3121 = vpop.permute.xlu0 %3120
    %3122 = vrot.lane.b32.xlu0 %v2873, 32
    %v3123 = vpop.permute.xlu0 %3122
    %3124 = vrot.lane.b32.xlu0 %v2874, 32
    %v3125 = vpop.permute.xlu0 %3124
    %3126 = vrot.lane.b32.xlu0 %v2875, 32
    %v3127 = vpop.permute.xlu0 %3126
    %3128 = vrot.lane.b32.xlu0 %v2876, 32
    %v3129 = vpop.permute.xlu0 %3128
    %3130 = vrot.lane.b32.xlu0 %v2877, 32
    %v3131 = vpop.permute.xlu0 %3130
    %3132 = vrot.lane.b32.xlu0 %v2878, 32
    %v3133 = vpop.permute.xlu0 %3132
    %3134 = vrot.lane.b32.xlu0 %v2879, 32
    %v3135 = vpop.permute.xlu0 %3134
    %3264 = vrot.lane.b32.xlu0 %v2880, 64
    %v3265 = vpop.permute.xlu0 %3264
    %3266 = vrot.lane.b32.xlu0 %v2881, 64
    %v3267 = vpop.permute.xlu0 %3266
    %3268 = vrot.lane.b32.xlu0 %v2882, 64
    %v3269 = vpop.permute.xlu0 %3268
    %3270 = vrot.lane.b32.xlu0 %v2883, 64
    %v3271 = vpop.permute.xlu0 %3270
    %3272 = vrot.lane.b32.xlu0 %v2884, 64
    %v3273 = vpop.permute.xlu0 %3272
    %3274 = vrot.lane.b32.xlu0 %v2885, 64
    %v3275 = vpop.permute.xlu0 %3274
    %3276 = vrot.lane.b32.xlu0 %v2886, 64
    %v3277 = vpop.permute.xlu0 %3276
    %3278 = vrot.lane.b32.xlu0 %v2887, 64
    %v3279 = vpop.permute.xlu0 %3278
    %3280 = vrot.lane.b32.xlu0 %v2888, 64
    %v3281 = vpop.permute.xlu0 %3280
    %3282 = vrot.lane.b32.xlu0 %v2889, 64
    %v3283 = vpop.permute.xlu0 %3282
    %3284 = vrot.lane.b32.xlu0 %v2890, 64
    %v3285 = vpop.permute.xlu0 %3284
    %3286 = vrot.lane.b32.xlu0 %v2891, 64
    %v3287 = vpop.permute.xlu0 %3286
    %3288 = vrot.lane.b32.xlu0 %v2892, 64
    %v3289 = vpop.permute.xlu0 %3288
    %3290 = vrot.lane.b32.xlu0 %v2893, 64
    %v3291 = vpop.permute.xlu0 %3290
    %3292 = vrot.lane.b32.xlu0 %v2894, 64
    %v3293 = vpop.permute.xlu0 %3292
    %3294 = vrot.lane.b32.xlu0 %v2895, 64
    %v3295 = vpop.permute.xlu0 %3294
    %3296 = vrot.lane.b32.xlu0 %v2896, 64
    %v3297 = vpop.permute.xlu0 %3296
    %3298 = vrot.lane.b32.xlu0 %v2897, 64
    %v3299 = vpop.permute.xlu0 %3298
    %3300 = vrot.lane.b32.xlu0 %v2898, 64
    %v3301 = vpop.permute.xlu0 %3300
    %3302 = vrot.lane.b32.xlu0 %v2899, 64
    %v3303 = vpop.permute.xlu0 %3302
    %3304 = vrot.lane.b32.xlu0 %v2900, 64
    %v3305 = vpop.permute.xlu0 %3304
    %3306 = vrot.lane.b32.xlu0 %v2901, 64
    %v3307 = vpop.permute.xlu0 %3306
    %3308 = vrot.lane.b32.xlu0 %v2902, 64
    %v3309 = vpop.permute.xlu0 %3308
    %3310 = vrot.lane.b32.xlu0 %v2903, 64
    %v3311 = vpop.permute.xlu0 %3310
    %3312 = vrot.lane.b32.xlu0 %v2904, 64
    %v3313 = vpop.permute.xlu0 %3312
    %3314 = vrot.lane.b32.xlu0 %v2905, 64
    %v3315 = vpop.permute.xlu0 %3314
    %3316 = vrot.lane.b32.xlu0 %v2906, 64
    %v3317 = vpop.permute.xlu0 %3316
    %3318 = vrot.lane.b32.xlu0 %v2907, 64
    %v3319 = vpop.permute.xlu0 %3318
    %3320 = vrot.lane.b32.xlu0 %v2908, 64
    %v3321 = vpop.permute.xlu0 %3320
    %3322 = vrot.lane.b32.xlu0 %v2909, 64
    %v3323 = vpop.permute.xlu0 %3322
    %3324 = vrot.lane.b32.xlu0 %v2910, 64
    %v3325 = vpop.permute.xlu0 %3324
    %3326 = vrot.lane.b32.xlu0 %v2911, 64
    %v3327 = vpop.permute.xlu0 %3326
    %3328 = vrot.lane.b32.xlu0 %v2912, 64
    %v3329 = vpop.permute.xlu0 %3328
    %3330 = vrot.lane.b32.xlu0 %v2913, 64
    %v3331 = vpop.permute.xlu0 %3330
    %3332 = vrot.lane.b32.xlu0 %v2914, 64
    %v3333 = vpop.permute.xlu0 %3332
    %3334 = vrot.lane.b32.xlu0 %v2915, 64
    %v3335 = vpop.permute.xlu0 %3334
    %3336 = vrot.lane.b32.xlu0 %v2916, 64
    %v3337 = vpop.permute.xlu0 %3336
    %3338 = vrot.lane.b32.xlu0 %v2917, 64
    %v3339 = vpop.permute.xlu0 %3338
    %3340 = vrot.lane.b32.xlu0 %v2918, 64
    %v3341 = vpop.permute.xlu0 %3340
    %3342 = vrot.lane.b32.xlu0 %v2919, 64
    %v3343 = vpop.permute.xlu0 %3342
    %3344 = vrot.lane.b32.xlu0 %v2920, 64
    %v3345 = vpop.permute.xlu0 %3344
    %3346 = vrot.lane.b32.xlu0 %v2921, 64
    %v3347 = vpop.permute.xlu0 %3346
    %3348 = vrot.lane.b32.xlu0 %v2922, 64
    %v3349 = vpop.permute.xlu0 %3348
    %3350 = vrot.lane.b32.xlu0 %v2923, 64
    %v3351 = vpop.permute.xlu0 %3350
    %3352 = vrot.lane.b32.xlu0 %v2924, 64
    %v3353 = vpop.permute.xlu0 %3352
    %3354 = vrot.lane.b32.xlu0 %v2925, 64
    %v3355 = vpop.permute.xlu0 %3354
    %3356 = vrot.lane.b32.xlu0 %v2926, 64
    %v3357 = vpop.permute.xlu0 %3356
    %3358 = vrot.lane.b32.xlu0 %v2927, 64
    %v3359 = vpop.permute.xlu0 %3358
    %3360 = vrot.lane.b32.xlu0 %v2928, 64
    %v3361 = vpop.permute.xlu0 %3360
    %3362 = vrot.lane.b32.xlu0 %v2929, 64
    %v3363 = vpop.permute.xlu0 %3362
    %3364 = vrot.lane.b32.xlu0 %v2930, 64
    %v3365 = vpop.permute.xlu0 %3364
    %3366 = vrot.lane.b32.xlu0 %v2931, 64
    %v3367 = vpop.permute.xlu0 %3366
    %3368 = vrot.lane.b32.xlu0 %v2932, 64
    %v3369 = vpop.permute.xlu0 %3368
    %3370 = vrot.lane.b32.xlu0 %v2933, 64
    %v3371 = vpop.permute.xlu0 %3370
    %3372 = vrot.lane.b32.xlu0 %v2934, 64
    %v3373 = vpop.permute.xlu0 %3372
    %3374 = vrot.lane.b32.xlu0 %v2935, 64
    %v3375 = vpop.permute.xlu0 %3374
    %3376 = vrot.lane.b32.xlu0 %v2936, 64
    %v3377 = vpop.permute.xlu0 %3376
    %3378 = vrot.lane.b32.xlu0 %v2937, 64
    %v3379 = vpop.permute.xlu0 %3378
    %3380 = vrot.lane.b32.xlu0 %v2938, 64
    %v3381 = vpop.permute.xlu0 %3380
    %3382 = vrot.lane.b32.xlu0 %v2939, 64
    %v3383 = vpop.permute.xlu0 %3382
    %3384 = vrot.lane.b32.xlu0 %v2940, 64
    %v3385 = vpop.permute.xlu0 %3384
    %3386 = vrot.lane.b32.xlu0 %v2941, 64
    %v3387 = vpop.permute.xlu0 %3386
    %3388 = vrot.lane.b32.xlu0 %v2942, 64
    %v3389 = vpop.permute.xlu0 %3388
    %3390 = vrot.lane.b32.xlu0 %v2943, 64
    %v3391 = vpop.permute.xlu0 %3390
    %v3456 = vsel %vm1020, %v2752, %v3009
    %v3457 = vsel %vm1020, %v2753, %v3011
    %v3458 = vsel %vm1020, %v2754, %v3013
    %v3459 = vsel %vm1020, %v2755, %v3015
    %v3460 = vsel %vm1020, %v2756, %v3017
    %v3461 = vsel %vm1020, %v2757, %v3019
    %v3462 = vsel %vm1020, %v2758, %v3021
    %v3463 = vsel %vm1020, %v2759, %v3023
    %v3464 = vsel %vm1020, %v2760, %v3025
    %v3465 = vsel %vm1020, %v2761, %v3027
    %v3466 = vsel %vm1020, %v2762, %v3029
    %v3467 = vsel %vm1020, %v2763, %v3031
    %v3468 = vsel %vm1020, %v2764, %v3033
    %v3469 = vsel %vm1020, %v2765, %v3035
    %v3470 = vsel %vm1020, %v2766, %v3037
    %v3471 = vsel %vm1020, %v2767, %v3039
    %v3472 = vsel %vm1020, %v2768, %v3041
    %v3473 = vsel %vm1020, %v2769, %v3043
    %v3474 = vsel %vm1020, %v2770, %v3045
    %v3475 = vsel %vm1020, %v2771, %v3047
    %v3476 = vsel %vm1020, %v2772, %v3049
    %v3477 = vsel %vm1020, %v2773, %v3051
    %v3478 = vsel %vm1020, %v2774, %v3053
    %v3479 = vsel %vm1020, %v2775, %v3055
    %v3480 = vsel %vm1020, %v2776, %v3057
    %v3481 = vsel %vm1020, %v2777, %v3059
    %v3482 = vsel %vm1020, %v2778, %v3061
    %v3483 = vsel %vm1020, %v2779, %v3063
    %v3484 = vsel %vm1020, %v2780, %v3065
    %v3485 = vsel %vm1020, %v2781, %v3067
    %v3486 = vsel %vm1020, %v2782, %v3069
    %v3487 = vsel %vm1020, %v2783, %v3071
    %v3488 = vsel %vm1020, %v2784, %v3073
    %v3489 = vsel %vm1020, %v2785, %v3075
    %v3490 = vsel %vm1020, %v2786, %v3077
    %v3491 = vsel %vm1020, %v2787, %v3079
    %v3492 = vsel %vm1020, %v2788, %v3081
    %v3493 = vsel %vm1020, %v2789, %v3083
    %v3494 = vsel %vm1020, %v2790, %v3085
    %v3495 = vsel %vm1020, %v2791, %v3087
    %v3496 = vsel %vm1020, %v2792, %v3089
    %v3497 = vsel %vm1020, %v2793, %v3091
    %v3498 = vsel %vm1020, %v2794, %v3093
    %v3499 = vsel %vm1020, %v2795, %v3095
    %v3500 = vsel %vm1020, %v2796, %v3097
    %v3501 = vsel %vm1020, %v2797, %v3099
    %v3502 = vsel %vm1020, %v2798, %v3101
    %v3503 = vsel %vm1020, %v2799, %v3103
    %v3504 = vsel %vm1020, %v2800, %v3105
    %v3505 = vsel %vm1020, %v2801, %v3107
    %v3506 = vsel %vm1020, %v2802, %v3109
    %v3507 = vsel %vm1020, %v2803, %v3111
    %v3508 = vsel %vm1020, %v2804, %v3113
    %v3509 = vsel %vm1020, %v2805, %v3115
    %v3510 = vsel %vm1020, %v2806, %v3117
    %v3511 = vsel %vm1020, %v2807, %v3119
    %v3512 = vsel %vm1020, %v2808, %v3121
    %v3513 = vsel %vm1020, %v2809, %v3123
    %v3514 = vsel %vm1020, %v2810, %v3125
    %v3515 = vsel %vm1020, %v2811, %v3127
    %v3516 = vsel %vm1020, %v2812, %v3129
    %v3517 = vsel %vm1020, %v2813, %v3131
    %v3518 = vsel %vm1020, %v2814, %v3133
    %v3519 = vsel %vm1020, %v2815, %v3135
    %v3520 = vsel %vm1085, %v3456, %v3265
    %v3521 = vsel %vm1085, %v3457, %v3267
    %v3522 = vsel %vm1085, %v3458, %v3269
    %v3523 = vsel %vm1085, %v3459, %v3271
    %v3524 = vsel %vm1085, %v3460, %v3273
    %v3525 = vsel %vm1085, %v3461, %v3275
    %v3526 = vsel %vm1085, %v3462, %v3277
    %v3527 = vsel %vm1085, %v3463, %v3279
    %v3528 = vsel %vm1085, %v3464, %v3281
    %v3529 = vsel %vm1085, %v3465, %v3283
    %v3530 = vsel %vm1085, %v3466, %v3285
    %v3531 = vsel %vm1085, %v3467, %v3287
    %v3532 = vsel %vm1085, %v3468, %v3289
    %v3533 = vsel %vm1085, %v3469, %v3291
    %v3534 = vsel %vm1085, %v3470, %v3293
    %v3535 = vsel %vm1085, %v3471, %v3295
    %v3536 = vsel %vm1085, %v3472, %v3297
    %v3537 = vsel %vm1085, %v3473, %v3299
    %v3538 = vsel %vm1085, %v3474, %v3301
    %v3539 = vsel %vm1085, %v3475, %v3303
    %v3540 = vsel %vm1085, %v3476, %v3305
    %v3541 = vsel %vm1085, %v3477, %v3307
    %v3542 = vsel %vm1085, %v3478, %v3309
    %v3543 = vsel %vm1085, %v3479, %v3311
    %v3544 = vsel %vm1085, %v3480, %v3313
    %v3545 = vsel %vm1085, %v3481, %v3315
    %v3546 = vsel %vm1085, %v3482, %v3317
    %v3547 = vsel %vm1085, %v3483, %v3319
    %v3548 = vsel %vm1085, %v3484, %v3321
    %v3549 = vsel %vm1085, %v3485, %v3323
    %v3550 = vsel %vm1085, %v3486, %v3325
    %v3551 = vsel %vm1085, %v3487, %v3327
    %v3552 = vsel %vm1085, %v3488, %v3329
    %v3553 = vsel %vm1085, %v3489, %v3331
    %v3554 = vsel %vm1085, %v3490, %v3333
    %v3555 = vsel %vm1085, %v3491, %v3335
    %v3556 = vsel %vm1085, %v3492, %v3337
    %v3557 = vsel %vm1085, %v3493, %v3339
    %v3558 = vsel %vm1085, %v3494, %v3341
    %v3559 = vsel %vm1085, %v3495, %v3343
    %v3560 = vsel %vm1085, %v3496, %v3345
    %v3561 = vsel %vm1085, %v3497, %v3347
    %v3562 = vsel %vm1085, %v3498, %v3349
    %v3563 = vsel %vm1085, %v3499, %v3351
    %v3564 = vsel %vm1085, %v3500, %v3353
    %v3565 = vsel %vm1085, %v3501, %v3355
    %v3566 = vsel %vm1085, %v3502, %v3357
    %v3567 = vsel %vm1085, %v3503, %v3359
    %v3568 = vsel %vm1085, %v3504, %v3361
    %v3569 = vsel %vm1085, %v3505, %v3363
    %v3570 = vsel %vm1085, %v3506, %v3365
    %v3571 = vsel %vm1085, %v3507, %v3367
    %v3572 = vsel %vm1085, %v3508, %v3369
    %v3573 = vsel %vm1085, %v3509, %v3371
    %v3574 = vsel %vm1085, %v3510, %v3373
    %v3575 = vsel %vm1085, %v3511, %v3375
    %v3576 = vsel %vm1085, %v3512, %v3377
    %v3577 = vsel %vm1085, %v3513, %v3379
    %v3578 = vsel %vm1085, %v3514, %v3381
    %v3579 = vsel %vm1085, %v3515, %v3383
    %v3580 = vsel %vm1085, %v3516, %v3385
    %v3581 = vsel %vm1085, %v3517, %v3387
    %v3582 = vsel %vm1085, %v3518, %v3389
    %v3583 = vsel %vm1085, %v3519, %v3391
    %v3584 = vsel %vm1150, %v3520, 0.0
    %v3585 = vsel %vm1150, %v3521, 0.0
    %v3586 = vsel %vm1150, %v3522, 0.0
    %v3587 = vsel %vm1150, %v3523, 0.0
    %v3588 = vsel %vm1150, %v3524, 0.0
    %v3589 = vsel %vm1150, %v3525, 0.0
    %v3590 = vsel %vm1150, %v3526, 0.0
    %v3591 = vsel %vm1150, %v3527, 0.0
    %v3592 = vsel %vm1150, %v3528, 0.0
    %v3593 = vsel %vm1150, %v3529, 0.0
    %v3594 = vsel %vm1150, %v3530, 0.0
    %v3595 = vsel %vm1150, %v3531, 0.0
    %v3596 = vsel %vm1150, %v3532, 0.0
    %v3597 = vsel %vm1150, %v3533, 0.0
    %v3598 = vsel %vm1150, %v3534, 0.0
    %v3599 = vsel %vm1150, %v3535, 0.0
    %v3600 = vsel %vm1150, %v3536, 0.0
    %v3601 = vsel %vm1150, %v3537, 0.0
    %v3602 = vsel %vm1150, %v3538, 0.0
    %v3603 = vsel %vm1150, %v3539, 0.0
    %v3604 = vsel %vm1150, %v3540, 0.0
    %v3605 = vsel %vm1150, %v3541, 0.0
    %v3606 = vsel %vm1150, %v3542, 0.0
    %v3607 = vsel %vm1150, %v3543, 0.0
    %v3608 = vsel %vm1150, %v3544, 0.0
    %v3609 = vsel %vm1150, %v3545, 0.0
    %v3610 = vsel %vm1150, %v3546, 0.0
    %v3611 = vsel %vm1150, %v3547, 0.0
    %v3612 = vsel %vm1150, %v3548, 0.0
    %v3613 = vsel %vm1150, %v3549, 0.0
    %v3614 = vsel %vm1150, %v3550, 0.0
    %v3615 = vsel %vm1150, %v3551, 0.0
    %v3616 = vsel %vm1150, %v3552, 0.0
    %v3617 = vsel %vm1150, %v3553, 0.0
    %v3618 = vsel %vm1150, %v3554, 0.0
    %v3619 = vsel %vm1150, %v3555, 0.0
    %v3620 = vsel %vm1150, %v3556, 0.0
    %v3621 = vsel %vm1150, %v3557, 0.0
    %v3622 = vsel %vm1150, %v3558, 0.0
    %v3623 = vsel %vm1150, %v3559, 0.0
    %v3624 = vsel %vm1150, %v3560, 0.0
    %v3625 = vsel %vm1150, %v3561, 0.0
    %v3626 = vsel %vm1150, %v3562, 0.0
    %v3627 = vsel %vm1150, %v3563, 0.0
    %v3628 = vsel %vm1150, %v3564, 0.0
    %v3629 = vsel %vm1150, %v3565, 0.0
    %v3630 = vsel %vm1150, %v3566, 0.0
    %v3631 = vsel %vm1150, %v3567, 0.0
    %v3632 = vsel %vm1150, %v3568, 0.0
    %v3633 = vsel %vm1150, %v3569, 0.0
    %v3634 = vsel %vm1150, %v3570, 0.0
    %v3635 = vsel %vm1150, %v3571, 0.0
    %v3636 = vsel %vm1150, %v3572, 0.0
    %v3637 = vsel %vm1150, %v3573, 0.0
    %v3638 = vsel %vm1150, %v3574, 0.0
    %v3639 = vsel %vm1150, %v3575, 0.0
    %v3640 = vsel %vm1150, %v3576, 0.0
    %v3641 = vsel %vm1150, %v3577, 0.0
    %v3642 = vsel %vm1150, %v3578, 0.0
    %v3643 = vsel %vm1150, %v3579, 0.0
    %v3644 = vsel %vm1150, %v3580, 0.0
    %v3645 = vsel %vm1150, %v3581, 0.0
    %v3646 = vsel %vm1150, %v3582, 0.0
    %v3647 = vsel %vm1150, %v3583, 0.0
    %v3648 = vpack.c.bf16 %v3585, %v3584
    %v3649 = vpack.c.bf16 %v3587, %v3586
    %v3650 = vpack.c.bf16 %v3589, %v3588
    %v3651 = vpack.c.bf16 %v3591, %v3590
    %v3652 = vpack.c.bf16 %v3593, %v3592
    %v3653 = vpack.c.bf16 %v3595, %v3594
    %v3654 = vpack.c.bf16 %v3597, %v3596
    %v3655 = vpack.c.bf16 %v3599, %v3598
    %v3656 = vpack.c.bf16 %v3601, %v3600
    %v3657 = vpack.c.bf16 %v3603, %v3602
    %v3658 = vpack.c.bf16 %v3605, %v3604
    %v3659 = vpack.c.bf16 %v3607, %v3606
    %v3660 = vpack.c.bf16 %v3609, %v3608
    %v3661 = vpack.c.bf16 %v3611, %v3610
    %v3662 = vpack.c.bf16 %v3613, %v3612
    %v3663 = vpack.c.bf16 %v3615, %v3614
    %v3664 = vpack.c.bf16 %v3617, %v3616
    %v3665 = vpack.c.bf16 %v3619, %v3618
    %v3666 = vpack.c.bf16 %v3621, %v3620
    %v3667 = vpack.c.bf16 %v3623, %v3622
    %v3668 = vpack.c.bf16 %v3625, %v3624
    %v3669 = vpack.c.bf16 %v3627, %v3626
    %v3670 = vpack.c.bf16 %v3629, %v3628
    %v3671 = vpack.c.bf16 %v3631, %v3630
    %v3672 = vpack.c.bf16 %v3633, %v3632
    %v3673 = vpack.c.bf16 %v3635, %v3634
    %v3674 = vpack.c.bf16 %v3637, %v3636
    %v3675 = vpack.c.bf16 %v3639, %v3638
    %v3676 = vpack.c.bf16 %v3641, %v3640
    %v3677 = vpack.c.bf16 %v3643, %v3642
    %v3678 = vpack.c.bf16 %v3645, %v3644
    %v3679 = vpack.c.bf16 %v3647, %v3646
    %v3712 = vunpack.c.l.b16 %v3648
    %v3713 = vunpack.c.h.b16 %v3648
    %v3714 = vunpack.c.l.b16 %v3649
    %v3715 = vunpack.c.h.b16 %v3649
    %v3716 = vunpack.c.l.b16 %v3650
    %v3717 = vunpack.c.h.b16 %v3650
    %v3718 = vunpack.c.l.b16 %v3651
    %v3719 = vunpack.c.h.b16 %v3651
    %v3720 = vunpack.c.l.b16 %v3652
    %v3721 = vunpack.c.h.b16 %v3652
    %v3722 = vunpack.c.l.b16 %v3653
    %v3723 = vunpack.c.h.b16 %v3653
    %v3724 = vunpack.c.l.b16 %v3654
    %v3725 = vunpack.c.h.b16 %v3654
    %v3726 = vunpack.c.l.b16 %v3655
    %v3727 = vunpack.c.h.b16 %v3655
    %v3728 = vunpack.c.l.b16 %v3656
    %v3729 = vunpack.c.h.b16 %v3656
    %v3730 = vunpack.c.l.b16 %v3657
    %v3731 = vunpack.c.h.b16 %v3657
    %v3732 = vunpack.c.l.b16 %v3658
    %v3733 = vunpack.c.h.b16 %v3658
    %v3734 = vunpack.c.l.b16 %v3659
    %v3735 = vunpack.c.h.b16 %v3659
    %v3736 = vunpack.c.l.b16 %v3660
    %v3737 = vunpack.c.h.b16 %v3660
    %v3738 = vunpack.c.l.b16 %v3661
    %v3739 = vunpack.c.h.b16 %v3661
    %v3740 = vunpack.c.l.b16 %v3662
    %v3741 = vunpack.c.h.b16 %v3662
    %v3742 = vunpack.c.l.b16 %v3663
    %v3743 = vunpack.c.h.b16 %v3663
    %v3744 = vunpack.c.l.b16 %v3664
    %v3745 = vunpack.c.h.b16 %v3664
    %v3746 = vunpack.c.l.b16 %v3665
    %v3747 = vunpack.c.h.b16 %v3665
    %v3748 = vunpack.c.l.b16 %v3666
    %v3749 = vunpack.c.h.b16 %v3666
    %v3750 = vunpack.c.l.b16 %v3667
    %v3751 = vunpack.c.h.b16 %v3667
    %v3752 = vunpack.c.l.b16 %v3668
    %v3753 = vunpack.c.h.b16 %v3668
    %v3754 = vunpack.c.l.b16 %v3669
    %v3755 = vunpack.c.h.b16 %v3669
    %v3756 = vunpack.c.l.b16 %v3670
    %v3757 = vunpack.c.h.b16 %v3670
    %v3758 = vunpack.c.l.b16 %v3671
    %v3759 = vunpack.c.h.b16 %v3671
    %v3760 = vunpack.c.l.b16 %v3672
    %v3761 = vunpack.c.h.b16 %v3672
    %v3762 = vunpack.c.l.b16 %v3673
    %v3763 = vunpack.c.h.b16 %v3673
    %v3764 = vunpack.c.l.b16 %v3674
    %v3765 = vunpack.c.h.b16 %v3674
    %v3766 = vunpack.c.l.b16 %v3675
    %v3767 = vunpack.c.h.b16 %v3675
    %v3768 = vunpack.c.l.b16 %v3676
    %v3769 = vunpack.c.h.b16 %v3676
    %v3770 = vunpack.c.l.b16 %v3677
    %v3771 = vunpack.c.h.b16 %v3677
    %v3772 = vunpack.c.l.b16 %v3678
    %v3773 = vunpack.c.h.b16 %v3678
    %v3774 = vunpack.c.l.b16 %v3679
    %v3775 = vunpack.c.h.b16 %v3679
    %v3776 = vpack.c.b16 %v3712, %v3712
    %v3777 = vpack.c.b16 %v3713, %v3713
    %v3778 = vpack.c.b16 %v3714, %v3714
    %v3779 = vpack.c.b16 %v3715, %v3715
    %v3780 = vpack.c.b16 %v3716, %v3716
    %v3781 = vpack.c.b16 %v3717, %v3717
    %v3782 = vpack.c.b16 %v3718, %v3718
    %v3783 = vpack.c.b16 %v3719, %v3719
    %v3784 = vpack.c.b16 %v3720, %v3720
    %v3785 = vpack.c.b16 %v3721, %v3721
    %v3786 = vpack.c.b16 %v3722, %v3722
    %v3787 = vpack.c.b16 %v3723, %v3723
    %v3788 = vpack.c.b16 %v3724, %v3724
    %v3789 = vpack.c.b16 %v3725, %v3725
    %v3790 = vpack.c.b16 %v3726, %v3726
    %v3791 = vpack.c.b16 %v3727, %v3727
    %v3792 = vpack.c.b16 %v3728, %v3728
    %v3793 = vpack.c.b16 %v3729, %v3729
    %v3794 = vpack.c.b16 %v3730, %v3730
    %v3795 = vpack.c.b16 %v3731, %v3731
    %v3796 = vpack.c.b16 %v3732, %v3732
    %v3797 = vpack.c.b16 %v3733, %v3733
    %v3798 = vpack.c.b16 %v3734, %v3734
    %v3799 = vpack.c.b16 %v3735, %v3735
    %v3800 = vpack.c.b16 %v3736, %v3736
    %v3801 = vpack.c.b16 %v3737, %v3737
    %v3802 = vpack.c.b16 %v3738, %v3738
    %v3803 = vpack.c.b16 %v3739, %v3739
    %v3804 = vpack.c.b16 %v3740, %v3740
    %v3805 = vpack.c.b16 %v3741, %v3741
    %v3806 = vpack.c.b16 %v3742, %v3742
    %v3807 = vpack.c.b16 %v3743, %v3743
    %v3808 = vpack.c.b16 %v3744, %v3744
    %v3809 = vpack.c.b16 %v3745, %v3745
    %v3810 = vpack.c.b16 %v3746, %v3746
    %v3811 = vpack.c.b16 %v3747, %v3747
    %v3812 = vpack.c.b16 %v3748, %v3748
    %v3813 = vpack.c.b16 %v3749, %v3749
    %v3814 = vpack.c.b16 %v3750, %v3750
    %v3815 = vpack.c.b16 %v3751, %v3751
    %v3816 = vpack.c.b16 %v3752, %v3752
    %v3817 = vpack.c.b16 %v3753, %v3753
    %v3818 = vpack.c.b16 %v3754, %v3754
    %v3819 = vpack.c.b16 %v3755, %v3755
    %v3820 = vpack.c.b16 %v3756, %v3756
    %v3821 = vpack.c.b16 %v3757, %v3757
    %v3822 = vpack.c.b16 %v3758, %v3758
    %v3823 = vpack.c.b16 %v3759, %v3759
    %v3824 = vpack.c.b16 %v3760, %v3760
    %v3825 = vpack.c.b16 %v3761, %v3761
    %v3826 = vpack.c.b16 %v3762, %v3762
    %v3827 = vpack.c.b16 %v3763, %v3763
    %v3828 = vpack.c.b16 %v3764, %v3764
    %v3829 = vpack.c.b16 %v3765, %v3765
    %v3830 = vpack.c.b16 %v3766, %v3766
    %v3831 = vpack.c.b16 %v3767, %v3767
    %v3832 = vpack.c.b16 %v3768, %v3768
    %v3833 = vpack.c.b16 %v3769, %v3769
    %v3834 = vpack.c.b16 %v3770, %v3770
    %v3835 = vpack.c.b16 %v3771, %v3771
    %v3836 = vpack.c.b16 %v3772, %v3772
    %v3837 = vpack.c.b16 %v3773, %v3773
    %v3838 = vpack.c.b16 %v3774, %v3774
    %v3839 = vpack.c.b16 %v3775, %v3775
    %3904 = vst [vmem:[#allocation3 + $0x8] sm:$0xf] %v3776
    %3905 = vst [vmem:[#allocation3 + $0x14] sm:$0xf] %v3777
    %3906 = vst [vmem:[#allocation3 + $0x20] sm:$0xf] %v3778
    %3907 = vst [vmem:[#allocation3 + $0x2c] sm:$0xf] %v3779
    %3908 = vst [vmem:[#allocation3 + $0x38] sm:$0xf] %v3780
    %3909 = vst [vmem:[#allocation3 + $0x44] sm:$0xf] %v3781
    %3910 = vst [vmem:[#allocation3 + $0x50] sm:$0xf] %v3782
    %3911 = vst [vmem:[#allocation3 + $0x5c] sm:$0xf] %v3783
    %3912 = vst [vmem:[#allocation3 + $0x68] sm:$0xf] %v3784
    %3913 = vst [vmem:[#allocation3 + $0x74] sm:$0xf] %v3785
    %3914 = vst [vmem:[#allocation3 + $0x80] sm:$0xf] %v3786
    %3915 = vst [vmem:[#allocation3 + $0x8c] sm:$0xf] %v3787
    %3916 = vst [vmem:[#allocation3 + $0x98] sm:$0xf] %v3788
    %3917 = vst [vmem:[#allocation3 + $0xa4] sm:$0xf] %v3789
    %3918 = vst [vmem:[#allocation3 + $0xb0] sm:$0xf] %v3790
    %3919 = vst [vmem:[#allocation3 + $0xbc] sm:$0xf] %v3791
    %3920 = vst [vmem:[#allocation3 + $0xc8] sm:$0xf] %v3792
    %3921 = vst [vmem:[#allocation3 + $0xd4] sm:$0xf] %v3793
    %3922 = vst [vmem:[#allocation3 + $0xe0] sm:$0xf] %v3794
    %3923 = vst [vmem:[#allocation3 + $0xec] sm:$0xf] %v3795
    %3924 = vst [vmem:[#allocation3 + $0xf8] sm:$0xf] %v3796
    %3925 = vst [vmem:[#allocation3 + $0x104] sm:$0xf] %v3797
    %3926 = vst [vmem:[#allocation3 + $0x110] sm:$0xf] %v3798
    %3927 = vst [vmem:[#allocation3 + $0x11c] sm:$0xf] %v3799
    %3928 = vst [vmem:[#allocation3 + $0x128] sm:$0xf] %v3800
    %3929 = vst [vmem:[#allocation3 + $0x134] sm:$0xf] %v3801
    %3930 = vst [vmem:[#allocation3 + $0x140] sm:$0xf] %v3802
    %3931 = vst [vmem:[#allocation3 + $0x14c] sm:$0xf] %v3803
    %3932 = vst [vmem:[#allocation3 + $0x158] sm:$0xf] %v3804
    %3933 = vst [vmem:[#allocation3 + $0x164] sm:$0xf] %v3805
    %3934 = vst [vmem:[#allocation3 + $0x170] sm:$0xf] %v3806
    %3935 = vst [vmem:[#allocation3 + $0x17c] sm:$0xf] %v3807
    %3936 = vst [vmem:[#allocation3 + $0x188] sm:$0xf] %v3808
    %3937 = vst [vmem:[#allocation3 + $0x194] sm:$0xf] %v3809
    %3938 = vst [vmem:[#allocation3 + $0x1a0] sm:$0xf] %v3810
    %3939 = vst [vmem:[#allocation3 + $0x1ac] sm:$0xf] %v3811
    %3940 = vst [vmem:[#allocation3 + $0x1b8] sm:$0xf] %v3812
    %3941 = vst [vmem:[#allocation3 + $0x1c4] sm:$0xf] %v3813
    %3942 = vst [vmem:[#allocation3 + $0x1d0] sm:$0xf] %v3814
    %3943 = vst [vmem:[#allocation3 + $0x1dc] sm:$0xf] %v3815
    %3944 = vst [vmem:[#allocation3 + $0x1e8] sm:$0xf] %v3816
    %3945 = vst [vmem:[#allocation3 + $0x1f4] sm:$0xf] %v3817
    %3946 = vst [vmem:[#allocation3 + $0x200] sm:$0xf] %v3818
    %3947 = vst [vmem:[#allocation3 + $0x20c] sm:$0xf] %v3819
    %3948 = vst [vmem:[#allocation3 + $0x218] sm:$0xf] %v3820
    %3949 = vst [vmem:[#allocation3 + $0x224] sm:$0xf] %v3821
    %3950 = vst [vmem:[#allocation3 + $0x230] sm:$0xf] %v3822
    %3951 = vst [vmem:[#allocation3 + $0x23c] sm:$0xf] %v3823
    %3952 = vst [vmem:[#allocation3 + $0x248] sm:$0xf] %v3824
    %3953 = vst [vmem:[#allocation3 + $0x254] sm:$0xf] %v3825
    %3954 = vst [vmem:[#allocation3 + $0x260] sm:$0xf] %v3826
    %3955 = vst [vmem:[#allocation3 + $0x26c] sm:$0xf] %v3827
    %3956 = vst [vmem:[#allocation3 + $0x278] sm:$0xf] %v3828
    %3957 = vst [vmem:[#allocation3 + $0x284] sm:$0xf] %v3829
    %3958 = vst [vmem:[#allocation3 + $0x290] sm:$0xf] %v3830
    %3959 = vst [vmem:[#allocation3 + $0x29c] sm:$0xf] %v3831
    %3960 = vst [vmem:[#allocation3 + $0x2a8] sm:$0xf] %v3832
    %3961 = vst [vmem:[#allocation3 + $0x2b4] sm:$0xf] %v3833
    %3962 = vst [vmem:[#allocation3 + $0x2c0] sm:$0xf] %v3834
    %3963 = vst [vmem:[#allocation3 + $0x2cc] sm:$0xf] %v3835
    %3964 = vst [vmem:[#allocation3 + $0x2d8] sm:$0xf] %v3836
    %3965 = vst [vmem:[#allocation3 + $0x2e4] sm:$0xf] %v3837
    %3966 = vst [vmem:[#allocation3 + $0x2f0] sm:$0xf] %v3838
    %3967 = vst [vmem:[#allocation3 + $0x2fc] sm:$0xf] %v3839
    %v3968 = vld [vmem:[#allocation3] sm:$0xff]
    %v3969 = vld [vmem:[#allocation3 + $0x8] sm:$0xf]
    %v3970 = vld [vmem:[#allocation3 + $0xc] sm:$0xff]
    %v3971 = vld [vmem:[#allocation3 + $0x14] sm:$0xf]
    %v3972 = vld [vmem:[#allocation3 + $0x18] sm:$0xff]
    %v3973 = vld [vmem:[#allocation3 + $0x20] sm:$0xf]
    %v3974 = vld [vmem:[#allocation3 + $0x24] sm:$0xff]
    %v3975 = vld [vmem:[#allocation3 + $0x2c] sm:$0xf]
    %v3976 = vld [vmem:[#allocation3 + $0x30] sm:$0xff]
    %v3977 = vld [vmem:[#allocation3 + $0x38] sm:$0xf]
    %v3978 = vld [vmem:[#allocation3 + $0x3c] sm:$0xff]
    %v3979 = vld [vmem:[#allocation3 + $0x44] sm:$0xf]
    %v3980 = vld [vmem:[#allocation3 + $0x48] sm:$0xff]
    %v3981 = vld [vmem:[#allocation3 + $0x50] sm:$0xf]
    %v3982 = vld [vmem:[#allocation3 + $0x54] sm:$0xff]
    %v3983 = vld [vmem:[#allocation3 + $0x5c] sm:$0xf]
    %v3984 = vld [vmem:[#allocation3 + $0x60] sm:$0xff]
    %v3985 = vld [vmem:[#allocation3 + $0x68] sm:$0xf]
    %v3986 = vld [vmem:[#allocation3 + $0x6c] sm:$0xff]
    %v3987 = vld [vmem:[#allocation3 + $0x74] sm:$0xf]
    %v3988 = vld [vmem:[#allocation3 + $0x78] sm:$0xff]
    %v3989 = vld [vmem:[#allocation3 + $0x80] sm:$0xf]
    %v3990 = vld [vmem:[#allocation3 + $0x84] sm:$0xff]
    %v3991 = vld [vmem:[#allocation3 + $0x8c] sm:$0xf]
    %v3992 = vld [vmem:[#allocation3 + $0x90] sm:$0xff]
    %v3993 = vld [vmem:[#allocation3 + $0x98] sm:$0xf]
    %v3994 = vld [vmem:[#allocation3 + $0x9c] sm:$0xff]
    %v3995 = vld [vmem:[#allocation3 + $0xa4] sm:$0xf]
    %v3996 = vld [vmem:[#allocation3 + $0xa8] sm:$0xff]
    %v3997 = vld [vmem:[#allocation3 + $0xb0] sm:$0xf]
    %v3998 = vld [vmem:[#allocation3 + $0xb4] sm:$0xff]
    %v3999 = vld [vmem:[#allocation3 + $0xbc] sm:$0xf]
    %v4000 = vld [vmem:[#allocation3 + $0xc0] sm:$0xff]
    %v4001 = vld [vmem:[#allocation3 + $0xc8] sm:$0xf]
    %v4002 = vld [vmem:[#allocation3 + $0xcc] sm:$0xff]
    %v4003 = vld [vmem:[#allocation3 + $0xd4] sm:$0xf]
    %v4004 = vld [vmem:[#allocation3 + $0xd8] sm:$0xff]
    %v4005 = vld [vmem:[#allocation3 + $0xe0] sm:$0xf]
    %v4006 = vld [vmem:[#allocation3 + $0xe4] sm:$0xff]
    %v4007 = vld [vmem:[#allocation3 + $0xec] sm:$0xf]
    %v4008 = vld [vmem:[#allocation3 + $0xf0] sm:$0xff]
    %v4009 = vld [vmem:[#allocation3 + $0xf8] sm:$0xf]
    %v4010 = vld [vmem:[#allocation3 + $0xfc] sm:$0xff]
    %v4011 = vld [vmem:[#allocation3 + $0x104] sm:$0xf]
    %v4012 = vld [vmem:[#allocation3 + $0x108] sm:$0xff]
    %v4013 = vld [vmem:[#allocation3 + $0x110] sm:$0xf]
    %v4014 = vld [vmem:[#allocation3 + $0x114] sm:$0xff]
    %v4015 = vld [vmem:[#allocation3 + $0x11c] sm:$0xf]
    %v4016 = vld [vmem:[#allocation3 + $0x120] sm:$0xff]
    %v4017 = vld [vmem:[#allocation3 + $0x128] sm:$0xf]
    %v4018 = vld [vmem:[#allocation3 + $0x12c] sm:$0xff]
    %v4019 = vld [vmem:[#allocation3 + $0x134] sm:$0xf]
    %v4020 = vld [vmem:[#allocation3 + $0x138] sm:$0xff]
    %v4021 = vld [vmem:[#allocation3 + $0x140] sm:$0xf]
    %v4022 = vld [vmem:[#allocation3 + $0x144] sm:$0xff]
    %v4023 = vld [vmem:[#allocation3 + $0x14c] sm:$0xf]
    %v4024 = vld [vmem:[#allocation3 + $0x150] sm:$0xff]
    %v4025 = vld [vmem:[#allocation3 + $0x158] sm:$0xf]
    %v4026 = vld [vmem:[#allocation3 + $0x15c] sm:$0xff]
    %v4027 = vld [vmem:[#allocation3 + $0x164] sm:$0xf]
    %v4028 = vld [vmem:[#allocation3 + $0x168] sm:$0xff]
    %v4029 = vld [vmem:[#allocation3 + $0x170] sm:$0xf]
    %v4030 = vld [vmem:[#allocation3 + $0x174] sm:$0xff]
    %v4031 = vld [vmem:[#allocation3 + $0x17c] sm:$0xf]
    %v4032 = vld [vmem:[#allocation3 + $0x180] sm:$0xff]
    %v4033 = vld [vmem:[#allocation3 + $0x188] sm:$0xf]
    %v4034 = vld [vmem:[#allocation3 + $0x18c] sm:$0xff]
    %v4035 = vld [vmem:[#allocation3 + $0x194] sm:$0xf]
    %v4036 = vld [vmem:[#allocation3 + $0x198] sm:$0xff]
    %v4037 = vld [vmem:[#allocation3 + $0x1a0] sm:$0xf]
    %v4038 = vld [vmem:[#allocation3 + $0x1a4] sm:$0xff]
    %v4039 = vld [vmem:[#allocation3 + $0x1ac] sm:$0xf]
    %v4040 = vld [vmem:[#allocation3 + $0x1b0] sm:$0xff]
    %v4041 = vld [vmem:[#allocation3 + $0x1b8] sm:$0xf]
    %v4042 = vld [vmem:[#allocation3 + $0x1bc] sm:$0xff]
    %v4043 = vld [vmem:[#allocation3 + $0x1c4] sm:$0xf]
    %v4044 = vld [vmem:[#allocation3 + $0x1c8] sm:$0xff]
    %v4045 = vld [vmem:[#allocation3 + $0x1d0] sm:$0xf]
    %v4046 = vld [vmem:[#allocation3 + $0x1d4] sm:$0xff]
    %v4047 = vld [vmem:[#allocation3 + $0x1dc] sm:$0xf]
    %v4048 = vld [vmem:[#allocation3 + $0x1e0] sm:$0xff]
    %v4049 = vld [vmem:[#allocation3 + $0x1e8] sm:$0xf]
    %v4050 = vld [vmem:[#allocation3 + $0x1ec] sm:$0xff]
    %v4051 = vld [vmem:[#allocation3 + $0x1f4] sm:$0xf]
    %v4052 = vld [vmem:[#allocation3 + $0x1f8] sm:$0xff]
    %v4053 = vld [vmem:[#allocation3 + $0x200] sm:$0xf]
    %v4054 = vld [vmem:[#allocation3 + $0x204] sm:$0xff]
    %v4055 = vld [vmem:[#allocation3 + $0x20c] sm:$0xf]
    %v4056 = vld [vmem:[#allocation3 + $0x210] sm:$0xff]
    %v4057 = vld [vmem:[#allocation3 + $0x218] sm:$0xf]
    %v4058 = vld [vmem:[#allocation3 + $0x21c] sm:$0xff]
    %v4059 = vld [vmem:[#allocation3 + $0x224] sm:$0xf]
    %v4060 = vld [vmem:[#allocation3 + $0x228] sm:$0xff]
    %v4061 = vld [vmem:[#allocation3 + $0x230] sm:$0xf]
    %v4062 = vld [vmem:[#allocation3 + $0x234] sm:$0xff]
    %v4063 = vld [vmem:[#allocation3 + $0x23c] sm:$0xf]
    %v4064 = vld [vmem:[#allocation3 + $0x240] sm:$0xff]
    %v4065 = vld [vmem:[#allocation3 + $0x248] sm:$0xf]
    %v4066 = vld [vmem:[#allocation3 + $0x24c] sm:$0xff]
    %v4067 = vld [vmem:[#allocation3 + $0x254] sm:$0xf]
    %v4068 = vld [vmem:[#allocation3 + $0x258] sm:$0xff]
    %v4069 = vld [vmem:[#allocation3 + $0x260] sm:$0xf]
    %v4070 = vld [vmem:[#allocation3 + $0x264] sm:$0xff]
    %v4071 = vld [vmem:[#allocation3 + $0x26c] sm:$0xf]
    %v4072 = vld [vmem:[#allocation3 + $0x270] sm:$0xff]
    %v4073 = vld [vmem:[#allocation3 + $0x278] sm:$0xf]
    %v4074 = vld [vmem:[#allocation3 + $0x27c] sm:$0xff]
    %v4075 = vld [vmem:[#allocation3 + $0x284] sm:$0xf]
    %v4076 = vld [vmem:[#allocation3 + $0x288] sm:$0xff]
    %v4077 = vld [vmem:[#allocation3 + $0x290] sm:$0xf]
    %v4078 = vld [vmem:[#allocation3 + $0x294] sm:$0xff]
    %v4079 = vld [vmem:[#allocation3 + $0x29c] sm:$0xf]
    %v4080 = vld [vmem:[#allocation3 + $0x2a0] sm:$0xff]
    %v4081 = vld [vmem:[#allocation3 + $0x2a8] sm:$0xf]
    %v4082 = vld [vmem:[#allocation3 + $0x2ac] sm:$0xff]
    %v4083 = vld [vmem:[#allocation3 + $0x2b4] sm:$0xf]
    %v4084 = vld [vmem:[#allocation3 + $0x2b8] sm:$0xff]
    %v4085 = vld [vmem:[#allocation3 + $0x2c0] sm:$0xf]
    %v4086 = vld [vmem:[#allocation3 + $0x2c4] sm:$0xff]
    %v4087 = vld [vmem:[#allocation3 + $0x2cc] sm:$0xf]
    %v4088 = vld [vmem:[#allocation3 + $0x2d0] sm:$0xff]
    %v4089 = vld [vmem:[#allocation3 + $0x2d8] sm:$0xf]
    %v4090 = vld [vmem:[#allocation3 + $0x2dc] sm:$0xff]
    %v4091 = vld [vmem:[#allocation3 + $0x2e4] sm:$0xf]
    %v4092 = vld [vmem:[#allocation3 + $0x2e8] sm:$0xff]
    %v4093 = vld [vmem:[#allocation3 + $0x2f0] sm:$0xf]
    %v4094 = vld [vmem:[#allocation3 + $0x2f4] sm:$0xff]
    %v4095 = vld [vmem:[#allocation3 + $0x2fc] sm:$0xf]
    %v4096 = vld [vmem:[#allocation7] sm:$0xf]
    %v4097 = vld [vmem:[#allocation7 + $0x4] sm:$0xf]
    %v4098 = vld [vmem:[#allocation7 + $0x8] sm:$0xf]
    %v4099 = vld [vmem:[#allocation7 + $0xc] sm:$0xf]
    %v4100 = vld [vmem:[#allocation7 + $0x10] sm:$0xf]
    %v4101 = vld [vmem:[#allocation7 + $0x14] sm:$0xf]
    %v4102 = vld [vmem:[#allocation7 + $0x18] sm:$0xf]
    %v4103 = vld [vmem:[#allocation7 + $0x1c] sm:$0xf]
    %v4104 = vld [vmem:[#allocation7 + $0x20] sm:$0xf]
    %v4105 = vld [vmem:[#allocation7 + $0x24] sm:$0xf]
    %v4106 = vld [vmem:[#allocation7 + $0x28] sm:$0xf]
    %v4107 = vld [vmem:[#allocation7 + $0x2c] sm:$0xf]
    %v4108 = vld [vmem:[#allocation7 + $0x30] sm:$0xf]
    %v4109 = vld [vmem:[#allocation7 + $0x34] sm:$0xf]
    %v4110 = vld [vmem:[#allocation7 + $0x38] sm:$0xf]
    %v4111 = vld [vmem:[#allocation7 + $0x3c] sm:$0xf]
    %v4112 = vld [vmem:[#allocation7 + $0x40] sm:$0xf]
    %v4113 = vld [vmem:[#allocation7 + $0x44] sm:$0xf]
    %v4114 = vld [vmem:[#allocation7 + $0x48] sm:$0xf]
    %v4115 = vld [vmem:[#allocation7 + $0x4c] sm:$0xf]
    %v4116 = vld [vmem:[#allocation7 + $0x50] sm:$0xf]
    %v4117 = vld [vmem:[#allocation7 + $0x54] sm:$0xf]
    %v4118 = vld [vmem:[#allocation7 + $0x58] sm:$0xf]
    %v4119 = vld [vmem:[#allocation7 + $0x5c] sm:$0xf]
    %v4120 = vld [vmem:[#allocation7 + $0x60] sm:$0xf]
    %v4121 = vld [vmem:[#allocation7 + $0x64] sm:$0xf]
    %v4122 = vld [vmem:[#allocation7 + $0x68] sm:$0xf]
    %v4123 = vld [vmem:[#allocation7 + $0x6c] sm:$0xf]
    %v4124 = vld [vmem:[#allocation7 + $0x70] sm:$0xf]
    %v4125 = vld [vmem:[#allocation7 + $0x74] sm:$0xf]
    %v4126 = vld [vmem:[#allocation7 + $0x78] sm:$0xf]
    %v4127 = vld [vmem:[#allocation7 + $0x7c] sm:$0xf]
    %v4128 = vld [vmem:[#allocation7 + $0x80] sm:$0xf]
    %v4129 = vld [vmem:[#allocation7 + $0x84] sm:$0xf]
    %v4130 = vld [vmem:[#allocation7 + $0x88] sm:$0xf]
    %v4131 = vld [vmem:[#allocation7 + $0x8c] sm:$0xf]
    %v4132 = vld [vmem:[#allocation7 + $0x90] sm:$0xf]
    %v4133 = vld [vmem:[#allocation7 + $0x94] sm:$0xf]
    %v4134 = vld [vmem:[#allocation7 + $0x98] sm:$0xf]
    %v4135 = vld [vmem:[#allocation7 + $0x9c] sm:$0xf]
    %v4136 = vld [vmem:[#allocation7 + $0xa0] sm:$0xf]
    %v4137 = vld [vmem:[#allocation7 + $0xa4] sm:$0xf]
    %v4138 = vld [vmem:[#allocation7 + $0xa8] sm:$0xf]
    %v4139 = vld [vmem:[#allocation7 + $0xac] sm:$0xf]
    %v4140 = vld [vmem:[#allocation7 + $0xb0] sm:$0xf]
    %v4141 = vld [vmem:[#allocation7 + $0xb4] sm:$0xf]
    %v4142 = vld [vmem:[#allocation7 + $0xb8] sm:$0xf]
    %v4143 = vld [vmem:[#allocation7 + $0xbc] sm:$0xf]
    %v4272 = vunpack.c.l.b16 %v3968
    %v4273 = vunpack.c.h.b16 %v3968
    %v4274 = vunpack.c.l.b16 %v3969
    %v4275 = vunpack.c.l.b16 %v3970
    %v4276 = vunpack.c.h.b16 %v3970
    %v4277 = vunpack.c.l.b16 %v3971
    %v4278 = vunpack.c.l.b16 %v3972
    %v4279 = vunpack.c.h.b16 %v3972
    %v4280 = vunpack.c.l.b16 %v3973
    %v4281 = vunpack.c.l.b16 %v3974
    %v4282 = vunpack.c.h.b16 %v3974
    %v4283 = vunpack.c.l.b16 %v3975
    %v4284 = vunpack.c.l.b16 %v3976
    %v4285 = vunpack.c.h.b16 %v3976
    %v4286 = vunpack.c.l.b16 %v3977
    %v4287 = vunpack.c.l.b16 %v3978
    %v4288 = vunpack.c.h.b16 %v3978
    %v4289 = vunpack.c.l.b16 %v3979
    %v4290 = vunpack.c.l.b16 %v3980
    %v4291 = vunpack.c.h.b16 %v3980
    %v4292 = vunpack.c.l.b16 %v3981
    %v4293 = vunpack.c.l.b16 %v3982
    %v4294 = vunpack.c.h.b16 %v3982
    %v4295 = vunpack.c.l.b16 %v3983
    %v4296 = vunpack.c.l.b16 %v3984
    %v4297 = vunpack.c.h.b16 %v3984
    %v4298 = vunpack.c.l.b16 %v3985
    %v4299 = vunpack.c.l.b16 %v3986
    %v4300 = vunpack.c.h.b16 %v3986
    %v4301 = vunpack.c.l.b16 %v3987
    %v4302 = vunpack.c.l.b16 %v3988
    %v4303 = vunpack.c.h.b16 %v3988
    %v4304 = vunpack.c.l.b16 %v3989
    %v4305 = vunpack.c.l.b16 %v3990
    %v4306 = vunpack.c.h.b16 %v3990
    %v4307 = vunpack.c.l.b16 %v3991
    %v4308 = vunpack.c.l.b16 %v3992
    %v4309 = vunpack.c.h.b16 %v3992
    %v4310 = vunpack.c.l.b16 %v3993
    %v4311 = vunpack.c.l.b16 %v3994
    %v4312 = vunpack.c.h.b16 %v3994
    %v4313 = vunpack.c.l.b16 %v3995
    %v4314 = vunpack.c.l.b16 %v3996
    %v4315 = vunpack.c.h.b16 %v3996
    %v4316 = vunpack.c.l.b16 %v3997
    %v4317 = vunpack.c.l.b16 %v3998
    %v4318 = vunpack.c.h.b16 %v3998
    %v4319 = vunpack.c.l.b16 %v3999
    %v4320 = vunpack.c.l.b16 %v4000
    %v4321 = vunpack.c.h.b16 %v4000
    %v4322 = vunpack.c.l.b16 %v4001
    %v4323 = vunpack.c.l.b16 %v4002
    %v4324 = vunpack.c.h.b16 %v4002
    %v4325 = vunpack.c.l.b16 %v4003
    %v4326 = vunpack.c.l.b16 %v4004
    %v4327 = vunpack.c.h.b16 %v4004
    %v4328 = vunpack.c.l.b16 %v4005
    %v4329 = vunpack.c.l.b16 %v4006
    %v4330 = vunpack.c.h.b16 %v4006
    %v4331 = vunpack.c.l.b16 %v4007
    %v4332 = vunpack.c.l.b16 %v4008
    %v4333 = vunpack.c.h.b16 %v4008
    %v4334 = vunpack.c.l.b16 %v4009
    %v4335 = vunpack.c.l.b16 %v4010
    %v4336 = vunpack.c.h.b16 %v4010
    %v4337 = vunpack.c.l.b16 %v4011
    %v4338 = vunpack.c.l.b16 %v4012
    %v4339 = vunpack.c.h.b16 %v4012
    %v4340 = vunpack.c.l.b16 %v4013
    %v4341 = vunpack.c.l.b16 %v4014
    %v4342 = vunpack.c.h.b16 %v4014
    %v4343 = vunpack.c.l.b16 %v4015
    %v4344 = vunpack.c.l.b16 %v4016
    %v4345 = vunpack.c.h.b16 %v4016
    %v4346 = vunpack.c.l.b16 %v4017
    %v4347 = vunpack.c.l.b16 %v4018
    %v4348 = vunpack.c.h.b16 %v4018
    %v4349 = vunpack.c.l.b16 %v4019
    %v4350 = vunpack.c.l.b16 %v4020
    %v4351 = vunpack.c.h.b16 %v4020
    %v4352 = vunpack.c.l.b16 %v4021
    %v4353 = vunpack.c.l.b16 %v4022
    %v4354 = vunpack.c.h.b16 %v4022
    %v4355 = vunpack.c.l.b16 %v4023
    %v4356 = vunpack.c.l.b16 %v4024
    %v4357 = vunpack.c.h.b16 %v4024
    %v4358 = vunpack.c.l.b16 %v4025
    %v4359 = vunpack.c.l.b16 %v4026
    %v4360 = vunpack.c.h.b16 %v4026
    %v4361 = vunpack.c.l.b16 %v4027
    %v4362 = vunpack.c.l.b16 %v4028
    %v4363 = vunpack.c.h.b16 %v4028
    %v4364 = vunpack.c.l.b16 %v4029
    %v4365 = vunpack.c.l.b16 %v4030
    %v4366 = vunpack.c.h.b16 %v4030
    %v4367 = vunpack.c.l.b16 %v4031
    %v4368 = vunpack.c.l.b16 %v4032
    %v4369 = vunpack.c.h.b16 %v4032
    %v4370 = vunpack.c.l.b16 %v4033
    %v4371 = vunpack.c.l.b16 %v4034
    %v4372 = vunpack.c.h.b16 %v4034
    %v4373 = vunpack.c.l.b16 %v4035
    %v4374 = vunpack.c.l.b16 %v4036
    %v4375 = vunpack.c.h.b16 %v4036
    %v4376 = vunpack.c.l.b16 %v4037
    %v4377 = vunpack.c.l.b16 %v4038
    %v4378 = vunpack.c.h.b16 %v4038
    %v4379 = vunpack.c.l.b16 %v4039
    %v4380 = vunpack.c.l.b16 %v4040
    %v4381 = vunpack.c.h.b16 %v4040
    %v4382 = vunpack.c.l.b16 %v4041
    %v4383 = vunpack.c.l.b16 %v4042
    %v4384 = vunpack.c.h.b16 %v4042
    %v4385 = vunpack.c.l.b16 %v4043
    %v4386 = vunpack.c.l.b16 %v4044
    %v4387 = vunpack.c.h.b16 %v4044
    %v4388 = vunpack.c.l.b16 %v4045
    %v4389 = vunpack.c.l.b16 %v4046
    %v4390 = vunpack.c.h.b16 %v4046
    %v4391 = vunpack.c.l.b16 %v4047
    %v4392 = vunpack.c.l.b16 %v4048
    %v4393 = vunpack.c.h.b16 %v4048
    %v4394 = vunpack.c.l.b16 %v4049
    %v4395 = vunpack.c.l.b16 %v4050
    %v4396 = vunpack.c.h.b16 %v4050
    %v4397 = vunpack.c.l.b16 %v4051
    %v4398 = vunpack.c.l.b16 %v4052
    %v4399 = vunpack.c.h.b16 %v4052
    %v4400 = vunpack.c.l.b16 %v4053
    %v4401 = vunpack.c.l.b16 %v4054
    %v4402 = vunpack.c.h.b16 %v4054
    %v4403 = vunpack.c.l.b16 %v4055
    %v4404 = vunpack.c.l.b16 %v4056
    %v4405 = vunpack.c.h.b16 %v4056
    %v4406 = vunpack.c.l.b16 %v4057
    %v4407 = vunpack.c.l.b16 %v4058
    %v4408 = vunpack.c.h.b16 %v4058
    %v4409 = vunpack.c.l.b16 %v4059
    %v4410 = vunpack.c.l.b16 %v4060
    %v4411 = vunpack.c.h.b16 %v4060
    %v4412 = vunpack.c.l.b16 %v4061
    %v4413 = vunpack.c.l.b16 %v4062
    %v4414 = vunpack.c.h.b16 %v4062
    %v4415 = vunpack.c.l.b16 %v4063
    %v4416 = vunpack.c.l.b16 %v4064
    %v4417 = vunpack.c.h.b16 %v4064
    %v4418 = vunpack.c.l.b16 %v4065
    %v4419 = vunpack.c.l.b16 %v4066
    %v4420 = vunpack.c.h.b16 %v4066
    %v4421 = vunpack.c.l.b16 %v4067
    %v4422 = vunpack.c.l.b16 %v4068
    %v4423 = vunpack.c.h.b16 %v4068
    %v4424 = vunpack.c.l.b16 %v4069
    %v4425 = vunpack.c.l.b16 %v4070
    %v4426 = vunpack.c.h.b16 %v4070
    %v4427 = vunpack.c.l.b16 %v4071
    %v4428 = vunpack.c.l.b16 %v4072
    %v4429 = vunpack.c.h.b16 %v4072
    %v4430 = vunpack.c.l.b16 %v4073
    %v4431 = vunpack.c.l.b16 %v4074
    %v4432 = vunpack.c.h.b16 %v4074
    %v4433 = vunpack.c.l.b16 %v4075
    %v4434 = vunpack.c.l.b16 %v4076
    %v4435 = vunpack.c.h.b16 %v4076
    %v4436 = vunpack.c.l.b16 %v4077
    %v4437 = vunpack.c.l.b16 %v4078
    %v4438 = vunpack.c.h.b16 %v4078
    %v4439 = vunpack.c.l.b16 %v4079
    %v4440 = vunpack.c.l.b16 %v4080
    %v4441 = vunpack.c.h.b16 %v4080
    %v4442 = vunpack.c.l.b16 %v4081
    %v4443 = vunpack.c.l.b16 %v4082
    %v4444 = vunpack.c.h.b16 %v4082
    %v4445 = vunpack.c.l.b16 %v4083
    %v4446 = vunpack.c.l.b16 %v4084
    %v4447 = vunpack.c.h.b16 %v4084
    %v4448 = vunpack.c.l.b16 %v4085
    %v4449 = vunpack.c.l.b16 %v4086
    %v4450 = vunpack.c.h.b16 %v4086
    %v4451 = vunpack.c.l.b16 %v4087
    %v4452 = vunpack.c.l.b16 %v4088
    %v4453 = vunpack.c.h.b16 %v4088
    %v4454 = vunpack.c.l.b16 %v4089
    %v4455 = vunpack.c.l.b16 %v4090
    %v4456 = vunpack.c.h.b16 %v4090
    %v4457 = vunpack.c.l.b16 %v4091
    %v4458 = vunpack.c.l.b16 %v4092
    %v4459 = vunpack.c.h.b16 %v4092
    %v4460 = vunpack.c.l.b16 %v4093
    %v4461 = vunpack.c.l.b16 %v4094
    %v4462 = vunpack.c.h.b16 %v4094
    %v4463 = vunpack.c.l.b16 %v4095
    %v4464 = vpack.c.b16 %v4275, %v4272
    %v4465 = vpack.c.b16 %v4276, %v4273
    %v4466 = vpack.c.b16 %v4277, %v4274
    %v4467 = vpack.c.b16 %v4281, %v4278
    %v4468 = vpack.c.b16 %v4282, %v4279
    %v4469 = vpack.c.b16 %v4283, %v4280
    %v4470 = vpack.c.b16 %v4287, %v4284
    %v4471 = vpack.c.b16 %v4288, %v4285
    %v4472 = vpack.c.b16 %v4289, %v4286
    %v4473 = vpack.c.b16 %v4293, %v4290
    %v4474 = vpack.c.b16 %v4294, %v4291
    %v4475 = vpack.c.b16 %v4295, %v4292
    %v4476 = vpack.c.b16 %v4299, %v4296
    %v4477 = vpack.c.b16 %v4300, %v4297
    %v4478 = vpack.c.b16 %v4301, %v4298
    %v4479 = vpack.c.b16 %v4305, %v4302
    %v4480 = vpack.c.b16 %v4306, %v4303
    %v4481 = vpack.c.b16 %v4307, %v4304
    %v4482 = vpack.c.b16 %v4311, %v4308
    %v4483 = vpack.c.b16 %v4312, %v4309
    %v4484 = vpack.c.b16 %v4313, %v4310
    %v4485 = vpack.c.b16 %v4317, %v4314
    %v4486 = vpack.c.b16 %v4318, %v4315
    %v4487 = vpack.c.b16 %v4319, %v4316
    %v4488 = vpack.c.b16 %v4323, %v4320
    %v4489 = vpack.c.b16 %v4324, %v4321
    %v4490 = vpack.c.b16 %v4325, %v4322
    %v4491 = vpack.c.b16 %v4329, %v4326
    %v4492 = vpack.c.b16 %v4330, %v4327
    %v4493 = vpack.c.b16 %v4331, %v4328
    %v4494 = vpack.c.b16 %v4335, %v4332
    %v4495 = vpack.c.b16 %v4336, %v4333
    %v4496 = vpack.c.b16 %v4337, %v4334
    %v4497 = vpack.c.b16 %v4341, %v4338
    %v4498 = vpack.c.b16 %v4342, %v4339
    %v4499 = vpack.c.b16 %v4343, %v4340
    %v4500 = vpack.c.b16 %v4347, %v4344
    %v4501 = vpack.c.b16 %v4348, %v4345
    %v4502 = vpack.c.b16 %v4349, %v4346
    %v4503 = vpack.c.b16 %v4353, %v4350
    %v4504 = vpack.c.b16 %v4354, %v4351
    %v4505 = vpack.c.b16 %v4355, %v4352
    %v4506 = vpack.c.b16 %v4359, %v4356
    %v4507 = vpack.c.b16 %v4360, %v4357
    %v4508 = vpack.c.b16 %v4361, %v4358
    %v4509 = vpack.c.b16 %v4365, %v4362
    %v4510 = vpack.c.b16 %v4366, %v4363
    %v4511 = vpack.c.b16 %v4367, %v4364
    %v4512 = vpack.c.b16 %v4371, %v4368
    %v4513 = vpack.c.b16 %v4372, %v4369
    %v4514 = vpack.c.b16 %v4373, %v4370
    %v4515 = vpack.c.b16 %v4377, %v4374
    %v4516 = vpack.c.b16 %v4378, %v4375
    %v4517 = vpack.c.b16 %v4379, %v4376
    %v4518 = vpack.c.b16 %v4383, %v4380
    %v4519 = vpack.c.b16 %v4384, %v4381
    %v4520 = vpack.c.b16 %v4385, %v4382
    %v4521 = vpack.c.b16 %v4389, %v4386
    %v4522 = vpack.c.b16 %v4390, %v4387
    %v4523 = vpack.c.b16 %v4391, %v4388
    %v4524 = vpack.c.b16 %v4395, %v4392
    %v4525 = vpack.c.b16 %v4396, %v4393
    %v4526 = vpack.c.b16 %v4397, %v4394
    %v4527 = vpack.c.b16 %v4401, %v4398
    %v4528 = vpack.c.b16 %v4402, %v4399
    %v4529 = vpack.c.b16 %v4403, %v4400
    %v4530 = vpack.c.b16 %v4407, %v4404
    %v4531 = vpack.c.b16 %v4408, %v4405
    %v4532 = vpack.c.b16 %v4409, %v4406
    %v4533 = vpack.c.b16 %v4413, %v4410
    %v4534 = vpack.c.b16 %v4414, %v4411
    %v4535 = vpack.c.b16 %v4415, %v4412
    %v4536 = vpack.c.b16 %v4419, %v4416
    %v4537 = vpack.c.b16 %v4420, %v4417
    %v4538 = vpack.c.b16 %v4421, %v4418
    %v4539 = vpack.c.b16 %v4425, %v4422
    %v4540 = vpack.c.b16 %v4426, %v4423
    %v4541 = vpack.c.b16 %v4427, %v4424
    %v4542 = vpack.c.b16 %v4431, %v4428
    %v4543 = vpack.c.b16 %v4432, %v4429
    %v4544 = vpack.c.b16 %v4433, %v4430
    %v4545 = vpack.c.b16 %v4437, %v4434
    %v4546 = vpack.c.b16 %v4438, %v4435
    %v4547 = vpack.c.b16 %v4439, %v4436
    %v4548 = vpack.c.b16 %v4443, %v4440
    %v4549 = vpack.c.b16 %v4444, %v4441
    %v4550 = vpack.c.b16 %v4445, %v4442
    %v4551 = vpack.c.b16 %v4449, %v4446
    %v4552 = vpack.c.b16 %v4450, %v4447
    %v4553 = vpack.c.b16 %v4451, %v4448
    %v4554 = vpack.c.b16 %v4455, %v4452
    %v4555 = vpack.c.b16 %v4456, %v4453
    %v4556 = vpack.c.b16 %v4457, %v4454
    %v4557 = vpack.c.b16 %v4461, %v4458
    %v4558 = vpack.c.b16 %v4462, %v4459
    %v4559 = vpack.c.b16 %v4463, %v4460
    %v4704 = vunpack.c.l.b16 %v4096
    %v4705 = vunpack.c.l.b16 %v4097
    %v4706 = vunpack.c.l.b16 %v4098
    %v4707 = vunpack.c.l.b16 %v4099
    %v4708 = vunpack.c.l.b16 %v4100
    %v4709 = vunpack.c.l.b16 %v4101
    %v4710 = vunpack.c.l.b16 %v4102
    %v4711 = vunpack.c.l.b16 %v4103
    %v4712 = vunpack.c.l.b16 %v4104
    %v4713 = vunpack.c.l.b16 %v4105
    %v4714 = vunpack.c.l.b16 %v4106
    %v4715 = vunpack.c.l.b16 %v4107
    %v4716 = vunpack.c.l.b16 %v4108
    %v4717 = vunpack.c.l.b16 %v4109
    %v4718 = vunpack.c.l.b16 %v4110
    %v4719 = vunpack.c.l.b16 %v4111
    %v4720 = vunpack.c.l.b16 %v4112
    %v4721 = vunpack.c.l.b16 %v4113
    %v4722 = vunpack.c.l.b16 %v4114
    %v4723 = vunpack.c.l.b16 %v4115
    %v4724 = vunpack.c.l.b16 %v4116
    %v4725 = vunpack.c.l.b16 %v4117
    %v4726 = vunpack.c.l.b16 %v4118
    %v4727 = vunpack.c.l.b16 %v4119
    %v4728 = vunpack.c.l.b16 %v4120
    %v4729 = vunpack.c.l.b16 %v4121
    %v4730 = vunpack.c.l.b16 %v4122
    %v4731 = vunpack.c.l.b16 %v4123
    %v4732 = vunpack.c.l.b16 %v4124
    %v4733 = vunpack.c.l.b16 %v4125
    %v4734 = vunpack.c.l.b16 %v4126
    %v4735 = vunpack.c.l.b16 %v4127
    %v4736 = vunpack.c.l.b16 %v4128
    %v4737 = vunpack.c.l.b16 %v4129
    %v4738 = vunpack.c.l.b16 %v4130
    %v4739 = vunpack.c.l.b16 %v4131
    %v4740 = vunpack.c.l.b16 %v4132
    %v4741 = vunpack.c.l.b16 %v4133
    %v4742 = vunpack.c.l.b16 %v4134
    %v4743 = vunpack.c.l.b16 %v4135
    %v4744 = vunpack.c.l.b16 %v4136
    %v4745 = vunpack.c.l.b16 %v4137
    %v4746 = vunpack.c.l.b16 %v4138
    %v4747 = vunpack.c.l.b16 %v4139
    %v4748 = vunpack.c.l.b16 %v4140
    %v4749 = vunpack.c.l.b16 %v4141
    %v4750 = vunpack.c.l.b16 %v4142
    %v4751 = vunpack.c.l.b16 %v4143
    %v4752 = vpack.c.b16 %v4705, %v4704
    %v4753 = vpack.c.b16 %v4707, %v4706
    %v4754 = vpack.c.b16 %v4709, %v4708
    %v4755 = vpack.c.b16 %v4711, %v4710
    %v4756 = vpack.c.b16 %v4713, %v4712
    %v4757 = vpack.c.b16 %v4715, %v4714
    %v4758 = vpack.c.b16 %v4717, %v4716
    %v4759 = vpack.c.b16 %v4719, %v4718
    %v4760 = vpack.c.b16 %v4721, %v4720
    %v4761 = vpack.c.b16 %v4723, %v4722
    %v4762 = vpack.c.b16 %v4725, %v4724
    %v4763 = vpack.c.b16 %v4727, %v4726
    %v4764 = vpack.c.b16 %v4729, %v4728
    %v4765 = vpack.c.b16 %v4731, %v4730
    %v4766 = vpack.c.b16 %v4733, %v4732
    %v4767 = vpack.c.b16 %v4735, %v4734
    %v4768 = vpack.c.b16 %v4737, %v4736
    %v4769 = vpack.c.b16 %v4739, %v4738
    %v4770 = vpack.c.b16 %v4741, %v4740
    %v4771 = vpack.c.b16 %v4743, %v4742
    %v4772 = vpack.c.b16 %v4745, %v4744
    %v4773 = vpack.c.b16 %v4747, %v4746
    %v4774 = vpack.c.b16 %v4749, %v4748
    %v4775 = vpack.c.b16 %v4751, %v4750
    %4800 = vmatprep.subr.bf16.mxu0 0
    %4801 = vmatpush1.bf16.msra.mxu0 %v4759
    %4802 = vmatprep.subr.bf16.mxu0 0
    %4803 = vmatpush1.bf16.msra.mxu0 %v4758
    %4804 = vmatprep.subr.bf16.mxu0 0
    %4805 = vmatpush1.bf16.msra.mxu0 %v4757
    %4806 = vmatprep.subr.bf16.mxu0 0
    %4807 = vmatpush1.bf16.msra.mxu0 %v4756
    %4808 = vmatprep.subr.bf16.mxu0 0
    %4809 = vmatpush1.bf16.msra.mxu0 %v4755
    %4810 = vmatprep.subr.bf16.mxu0 0
    %4811 = vmatpush1.bf16.msra.mxu0 %v4754
    %4812 = vmatprep.subr.bf16.mxu0 0
    %4813 = vmatpush1.bf16.msra.mxu0 %v4753
    %4814 = vmatprep.subr.bf16.mxu0 0
    %4815 = vmatpush1.bf16.msra.mxu0 %v4752
    %4816 = vmatprep.subr.bf16.mxu0 0
    %4817 = vmatpush2.bf16.msra.mxu0 %v4767
    %4818 = vmatprep.subr.bf16.mxu0 0
    %4819 = vmatpush2.bf16.msra.mxu0 %v4766
    %4820 = vmatprep.subr.bf16.mxu0 0
    %4821 = vmatpush2.bf16.msra.mxu0 %v4765
    %4822 = vmatprep.subr.bf16.mxu0 0
    %4823 = vmatpush2.bf16.msra.mxu0 %v4764
    %4824 = vmatprep.subr.bf16.mxu0 0
    %4825 = vmatpush2.bf16.msra.mxu0 %v4763
    %4826 = vmatprep.subr.bf16.mxu0 0
    %4827 = vmatpush2.bf16.msra.mxu0 %v4762
    %4828 = vmatprep.subr.bf16.mxu0 0
    %4829 = vmatpush2.bf16.msra.mxu0 %v4761
    %4830 = vmatprep.subr.bf16.mxu0 0
    %4831 = vmatpush2.bf16.msra.mxu0 %v4760
    %4832 = vmatprep.mubr.bf16.mxu0 %v4465
    %4833 = vmatmul.mubr.bf16.gmra.mxu0 %v4464
    %v4834 = vpop.f32.mrf.mxu0
    %v4835 = vadd.f32 0.0, %v4834
    %v4836 = vpop.f32.mrf.mxu0
    %v4837 = vpop.f32.mrf.mxu0
    %v4838 = vadd.f32 0.0, %v4837
    %v4839 = vpop.f32.mrf.mxu0
    %4840 = vmatprep.mubr.bf16.mxu0 %v4468
    %4841 = vmatmul.mubr.bf16.gmra.mxu0 %v4467
    %v4842 = vpop.f32.mrf.mxu0
    %v4843 = vadd.f32 0.0, %v4842
    %v4844 = vpop.f32.mrf.mxu0
    %v4845 = vpop.f32.mrf.mxu0
    %v4846 = vadd.f32 0.0, %v4845
    %v4847 = vpop.f32.mrf.mxu0
    %4848 = vmatprep.mubr.bf16.mxu0 %v4471
    %4849 = vmatmul.mubr.bf16.gmra.mxu0 %v4470
    %v4850 = vpop.f32.mrf.mxu0
    %v4851 = vadd.f32 0.0, %v4850
    %v4852 = vpop.f32.mrf.mxu0
    %v4853 = vpop.f32.mrf.mxu0
    %v4854 = vadd.f32 0.0, %v4853
    %v4855 = vpop.f32.mrf.mxu0
    %4856 = vmatprep.mubr.bf16.mxu0 %v4474
    %4857 = vmatmul.mubr.bf16.gmra.mxu0 %v4473
    %v4858 = vpop.f32.mrf.mxu0
    %v4859 = vadd.f32 0.0, %v4858
    %v4860 = vpop.f32.mrf.mxu0
    %v4861 = vpop.f32.mrf.mxu0
    %v4862 = vadd.f32 0.0, %v4861
    %v4863 = vpop.f32.mrf.mxu0
    %4864 = vmatprep.mubr.bf16.mxu0 %v4477
    %4865 = vmatmul.mubr.bf16.gmra.mxu0 %v4476
    %v4866 = vpop.f32.mrf.mxu0
    %v4867 = vadd.f32 0.0, %v4866
    %v4868 = vpop.f32.mrf.mxu0
    %v4869 = vpop.f32.mrf.mxu0
    %v4870 = vadd.f32 0.0, %v4869
    %v4871 = vpop.f32.mrf.mxu0
    %4872 = vmatprep.mubr.bf16.mxu0 %v4480
    %4873 = vmatmul.mubr.bf16.gmra.mxu0 %v4479
    %v4874 = vpop.f32.mrf.mxu0
    %v4875 = vadd.f32 0.0, %v4874
    %v4876 = vpop.f32.mrf.mxu0
    %v4877 = vpop.f32.mrf.mxu0
    %v4878 = vadd.f32 0.0, %v4877
    %v4879 = vpop.f32.mrf.mxu0
    %4880 = vmatprep.mubr.bf16.mxu0 %v4483
    %4881 = vmatmul.mubr.bf16.gmra.mxu0 %v4482
    %v4882 = vpop.f32.mrf.mxu0
    %v4883 = vadd.f32 0.0, %v4882
    %v4884 = vpop.f32.mrf.mxu0
    %v4885 = vpop.f32.mrf.mxu0
    %v4886 = vadd.f32 0.0, %v4885
    %v4887 = vpop.f32.mrf.mxu0
    %4888 = vmatprep.mubr.bf16.mxu0 %v4486
    %4889 = vmatmul.mubr.bf16.gmra.mxu0 %v4485
    %v4890 = vpop.f32.mrf.mxu0
    %v4891 = vadd.f32 0.0, %v4890
    %v4892 = vpop.f32.mrf.mxu0
    %v4893 = vpop.f32.mrf.mxu0
    %v4894 = vadd.f32 0.0, %v4893
    %v4895 = vpop.f32.mrf.mxu0
    %4896 = vmatprep.mubr.bf16.mxu0 %v4489
    %4897 = vmatmul.mubr.bf16.gmra.mxu0 %v4488
    %v4898 = vpop.f32.mrf.mxu0
    %v4899 = vadd.f32 0.0, %v4898
    %v4900 = vpop.f32.mrf.mxu0
    %v4901 = vpop.f32.mrf.mxu0
    %v4902 = vadd.f32 0.0, %v4901
    %v4903 = vpop.f32.mrf.mxu0
    %4904 = vmatprep.mubr.bf16.mxu0 %v4492
    %4905 = vmatmul.mubr.bf16.gmra.mxu0 %v4491
    %v4906 = vpop.f32.mrf.mxu0
    %v4907 = vadd.f32 0.0, %v4906
    %v4908 = vpop.f32.mrf.mxu0
    %v4909 = vpop.f32.mrf.mxu0
    %v4910 = vadd.f32 0.0, %v4909
    %v4911 = vpop.f32.mrf.mxu0
    %4912 = vmatprep.mubr.bf16.mxu0 %v4495
    %4913 = vmatmul.mubr.bf16.gmra.mxu0 %v4494
    %v4914 = vpop.f32.mrf.mxu0
    %v4915 = vadd.f32 0.0, %v4914
    %v4916 = vpop.f32.mrf.mxu0
    %v4917 = vpop.f32.mrf.mxu0
    %v4918 = vadd.f32 0.0, %v4917
    %v4919 = vpop.f32.mrf.mxu0
    %4920 = vmatprep.mubr.bf16.mxu0 %v4498
    %4921 = vmatmul.mubr.bf16.gmra.mxu0 %v4497
    %v4922 = vpop.f32.mrf.mxu0
    %v4923 = vadd.f32 0.0, %v4922
    %v4924 = vpop.f32.mrf.mxu0
    %v4925 = vpop.f32.mrf.mxu0
    %v4926 = vadd.f32 0.0, %v4925
    %v4927 = vpop.f32.mrf.mxu0
    %4928 = vmatprep.mubr.bf16.mxu0 %v4501
    %4929 = vmatmul.mubr.bf16.gmra.mxu0 %v4500
    %v4930 = vpop.f32.mrf.mxu0
    %v4931 = vadd.f32 0.0, %v4930
    %v4932 = vpop.f32.mrf.mxu0
    %v4933 = vpop.f32.mrf.mxu0
    %v4934 = vadd.f32 0.0, %v4933
    %v4935 = vpop.f32.mrf.mxu0
    %4936 = vmatprep.mubr.bf16.mxu0 %v4504
    %4937 = vmatmul.mubr.bf16.gmra.mxu0 %v4503
    %v4938 = vpop.f32.mrf.mxu0
    %v4939 = vadd.f32 0.0, %v4938
    %v4940 = vpop.f32.mrf.mxu0
    %v4941 = vpop.f32.mrf.mxu0
    %v4942 = vadd.f32 0.0, %v4941
    %v4943 = vpop.f32.mrf.mxu0
    %4944 = vmatprep.mubr.bf16.mxu0 %v4507
    %4945 = vmatmul.mubr.bf16.gmra.mxu0 %v4506
    %v4946 = vpop.f32.mrf.mxu0
    %v4947 = vadd.f32 0.0, %v4946
    %v4948 = vpop.f32.mrf.mxu0
    %v4949 = vpop.f32.mrf.mxu0
    %v4950 = vadd.f32 0.0, %v4949
    %v4951 = vpop.f32.mrf.mxu0
    %4952 = vmatprep.mubr.bf16.mxu0 %v4510
    %4953 = vmatmul.mubr.bf16.gmra.mxu0 %v4509
    %v4954 = vpop.f32.mrf.mxu0
    %v4955 = vadd.f32 0.0, %v4954
    %v4956 = vpop.f32.mrf.mxu0
    %v4957 = vpop.f32.mrf.mxu0
    %v4958 = vadd.f32 0.0, %v4957
    %v4959 = vpop.f32.mrf.mxu0
    %4960 = vmatprep.mubr.bf16.mxu0 %v4513
    %4961 = vmatmul.mubr.bf16.gmra.mxu0 %v4512
    %v4962 = vpop.f32.mrf.mxu0
    %v4963 = vadd.f32 0.0, %v4962
    %v4964 = vpop.f32.mrf.mxu0
    %v4965 = vpop.f32.mrf.mxu0
    %v4966 = vadd.f32 0.0, %v4965
    %v4967 = vpop.f32.mrf.mxu0
    %4968 = vmatprep.mubr.bf16.mxu0 %v4516
    %4969 = vmatmul.mubr.bf16.gmra.mxu0 %v4515
    %v4970 = vpop.f32.mrf.mxu0
    %v4971 = vadd.f32 0.0, %v4970
    %v4972 = vpop.f32.mrf.mxu0
    %v4973 = vpop.f32.mrf.mxu0
    %v4974 = vadd.f32 0.0, %v4973
    %v4975 = vpop.f32.mrf.mxu0
    %4976 = vmatprep.mubr.bf16.mxu0 %v4519
    %4977 = vmatmul.mubr.bf16.gmra.mxu0 %v4518
    %v4978 = vpop.f32.mrf.mxu0
    %v4979 = vadd.f32 0.0, %v4978
    %v4980 = vpop.f32.mrf.mxu0
    %v4981 = vpop.f32.mrf.mxu0
    %v4982 = vadd.f32 0.0, %v4981
    %v4983 = vpop.f32.mrf.mxu0
    %4984 = vmatprep.mubr.bf16.mxu0 %v4522
    %4985 = vmatmul.mubr.bf16.gmra.mxu0 %v4521
    %v4986 = vpop.f32.mrf.mxu0
    %v4987 = vadd.f32 0.0, %v4986
    %v4988 = vpop.f32.mrf.mxu0
    %v4989 = vpop.f32.mrf.mxu0
    %v4990 = vadd.f32 0.0, %v4989
    %v4991 = vpop.f32.mrf.mxu0
    %4992 = vmatprep.mubr.bf16.mxu0 %v4525
    %4993 = vmatmul.mubr.bf16.gmra.mxu0 %v4524
    %v4994 = vpop.f32.mrf.mxu0
    %v4995 = vadd.f32 0.0, %v4994
    %v4996 = vpop.f32.mrf.mxu0
    %v4997 = vpop.f32.mrf.mxu0
    %v4998 = vadd.f32 0.0, %v4997
    %v4999 = vpop.f32.mrf.mxu0
    %5000 = vmatprep.mubr.bf16.mxu0 %v4528
    %5001 = vmatmul.mubr.bf16.gmra.mxu0 %v4527
    %v5002 = vpop.f32.mrf.mxu0
    %v5003 = vadd.f32 0.0, %v5002
    %v5004 = vpop.f32.mrf.mxu0
    %v5005 = vpop.f32.mrf.mxu0
    %v5006 = vadd.f32 0.0, %v5005
    %v5007 = vpop.f32.mrf.mxu0
    %5008 = vmatprep.mubr.bf16.mxu0 %v4531
    %5009 = vmatmul.mubr.bf16.gmra.mxu0 %v4530
    %v5010 = vpop.f32.mrf.mxu0
    %v5011 = vadd.f32 0.0, %v5010
    %v5012 = vpop.f32.mrf.mxu0
    %v5013 = vpop.f32.mrf.mxu0
    %v5014 = vadd.f32 0.0, %v5013
    %v5015 = vpop.f32.mrf.mxu0
    %5016 = vmatprep.mubr.bf16.mxu0 %v4534
    %5017 = vmatmul.mubr.bf16.gmra.mxu0 %v4533
    %v5018 = vpop.f32.mrf.mxu0
    %v5019 = vadd.f32 0.0, %v5018
    %v5020 = vpop.f32.mrf.mxu0
    %v5021 = vpop.f32.mrf.mxu0
    %v5022 = vadd.f32 0.0, %v5021
    %v5023 = vpop.f32.mrf.mxu0
    %5024 = vmatprep.mubr.bf16.mxu0 %v4537
    %5025 = vmatmul.mubr.bf16.gmra.mxu0 %v4536
    %v5026 = vpop.f32.mrf.mxu0
    %v5027 = vadd.f32 0.0, %v5026
    %v5028 = vpop.f32.mrf.mxu0
    %v5029 = vpop.f32.mrf.mxu0
    %v5030 = vadd.f32 0.0, %v5029
    %v5031 = vpop.f32.mrf.mxu0
    %5032 = vmatprep.mubr.bf16.mxu0 %v4540
    %5033 = vmatmul.mubr.bf16.gmra.mxu0 %v4539
    %v5034 = vpop.f32.mrf.mxu0
    %v5035 = vadd.f32 0.0, %v5034
    %v5036 = vpop.f32.mrf.mxu0
    %v5037 = vpop.f32.mrf.mxu0
    %v5038 = vadd.f32 0.0, %v5037
    %v5039 = vpop.f32.mrf.mxu0
    %5040 = vmatprep.mubr.bf16.mxu0 %v4543
    %5041 = vmatmul.mubr.bf16.gmra.mxu0 %v4542
    %v5042 = vpop.f32.mrf.mxu0
    %v5043 = vadd.f32 0.0, %v5042
    %v5044 = vpop.f32.mrf.mxu0
    %v5045 = vpop.f32.mrf.mxu0
    %v5046 = vadd.f32 0.0, %v5045
    %v5047 = vpop.f32.mrf.mxu0
    %5048 = vmatprep.mubr.bf16.mxu0 %v4546
    %5049 = vmatmul.mubr.bf16.gmra.mxu0 %v4545
    %v5050 = vpop.f32.mrf.mxu0
    %v5051 = vadd.f32 0.0, %v5050
    %v5052 = vpop.f32.mrf.mxu0
    %v5053 = vpop.f32.mrf.mxu0
    %v5054 = vadd.f32 0.0, %v5053
    %v5055 = vpop.f32.mrf.mxu0
    %5056 = vmatprep.mubr.bf16.mxu0 %v4549
    %5057 = vmatmul.mubr.bf16.gmra.mxu0 %v4548
    %v5058 = vpop.f32.mrf.mxu0
    %v5059 = vadd.f32 0.0, %v5058
    %v5060 = vpop.f32.mrf.mxu0
    %v5061 = vpop.f32.mrf.mxu0
    %v5062 = vadd.f32 0.0, %v5061
    %v5063 = vpop.f32.mrf.mxu0
    %5064 = vmatprep.mubr.bf16.mxu0 %v4552
    %5065 = vmatmul.mubr.bf16.gmra.mxu0 %v4551
    %v5066 = vpop.f32.mrf.mxu0
    %v5067 = vadd.f32 0.0, %v5066
    %v5068 = vpop.f32.mrf.mxu0
    %v5069 = vpop.f32.mrf.mxu0
    %v5070 = vadd.f32 0.0, %v5069
    %v5071 = vpop.f32.mrf.mxu0
    %5072 = vmatprep.mubr.bf16.mxu0 %v4555
    %5073 = vmatmul.mubr.bf16.gmra.mxu0 %v4554
    %v5074 = vpop.f32.mrf.mxu0
    %v5075 = vadd.f32 0.0, %v5074
    %v5076 = vpop.f32.mrf.mxu0
    %v5077 = vpop.f32.mrf.mxu0
    %v5078 = vadd.f32 0.0, %v5077
    %v5079 = vpop.f32.mrf.mxu0
    %5080 = vmatprep.mubr.bf16.mxu0 %v4558
    %5081 = vmatmul.mubr.bf16.gmra.mxu0 %v4557
    %v5082 = vpop.f32.mrf.mxu0
    %v5083 = vadd.f32 0.0, %v5082
    %v5084 = vpop.f32.mrf.mxu0
    %v5085 = vpop.f32.mrf.mxu0
    %v5086 = vadd.f32 0.0, %v5085
    %v5087 = vpop.f32.mrf.mxu0
    %5088 = vdwg.mxu0
    %5089 = vmatprep.subr.bf16.mxu0 0
    %5090 = vmatpush1.bf16.msra.mxu0 %v4775
    %5091 = vmatprep.subr.bf16.mxu0 0
    %5092 = vmatpush1.bf16.msra.mxu0 %v4774
    %5093 = vmatprep.subr.bf16.mxu0 0
    %5094 = vmatpush1.bf16.msra.mxu0 %v4773
    %5095 = vmatprep.subr.bf16.mxu0 0
    %5096 = vmatpush1.bf16.msra.mxu0 %v4772
    %5097 = vmatprep.subr.bf16.mxu0 0
    %5098 = vmatpush1.bf16.msra.mxu0 %v4771
    %5099 = vmatprep.subr.bf16.mxu0 0
    %5100 = vmatpush1.bf16.msra.mxu0 %v4770
    %5101 = vmatprep.subr.bf16.mxu0 0
    %5102 = vmatpush1.bf16.msra.mxu0 %v4769
    %5103 = vmatprep.subr.bf16.mxu0 0
    %5104 = vmatpush1.bf16.msra.mxu0 %v4768
    %5105 = vmatprep.subr.bf16.mxu0 0
    %5106 = vmatpush2.bf16.msra.mxu0 0
    %5107 = vmatprep.subr.bf16.mxu0 0
    %5108 = vmatpush2.bf16.msra.mxu0 0
    %5109 = vmatprep.subr.bf16.mxu0 0
    %5110 = vmatpush2.bf16.msra.mxu0 0
    %5111 = vmatprep.subr.bf16.mxu0 0
    %5112 = vmatpush2.bf16.msra.mxu0 0
    %5113 = vmatprep.subr.bf16.mxu0 0
    %5114 = vmatpush2.bf16.msra.mxu0 0
    %5115 = vmatprep.subr.bf16.mxu0 0
    %5116 = vmatpush2.bf16.msra.mxu0 0
    %5117 = vmatprep.subr.bf16.mxu0 0
    %5118 = vmatpush2.bf16.msra.mxu0 0
    %5119 = vmatprep.subr.bf16.mxu0 0
    %5120 = vmatpush2.bf16.msra.mxu0 0
    %5121 = vmatprep.mubr.bf16.mxu0 0
    %5122 = vmatmul.mubr.bf16.gmra.mxu0 %v4466
    %v5123 = vpop.f32.mrf.mxu0
    %v5124 = vadd.f32 %v4835, %v5123
    %v5125 = vpop.f32.mrf.mxu0
    %v5126 = vpop.f32.mrf.mxu0
    %v5127 = vadd.f32 %v4838, %v5126
    %v5128 = vpop.f32.mrf.mxu0
    %5129 = vmatprep.mubr.bf16.mxu0 0
    %5130 = vmatmul.mubr.bf16.gmra.mxu0 %v4469
    %v5131 = vpop.f32.mrf.mxu0
    %v5132 = vadd.f32 %v4843, %v5131
    %v5133 = vpop.f32.mrf.mxu0
    %v5134 = vpop.f32.mrf.mxu0
    %v5135 = vadd.f32 %v4846, %v5134
    %v5136 = vpop.f32.mrf.mxu0
    %5137 = vmatprep.mubr.bf16.mxu0 0
    %5138 = vmatmul.mubr.bf16.gmra.mxu0 %v4472
    %v5139 = vpop.f32.mrf.mxu0
    %v5140 = vadd.f32 %v4851, %v5139
    %v5141 = vpop.f32.mrf.mxu0
    %v5142 = vpop.f32.mrf.mxu0
    %v5143 = vadd.f32 %v4854, %v5142
    %v5144 = vpop.f32.mrf.mxu0
    %5145 = vmatprep.mubr.bf16.mxu0 0
    %5146 = vmatmul.mubr.bf16.gmra.mxu0 %v4475
    %v5147 = vpop.f32.mrf.mxu0
    %v5148 = vadd.f32 %v4859, %v5147
    %v5149 = vpop.f32.mrf.mxu0
    %v5150 = vpop.f32.mrf.mxu0
    %v5151 = vadd.f32 %v4862, %v5150
    %v5152 = vpop.f32.mrf.mxu0
    %5153 = vmatprep.mubr.bf16.mxu0 0
    %5154 = vmatmul.mubr.bf16.gmra.mxu0 %v4478
    %v5155 = vpop.f32.mrf.mxu0
    %v5156 = vadd.f32 %v4867, %v5155
    %v5157 = vpop.f32.mrf.mxu0
    %v5158 = vpop.f32.mrf.mxu0
    %v5159 = vadd.f32 %v4870, %v5158
    %v5160 = vpop.f32.mrf.mxu0
    %5161 = vmatprep.mubr.bf16.mxu0 0
    %5162 = vmatmul.mubr.bf16.gmra.mxu0 %v4481
    %v5163 = vpop.f32.mrf.mxu0
    %v5164 = vadd.f32 %v4875, %v5163
    %v5165 = vpop.f32.mrf.mxu0
    %v5166 = vpop.f32.mrf.mxu0
    %v5167 = vadd.f32 %v4878, %v5166
    %v5168 = vpop.f32.mrf.mxu0
    %5169 = vmatprep.mubr.bf16.mxu0 0
    %5170 = vmatmul.mubr.bf16.gmra.mxu0 %v4484
    %v5171 = vpop.f32.mrf.mxu0
    %v5172 = vadd.f32 %v4883, %v5171
    %v5173 = vpop.f32.mrf.mxu0
    %v5174 = vpop.f32.mrf.mxu0
    %v5175 = vadd.f32 %v4886, %v5174
    %v5176 = vpop.f32.mrf.mxu0
    %5177 = vmatprep.mubr.bf16.mxu0 0
    %5178 = vmatmul.mubr.bf16.gmra.mxu0 %v4487
    %v5179 = vpop.f32.mrf.mxu0
    %v5180 = vadd.f32 %v4891, %v5179
    %v5181 = vpop.f32.mrf.mxu0
    %v5182 = vpop.f32.mrf.mxu0
    %v5183 = vadd.f32 %v4894, %v5182
    %v5184 = vpop.f32.mrf.mxu0
    %5185 = vmatprep.mubr.bf16.mxu0 0
    %5186 = vmatmul.mubr.bf16.gmra.mxu0 %v4490
    %v5187 = vpop.f32.mrf.mxu0
    %v5188 = vadd.f32 %v4899, %v5187
    %v5189 = vpop.f32.mrf.mxu0
    %v5190 = vpop.f32.mrf.mxu0
    %v5191 = vadd.f32 %v4902, %v5190
    %v5192 = vpop.f32.mrf.mxu0
    %5193 = vmatprep.mubr.bf16.mxu0 0
    %5194 = vmatmul.mubr.bf16.gmra.mxu0 %v4493
    %v5195 = vpop.f32.mrf.mxu0
    %v5196 = vadd.f32 %v4907, %v5195
    %v5197 = vpop.f32.mrf.mxu0
    %v5198 = vpop.f32.mrf.mxu0
    %v5199 = vadd.f32 %v4910, %v5198
    %v5200 = vpop.f32.mrf.mxu0
    %5201 = vmatprep.mubr.bf16.mxu0 0
    %5202 = vmatmul.mubr.bf16.gmra.mxu0 %v4496
    %v5203 = vpop.f32.mrf.mxu0
    %v5204 = vadd.f32 %v4915, %v5203
    %v5205 = vpop.f32.mrf.mxu0
    %v5206 = vpop.f32.mrf.mxu0
    %v5207 = vadd.f32 %v4918, %v5206
    %v5208 = vpop.f32.mrf.mxu0
    %5209 = vmatprep.mubr.bf16.mxu0 0
    %5210 = vmatmul.mubr.bf16.gmra.mxu0 %v4499
    %v5211 = vpop.f32.mrf.mxu0
    %v5212 = vadd.f32 %v4923, %v5211
    %v5213 = vpop.f32.mrf.mxu0
    %v5214 = vpop.f32.mrf.mxu0
    %v5215 = vadd.f32 %v4926, %v5214
    %v5216 = vpop.f32.mrf.mxu0
    %5217 = vmatprep.mubr.bf16.mxu0 0
    %5218 = vmatmul.mubr.bf16.gmra.mxu0 %v4502
    %v5219 = vpop.f32.mrf.mxu0
    %v5220 = vadd.f32 %v4931, %v5219
    %v5221 = vpop.f32.mrf.mxu0
    %v5222 = vpop.f32.mrf.mxu0
    %v5223 = vadd.f32 %v4934, %v5222
    %v5224 = vpop.f32.mrf.mxu0
    %5225 = vmatprep.mubr.bf16.mxu0 0
    %5226 = vmatmul.mubr.bf16.gmra.mxu0 %v4505
    %v5227 = vpop.f32.mrf.mxu0
    %v5228 = vadd.f32 %v4939, %v5227
    %v5229 = vpop.f32.mrf.mxu0
    %v5230 = vpop.f32.mrf.mxu0
    %v5231 = vadd.f32 %v4942, %v5230
    %v5232 = vpop.f32.mrf.mxu0
    %5233 = vmatprep.mubr.bf16.mxu0 0
    %5234 = vmatmul.mubr.bf16.gmra.mxu0 %v4508
    %v5235 = vpop.f32.mrf.mxu0
    %v5236 = vadd.f32 %v4947, %v5235
    %v5237 = vpop.f32.mrf.mxu0
    %v5238 = vpop.f32.mrf.mxu0
    %v5239 = vadd.f32 %v4950, %v5238
    %v5240 = vpop.f32.mrf.mxu0
    %5241 = vmatprep.mubr.bf16.mxu0 0
    %5242 = vmatmul.mubr.bf16.gmra.mxu0 %v4511
    %v5243 = vpop.f32.mrf.mxu0
    %v5244 = vadd.f32 %v4955, %v5243
    %v5245 = vpop.f32.mrf.mxu0
    %v5246 = vpop.f32.mrf.mxu0
    %v5247 = vadd.f32 %v4958, %v5246
    %v5248 = vpop.f32.mrf.mxu0
    %5249 = vmatprep.mubr.bf16.mxu0 0
    %5250 = vmatmul.mubr.bf16.gmra.mxu0 %v4514
    %v5251 = vpop.f32.mrf.mxu0
    %v5252 = vadd.f32 %v4963, %v5251
    %v5253 = vpop.f32.mrf.mxu0
    %v5254 = vpop.f32.mrf.mxu0
    %v5255 = vadd.f32 %v4966, %v5254
    %v5256 = vpop.f32.mrf.mxu0
    %5257 = vmatprep.mubr.bf16.mxu0 0
    %5258 = vmatmul.mubr.bf16.gmra.mxu0 %v4517
    %v5259 = vpop.f32.mrf.mxu0
    %v5260 = vadd.f32 %v4971, %v5259
    %v5261 = vpop.f32.mrf.mxu0
    %v5262 = vpop.f32.mrf.mxu0
    %v5263 = vadd.f32 %v4974, %v5262
    %v5264 = vpop.f32.mrf.mxu0
    %5265 = vmatprep.mubr.bf16.mxu0 0
    %5266 = vmatmul.mubr.bf16.gmra.mxu0 %v4520
    %v5267 = vpop.f32.mrf.mxu0
    %v5268 = vadd.f32 %v4979, %v5267
    %v5269 = vpop.f32.mrf.mxu0
    %v5270 = vpop.f32.mrf.mxu0
    %v5271 = vadd.f32 %v4982, %v5270
    %v5272 = vpop.f32.mrf.mxu0
    %5273 = vmatprep.mubr.bf16.mxu0 0
    %5274 = vmatmul.mubr.bf16.gmra.mxu0 %v4523
    %v5275 = vpop.f32.mrf.mxu0
    %v5276 = vadd.f32 %v4987, %v5275
    %v5277 = vpop.f32.mrf.mxu0
    %v5278 = vpop.f32.mrf.mxu0
    %v5279 = vadd.f32 %v4990, %v5278
    %v5280 = vpop.f32.mrf.mxu0
    %5281 = vmatprep.mubr.bf16.mxu0 0
    %5282 = vmatmul.mubr.bf16.gmra.mxu0 %v4526
    %v5283 = vpop.f32.mrf.mxu0
    %v5284 = vadd.f32 %v4995, %v5283
    %v5285 = vpop.f32.mrf.mxu0
    %v5286 = vpop.f32.mrf.mxu0
    %v5287 = vadd.f32 %v4998, %v5286
    %v5288 = vpop.f32.mrf.mxu0
    %5289 = vmatprep.mubr.bf16.mxu0 0
    %5290 = vmatmul.mubr.bf16.gmra.mxu0 %v4529
    %v5291 = vpop.f32.mrf.mxu0
    %v5292 = vadd.f32 %v5003, %v5291
    %v5293 = vpop.f32.mrf.mxu0
    %v5294 = vpop.f32.mrf.mxu0
    %v5295 = vadd.f32 %v5006, %v5294
    %v5296 = vpop.f32.mrf.mxu0
    %5297 = vmatprep.mubr.bf16.mxu0 0
    %5298 = vmatmul.mubr.bf16.gmra.mxu0 %v4532
    %v5299 = vpop.f32.mrf.mxu0
    %v5300 = vadd.f32 %v5011, %v5299
    %v5301 = vpop.f32.mrf.mxu0
    %v5302 = vpop.f32.mrf.mxu0
    %v5303 = vadd.f32 %v5014, %v5302
    %v5304 = vpop.f32.mrf.mxu0
    %5305 = vmatprep.mubr.bf16.mxu0 0
    %5306 = vmatmul.mubr.bf16.gmra.mxu0 %v4535
    %v5307 = vpop.f32.mrf.mxu0
    %v5308 = vadd.f32 %v5019, %v5307
    %v5309 = vpop.f32.mrf.mxu0
    %v5310 = vpop.f32.mrf.mxu0
    %v5311 = vadd.f32 %v5022, %v5310
    %v5312 = vpop.f32.mrf.mxu0
    %5313 = vmatprep.mubr.bf16.mxu0 0
    %5314 = vmatmul.mubr.bf16.gmra.mxu0 %v4538
    %v5315 = vpop.f32.mrf.mxu0
    %v5316 = vadd.f32 %v5027, %v5315
    %v5317 = vpop.f32.mrf.mxu0
    %v5318 = vpop.f32.mrf.mxu0
    %v5319 = vadd.f32 %v5030, %v5318
    %v5320 = vpop.f32.mrf.mxu0
    %5321 = vmatprep.mubr.bf16.mxu0 0
    %5322 = vmatmul.mubr.bf16.gmra.mxu0 %v4541
    %v5323 = vpop.f32.mrf.mxu0
    %v5324 = vadd.f32 %v5035, %v5323
    %v5325 = vpop.f32.mrf.mxu0
    %v5326 = vpop.f32.mrf.mxu0
    %v5327 = vadd.f32 %v5038, %v5326
    %v5328 = vpop.f32.mrf.mxu0
    %5329 = vmatprep.mubr.bf16.mxu0 0
    %5330 = vmatmul.mubr.bf16.gmra.mxu0 %v4544
    %v5331 = vpop.f32.mrf.mxu0
    %v5332 = vadd.f32 %v5043, %v5331
    %v5333 = vpop.f32.mrf.mxu0
    %v5334 = vpop.f32.mrf.mxu0
    %v5335 = vadd.f32 %v5046, %v5334
    %v5336 = vpop.f32.mrf.mxu0
    %5337 = vmatprep.mubr.bf16.mxu0 0
    %5338 = vmatmul.mubr.bf16.gmra.mxu0 %v4547
    %v5339 = vpop.f32.mrf.mxu0
    %v5340 = vadd.f32 %v5051, %v5339
    %v5341 = vpop.f32.mrf.mxu0
    %v5342 = vpop.f32.mrf.mxu0
    %v5343 = vadd.f32 %v5054, %v5342
    %v5344 = vpop.f32.mrf.mxu0
    %5345 = vmatprep.mubr.bf16.mxu0 0
    %5346 = vmatmul.mubr.bf16.gmra.mxu0 %v4550
    %v5347 = vpop.f32.mrf.mxu0
    %v5348 = vadd.f32 %v5059, %v5347
    %v5349 = vpop.f32.mrf.mxu0
    %v5350 = vpop.f32.mrf.mxu0
    %v5351 = vadd.f32 %v5062, %v5350
    %v5352 = vpop.f32.mrf.mxu0
    %5353 = vmatprep.mubr.bf16.mxu0 0
    %5354 = vmatmul.mubr.bf16.gmra.mxu0 %v4553
    %v5355 = vpop.f32.mrf.mxu0
    %v5356 = vadd.f32 %v5067, %v5355
    %v5357 = vpop.f32.mrf.mxu0
    %v5358 = vpop.f32.mrf.mxu0
    %v5359 = vadd.f32 %v5070, %v5358
    %v5360 = vpop.f32.mrf.mxu0
    %5361 = vmatprep.mubr.bf16.mxu0 0
    %5362 = vmatmul.mubr.bf16.gmra.mxu0 %v4556
    %v5363 = vpop.f32.mrf.mxu0
    %v5364 = vadd.f32 %v5075, %v5363
    %v5365 = vpop.f32.mrf.mxu0
    %v5366 = vpop.f32.mrf.mxu0
    %v5367 = vadd.f32 %v5078, %v5366
    %v5368 = vpop.f32.mrf.mxu0
    %5369 = vmatprep.mubr.bf16.mxu0 0
    %5370 = vmatmul.mubr.bf16.gmra.mxu0 %v4559
    %v5371 = vpop.f32.mrf.mxu0
    %v5372 = vadd.f32 %v5083, %v5371
    %v5373 = vpop.f32.mrf.mxu0
    %v5374 = vpop.f32.mrf.mxu0
    %v5375 = vadd.f32 %v5086, %v5374
    %v5376 = vpop.f32.mrf.mxu0
    %5377 = vdwg.mxu0
    %v5378 = vadd.f32 %v5124, %v5127
    %v5379 = vadd.f32 %v5378, %v5132
    %v5380 = vadd.f32 %v5379, %v5135
    %v5381 = vadd.f32 %v5380, %v5140
    %v5382 = vadd.f32 %v5381, %v5143
    %v5383 = vadd.f32 %v5382, %v5148
    %v5384 = vadd.f32 %v5383, %v5151
    %v5385 = vadd.f32 %v5384, %v5156
    %v5386 = vadd.f32 %v5385, %v5159
    %v5387 = vadd.f32 %v5386, %v5164
    %v5388 = vadd.f32 %v5387, %v5167
    %v5389 = vadd.f32 %v5388, %v5172
    %v5390 = vadd.f32 %v5389, %v5175
    %v5391 = vadd.f32 %v5390, %v5180
    %v5392 = vadd.f32 %v5391, %v5183
    %v5393 = vadd.f32 %v5392, %v5188
    %v5394 = vadd.f32 %v5393, %v5191
    %v5395 = vadd.f32 %v5394, %v5196
    %v5396 = vadd.f32 %v5395, %v5199
    %v5397 = vadd.f32 %v5396, %v5204
    %v5398 = vadd.f32 %v5397, %v5207
    %v5399 = vadd.f32 %v5398, %v5212
    %v5400 = vadd.f32 %v5399, %v5215
    %v5401 = vadd.f32 %v5400, %v5220
    %v5402 = vadd.f32 %v5401, %v5223
    %v5403 = vadd.f32 %v5402, %v5228
    %v5404 = vadd.f32 %v5403, %v5231
    %v5405 = vadd.f32 %v5404, %v5236
    %v5406 = vadd.f32 %v5405, %v5239
    %v5407 = vadd.f32 %v5406, %v5244
    %v5408 = vadd.f32 %v5407, %v5247
    %v5409 = vadd.f32 %v5408, %v5252
    %v5410 = vadd.f32 %v5409, %v5255
    %v5411 = vadd.f32 %v5410, %v5260
    %v5412 = vadd.f32 %v5411, %v5263
    %v5413 = vadd.f32 %v5412, %v5268
    %v5414 = vadd.f32 %v5413, %v5271
    %v5415 = vadd.f32 %v5414, %v5276
    %v5416 = vadd.f32 %v5415, %v5279
    %v5417 = vadd.f32 %v5416, %v5284
    %v5418 = vadd.f32 %v5417, %v5287
    %v5419 = vadd.f32 %v5418, %v5292
    %v5420 = vadd.f32 %v5419, %v5295
    %v5421 = vadd.f32 %v5420, %v5300
    %v5422 = vadd.f32 %v5421, %v5303
    %v5423 = vadd.f32 %v5422, %v5308
    %v5424 = vadd.f32 %v5423, %v5311
    %v5425 = vadd.f32 %v5424, %v5316
    %v5426 = vadd.f32 %v5425, %v5319
    %v5427 = vadd.f32 %v5426, %v5324
    %v5428 = vadd.f32 %v5427, %v5327
    %v5429 = vadd.f32 %v5428, %v5332
    %v5430 = vadd.f32 %v5429, %v5335
    %v5431 = vadd.f32 %v5430, %v5340
    %v5432 = vadd.f32 %v5431, %v5343
    %v5433 = vadd.f32 %v5432, %v5348
    %v5434 = vadd.f32 %v5433, %v5351
    %v5435 = vadd.f32 %v5434, %v5356
    %v5436 = vadd.f32 %v5435, %v5359
    %v5437 = vadd.f32 %v5436, %v5364
    %v5438 = vadd.f32 %v5437, %v5367
    %v5439 = vadd.f32 %v5438, %v5372
    %v5440 = vadd.f32 %v5439, %v5375
    %v5441 = vrot.slane %v5440, 4
    %v5442 = vadd.f32 %v5440, %v5441
    %v5443 = vrot.slane %v5442, 2
    %v5444 = vadd.f32 %v5442, %v5443
    %v5445 = vrot.slane %v5444, 1
    %v5446 = vadd.f32 %v5444, %v5445
    %v5447 = vmul.f32 %v5446, 0.001953125
    %v5448 = vsub.f32 %v5124, %v5447
    %v5449 = vsub.f32 %v5127, %v5447
    %v5450 = vsub.f32 %v5132, %v5447
    %v5451 = vsub.f32 %v5135, %v5447
    %v5452 = vsub.f32 %v5140, %v5447
    %v5453 = vsub.f32 %v5143, %v5447
    %v5454 = vsub.f32 %v5148, %v5447
    %v5455 = vsub.f32 %v5151, %v5447
    %v5456 = vsub.f32 %v5156, %v5447
    %v5457 = vsub.f32 %v5159, %v5447
    %v5458 = vsub.f32 %v5164, %v5447
    %v5459 = vsub.f32 %v5167, %v5447
    %v5460 = vsub.f32 %v5172, %v5447
    %v5461 = vsub.f32 %v5175, %v5447
    %v5462 = vsub.f32 %v5180, %v5447
    %v5463 = vsub.f32 %v5183, %v5447
    %v5464 = vsub.f32 %v5188, %v5447
    %v5465 = vsub.f32 %v5191, %v5447
    %v5466 = vsub.f32 %v5196, %v5447
    %v5467 = vsub.f32 %v5199, %v5447
    %v5468 = vsub.f32 %v5204, %v5447
    %v5469 = vsub.f32 %v5207, %v5447
    %v5470 = vsub.f32 %v5212, %v5447
    %v5471 = vsub.f32 %v5215, %v5447
    %v5472 = vsub.f32 %v5220, %v5447
    %v5473 = vsub.f32 %v5223, %v5447
    %v5474 = vsub.f32 %v5228, %v5447
    %v5475 = vsub.f32 %v5231, %v5447
    %v5476 = vsub.f32 %v5236, %v5447
    %v5477 = vsub.f32 %v5239, %v5447
    %v5478 = vsub.f32 %v5244, %v5447
    %v5479 = vsub.f32 %v5247, %v5447
    %v5480 = vsub.f32 %v5252, %v5447
    %v5481 = vsub.f32 %v5255, %v5447
    %v5482 = vsub.f32 %v5260, %v5447
    %v5483 = vsub.f32 %v5263, %v5447
    %v5484 = vsub.f32 %v5268, %v5447
    %v5485 = vsub.f32 %v5271, %v5447
    %v5486 = vsub.f32 %v5276, %v5447
    %v5487 = vsub.f32 %v5279, %v5447
    %v5488 = vsub.f32 %v5284, %v5447
    %v5489 = vsub.f32 %v5287, %v5447
    %v5490 = vsub.f32 %v5292, %v5447
    %v5491 = vsub.f32 %v5295, %v5447
    %v5492 = vsub.f32 %v5300, %v5447
    %v5493 = vsub.f32 %v5303, %v5447
    %v5494 = vsub.f32 %v5308, %v5447
    %v5495 = vsub.f32 %v5311, %v5447
    %v5496 = vsub.f32 %v5316, %v5447
    %v5497 = vsub.f32 %v5319, %v5447
    %v5498 = vsub.f32 %v5324, %v5447
    %v5499 = vsub.f32 %v5327, %v5447
    %v5500 = vsub.f32 %v5332, %v5447
    %v5501 = vsub.f32 %v5335, %v5447
    %v5502 = vsub.f32 %v5340, %v5447
    %v5503 = vsub.f32 %v5343, %v5447
    %v5504 = vsub.f32 %v5348, %v5447
    %v5505 = vsub.f32 %v5351, %v5447
    %v5506 = vsub.f32 %v5356, %v5447
    %v5507 = vsub.f32 %v5359, %v5447
    %v5508 = vsub.f32 %v5364, %v5447
    %v5509 = vsub.f32 %v5367, %v5447
    %v5510 = vsub.f32 %v5372, %v5447
    %v5511 = vsub.f32 %v5375, %v5447
    %v5512 = vmul.f32 %v5448, %v5448
    %v5513 = vmul.f32 %v5449, %v5449
    %v5514 = vmul.f32 %v5450, %v5450
    %v5515 = vmul.f32 %v5451, %v5451
    %v5516 = vmul.f32 %v5452, %v5452
    %v5517 = vmul.f32 %v5453, %v5453
    %v5518 = vmul.f32 %v5454, %v5454
    %v5519 = vmul.f32 %v5455, %v5455
    %v5520 = vmul.f32 %v5456, %v5456
    %v5521 = vmul.f32 %v5457, %v5457
    %v5522 = vmul.f32 %v5458, %v5458
    %v5523 = vmul.f32 %v5459, %v5459
    %v5524 = vmul.f32 %v5460, %v5460
    %v5525 = vmul.f32 %v5461, %v5461
    %v5526 = vmul.f32 %v5462, %v5462
    %v5527 = vmul.f32 %v5463, %v5463
    %v5528 = vmul.f32 %v5464, %v5464
    %v5529 = vmul.f32 %v5465, %v5465
    %v5530 = vmul.f32 %v5466, %v5466
    %v5531 = vmul.f32 %v5467, %v5467
    %v5532 = vmul.f32 %v5468, %v5468
    %v5533 = vmul.f32 %v5469, %v5469
    %v5534 = vmul.f32 %v5470, %v5470
    %v5535 = vmul.f32 %v5471, %v5471
    %v5536 = vmul.f32 %v5472, %v5472
    %v5537 = vmul.f32 %v5473, %v5473
    %v5538 = vmul.f32 %v5474, %v5474
    %v5539 = vmul.f32 %v5475, %v5475
    %v5540 = vmul.f32 %v5476, %v5476
    %v5541 = vmul.f32 %v5477, %v5477
    %v5542 = vmul.f32 %v5478, %v5478
    %v5543 = vmul.f32 %v5479, %v5479
    %v5544 = vmul.f32 %v5480, %v5480
    %v5545 = vmul.f32 %v5481, %v5481
    %v5546 = vmul.f32 %v5482, %v5482
    %v5547 = vmul.f32 %v5483, %v5483
    %v5548 = vmul.f32 %v5484, %v5484
    %v5549 = vmul.f32 %v5485, %v5485
    %v5550 = vmul.f32 %v5486, %v5486
    %v5551 = vmul.f32 %v5487, %v5487
    %v5552 = vmul.f32 %v5488, %v5488
    %v5553 = vmul.f32 %v5489, %v5489
    %v5554 = vmul.f32 %v5490, %v5490
    %v5555 = vmul.f32 %v5491, %v5491
    %v5556 = vmul.f32 %v5492, %v5492
    %v5557 = vmul.f32 %v5493, %v5493
    %v5558 = vmul.f32 %v5494, %v5494
    %v5559 = vmul.f32 %v5495, %v5495
    %v5560 = vmul.f32 %v5496, %v5496
    %v5561 = vmul.f32 %v5497, %v5497
    %v5562 = vmul.f32 %v5498, %v5498
    %v5563 = vmul.f32 %v5499, %v5499
    %v5564 = vmul.f32 %v5500, %v5500
    %v5565 = vmul.f32 %v5501, %v5501
    %v5566 = vmul.f32 %v5502, %v5502
    %v5567 = vmul.f32 %v5503, %v5503
    %v5568 = vmul.f32 %v5504, %v5504
    %v5569 = vmul.f32 %v5505, %v5505
    %v5570 = vmul.f32 %v5506, %v5506
    %v5571 = vmul.f32 %v5507, %v5507
    %v5572 = vmul.f32 %v5508, %v5508
    %v5573 = vmul.f32 %v5509, %v5509
    %v5574 = vmul.f32 %v5510, %v5510
    %v5575 = vmul.f32 %v5511, %v5511
    %v5576 = vadd.f32 %v5512, %v5513
    %v5577 = vadd.f32 %v5576, %v5514
    %v5578 = vadd.f32 %v5577, %v5515
    %v5579 = vadd.f32 %v5578, %v5516
    %v5580 = vadd.f32 %v5579, %v5517
    %v5581 = vadd.f32 %v5580, %v5518
    %v5582 = vadd.f32 %v5581, %v5519
    %v5583 = vadd.f32 %v5582, %v5520
    %v5584 = vadd.f32 %v5583, %v5521
    %v5585 = vadd.f32 %v5584, %v5522
    %v5586 = vadd.f32 %v5585, %v5523
    %v5587 = vadd.f32 %v5586, %v5524
    %v5588 = vadd.f32 %v5587, %v5525
    %v5589 = vadd.f32 %v5588, %v5526
    %v5590 = vadd.f32 %v5589, %v5527
    %v5591 = vadd.f32 %v5590, %v5528
    %v5592 = vadd.f32 %v5591, %v5529
    %v5593 = vadd.f32 %v5592, %v5530
    %v5594 = vadd.f32 %v5593, %v5531
    %v5595 = vadd.f32 %v5594, %v5532
    %v5596 = vadd.f32 %v5595, %v5533
    %v5597 = vadd.f32 %v5596, %v5534
    %v5598 = vadd.f32 %v5597, %v5535
    %v5599 = vadd.f32 %v5598, %v5536
    %v5600 = vadd.f32 %v5599, %v5537
    %v5601 = vadd.f32 %v5600, %v5538
    %v5602 = vadd.f32 %v5601, %v5539
    %v5603 = vadd.f32 %v5602, %v5540
    %v5604 = vadd.f32 %v5603, %v5541
    %v5605 = vadd.f32 %v5604, %v5542
    %v5606 = vadd.f32 %v5605, %v5543
    %v5607 = vadd.f32 %v5606, %v5544
    %v5608 = vadd.f32 %v5607, %v5545
    %v5609 = vadd.f32 %v5608, %v5546
    %v5610 = vadd.f32 %v5609, %v5547
    %v5611 = vadd.f32 %v5610, %v5548
    %v5612 = vadd.f32 %v5611, %v5549
    %v5613 = vadd.f32 %v5612, %v5550
    %v5614 = vadd.f32 %v5613, %v5551
    %v5615 = vadd.f32 %v5614, %v5552
    %v5616 = vadd.f32 %v5615, %v5553
    %v5617 = vadd.f32 %v5616, %v5554
    %v5618 = vadd.f32 %v5617, %v5555
    %v5619 = vadd.f32 %v5618, %v5556
    %v5620 = vadd.f32 %v5619, %v5557
    %v5621 = vadd.f32 %v5620, %v5558
    %v5622 = vadd.f32 %v5621, %v5559
    %v5623 = vadd.f32 %v5622, %v5560
    %v5624 = vadd.f32 %v5623, %v5561
    %v5625 = vadd.f32 %v5624, %v5562
    %v5626 = vadd.f32 %v5625, %v5563
    %v5627 = vadd.f32 %v5626, %v5564
    %v5628 = vadd.f32 %v5627, %v5565
    %v5629 = vadd.f32 %v5628, %v5566
    %v5630 = vadd.f32 %v5629, %v5567
    %v5631 = vadd.f32 %v5630, %v5568
    %v5632 = vadd.f32 %v5631, %v5569
    %v5633 = vadd.f32 %v5632, %v5570
    %v5634 = vadd.f32 %v5633, %v5571
    %v5635 = vadd.f32 %v5634, %v5572
    %v5636 = vadd.f32 %v5635, %v5573
    %v5637 = vadd.f32 %v5636, %v5574
    %v5638 = vadd.f32 %v5637, %v5575
    %v5639 = vrot.slane %v5638, 4
    %v5640 = vadd.f32 %v5638, %v5639
    %v5641 = vrot.slane %v5640, 2
    %v5642 = vadd.f32 %v5640, %v5641
    %v5643 = vrot.slane %v5642, 1
    %v5644 = vadd.f32 %v5642, %v5643
    %v5645 = vmul.f32 %v5644, 0.001953125
    %v5646 = vld [vmem:[%s3] sm:$0x1]
    %v5647 = vadd.f32 %v5645, 1e-05
    %v5648 = vrsqrt.pop %v5647
    %v5649 = vmul.f32 %v5646, %v5648
    %v5650 = vld [vmem:[%s4] sm:$0x1]
    %v5651 = vmul.f32 %v5447, %v5649
    %v5652 = vsub.f32 %v5650, %v5651
    %v5654 = vlaneseq
    %v5655 = vshrl.u32 %v5654, 7
    %v5656 = vsub.s32 0, %v5655
    %v5657 = vrot.slane %v5649, %v5656
    %v5659 = vmul.f32 %v5124, %v5657
    %v5660 = vmul.f32 %v5127, %v5657
    %v5661 = vmul.f32 %v5132, %v5657
    %v5662 = vmul.f32 %v5135, %v5657
    %v5663 = vmul.f32 %v5140, %v5657
    %v5664 = vmul.f32 %v5143, %v5657
    %v5665 = vmul.f32 %v5148, %v5657
    %v5666 = vmul.f32 %v5151, %v5657
    %v5667 = vmul.f32 %v5156, %v5657
    %v5668 = vmul.f32 %v5159, %v5657
    %v5669 = vmul.f32 %v5164, %v5657
    %v5670 = vmul.f32 %v5167, %v5657
    %v5671 = vmul.f32 %v5172, %v5657
    %v5672 = vmul.f32 %v5175, %v5657
    %v5673 = vmul.f32 %v5180, %v5657
    %v5674 = vmul.f32 %v5183, %v5657
    %v5675 = vmul.f32 %v5188, %v5657
    %v5676 = vmul.f32 %v5191, %v5657
    %v5677 = vmul.f32 %v5196, %v5657
    %v5678 = vmul.f32 %v5199, %v5657
    %v5679 = vmul.f32 %v5204, %v5657
    %v5680 = vmul.f32 %v5207, %v5657
    %v5681 = vmul.f32 %v5212, %v5657
    %v5682 = vmul.f32 %v5215, %v5657
    %v5683 = vmul.f32 %v5220, %v5657
    %v5684 = vmul.f32 %v5223, %v5657
    %v5685 = vmul.f32 %v5228, %v5657
    %v5686 = vmul.f32 %v5231, %v5657
    %v5687 = vmul.f32 %v5236, %v5657
    %v5688 = vmul.f32 %v5239, %v5657
    %v5689 = vmul.f32 %v5244, %v5657
    %v5690 = vmul.f32 %v5247, %v5657
    %v5691 = vmul.f32 %v5252, %v5657
    %v5692 = vmul.f32 %v5255, %v5657
    %v5693 = vmul.f32 %v5260, %v5657
    %v5694 = vmul.f32 %v5263, %v5657
    %v5695 = vmul.f32 %v5268, %v5657
    %v5696 = vmul.f32 %v5271, %v5657
    %v5697 = vmul.f32 %v5276, %v5657
    %v5698 = vmul.f32 %v5279, %v5657
    %v5699 = vmul.f32 %v5284, %v5657
    %v5700 = vmul.f32 %v5287, %v5657
    %v5701 = vmul.f32 %v5292, %v5657
    %v5702 = vmul.f32 %v5295, %v5657
    %v5703 = vmul.f32 %v5300, %v5657
    %v5704 = vmul.f32 %v5303, %v5657
    %v5705 = vmul.f32 %v5308, %v5657
    %v5706 = vmul.f32 %v5311, %v5657
    %v5707 = vmul.f32 %v5316, %v5657
    %v5708 = vmul.f32 %v5319, %v5657
    %v5709 = vmul.f32 %v5324, %v5657
    %v5710 = vmul.f32 %v5327, %v5657
    %v5711 = vmul.f32 %v5332, %v5657
    %v5712 = vmul.f32 %v5335, %v5657
    %v5713 = vmul.f32 %v5340, %v5657
    %v5714 = vmul.f32 %v5343, %v5657
    %v5715 = vmul.f32 %v5348, %v5657
    %v5716 = vmul.f32 %v5351, %v5657
    %v5717 = vmul.f32 %v5356, %v5657
    %v5718 = vmul.f32 %v5359, %v5657
    %v5719 = vmul.f32 %v5364, %v5657
    %v5720 = vmul.f32 %v5367, %v5657
    %v5721 = vmul.f32 %v5372, %v5657
    %v5722 = vmul.f32 %v5375, %v5657
    %v5724 = vlaneseq
    %v5725 = vshrl.u32 %v5724, 7
    %v5726 = vsub.s32 0, %v5725
    %v5727 = vrot.slane %v5652, %v5726
    %v5729 = vadd.f32 %v5659, %v5727
    %v5730 = vadd.f32 %v5660, %v5727
    %v5731 = vadd.f32 %v5661, %v5727
    %v5732 = vadd.f32 %v5662, %v5727
    %v5733 = vadd.f32 %v5663, %v5727
    %v5734 = vadd.f32 %v5664, %v5727
    %v5735 = vadd.f32 %v5665, %v5727
    %v5736 = vadd.f32 %v5666, %v5727
    %v5737 = vadd.f32 %v5667, %v5727
    %v5738 = vadd.f32 %v5668, %v5727
    %v5739 = vadd.f32 %v5669, %v5727
    %v5740 = vadd.f32 %v5670, %v5727
    %v5741 = vadd.f32 %v5671, %v5727
    %v5742 = vadd.f32 %v5672, %v5727
    %v5743 = vadd.f32 %v5673, %v5727
    %v5744 = vadd.f32 %v5674, %v5727
    %v5745 = vadd.f32 %v5675, %v5727
    %v5746 = vadd.f32 %v5676, %v5727
    %v5747 = vadd.f32 %v5677, %v5727
    %v5748 = vadd.f32 %v5678, %v5727
    %v5749 = vadd.f32 %v5679, %v5727
    %v5750 = vadd.f32 %v5680, %v5727
    %v5751 = vadd.f32 %v5681, %v5727
    %v5752 = vadd.f32 %v5682, %v5727
    %v5753 = vadd.f32 %v5683, %v5727
    %v5754 = vadd.f32 %v5684, %v5727
    %v5755 = vadd.f32 %v5685, %v5727
    %v5756 = vadd.f32 %v5686, %v5727
    %v5757 = vadd.f32 %v5687, %v5727
    %v5758 = vadd.f32 %v5688, %v5727
    %v5759 = vadd.f32 %v5689, %v5727
    %v5760 = vadd.f32 %v5690, %v5727
    %v5761 = vadd.f32 %v5691, %v5727
    %v5762 = vadd.f32 %v5692, %v5727
    %v5763 = vadd.f32 %v5693, %v5727
    %v5764 = vadd.f32 %v5694, %v5727
    %v5765 = vadd.f32 %v5695, %v5727
    %v5766 = vadd.f32 %v5696, %v5727
    %v5767 = vadd.f32 %v5697, %v5727
    %v5768 = vadd.f32 %v5698, %v5727
    %v5769 = vadd.f32 %v5699, %v5727
    %v5770 = vadd.f32 %v5700, %v5727
    %v5771 = vadd.f32 %v5701, %v5727
    %v5772 = vadd.f32 %v5702, %v5727
    %v5773 = vadd.f32 %v5703, %v5727
    %v5774 = vadd.f32 %v5704, %v5727
    %v5775 = vadd.f32 %v5705, %v5727
    %v5776 = vadd.f32 %v5706, %v5727
    %v5777 = vadd.f32 %v5707, %v5727
    %v5778 = vadd.f32 %v5708, %v5727
    %v5779 = vadd.f32 %v5709, %v5727
    %v5780 = vadd.f32 %v5710, %v5727
    %v5781 = vadd.f32 %v5711, %v5727
    %v5782 = vadd.f32 %v5712, %v5727
    %v5783 = vadd.f32 %v5713, %v5727
    %v5784 = vadd.f32 %v5714, %v5727
    %v5785 = vadd.f32 %v5715, %v5727
    %v5786 = vadd.f32 %v5716, %v5727
    %v5787 = vadd.f32 %v5717, %v5727
    %v5788 = vadd.f32 %v5718, %v5727
    %v5789 = vadd.f32 %v5719, %v5727
    %v5790 = vadd.f32 %v5720, %v5727
    %v5791 = vadd.f32 %v5721, %v5727
    %v5792 = vadd.f32 %v5722, %v5727
    %v5793 = vmax.f32 %v5729, 0.0
    %v5794 = vmax.f32 %v5730, 0.0
    %v5795 = vmax.f32 %v5731, 0.0
    %v5796 = vmax.f32 %v5732, 0.0
    %v5797 = vmax.f32 %v5733, 0.0
    %v5798 = vmax.f32 %v5734, 0.0
    %v5799 = vmax.f32 %v5735, 0.0
    %v5800 = vmax.f32 %v5736, 0.0
    %v5801 = vmax.f32 %v5737, 0.0
    %v5802 = vmax.f32 %v5738, 0.0
    %v5803 = vmax.f32 %v5739, 0.0
    %v5804 = vmax.f32 %v5740, 0.0
    %v5805 = vmax.f32 %v5741, 0.0
    %v5806 = vmax.f32 %v5742, 0.0
    %v5807 = vmax.f32 %v5743, 0.0
    %v5808 = vmax.f32 %v5744, 0.0
    %v5809 = vmax.f32 %v5745, 0.0
    %v5810 = vmax.f32 %v5746, 0.0
    %v5811 = vmax.f32 %v5747, 0.0
    %v5812 = vmax.f32 %v5748, 0.0
    %v5813 = vmax.f32 %v5749, 0.0
    %v5814 = vmax.f32 %v5750, 0.0
    %v5815 = vmax.f32 %v5751, 0.0
    %v5816 = vmax.f32 %v5752, 0.0
    %v5817 = vmax.f32 %v5753, 0.0
    %v5818 = vmax.f32 %v5754, 0.0
    %v5819 = vmax.f32 %v5755, 0.0
    %v5820 = vmax.f32 %v5756, 0.0
    %v5821 = vmax.f32 %v5757, 0.0
    %v5822 = vmax.f32 %v5758, 0.0
    %v5823 = vmax.f32 %v5759, 0.0
    %v5824 = vmax.f32 %v5760, 0.0
    %v5825 = vmax.f32 %v5761, 0.0
    %v5826 = vmax.f32 %v5762, 0.0
    %v5827 = vmax.f32 %v5763, 0.0
    %v5828 = vmax.f32 %v5764, 0.0
    %v5829 = vmax.f32 %v5765, 0.0
    %v5830 = vmax.f32 %v5766, 0.0
    %v5831 = vmax.f32 %v5767, 0.0
    %v5832 = vmax.f32 %v5768, 0.0
    %v5833 = vmax.f32 %v5769, 0.0
    %v5834 = vmax.f32 %v5770, 0.0
    %v5835 = vmax.f32 %v5771, 0.0
    %v5836 = vmax.f32 %v5772, 0.0
    %v5837 = vmax.f32 %v5773, 0.0
    %v5838 = vmax.f32 %v5774, 0.0
    %v5839 = vmax.f32 %v5775, 0.0
    %v5840 = vmax.f32 %v5776, 0.0
    %v5841 = vmax.f32 %v5777, 0.0
    %v5842 = vmax.f32 %v5778, 0.0
    %v5843 = vmax.f32 %v5779, 0.0
    %v5844 = vmax.f32 %v5780, 0.0
    %v5845 = vmax.f32 %v5781, 0.0
    %v5846 = vmax.f32 %v5782, 0.0
    %v5847 = vmax.f32 %v5783, 0.0
    %v5848 = vmax.f32 %v5784, 0.0
    %v5849 = vmax.f32 %v5785, 0.0
    %v5850 = vmax.f32 %v5786, 0.0
    %v5851 = vmax.f32 %v5787, 0.0
    %v5852 = vmax.f32 %v5788, 0.0
    %v5853 = vmax.f32 %v5789, 0.0
    %v5854 = vmax.f32 %v5790, 0.0
    %v5855 = vmax.f32 %v5791, 0.0
    %v5856 = vmax.f32 %v5792, 0.0
    %5857 = vst [vmem:[%s251 + $0x1] sm:$0xff] %v5793
    %5858 = vst [vmem:[%s251 + $0x9] sm:$0xff] %v5794
    %5859 = vst [vmem:[%s251 + $0x19] sm:$0xff] %v5795
    %5860 = vst [vmem:[%s251 + $0x21] sm:$0xff] %v5796
    %5861 = vst [vmem:[%s251 + $0x31] sm:$0xff] %v5797
    %5862 = vst [vmem:[%s251 + $0x39] sm:$0xff] %v5798
    %5863 = vst [vmem:[%s251 + $0x49] sm:$0xff] %v5799
    %5864 = vst [vmem:[%s251 + $0x51] sm:$0xff] %v5800
    %5865 = vst [vmem:[%s251 + $0x61] sm:$0xff] %v5801
    %5866 = vst [vmem:[%s251 + $0x69] sm:$0xff] %v5802
    %5867 = vst [vmem:[%s251 + $0x79] sm:$0xff] %v5803
    %5868 = vst [vmem:[%s251 + $0x81] sm:$0xff] %v5804
    %5869 = vst [vmem:[%s251 + $0x91] sm:$0xff] %v5805
    %5870 = vst [vmem:[%s251 + $0x99] sm:$0xff] %v5806
    %5871 = vst [vmem:[%s251 + $0xa9] sm:$0xff] %v5807
    %5872 = vst [vmem:[%s251 + $0xb1] sm:$0xff] %v5808
    %5873 = vst [vmem:[%s251 + $0xc1] sm:$0xff] %v5809
    %5874 = vst [vmem:[%s251 + $0xc9] sm:$0xff] %v5810
    %5875 = vst [vmem:[%s251 + $0xd9] sm:$0xff] %v5811
    %5876 = vst [vmem:[%s251 + $0xe1] sm:$0xff] %v5812
    %5877 = vst [vmem:[%s251 + $0xf1] sm:$0xff] %v5813
    %5878 = vst [vmem:[%s251 + $0xf9] sm:$0xff] %v5814
    %5879 = vst [vmem:[%s251 + $0x109] sm:$0xff] %v5815
    %5880 = vst [vmem:[%s251 + $0x111] sm:$0xff] %v5816
    %5881 = vst [vmem:[%s251 + $0x121] sm:$0xff] %v5817
    %5882 = vst [vmem:[%s251 + $0x129] sm:$0xff] %v5818
    %5883 = vst [vmem:[%s251 + $0x139] sm:$0xff] %v5819
    %5884 = vst [vmem:[%s251 + $0x141] sm:$0xff] %v5820
    %5885 = vst [vmem:[%s251 + $0x151] sm:$0xff] %v5821
    %5886 = vst [vmem:[%s251 + $0x159] sm:$0xff] %v5822
    %5887 = vst [vmem:[%s251 + $0x169] sm:$0xff] %v5823
    %5888 = vst [vmem:[%s251 + $0x171] sm:$0xff] %v5824
    %5889 = vst [vmem:[%s251 + $0x1b1] sm:$0xff] %v5825
    %5890 = vst [vmem:[%s251 + $0x1b9] sm:$0xff] %v5826
    %5891 = vst [vmem:[%s251 + $0x1c9] sm:$0xff] %v5827
    %5892 = vst [vmem:[%s251 + $0x1d1] sm:$0xff] %v5828
    %5893 = vst [vmem:[%s251 + $0x1e1] sm:$0xff] %v5829
    %5894 = vst [vmem:[%s251 + $0x1e9] sm:$0xff] %v5830
    %5895 = vst [vmem:[%s251 + $0x1f9] sm:$0xff] %v5831
    %5896 = vst [vmem:[%s251 + $0x201] sm:$0xff] %v5832
    %5897 = vst [vmem:[%s251 + $0x211] sm:$0xff] %v5833
    %5898 = vst [vmem:[%s251 + $0x219] sm:$0xff] %v5834
    %5899 = vst [vmem:[%s251 + $0x229] sm:$0xff] %v5835
    %5900 = vst [vmem:[%s251 + $0x231] sm:$0xff] %v5836
    %5901 = vst [vmem:[%s251 + $0x241] sm:$0xff] %v5837
    %5902 = vst [vmem:[%s251 + $0x249] sm:$0xff] %v5838
    %5903 = vst [vmem:[%s251 + $0x259] sm:$0xff] %v5839
    %5904 = vst [vmem:[%s251 + $0x261] sm:$0xff] %v5840
    %5905 = vst [vmem:[%s251 + $0x271] sm:$0xff] %v5841
    %5906 = vst [vmem:[%s251 + $0x279] sm:$0xff] %v5842
    %5907 = vst [vmem:[%s251 + $0x289] sm:$0xff] %v5843
    %5908 = vst [vmem:[%s251 + $0x291] sm:$0xff] %v5844
    %5909 = vst [vmem:[%s251 + $0x2a1] sm:$0xff] %v5845
    %5910 = vst [vmem:[%s251 + $0x2a9] sm:$0xff] %v5846
    %5911 = vst [vmem:[%s251 + $0x2b9] sm:$0xff] %v5847
    %5912 = vst [vmem:[%s251 + $0x2c1] sm:$0xff] %v5848
    %5913 = vst [vmem:[%s251 + $0x2d1] sm:$0xff] %v5849
    %5914 = vst [vmem:[%s251 + $0x2d9] sm:$0xff] %v5850
    %5915 = vst [vmem:[%s251 + $0x2e9] sm:$0xff] %v5851
    %5916 = vst [vmem:[%s251 + $0x2f1] sm:$0xff] %v5852
    %5917 = vst [vmem:[%s251 + $0x301] sm:$0xff] %v5853
    %5918 = vst [vmem:[%s251 + $0x309] sm:$0xff] %v5854
    %5919 = vst [vmem:[%s251 + $0x319] sm:$0xff] %v5855
    %5920 = vst [vmem:[%s251 + $0x321] sm:$0xff] %v5856
    %v5921 = vld [vmem:[#allocation2] sm:$0xff]
    %v5922 = vld [vmem:[#allocation2 + $0x8] sm:$0xff]
    %v5923 = vld [vmem:[#allocation2 + $0x18] sm:$0xff]
    %v5924 = vld [vmem:[#allocation2 + $0x20] sm:$0xff]
    %v5925 = vld [vmem:[#allocation2 + $0x30] sm:$0xff]
    %v5926 = vld [vmem:[#allocation2 + $0x38] sm:$0xff]
    %v5927 = vld [vmem:[#allocation2 + $0x48] sm:$0xff]
    %v5928 = vld [vmem:[#allocation2 + $0x50] sm:$0xff]
    %v5929 = vld [vmem:[#allocation2 + $0x60] sm:$0xff]
    %v5930 = vld [vmem:[#allocation2 + $0x68] sm:$0xff]
    %v5931 = vld [vmem:[#allocation2 + $0x78] sm:$0xff]
    %v5932 = vld [vmem:[#allocation2 + $0x80] sm:$0xff]
    %v5933 = vld [vmem:[#allocation2 + $0x90] sm:$0xff]
    %v5934 = vld [vmem:[#allocation2 + $0x98] sm:$0xff]
    %v5935 = vld [vmem:[#allocation2 + $0xa8] sm:$0xff]
    %v5936 = vld [vmem:[#allocation2 + $0xb0] sm:$0xff]
    %v5937 = vld [vmem:[#allocation2 + $0xc0] sm:$0xff]
    %v5938 = vld [vmem:[#allocation2 + $0xc8] sm:$0xff]
    %v5939 = vld [vmem:[#allocation2 + $0xd8] sm:$0xff]
    %v5940 = vld [vmem:[#allocation2 + $0xe0] sm:$0xff]
    %v5941 = vld [vmem:[#allocation2 + $0xf0] sm:$0xff]
    %v5942 = vld [vmem:[#allocation2 + $0xf8] sm:$0xff]
    %v5943 = vld [vmem:[#allocation2 + $0x108] sm:$0xff]
    %v5944 = vld [vmem:[#allocation2 + $0x110] sm:$0xff]
    %v5945 = vld [vmem:[#allocation2 + $0x120] sm:$0xff]
    %v5946 = vld [vmem:[#allocation2 + $0x128] sm:$0xff]
    %v5947 = vld [vmem:[#allocation2 + $0x138] sm:$0xff]
    %v5948 = vld [vmem:[#allocation2 + $0x140] sm:$0xff]
    %v5949 = vld [vmem:[#allocation2 + $0x150] sm:$0xff]
    %v5950 = vld [vmem:[#allocation2 + $0x158] sm:$0xff]
    %v5951 = vld [vmem:[#allocation2 + $0x168] sm:$0xff]
    %v5952 = vld [vmem:[#allocation2 + $0x170] sm:$0xff]
    %v5953 = vld [vmem:[#allocation2 + $0x1b0] sm:$0xff]
    %v5954 = vld [vmem:[#allocation2 + $0x1b8] sm:$0xff]
    %v5955 = vld [vmem:[#allocation2 + $0x1c8] sm:$0xff]
    %v5956 = vld [vmem:[#allocation2 + $0x1d0] sm:$0xff]
    %v5957 = vld [vmem:[#allocation2 + $0x1e0] sm:$0xff]
    %v5958 = vld [vmem:[#allocation2 + $0x1e8] sm:$0xff]
    %v5959 = vld [vmem:[#allocation2 + $0x1f8] sm:$0xff]
    %v5960 = vld [vmem:[#allocation2 + $0x200] sm:$0xff]
    %v5961 = vld [vmem:[#allocation2 + $0x210] sm:$0xff]
    %v5962 = vld [vmem:[#allocation2 + $0x218] sm:$0xff]
    %v5963 = vld [vmem:[#allocation2 + $0x228] sm:$0xff]
    %v5964 = vld [vmem:[#allocation2 + $0x230] sm:$0xff]
    %v5965 = vld [vmem:[#allocation2 + $0x240] sm:$0xff]
    %v5966 = vld [vmem:[#allocation2 + $0x248] sm:$0xff]
    %v5967 = vld [vmem:[#allocation2 + $0x258] sm:$0xff]
    %v5968 = vld [vmem:[#allocation2 + $0x260] sm:$0xff]
    %v5969 = vld [vmem:[#allocation2 + $0x270] sm:$0xff]
    %v5970 = vld [vmem:[#allocation2 + $0x278] sm:$0xff]
    %v5971 = vld [vmem:[#allocation2 + $0x288] sm:$0xff]
    %v5972 = vld [vmem:[#allocation2 + $0x290] sm:$0xff]
    %v5973 = vld [vmem:[#allocation2 + $0x2a0] sm:$0xff]
    %v5974 = vld [vmem:[#allocation2 + $0x2a8] sm:$0xff]
    %v5975 = vld [vmem:[#allocation2 + $0x2b8] sm:$0xff]
    %v5976 = vld [vmem:[#allocation2 + $0x2c0] sm:$0xff]
    %v5977 = vld [vmem:[#allocation2 + $0x2d0] sm:$0xff]
    %v5978 = vld [vmem:[#allocation2 + $0x2d8] sm:$0xff]
    %v5979 = vld [vmem:[#allocation2 + $0x2e8] sm:$0xff]
    %v5980 = vld [vmem:[#allocation2 + $0x2f0] sm:$0xff]
    %v5981 = vld [vmem:[#allocation2 + $0x300] sm:$0xff]
    %v5982 = vld [vmem:[#allocation2 + $0x308] sm:$0xff]
    %v5983 = vld [vmem:[#allocation2 + $0x318] sm:$0xff]
    %v5984 = vld [vmem:[#allocation2 + $0x320] sm:$0xff]
    %v5985 = vld [vmem:[#allocation2 + $0x1] sm:$0xff]
    %v5986 = vld [vmem:[#allocation2 + $0x9] sm:$0xff]
    %v5987 = vld [vmem:[#allocation2 + $0x19] sm:$0xff]
    %v5988 = vld [vmem:[#allocation2 + $0x21] sm:$0xff]
    %v5989 = vld [vmem:[#allocation2 + $0x31] sm:$0xff]
    %v5990 = vld [vmem:[#allocation2 + $0x39] sm:$0xff]
    %v5991 = vld [vmem:[#allocation2 + $0x49] sm:$0xff]
    %v5992 = vld [vmem:[#allocation2 + $0x51] sm:$0xff]
    %v5993 = vld [vmem:[#allocation2 + $0x61] sm:$0xff]
    %v5994 = vld [vmem:[#allocation2 + $0x69] sm:$0xff]
    %v5995 = vld [vmem:[#allocation2 + $0x79] sm:$0xff]
    %v5996 = vld [vmem:[#allocation2 + $0x81] sm:$0xff]
    %v5997 = vld [vmem:[#allocation2 + $0x91] sm:$0xff]
    %v5998 = vld [vmem:[#allocation2 + $0x99] sm:$0xff]
    %v5999 = vld [vmem:[#allocation2 + $0xa9] sm:$0xff]
    %v6000 = vld [vmem:[#allocation2 + $0xb1] sm:$0xff]
    %v6001 = vld [vmem:[#allocation2 + $0xc1] sm:$0xff]
    %v6002 = vld [vmem:[#allocation2 + $0xc9] sm:$0xff]
    %v6003 = vld [vmem:[#allocation2 + $0xd9] sm:$0xff]
    %v6004 = vld [vmem:[#allocation2 + $0xe1] sm:$0xff]
    %v6005 = vld [vmem:[#allocation2 + $0xf1] sm:$0xff]
    %v6006 = vld [vmem:[#allocation2 + $0xf9] sm:$0xff]
    %v6007 = vld [vmem:[#allocation2 + $0x109] sm:$0xff]
    %v6008 = vld [vmem:[#allocation2 + $0x111] sm:$0xff]
    %v6009 = vld [vmem:[#allocation2 + $0x121] sm:$0xff]
    %v6010 = vld [vmem:[#allocation2 + $0x129] sm:$0xff]
    %v6011 = vld [vmem:[#allocation2 + $0x139] sm:$0xff]
    %v6012 = vld [vmem:[#allocation2 + $0x141] sm:$0xff]
    %v6013 = vld [vmem:[#allocation2 + $0x151] sm:$0xff]
    %v6014 = vld [vmem:[#allocation2 + $0x159] sm:$0xff]
    %v6015 = vld [vmem:[#allocation2 + $0x169] sm:$0xff]
    %v6016 = vld [vmem:[#allocation2 + $0x171] sm:$0xff]
    %v6017 = vld [vmem:[#allocation2 + $0x1b1] sm:$0xff]
    %v6018 = vld [vmem:[#allocation2 + $0x1b9] sm:$0xff]
    %v6019 = vld [vmem:[#allocation2 + $0x1c9] sm:$0xff]
    %v6020 = vld [vmem:[#allocation2 + $0x1d1] sm:$0xff]
    %v6021 = vld [vmem:[#allocation2 + $0x1e1] sm:$0xff]
    %v6022 = vld [vmem:[#allocation2 + $0x1e9] sm:$0xff]
    %v6023 = vld [vmem:[#allocation2 + $0x1f9] sm:$0xff]
    %v6024 = vld [vmem:[#allocation2 + $0x201] sm:$0xff]
    %v6025 = vld [vmem:[#allocation2 + $0x211] sm:$0xff]
    %v6026 = vld [vmem:[#allocation2 + $0x219] sm:$0xff]
    %v6027 = vld [vmem:[#allocation2 + $0x229] sm:$0xff]
    %v6028 = vld [vmem:[#allocation2 + $0x231] sm:$0xff]
    %v6029 = vld [vmem:[#allocation2 + $0x241] sm:$0xff]
    %v6030 = vld [vmem:[#allocation2 + $0x249] sm:$0xff]
    %v6031 = vld [vmem:[#allocation2 + $0x259] sm:$0xff]
    %v6032 = vld [vmem:[#allocation2 + $0x261] sm:$0xff]
    %v6033 = vld [vmem:[#allocation2 + $0x271] sm:$0xff]
    %v6034 = vld [vmem:[#allocation2 + $0x279] sm:$0xff]
    %v6035 = vld [vmem:[#allocation2 + $0x289] sm:$0xff]
    %v6036 = vld [vmem:[#allocation2 + $0x291] sm:$0xff]
    %v6037 = vld [vmem:[#allocation2 + $0x2a1] sm:$0xff]
    %v6038 = vld [vmem:[#allocation2 + $0x2a9] sm:$0xff]
    %v6039 = vld [vmem:[#allocation2 + $0x2b9] sm:$0xff]
    %v6040 = vld [vmem:[#allocation2 + $0x2c1] sm:$0xff]
    %v6041 = vld [vmem:[#allocation2 + $0x2d1] sm:$0xff]
    %v6042 = vld [vmem:[#allocation2 + $0x2d9] sm:$0xff]
    %v6043 = vld [vmem:[#allocation2 + $0x2e9] sm:$0xff]
    %v6044 = vld [vmem:[#allocation2 + $0x2f1] sm:$0xff]
    %v6045 = vld [vmem:[#allocation2 + $0x301] sm:$0xff]
    %v6046 = vld [vmem:[#allocation2 + $0x309] sm:$0xff]
    %v6047 = vld [vmem:[#allocation2 + $0x319] sm:$0xff]
    %v6048 = vld [vmem:[#allocation2 + $0x321] sm:$0xff]
    %v6049 = vld [vmem:[#allocation2 + $0x2] sm:$0xff]
    %v6050 = vld [vmem:[#allocation2 + $0xa] sm:$0xff]
    %v6051 = vld [vmem:[#allocation2 + $0x1a] sm:$0xff]
    %v6052 = vld [vmem:[#allocation2 + $0x22] sm:$0xff]
    %v6053 = vld [vmem:[#allocation2 + $0x32] sm:$0xff]
    %v6054 = vld [vmem:[#allocation2 + $0x3a] sm:$0xff]
    %v6055 = vld [vmem:[#allocation2 + $0x4a] sm:$0xff]
    %v6056 = vld [vmem:[#allocation2 + $0x52] sm:$0xff]
    %v6057 = vld [vmem:[#allocation2 + $0x62] sm:$0xff]
    %v6058 = vld [vmem:[#allocation2 + $0x6a] sm:$0xff]
    %v6059 = vld [vmem:[#allocation2 + $0x7a] sm:$0xff]
    %v6060 = vld [vmem:[#allocation2 + $0x82] sm:$0xff]
    %v6061 = vld [vmem:[#allocation2 + $0x92] sm:$0xff]
    %v6062 = vld [vmem:[#allocation2 + $0x9a] sm:$0xff]
    %v6063 = vld [vmem:[#allocation2 + $0xaa] sm:$0xff]
    %v6064 = vld [vmem:[#allocation2 + $0xb2] sm:$0xff]
    %v6065 = vld [vmem:[#allocation2 + $0xc2] sm:$0xff]
    %v6066 = vld [vmem:[#allocation2 + $0xca] sm:$0xff]
    %v6067 = vld [vmem:[#allocation2 + $0xda] sm:$0xff]
    %v6068 = vld [vmem:[#allocation2 + $0xe2] sm:$0xff]
    %v6069 = vld [vmem:[#allocation2 + $0xf2] sm:$0xff]
    %v6070 = vld [vmem:[#allocation2 + $0xfa] sm:$0xff]
    %v6071 = vld [vmem:[#allocation2 + $0x10a] sm:$0xff]
    %v6072 = vld [vmem:[#allocation2 + $0x112] sm:$0xff]
    %v6073 = vld [vmem:[#allocation2 + $0x122] sm:$0xff]
    %v6074 = vld [vmem:[#allocation2 + $0x12a] sm:$0xff]
    %v6075 = vld [vmem:[#allocation2 + $0x13a] sm:$0xff]
    %v6076 = vld [vmem:[#allocation2 + $0x142] sm:$0xff]
    %v6077 = vld [vmem:[#allocation2 + $0x152] sm:$0xff]
    %v6078 = vld [vmem:[#allocation2 + $0x15a] sm:$0xff]
    %v6079 = vld [vmem:[#allocation2 + $0x16a] sm:$0xff]
    %v6080 = vld [vmem:[#allocation2 + $0x172] sm:$0xff]
    %v6081 = vld [vmem:[#allocation2 + $0x1b2] sm:$0xff]
    %v6082 = vld [vmem:[#allocation2 + $0x1ba] sm:$0xff]
    %v6083 = vld [vmem:[#allocation2 + $0x1ca] sm:$0xff]
    %v6084 = vld [vmem:[#allocation2 + $0x1d2] sm:$0xff]
    %v6085 = vld [vmem:[#allocation2 + $0x1e2] sm:$0xff]
    %v6086 = vld [vmem:[#allocation2 + $0x1ea] sm:$0xff]
    %v6087 = vld [vmem:[#allocation2 + $0x1fa] sm:$0xff]
    %v6088 = vld [vmem:[#allocation2 + $0x202] sm:$0xff]
    %v6089 = vld [vmem:[#allocation2 + $0x212] sm:$0xff]
    %v6090 = vld [vmem:[#allocation2 + $0x21a] sm:$0xff]
    %v6091 = vld [vmem:[#allocation2 + $0x22a] sm:$0xff]
    %v6092 = vld [vmem:[#allocation2 + $0x232] sm:$0xff]
    %v6093 = vld [vmem:[#allocation2 + $0x242] sm:$0xff]
    %v6094 = vld [vmem:[#allocation2 + $0x24a] sm:$0xff]
    %v6095 = vld [vmem:[#allocation2 + $0x25a] sm:$0xff]
    %v6096 = vld [vmem:[#allocation2 + $0x262] sm:$0xff]
    %v6097 = vld [vmem:[#allocation2 + $0x272] sm:$0xff]
    %v6098 = vld [vmem:[#allocation2 + $0x27a] sm:$0xff]
    %v6099 = vld [vmem:[#allocation2 + $0x28a] sm:$0xff]
    %v6100 = vld [vmem:[#allocation2 + $0x292] sm:$0xff]
    %v6101 = vld [vmem:[#allocation2 + $0x2a2] sm:$0xff]
    %v6102 = vld [vmem:[#allocation2 + $0x2aa] sm:$0xff]
    %v6103 = vld [vmem:[#allocation2 + $0x2ba] sm:$0xff]
    %v6104 = vld [vmem:[#allocation2 + $0x2c2] sm:$0xff]
    %v6105 = vld [vmem:[#allocation2 + $0x2d2] sm:$0xff]
    %v6106 = vld [vmem:[#allocation2 + $0x2da] sm:$0xff]
    %v6107 = vld [vmem:[#allocation2 + $0x2ea] sm:$0xff]
    %v6108 = vld [vmem:[#allocation2 + $0x2f2] sm:$0xff]
    %v6109 = vld [vmem:[#allocation2 + $0x302] sm:$0xff]
    %v6110 = vld [vmem:[#allocation2 + $0x30a] sm:$0xff]
    %v6111 = vld [vmem:[#allocation2 + $0x31a] sm:$0xff]
    %v6112 = vld [vmem:[#allocation2 + $0x322] sm:$0xff]
    %6177 = vrot.lane.b32.xlu0 %v5985, 32
    %v6178 = vpop.permute.xlu0 %6177
    %6179 = vrot.lane.b32.xlu0 %v5986, 32
    %v6180 = vpop.permute.xlu0 %6179
    %6181 = vrot.lane.b32.xlu0 %v5987, 32
    %v6182 = vpop.permute.xlu0 %6181
    %6183 = vrot.lane.b32.xlu0 %v5988, 32
    %v6184 = vpop.permute.xlu0 %6183
    %6185 = vrot.lane.b32.xlu0 %v5989, 32
    %v6186 = vpop.permute.xlu0 %6185
    %6187 = vrot.lane.b32.xlu0 %v5990, 32
    %v6188 = vpop.permute.xlu0 %6187
    %6189 = vrot.lane.b32.xlu0 %v5991, 32
    %v6190 = vpop.permute.xlu0 %6189
    %6191 = vrot.lane.b32.xlu0 %v5992, 32
    %v6192 = vpop.permute.xlu0 %6191
    %6193 = vrot.lane.b32.xlu0 %v5993, 32
    %v6194 = vpop.permute.xlu0 %6193
    %6195 = vrot.lane.b32.xlu0 %v5994, 32
    %v6196 = vpop.permute.xlu0 %6195
    %6197 = vrot.lane.b32.xlu0 %v5995, 32
    %v6198 = vpop.permute.xlu0 %6197
    %6199 = vrot.lane.b32.xlu0 %v5996, 32
    %v6200 = vpop.permute.xlu0 %6199
    %6201 = vrot.lane.b32.xlu0 %v5997, 32
    %v6202 = vpop.permute.xlu0 %6201
    %6203 = vrot.lane.b32.xlu0 %v5998, 32
    %v6204 = vpop.permute.xlu0 %6203
    %6205 = vrot.lane.b32.xlu0 %v5999, 32
    %v6206 = vpop.permute.xlu0 %6205
    %6207 = vrot.lane.b32.xlu0 %v6000, 32
    %v6208 = vpop.permute.xlu0 %6207
    %6209 = vrot.lane.b32.xlu0 %v6001, 32
    %v6210 = vpop.permute.xlu0 %6209
    %6211 = vrot.lane.b32.xlu0 %v6002, 32
    %v6212 = vpop.permute.xlu0 %6211
    %6213 = vrot.lane.b32.xlu0 %v6003, 32
    %v6214 = vpop.permute.xlu0 %6213
    %6215 = vrot.lane.b32.xlu0 %v6004, 32
    %v6216 = vpop.permute.xlu0 %6215
    %6217 = vrot.lane.b32.xlu0 %v6005, 32
    %v6218 = vpop.permute.xlu0 %6217
    %6219 = vrot.lane.b32.xlu0 %v6006, 32
    %v6220 = vpop.permute.xlu0 %6219
    %6221 = vrot.lane.b32.xlu0 %v6007, 32
    %v6222 = vpop.permute.xlu0 %6221
    %6223 = vrot.lane.b32.xlu0 %v6008, 32
    %v6224 = vpop.permute.xlu0 %6223
    %6225 = vrot.lane.b32.xlu0 %v6009, 32
    %v6226 = vpop.permute.xlu0 %6225
    %6227 = vrot.lane.b32.xlu0 %v6010, 32
    %v6228 = vpop.permute.xlu0 %6227
    %6229 = vrot.lane.b32.xlu0 %v6011, 32
    %v6230 = vpop.permute.xlu0 %6229
    %6231 = vrot.lane.b32.xlu0 %v6012, 32
    %v6232 = vpop.permute.xlu0 %6231
    %6233 = vrot.lane.b32.xlu0 %v6013, 32
    %v6234 = vpop.permute.xlu0 %6233
    %6235 = vrot.lane.b32.xlu0 %v6014, 32
    %v6236 = vpop.permute.xlu0 %6235
    %6237 = vrot.lane.b32.xlu0 %v6015, 32
    %v6238 = vpop.permute.xlu0 %6237
    %6239 = vrot.lane.b32.xlu0 %v6016, 32
    %v6240 = vpop.permute.xlu0 %6239
    %6241 = vrot.lane.b32.xlu0 %v6017, 32
    %v6242 = vpop.permute.xlu0 %6241
    %6243 = vrot.lane.b32.xlu0 %v6018, 32
    %v6244 = vpop.permute.xlu0 %6243
    %6245 = vrot.lane.b32.xlu0 %v6019, 32
    %v6246 = vpop.permute.xlu0 %6245
    %6247 = vrot.lane.b32.xlu0 %v6020, 32
    %v6248 = vpop.permute.xlu0 %6247
    %6249 = vrot.lane.b32.xlu0 %v6021, 32
    %v6250 = vpop.permute.xlu0 %6249
    %6251 = vrot.lane.b32.xlu0 %v6022, 32
    %v6252 = vpop.permute.xlu0 %6251
    %6253 = vrot.lane.b32.xlu0 %v6023, 32
    %v6254 = vpop.permute.xlu0 %6253
    %6255 = vrot.lane.b32.xlu0 %v6024, 32
    %v6256 = vpop.permute.xlu0 %6255
    %6257 = vrot.lane.b32.xlu0 %v6025, 32
    %v6258 = vpop.permute.xlu0 %6257
    %6259 = vrot.lane.b32.xlu0 %v6026, 32
    %v6260 = vpop.permute.xlu0 %6259
    %6261 = vrot.lane.b32.xlu0 %v6027, 32
    %v6262 = vpop.permute.xlu0 %6261
    %6263 = vrot.lane.b32.xlu0 %v6028, 32
    %v6264 = vpop.permute.xlu0 %6263
    %6265 = vrot.lane.b32.xlu0 %v6029, 32
    %v6266 = vpop.permute.xlu0 %6265
    %6267 = vrot.lane.b32.xlu0 %v6030, 32
    %v6268 = vpop.permute.xlu0 %6267
    %6269 = vrot.lane.b32.xlu0 %v6031, 32
    %v6270 = vpop.permute.xlu0 %6269
    %6271 = vrot.lane.b32.xlu0 %v6032, 32
    %v6272 = vpop.permute.xlu0 %6271
    %6273 = vrot.lane.b32.xlu0 %v6033, 32
    %v6274 = vpop.permute.xlu0 %6273
    %6275 = vrot.lane.b32.xlu0 %v6034, 32
    %v6276 = vpop.permute.xlu0 %6275
    %6277 = vrot.lane.b32.xlu0 %v6035, 32
    %v6278 = vpop.permute.xlu0 %6277
    %6279 = vrot.lane.b32.xlu0 %v6036, 32
    %v6280 = vpop.permute.xlu0 %6279
    %6281 = vrot.lane.b32.xlu0 %v6037, 32
    %v6282 = vpop.permute.xlu0 %6281
    %6283 = vrot.lane.b32.xlu0 %v6038, 32
    %v6284 = vpop.permute.xlu0 %6283
    %6285 = vrot.lane.b32.xlu0 %v6039, 32
    %v6286 = vpop.permute.xlu0 %6285
    %6287 = vrot.lane.b32.xlu0 %v6040, 32
    %v6288 = vpop.permute.xlu0 %6287
    %6289 = vrot.lane.b32.xlu0 %v6041, 32
    %v6290 = vpop.permute.xlu0 %6289
    %6291 = vrot.lane.b32.xlu0 %v6042, 32
    %v6292 = vpop.permute.xlu0 %6291
    %6293 = vrot.lane.b32.xlu0 %v6043, 32
    %v6294 = vpop.permute.xlu0 %6293
    %6295 = vrot.lane.b32.xlu0 %v6044, 32
    %v6296 = vpop.permute.xlu0 %6295
    %6297 = vrot.lane.b32.xlu0 %v6045, 32
    %v6298 = vpop.permute.xlu0 %6297
    %6299 = vrot.lane.b32.xlu0 %v6046, 32
    %v6300 = vpop.permute.xlu0 %6299
    %6301 = vrot.lane.b32.xlu0 %v6047, 32
    %v6302 = vpop.permute.xlu0 %6301
    %6303 = vrot.lane.b32.xlu0 %v6048, 32
    %v6304 = vpop.permute.xlu0 %6303
    %6433 = vrot.lane.b32.xlu0 %v6049, 64
    %v6434 = vpop.permute.xlu0 %6433
    %6435 = vrot.lane.b32.xlu0 %v6050, 64
    %v6436 = vpop.permute.xlu0 %6435
    %6437 = vrot.lane.b32.xlu0 %v6051, 64
    %v6438 = vpop.permute.xlu0 %6437
    %6439 = vrot.lane.b32.xlu0 %v6052, 64
    %v6440 = vpop.permute.xlu0 %6439
    %6441 = vrot.lane.b32.xlu0 %v6053, 64
    %v6442 = vpop.permute.xlu0 %6441
    %6443 = vrot.lane.b32.xlu0 %v6054, 64
    %v6444 = vpop.permute.xlu0 %6443
    %6445 = vrot.lane.b32.xlu0 %v6055, 64
    %v6446 = vpop.permute.xlu0 %6445
    %6447 = vrot.lane.b32.xlu0 %v6056, 64
    %v6448 = vpop.permute.xlu0 %6447
    %6449 = vrot.lane.b32.xlu0 %v6057, 64
    %v6450 = vpop.permute.xlu0 %6449
    %6451 = vrot.lane.b32.xlu0 %v6058, 64
    %v6452 = vpop.permute.xlu0 %6451
    %6453 = vrot.lane.b32.xlu0 %v6059, 64
    %v6454 = vpop.permute.xlu0 %6453
    %6455 = vrot.lane.b32.xlu0 %v6060, 64
    %v6456 = vpop.permute.xlu0 %6455
    %6457 = vrot.lane.b32.xlu0 %v6061, 64
    %v6458 = vpop.permute.xlu0 %6457
    %6459 = vrot.lane.b32.xlu0 %v6062, 64
    %v6460 = vpop.permute.xlu0 %6459
    %6461 = vrot.lane.b32.xlu0 %v6063, 64
    %v6462 = vpop.permute.xlu0 %6461
    %6463 = vrot.lane.b32.xlu0 %v6064, 64
    %v6464 = vpop.permute.xlu0 %6463
    %6465 = vrot.lane.b32.xlu0 %v6065, 64
    %v6466 = vpop.permute.xlu0 %6465
    %6467 = vrot.lane.b32.xlu0 %v6066, 64
    %v6468 = vpop.permute.xlu0 %6467
    %6469 = vrot.lane.b32.xlu0 %v6067, 64
    %v6470 = vpop.permute.xlu0 %6469
    %6471 = vrot.lane.b32.xlu0 %v6068, 64
    %v6472 = vpop.permute.xlu0 %6471
    %6473 = vrot.lane.b32.xlu0 %v6069, 64
    %v6474 = vpop.permute.xlu0 %6473
    %6475 = vrot.lane.b32.xlu0 %v6070, 64
    %v6476 = vpop.permute.xlu0 %6475
    %6477 = vrot.lane.b32.xlu0 %v6071, 64
    %v6478 = vpop.permute.xlu0 %6477
    %6479 = vrot.lane.b32.xlu0 %v6072, 64
    %v6480 = vpop.permute.xlu0 %6479
    %6481 = vrot.lane.b32.xlu0 %v6073, 64
    %v6482 = vpop.permute.xlu0 %6481
    %6483 = vrot.lane.b32.xlu0 %v6074, 64
    %v6484 = vpop.permute.xlu0 %6483
    %6485 = vrot.lane.b32.xlu0 %v6075, 64
    %v6486 = vpop.permute.xlu0 %6485
    %6487 = vrot.lane.b32.xlu0 %v6076, 64
    %v6488 = vpop.permute.xlu0 %6487
    %6489 = vrot.lane.b32.xlu0 %v6077, 64
    %v6490 = vpop.permute.xlu0 %6489
    %6491 = vrot.lane.b32.xlu0 %v6078, 64
    %v6492 = vpop.permute.xlu0 %6491
    %6493 = vrot.lane.b32.xlu0 %v6079, 64
    %v6494 = vpop.permute.xlu0 %6493
    %6495 = vrot.lane.b32.xlu0 %v6080, 64
    %v6496 = vpop.permute.xlu0 %6495
    %6497 = vrot.lane.b32.xlu0 %v6081, 64
    %v6498 = vpop.permute.xlu0 %6497
    %6499 = vrot.lane.b32.xlu0 %v6082, 64
    %v6500 = vpop.permute.xlu0 %6499
    %6501 = vrot.lane.b32.xlu0 %v6083, 64
    %v6502 = vpop.permute.xlu0 %6501
    %6503 = vrot.lane.b32.xlu0 %v6084, 64
    %v6504 = vpop.permute.xlu0 %6503
    %6505 = vrot.lane.b32.xlu0 %v6085, 64
    %v6506 = vpop.permute.xlu0 %6505
    %6507 = vrot.lane.b32.xlu0 %v6086, 64
    %v6508 = vpop.permute.xlu0 %6507
    %6509 = vrot.lane.b32.xlu0 %v6087, 64
    %v6510 = vpop.permute.xlu0 %6509
    %6511 = vrot.lane.b32.xlu0 %v6088, 64
    %v6512 = vpop.permute.xlu0 %6511
    %6513 = vrot.lane.b32.xlu0 %v6089, 64
    %v6514 = vpop.permute.xlu0 %6513
    %6515 = vrot.lane.b32.xlu0 %v6090, 64
    %v6516 = vpop.permute.xlu0 %6515
    %6517 = vrot.lane.b32.xlu0 %v6091, 64
    %v6518 = vpop.permute.xlu0 %6517
    %6519 = vrot.lane.b32.xlu0 %v6092, 64
    %v6520 = vpop.permute.xlu0 %6519
    %6521 = vrot.lane.b32.xlu0 %v6093, 64
    %v6522 = vpop.permute.xlu0 %6521
    %6523 = vrot.lane.b32.xlu0 %v6094, 64
    %v6524 = vpop.permute.xlu0 %6523
    %6525 = vrot.lane.b32.xlu0 %v6095, 64
    %v6526 = vpop.permute.xlu0 %6525
    %6527 = vrot.lane.b32.xlu0 %v6096, 64
    %v6528 = vpop.permute.xlu0 %6527
    %6529 = vrot.lane.b32.xlu0 %v6097, 64
    %v6530 = vpop.permute.xlu0 %6529
    %6531 = vrot.lane.b32.xlu0 %v6098, 64
    %v6532 = vpop.permute.xlu0 %6531
    %6533 = vrot.lane.b32.xlu0 %v6099, 64
    %v6534 = vpop.permute.xlu0 %6533
    %6535 = vrot.lane.b32.xlu0 %v6100, 64
    %v6536 = vpop.permute.xlu0 %6535
    %6537 = vrot.lane.b32.xlu0 %v6101, 64
    %v6538 = vpop.permute.xlu0 %6537
    %6539 = vrot.lane.b32.xlu0 %v6102, 64
    %v6540 = vpop.permute.xlu0 %6539
    %6541 = vrot.lane.b32.xlu0 %v6103, 64
    %v6542 = vpop.permute.xlu0 %6541
    %6543 = vrot.lane.b32.xlu0 %v6104, 64
    %v6544 = vpop.permute.xlu0 %6543
    %6545 = vrot.lane.b32.xlu0 %v6105, 64
    %v6546 = vpop.permute.xlu0 %6545
    %6547 = vrot.lane.b32.xlu0 %v6106, 64
    %v6548 = vpop.permute.xlu0 %6547
    %6549 = vrot.lane.b32.xlu0 %v6107, 64
    %v6550 = vpop.permute.xlu0 %6549
    %6551 = vrot.lane.b32.xlu0 %v6108, 64
    %v6552 = vpop.permute.xlu0 %6551
    %6553 = vrot.lane.b32.xlu0 %v6109, 64
    %v6554 = vpop.permute.xlu0 %6553
    %6555 = vrot.lane.b32.xlu0 %v6110, 64
    %v6556 = vpop.permute.xlu0 %6555
    %6557 = vrot.lane.b32.xlu0 %v6111, 64
    %v6558 = vpop.permute.xlu0 %6557
    %6559 = vrot.lane.b32.xlu0 %v6112, 64
    %v6560 = vpop.permute.xlu0 %6559
    %v6625 = vsel %vm1020, %v5921, %v6178
    %v6626 = vsel %vm1020, %v5922, %v6180
    %v6627 = vsel %vm1020, %v5923, %v6182
    %v6628 = vsel %vm1020, %v5924, %v6184
    %v6629 = vsel %vm1020, %v5925, %v6186
    %v6630 = vsel %vm1020, %v5926, %v6188
    %v6631 = vsel %vm1020, %v5927, %v6190
    %v6632 = vsel %vm1020, %v5928, %v6192
    %v6633 = vsel %vm1020, %v5929, %v6194
    %v6634 = vsel %vm1020, %v5930, %v6196
    %v6635 = vsel %vm1020, %v5931, %v6198
    %v6636 = vsel %vm1020, %v5932, %v6200
    %v6637 = vsel %vm1020, %v5933, %v6202
    %v6638 = vsel %vm1020, %v5934, %v6204
    %v6639 = vsel %vm1020, %v5935, %v6206
    %v6640 = vsel %vm1020, %v5936, %v6208
    %v6641 = vsel %vm1020, %v5937, %v6210
    %v6642 = vsel %vm1020, %v5938, %v6212
    %v6643 = vsel %vm1020, %v5939, %v6214
    %v6644 = vsel %vm1020, %v5940, %v6216
    %v6645 = vsel %vm1020, %v5941, %v6218
    %v6646 = vsel %vm1020, %v5942, %v6220
    %v6647 = vsel %vm1020, %v5943, %v6222
    %v6648 = vsel %vm1020, %v5944, %v6224
    %v6649 = vsel %vm1020, %v5945, %v6226
    %v6650 = vsel %vm1020, %v5946, %v6228
    %v6651 = vsel %vm1020, %v5947, %v6230
    %v6652 = vsel %vm1020, %v5948, %v6232
    %v6653 = vsel %vm1020, %v5949, %v6234
    %v6654 = vsel %vm1020, %v5950, %v6236
    %v6655 = vsel %vm1020, %v5951, %v6238
    %v6656 = vsel %vm1020, %v5952, %v6240
    %v6657 = vsel %vm1020, %v5953, %v6242
    %v6658 = vsel %vm1020, %v5954, %v6244
    %v6659 = vsel %vm1020, %v5955, %v6246
    %v6660 = vsel %vm1020, %v5956, %v6248
    %v6661 = vsel %vm1020, %v5957, %v6250
    %v6662 = vsel %vm1020, %v5958, %v6252
    %v6663 = vsel %vm1020, %v5959, %v6254
    %v6664 = vsel %vm1020, %v5960, %v6256
    %v6665 = vsel %vm1020, %v5961, %v6258
    %v6666 = vsel %vm1020, %v5962, %v6260
    %v6667 = vsel %vm1020, %v5963, %v6262
    %v6668 = vsel %vm1020, %v5964, %v6264
    %v6669 = vsel %vm1020, %v5965, %v6266
    %v6670 = vsel %vm1020, %v5966, %v6268
    %v6671 = vsel %vm1020, %v5967, %v6270
    %v6672 = vsel %vm1020, %v5968, %v6272
    %v6673 = vsel %vm1020, %v5969, %v6274
    %v6674 = vsel %vm1020, %v5970, %v6276
    %v6675 = vsel %vm1020, %v5971, %v6278
    %v6676 = vsel %vm1020, %v5972, %v6280
    %v6677 = vsel %vm1020, %v5973, %v6282
    %v6678 = vsel %vm1020, %v5974, %v6284
    %v6679 = vsel %vm1020, %v5975, %v6286
    %v6680 = vsel %vm1020, %v5976, %v6288
    %v6681 = vsel %vm1020, %v5977, %v6290
    %v6682 = vsel %vm1020, %v5978, %v6292
    %v6683 = vsel %vm1020, %v5979, %v6294
    %v6684 = vsel %vm1020, %v5980, %v6296
    %v6685 = vsel %vm1020, %v5981, %v6298
    %v6686 = vsel %vm1020, %v5982, %v6300
    %v6687 = vsel %vm1020, %v5983, %v6302
    %v6688 = vsel %vm1020, %v5984, %v6304
    %v6689 = vsel %vm1085, %v6625, %v6434
    %v6690 = vsel %vm1085, %v6626, %v6436
    %v6691 = vsel %vm1085, %v6627, %v6438
    %v6692 = vsel %vm1085, %v6628, %v6440
    %v6693 = vsel %vm1085, %v6629, %v6442
    %v6694 = vsel %vm1085, %v6630, %v6444
    %v6695 = vsel %vm1085, %v6631, %v6446
    %v6696 = vsel %vm1085, %v6632, %v6448
    %v6697 = vsel %vm1085, %v6633, %v6450
    %v6698 = vsel %vm1085, %v6634, %v6452
    %v6699 = vsel %vm1085, %v6635, %v6454
    %v6700 = vsel %vm1085, %v6636, %v6456
    %v6701 = vsel %vm1085, %v6637, %v6458
    %v6702 = vsel %vm1085, %v6638, %v6460
    %v6703 = vsel %vm1085, %v6639, %v6462
    %v6704 = vsel %vm1085, %v6640, %v6464
    %v6705 = vsel %vm1085, %v6641, %v6466
    %v6706 = vsel %vm1085, %v6642, %v6468
    %v6707 = vsel %vm1085, %v6643, %v6470
    %v6708 = vsel %vm1085, %v6644, %v6472
    %v6709 = vsel %vm1085, %v6645, %v6474
    %v6710 = vsel %vm1085, %v6646, %v6476
    %v6711 = vsel %vm1085, %v6647, %v6478
    %v6712 = vsel %vm1085, %v6648, %v6480
    %v6713 = vsel %vm1085, %v6649, %v6482
    %v6714 = vsel %vm1085, %v6650, %v6484
    %v6715 = vsel %vm1085, %v6651, %v6486
    %v6716 = vsel %vm1085, %v6652, %v6488
    %v6717 = vsel %vm1085, %v6653, %v6490
    %v6718 = vsel %vm1085, %v6654, %v6492
    %v6719 = vsel %vm1085, %v6655, %v6494
    %v6720 = vsel %vm1085, %v6656, %v6496
    %v6721 = vsel %vm1085, %v6657, %v6498
    %v6722 = vsel %vm1085, %v6658, %v6500
    %v6723 = vsel %vm1085, %v6659, %v6502
    %v6724 = vsel %vm1085, %v6660, %v6504
    %v6725 = vsel %vm1085, %v6661, %v6506
    %v6726 = vsel %vm1085, %v6662, %v6508
    %v6727 = vsel %vm1085, %v6663, %v6510
    %v6728 = vsel %vm1085, %v6664, %v6512
    %v6729 = vsel %vm1085, %v6665, %v6514
    %v6730 = vsel %vm1085, %v6666, %v6516
    %v6731 = vsel %vm1085, %v6667, %v6518
    %v6732 = vsel %vm1085, %v6668, %v6520
    %v6733 = vsel %vm1085, %v6669, %v6522
    %v6734 = vsel %vm1085, %v6670, %v6524
    %v6735 = vsel %vm1085, %v6671, %v6526
    %v6736 = vsel %vm1085, %v6672, %v6528
    %v6737 = vsel %vm1085, %v6673, %v6530
    %v6738 = vsel %vm1085, %v6674, %v6532
    %v6739 = vsel %vm1085, %v6675, %v6534
    %v6740 = vsel %vm1085, %v6676, %v6536
    %v6741 = vsel %vm1085, %v6677, %v6538
    %v6742 = vsel %vm1085, %v6678, %v6540
    %v6743 = vsel %vm1085, %v6679, %v6542
    %v6744 = vsel %vm1085, %v6680, %v6544
    %v6745 = vsel %vm1085, %v6681, %v6546
    %v6746 = vsel %vm1085, %v6682, %v6548
    %v6747 = vsel %vm1085, %v6683, %v6550
    %v6748 = vsel %vm1085, %v6684, %v6552
    %v6749 = vsel %vm1085, %v6685, %v6554
    %v6750 = vsel %vm1085, %v6686, %v6556
    %v6751 = vsel %vm1085, %v6687, %v6558
    %v6752 = vsel %vm1085, %v6688, %v6560
    %v6753 = vsel %vm1150, %v6689, 0.0
    %v6754 = vsel %vm1150, %v6690, 0.0
    %v6755 = vsel %vm1150, %v6691, 0.0
    %v6756 = vsel %vm1150, %v6692, 0.0
    %v6757 = vsel %vm1150, %v6693, 0.0
    %v6758 = vsel %vm1150, %v6694, 0.0
    %v6759 = vsel %vm1150, %v6695, 0.0
    %v6760 = vsel %vm1150, %v6696, 0.0
    %v6761 = vsel %vm1150, %v6697, 0.0
    %v6762 = vsel %vm1150, %v6698, 0.0
    %v6763 = vsel %vm1150, %v6699, 0.0
    %v6764 = vsel %vm1150, %v6700, 0.0
    %v6765 = vsel %vm1150, %v6701, 0.0
    %v6766 = vsel %vm1150, %v6702, 0.0
    %v6767 = vsel %vm1150, %v6703, 0.0
    %v6768 = vsel %vm1150, %v6704, 0.0
    %v6769 = vsel %vm1150, %v6705, 0.0
    %v6770 = vsel %vm1150, %v6706, 0.0
    %v6771 = vsel %vm1150, %v6707, 0.0
    %v6772 = vsel %vm1150, %v6708, 0.0
    %v6773 = vsel %vm1150, %v6709, 0.0
    %v6774 = vsel %vm1150, %v6710, 0.0
    %v6775 = vsel %vm1150, %v6711, 0.0
    %v6776 = vsel %vm1150, %v6712, 0.0
    %v6777 = vsel %vm1150, %v6713, 0.0
    %v6778 = vsel %vm1150, %v6714, 0.0
    %v6779 = vsel %vm1150, %v6715, 0.0
    %v6780 = vsel %vm1150, %v6716, 0.0
    %v6781 = vsel %vm1150, %v6717, 0.0
    %v6782 = vsel %vm1150, %v6718, 0.0
    %v6783 = vsel %vm1150, %v6719, 0.0
    %v6784 = vsel %vm1150, %v6720, 0.0
    %v6785 = vsel %vm1150, %v6721, 0.0
    %v6786 = vsel %vm1150, %v6722, 0.0
    %v6787 = vsel %vm1150, %v6723, 0.0
    %v6788 = vsel %vm1150, %v6724, 0.0
    %v6789 = vsel %vm1150, %v6725, 0.0
    %v6790 = vsel %vm1150, %v6726, 0.0
    %v6791 = vsel %vm1150, %v6727, 0.0
    %v6792 = vsel %vm1150, %v6728, 0.0
    %v6793 = vsel %vm1150, %v6729, 0.0
    %v6794 = vsel %vm1150, %v6730, 0.0
    %v6795 = vsel %vm1150, %v6731, 0.0
    %v6796 = vsel %vm1150, %v6732, 0.0
    %v6797 = vsel %vm1150, %v6733, 0.0
    %v6798 = vsel %vm1150, %v6734, 0.0
    %v6799 = vsel %vm1150, %v6735, 0.0
    %v6800 = vsel %vm1150, %v6736, 0.0
    %v6801 = vsel %vm1150, %v6737, 0.0
    %v6802 = vsel %vm1150, %v6738, 0.0
    %v6803 = vsel %vm1150, %v6739, 0.0
    %v6804 = vsel %vm1150, %v6740, 0.0
    %v6805 = vsel %vm1150, %v6741, 0.0
    %v6806 = vsel %vm1150, %v6742, 0.0
    %v6807 = vsel %vm1150, %v6743, 0.0
    %v6808 = vsel %vm1150, %v6744, 0.0
    %v6809 = vsel %vm1150, %v6745, 0.0
    %v6810 = vsel %vm1150, %v6746, 0.0
    %v6811 = vsel %vm1150, %v6747, 0.0
    %v6812 = vsel %vm1150, %v6748, 0.0
    %v6813 = vsel %vm1150, %v6749, 0.0
    %v6814 = vsel %vm1150, %v6750, 0.0
    %v6815 = vsel %vm1150, %v6751, 0.0
    %v6816 = vsel %vm1150, %v6752, 0.0
    %v6817 = vpack.c.bf16 %v6754, %v6753
    %v6818 = vpack.c.bf16 %v6756, %v6755
    %v6819 = vpack.c.bf16 %v6758, %v6757
    %v6820 = vpack.c.bf16 %v6760, %v6759
    %v6821 = vpack.c.bf16 %v6762, %v6761
    %v6822 = vpack.c.bf16 %v6764, %v6763
    %v6823 = vpack.c.bf16 %v6766, %v6765
    %v6824 = vpack.c.bf16 %v6768, %v6767
    %v6825 = vpack.c.bf16 %v6770, %v6769
    %v6826 = vpack.c.bf16 %v6772, %v6771
    %v6827 = vpack.c.bf16 %v6774, %v6773
    %v6828 = vpack.c.bf16 %v6776, %v6775
    %v6829 = vpack.c.bf16 %v6778, %v6777
    %v6830 = vpack.c.bf16 %v6780, %v6779
    %v6831 = vpack.c.bf16 %v6782, %v6781
    %v6832 = vpack.c.bf16 %v6784, %v6783
    %v6833 = vpack.c.bf16 %v6786, %v6785
    %v6834 = vpack.c.bf16 %v6788, %v6787
    %v6835 = vpack.c.bf16 %v6790, %v6789
    %v6836 = vpack.c.bf16 %v6792, %v6791
    %v6837 = vpack.c.bf16 %v6794, %v6793
    %v6838 = vpack.c.bf16 %v6796, %v6795
    %v6839 = vpack.c.bf16 %v6798, %v6797
    %v6840 = vpack.c.bf16 %v6800, %v6799
    %v6841 = vpack.c.bf16 %v6802, %v6801
    %v6842 = vpack.c.bf16 %v6804, %v6803
    %v6843 = vpack.c.bf16 %v6806, %v6805
    %v6844 = vpack.c.bf16 %v6808, %v6807
    %v6845 = vpack.c.bf16 %v6810, %v6809
    %v6846 = vpack.c.bf16 %v6812, %v6811
    %v6847 = vpack.c.bf16 %v6814, %v6813
    %v6848 = vpack.c.bf16 %v6816, %v6815
    %v6881 = vunpack.c.l.b16 %v6817
    %v6882 = vunpack.c.h.b16 %v6817
    %v6883 = vunpack.c.l.b16 %v6818
    %v6884 = vunpack.c.h.b16 %v6818
    %v6885 = vunpack.c.l.b16 %v6819
    %v6886 = vunpack.c.h.b16 %v6819
    %v6887 = vunpack.c.l.b16 %v6820
    %v6888 = vunpack.c.h.b16 %v6820
    %v6889 = vunpack.c.l.b16 %v6821
    %v6890 = vunpack.c.h.b16 %v6821
    %v6891 = vunpack.c.l.b16 %v6822
    %v6892 = vunpack.c.h.b16 %v6822
    %v6893 = vunpack.c.l.b16 %v6823
    %v6894 = vunpack.c.h.b16 %v6823
    %v6895 = vunpack.c.l.b16 %v6824
    %v6896 = vunpack.c.h.b16 %v6824
    %v6897 = vunpack.c.l.b16 %v6825
    %v6898 = vunpack.c.h.b16 %v6825
    %v6899 = vunpack.c.l.b16 %v6826
    %v6900 = vunpack.c.h.b16 %v6826
    %v6901 = vunpack.c.l.b16 %v6827
    %v6902 = vunpack.c.h.b16 %v6827
    %v6903 = vunpack.c.l.b16 %v6828
    %v6904 = vunpack.c.h.b16 %v6828
    %v6905 = vunpack.c.l.b16 %v6829
    %v6906 = vunpack.c.h.b16 %v6829
    %v6907 = vunpack.c.l.b16 %v6830
    %v6908 = vunpack.c.h.b16 %v6830
    %v6909 = vunpack.c.l.b16 %v6831
    %v6910 = vunpack.c.h.b16 %v6831
    %v6911 = vunpack.c.l.b16 %v6832
    %v6912 = vunpack.c.h.b16 %v6832
    %v6913 = vunpack.c.l.b16 %v6833
    %v6914 = vunpack.c.h.b16 %v6833
    %v6915 = vunpack.c.l.b16 %v6834
    %v6916 = vunpack.c.h.b16 %v6834
    %v6917 = vunpack.c.l.b16 %v6835
    %v6918 = vunpack.c.h.b16 %v6835
    %v6919 = vunpack.c.l.b16 %v6836
    %v6920 = vunpack.c.h.b16 %v6836
    %v6921 = vunpack.c.l.b16 %v6837
    %v6922 = vunpack.c.h.b16 %v6837
    %v6923 = vunpack.c.l.b16 %v6838
    %v6924 = vunpack.c.h.b16 %v6838
    %v6925 = vunpack.c.l.b16 %v6839
    %v6926 = vunpack.c.h.b16 %v6839
    %v6927 = vunpack.c.l.b16 %v6840
    %v6928 = vunpack.c.h.b16 %v6840
    %v6929 = vunpack.c.l.b16 %v6841
    %v6930 = vunpack.c.h.b16 %v6841
    %v6931 = vunpack.c.l.b16 %v6842
    %v6932 = vunpack.c.h.b16 %v6842
    %v6933 = vunpack.c.l.b16 %v6843
    %v6934 = vunpack.c.h.b16 %v6843
    %v6935 = vunpack.c.l.b16 %v6844
    %v6936 = vunpack.c.h.b16 %v6844
    %v6937 = vunpack.c.l.b16 %v6845
    %v6938 = vunpack.c.h.b16 %v6845
    %v6939 = vunpack.c.l.b16 %v6846
    %v6940 = vunpack.c.h.b16 %v6846
    %v6941 = vunpack.c.l.b16 %v6847
    %v6942 = vunpack.c.h.b16 %v6847
    %v6943 = vunpack.c.l.b16 %v6848
    %v6944 = vunpack.c.h.b16 %v6848
    %v6945 = vpack.c.b16 %v6881, %v6881
    %v6946 = vpack.c.b16 %v6882, %v6882
    %v6947 = vpack.c.b16 %v6883, %v6883
    %v6948 = vpack.c.b16 %v6884, %v6884
    %v6949 = vpack.c.b16 %v6885, %v6885
    %v6950 = vpack.c.b16 %v6886, %v6886
    %v6951 = vpack.c.b16 %v6887, %v6887
    %v6952 = vpack.c.b16 %v6888, %v6888
    %v6953 = vpack.c.b16 %v6889, %v6889
    %v6954 = vpack.c.b16 %v6890, %v6890
    %v6955 = vpack.c.b16 %v6891, %v6891
    %v6956 = vpack.c.b16 %v6892, %v6892
    %v6957 = vpack.c.b16 %v6893, %v6893
    %v6958 = vpack.c.b16 %v6894, %v6894
    %v6959 = vpack.c.b16 %v6895, %v6895
    %v6960 = vpack.c.b16 %v6896, %v6896
    %v6961 = vpack.c.b16 %v6897, %v6897
    %v6962 = vpack.c.b16 %v6898, %v6898
    %v6963 = vpack.c.b16 %v6899, %v6899
    %v6964 = vpack.c.b16 %v6900, %v6900
    %v6965 = vpack.c.b16 %v6901, %v6901
    %v6966 = vpack.c.b16 %v6902, %v6902
    %v6967 = vpack.c.b16 %v6903, %v6903
    %v6968 = vpack.c.b16 %v6904, %v6904
    %v6969 = vpack.c.b16 %v6905, %v6905
    %v6970 = vpack.c.b16 %v6906, %v6906
    %v6971 = vpack.c.b16 %v6907, %v6907
    %v6972 = vpack.c.b16 %v6908, %v6908
    %v6973 = vpack.c.b16 %v6909, %v6909
    %v6974 = vpack.c.b16 %v6910, %v6910
    %v6975 = vpack.c.b16 %v6911, %v6911
    %v6976 = vpack.c.b16 %v6912, %v6912
    %v6977 = vpack.c.b16 %v6913, %v6913
    %v6978 = vpack.c.b16 %v6914, %v6914
    %v6979 = vpack.c.b16 %v6915, %v6915
    %v6980 = vpack.c.b16 %v6916, %v6916
    %v6981 = vpack.c.b16 %v6917, %v6917
    %v6982 = vpack.c.b16 %v6918, %v6918
    %v6983 = vpack.c.b16 %v6919, %v6919
    %v6984 = vpack.c.b16 %v6920, %v6920
    %v6985 = vpack.c.b16 %v6921, %v6921
    %v6986 = vpack.c.b16 %v6922, %v6922
    %v6987 = vpack.c.b16 %v6923, %v6923
    %v6988 = vpack.c.b16 %v6924, %v6924
    %v6989 = vpack.c.b16 %v6925, %v6925
    %v6990 = vpack.c.b16 %v6926, %v6926
    %v6991 = vpack.c.b16 %v6927, %v6927
    %v6992 = vpack.c.b16 %v6928, %v6928
    %v6993 = vpack.c.b16 %v6929, %v6929
    %v6994 = vpack.c.b16 %v6930, %v6930
    %v6995 = vpack.c.b16 %v6931, %v6931
    %v6996 = vpack.c.b16 %v6932, %v6932
    %v6997 = vpack.c.b16 %v6933, %v6933
    %v6998 = vpack.c.b16 %v6934, %v6934
    %v6999 = vpack.c.b16 %v6935, %v6935
    %v7000 = vpack.c.b16 %v6936, %v6936
    %v7001 = vpack.c.b16 %v6937, %v6937
    %v7002 = vpack.c.b16 %v6938, %v6938
    %v7003 = vpack.c.b16 %v6939, %v6939
    %v7004 = vpack.c.b16 %v6940, %v6940
    %v7005 = vpack.c.b16 %v6941, %v6941
    %v7006 = vpack.c.b16 %v6942, %v6942
    %v7007 = vpack.c.b16 %v6943, %v6943
    %v7008 = vpack.c.b16 %v6944, %v6944
    %7073 = vst [vmem:[#allocation3] sm:$0xf] %v6945
    %7074 = vst [vmem:[#allocation3 + $0xc] sm:$0xf] %v6946
    %7075 = vst [vmem:[#allocation3 + $0x18] sm:$0xf] %v6947
    %7076 = vst [vmem:[#allocation3 + $0x24] sm:$0xf] %v6948
    %7077 = vst [vmem:[#allocation3 + $0x30] sm:$0xf] %v6949
    %7078 = vst [vmem:[#allocation3 + $0x3c] sm:$0xf] %v6950
    %7079 = vst [vmem:[#allocation3 + $0x48] sm:$0xf] %v6951
    %7080 = vst [vmem:[#allocation3 + $0x54] sm:$0xf] %v6952
    %7081 = vst [vmem:[#allocation3 + $0x60] sm:$0xf] %v6953
    %7082 = vst [vmem:[#allocation3 + $0x6c] sm:$0xf] %v6954
    %7083 = vst [vmem:[#allocation3 + $0x78] sm:$0xf] %v6955
    %7084 = vst [vmem:[#allocation3 + $0x84] sm:$0xf] %v6956
    %7085 = vst [vmem:[#allocation3 + $0x90] sm:$0xf] %v6957
    %7086 = vst [vmem:[#allocation3 + $0x9c] sm:$0xf] %v6958
    %7087 = vst [vmem:[#allocation3 + $0xa8] sm:$0xf] %v6959
    %7088 = vst [vmem:[#allocation3 + $0xb4] sm:$0xf] %v6960
    %7089 = vst [vmem:[#allocation3 + $0xc0] sm:$0xf] %v6961
    %7090 = vst [vmem:[#allocation3 + $0xcc] sm:$0xf] %v6962
    %7091 = vst [vmem:[#allocation3 + $0xd8] sm:$0xf] %v6963
    %7092 = vst [vmem:[#allocation3 + $0xe4] sm:$0xf] %v6964
    %7093 = vst [vmem:[#allocation3 + $0xf0] sm:$0xf] %v6965
    %7094 = vst [vmem:[#allocation3 + $0xfc] sm:$0xf] %v6966
    %7095 = vst [vmem:[#allocation3 + $0x108] sm:$0xf] %v6967
    %7096 = vst [vmem:[#allocation3 + $0x114] sm:$0xf] %v6968
    %7097 = vst [vmem:[#allocation3 + $0x120] sm:$0xf] %v6969
    %7098 = vst [vmem:[#allocation3 + $0x12c] sm:$0xf] %v6970
    %7099 = vst [vmem:[#allocation3 + $0x138] sm:$0xf] %v6971
    %7100 = vst [vmem:[#allocation3 + $0x144] sm:$0xf] %v6972
    %7101 = vst [vmem:[#allocation3 + $0x150] sm:$0xf] %v6973
    %7102 = vst [vmem:[#allocation3 + $0x15c] sm:$0xf] %v6974
    %7103 = vst [vmem:[#allocation3 + $0x168] sm:$0xf] %v6975
    %7104 = vst [vmem:[#allocation3 + $0x174] sm:$0xf] %v6976
    %7105 = vst [vmem:[#allocation3 + $0x180] sm:$0xf] %v6977
    %7106 = vst [vmem:[#allocation3 + $0x18c] sm:$0xf] %v6978
    %7107 = vst [vmem:[#allocation3 + $0x198] sm:$0xf] %v6979
    %7108 = vst [vmem:[#allocation3 + $0x1a4] sm:$0xf] %v6980
    %7109 = vst [vmem:[#allocation3 + $0x1b0] sm:$0xf] %v6981
    %7110 = vst [vmem:[#allocation3 + $0x1bc] sm:$0xf] %v6982
    %7111 = vst [vmem:[#allocation3 + $0x1c8] sm:$0xf] %v6983
    %7112 = vst [vmem:[#allocation3 + $0x1d4] sm:$0xf] %v6984
    %7113 = vst [vmem:[#allocation3 + $0x1e0] sm:$0xf] %v6985
    %7114 = vst [vmem:[#allocation3 + $0x1ec] sm:$0xf] %v6986
    %7115 = vst [vmem:[#allocation3 + $0x1f8] sm:$0xf] %v6987
    %7116 = vst [vmem:[#allocation3 + $0x204] sm:$0xf] %v6988
    %7117 = vst [vmem:[#allocation3 + $0x210] sm:$0xf] %v6989
    %7118 = vst [vmem:[#allocation3 + $0x21c] sm:$0xf] %v6990
    %7119 = vst [vmem:[#allocation3 + $0x228] sm:$0xf] %v6991
    %7120 = vst [vmem:[#allocation3 + $0x234] sm:$0xf] %v6992
    %7121 = vst [vmem:[#allocation3 + $0x240] sm:$0xf] %v6993
    %7122 = vst [vmem:[#allocation3 + $0x24c] sm:$0xf] %v6994
    %7123 = vst [vmem:[#allocation3 + $0x258] sm:$0xf] %v6995
    %7124 = vst [vmem:[#allocation3 + $0x264] sm:$0xf] %v6996
    %7125 = vst [vmem:[#allocation3 + $0x270] sm:$0xf] %v6997
    %7126 = vst [vmem:[#allocation3 + $0x27c] sm:$0xf] %v6998
    %7127 = vst [vmem:[#allocation3 + $0x288] sm:$0xf] %v6999
    %7128 = vst [vmem:[#allocation3 + $0x294] sm:$0xf] %v7000
    %7129 = vst [vmem:[#allocation3 + $0x2a0] sm:$0xf] %v7001
    %7130 = vst [vmem:[#allocation3 + $0x2ac] sm:$0xf] %v7002
    %7131 = vst [vmem:[#allocation3 + $0x2b8] sm:$0xf] %v7003
    %7132 = vst [vmem:[#allocation3 + $0x2c4] sm:$0xf] %v7004
    %7133 = vst [vmem:[#allocation3 + $0x2d0] sm:$0xf] %v7005
    %7134 = vst [vmem:[#allocation3 + $0x2dc] sm:$0xf] %v7006
    %7135 = vst [vmem:[#allocation3 + $0x2e8] sm:$0xf] %v7007
    %7136 = vst [vmem:[#allocation3 + $0x2f4] sm:$0xf] %v7008
    %v7137 = vld [vmem:[%s251] sm:$0xff]
    %v7138 = vld [vmem:[%s251 + $0x8] sm:$0xff]
    %v7139 = vld [vmem:[%s251 + $0x18] sm:$0xff]
    %v7140 = vld [vmem:[%s251 + $0x20] sm:$0xff]
    %v7141 = vld [vmem:[%s251 + $0x30] sm:$0xff]
    %v7142 = vld [vmem:[%s251 + $0x38] sm:$0xff]
    %v7143 = vld [vmem:[%s251 + $0x48] sm:$0xff]
    %v7144 = vld [vmem:[%s251 + $0x50] sm:$0xff]
    %v7145 = vld [vmem:[%s251 + $0x60] sm:$0xff]
    %v7146 = vld [vmem:[%s251 + $0x68] sm:$0xff]
    %v7147 = vld [vmem:[%s251 + $0x78] sm:$0xff]
    %v7148 = vld [vmem:[%s251 + $0x80] sm:$0xff]
    %v7149 = vld [vmem:[%s251 + $0x90] sm:$0xff]
    %v7150 = vld [vmem:[%s251 + $0x98] sm:$0xff]
    %v7151 = vld [vmem:[%s251 + $0xa8] sm:$0xff]
    %v7152 = vld [vmem:[%s251 + $0xb0] sm:$0xff]
    %v7153 = vld [vmem:[%s251 + $0xc0] sm:$0xff]
    %v7154 = vld [vmem:[%s251 + $0xc8] sm:$0xff]
    %v7155 = vld [vmem:[%s251 + $0xd8] sm:$0xff]
    %v7156 = vld [vmem:[%s251 + $0xe0] sm:$0xff]
    %v7157 = vld [vmem:[%s251 + $0xf0] sm:$0xff]
    %v7158 = vld [vmem:[%s251 + $0xf8] sm:$0xff]
    %v7159 = vld [vmem:[%s251 + $0x108] sm:$0xff]
    %v7160 = vld [vmem:[%s251 + $0x110] sm:$0xff]
    %v7161 = vld [vmem:[%s251 + $0x120] sm:$0xff]
    %v7162 = vld [vmem:[%s251 + $0x128] sm:$0xff]
    %v7163 = vld [vmem:[%s251 + $0x138] sm:$0xff]
    %v7164 = vld [vmem:[%s251 + $0x140] sm:$0xff]
    %v7165 = vld [vmem:[%s251 + $0x150] sm:$0xff]
    %v7166 = vld [vmem:[%s251 + $0x158] sm:$0xff]
    %v7167 = vld [vmem:[%s251 + $0x168] sm:$0xff]
    %v7168 = vld [vmem:[%s251 + $0x170] sm:$0xff]
    %v7169 = vld [vmem:[%s251 + $0x1b0] sm:$0xff]
    %v7170 = vld [vmem:[%s251 + $0x1b8] sm:$0xff]
    %v7171 = vld [vmem:[%s251 + $0x1c8] sm:$0xff]
    %v7172 = vld [vmem:[%s251 + $0x1d0] sm:$0xff]
    %v7173 = vld [vmem:[%s251 + $0x1e0] sm:$0xff]
    %v7174 = vld [vmem:[%s251 + $0x1e8] sm:$0xff]
    %v7175 = vld [vmem:[%s251 + $0x1f8] sm:$0xff]
    %v7176 = vld [vmem:[%s251 + $0x200] sm:$0xff]
    %v7177 = vld [vmem:[%s251 + $0x210] sm:$0xff]
    %v7178 = vld [vmem:[%s251 + $0x218] sm:$0xff]
    %v7179 = vld [vmem:[%s251 + $0x228] sm:$0xff]
    %v7180 = vld [vmem:[%s251 + $0x230] sm:$0xff]
    %v7181 = vld [vmem:[%s251 + $0x240] sm:$0xff]
    %v7182 = vld [vmem:[%s251 + $0x248] sm:$0xff]
    %v7183 = vld [vmem:[%s251 + $0x258] sm:$0xff]
    %v7184 = vld [vmem:[%s251 + $0x260] sm:$0xff]
    %v7185 = vld [vmem:[%s251 + $0x270] sm:$0xff]
    %v7186 = vld [vmem:[%s251 + $0x278] sm:$0xff]
    %v7187 = vld [vmem:[%s251 + $0x288] sm:$0xff]
    %v7188 = vld [vmem:[%s251 + $0x290] sm:$0xff]
    %v7189 = vld [vmem:[%s251 + $0x2a0] sm:$0xff]
    %v7190 = vld [vmem:[%s251 + $0x2a8] sm:$0xff]
    %v7191 = vld [vmem:[%s251 + $0x2b8] sm:$0xff]
    %v7192 = vld [vmem:[%s251 + $0x2c0] sm:$0xff]
    %v7193 = vld [vmem:[%s251 + $0x2d0] sm:$0xff]
    %v7194 = vld [vmem:[%s251 + $0x2d8] sm:$0xff]
    %v7195 = vld [vmem:[%s251 + $0x2e8] sm:$0xff]
    %v7196 = vld [vmem:[%s251 + $0x2f0] sm:$0xff]
    %v7197 = vld [vmem:[%s251 + $0x300] sm:$0xff]
    %v7198 = vld [vmem:[%s251 + $0x308] sm:$0xff]
    %v7199 = vld [vmem:[%s251 + $0x318] sm:$0xff]
    %v7200 = vld [vmem:[%s251 + $0x320] sm:$0xff]
    %v7201 = vld [vmem:[%s251 + $0x1] sm:$0xff]
    %v7202 = vld [vmem:[%s251 + $0x9] sm:$0xff]
    %v7203 = vld [vmem:[%s251 + $0x19] sm:$0xff]
    %v7204 = vld [vmem:[%s251 + $0x21] sm:$0xff]
    %v7205 = vld [vmem:[%s251 + $0x31] sm:$0xff]
    %v7206 = vld [vmem:[%s251 + $0x39] sm:$0xff]
    %v7207 = vld [vmem:[%s251 + $0x49] sm:$0xff]
    %v7208 = vld [vmem:[%s251 + $0x51] sm:$0xff]
    %v7209 = vld [vmem:[%s251 + $0x61] sm:$0xff]
    %v7210 = vld [vmem:[%s251 + $0x69] sm:$0xff]
    %v7211 = vld [vmem:[%s251 + $0x79] sm:$0xff]
    %v7212 = vld [vmem:[%s251 + $0x81] sm:$0xff]
    %v7213 = vld [vmem:[%s251 + $0x91] sm:$0xff]
    %v7214 = vld [vmem:[%s251 + $0x99] sm:$0xff]
    %v7215 = vld [vmem:[%s251 + $0xa9] sm:$0xff]
    %v7216 = vld [vmem:[%s251 + $0xb1] sm:$0xff]
    %v7217 = vld [vmem:[%s251 + $0xc1] sm:$0xff]
    %v7218 = vld [vmem:[%s251 + $0xc9] sm:$0xff]
    %v7219 = vld [vmem:[%s251 + $0xd9] sm:$0xff]
    %v7220 = vld [vmem:[%s251 + $0xe1] sm:$0xff]
    %v7221 = vld [vmem:[%s251 + $0xf1] sm:$0xff]
    %v7222 = vld [vmem:[%s251 + $0xf9] sm:$0xff]
    %v7223 = vld [vmem:[%s251 + $0x109] sm:$0xff]
    %v7224 = vld [vmem:[%s251 + $0x111] sm:$0xff]
    %v7225 = vld [vmem:[%s251 + $0x121] sm:$0xff]
    %v7226 = vld [vmem:[%s251 + $0x129] sm:$0xff]
    %v7227 = vld [vmem:[%s251 + $0x139] sm:$0xff]
    %v7228 = vld [vmem:[%s251 + $0x141] sm:$0xff]
    %v7229 = vld [vmem:[%s251 + $0x151] sm:$0xff]
    %v7230 = vld [vmem:[%s251 + $0x159] sm:$0xff]
    %v7231 = vld [vmem:[%s251 + $0x169] sm:$0xff]
    %v7232 = vld [vmem:[%s251 + $0x171] sm:$0xff]
    %v7233 = vld [vmem:[%s251 + $0x1b1] sm:$0xff]
    %v7234 = vld [vmem:[%s251 + $0x1b9] sm:$0xff]
    %v7235 = vld [vmem:[%s251 + $0x1c9] sm:$0xff]
    %v7236 = vld [vmem:[%s251 + $0x1d1] sm:$0xff]
    %v7237 = vld [vmem:[%s251 + $0x1e1] sm:$0xff]
    %v7238 = vld [vmem:[%s251 + $0x1e9] sm:$0xff]
    %v7239 = vld [vmem:[%s251 + $0x1f9] sm:$0xff]
    %v7240 = vld [vmem:[%s251 + $0x201] sm:$0xff]
    %v7241 = vld [vmem:[%s251 + $0x211] sm:$0xff]
    %v7242 = vld [vmem:[%s251 + $0x219] sm:$0xff]
    %v7243 = vld [vmem:[%s251 + $0x229] sm:$0xff]
    %v7244 = vld [vmem:[%s251 + $0x231] sm:$0xff]
    %v7245 = vld [vmem:[%s251 + $0x241] sm:$0xff]
    %v7246 = vld [vmem:[%s251 + $0x249] sm:$0xff]
    %v7247 = vld [vmem:[%s251 + $0x259] sm:$0xff]
    %v7248 = vld [vmem:[%s251 + $0x261] sm:$0xff]
    %v7249 = vld [vmem:[%s251 + $0x271] sm:$0xff]
    %v7250 = vld [vmem:[%s251 + $0x279] sm:$0xff]
    %v7251 = vld [vmem:[%s251 + $0x289] sm:$0xff]
    %v7252 = vld [vmem:[%s251 + $0x291] sm:$0xff]
    %v7253 = vld [vmem:[%s251 + $0x2a1] sm:$0xff]
    %v7254 = vld [vmem:[%s251 + $0x2a9] sm:$0xff]
    %v7255 = vld [vmem:[%s251 + $0x2b9] sm:$0xff]
    %v7256 = vld [vmem:[%s251 + $0x2c1] sm:$0xff]
    %v7257 = vld [vmem:[%s251 + $0x2d1] sm:$0xff]
    %v7258 = vld [vmem:[%s251 + $0x2d9] sm:$0xff]
    %v7259 = vld [vmem:[%s251 + $0x2e9] sm:$0xff]
    %v7260 = vld [vmem:[%s251 + $0x2f1] sm:$0xff]
    %v7261 = vld [vmem:[%s251 + $0x301] sm:$0xff]
    %v7262 = vld [vmem:[%s251 + $0x309] sm:$0xff]
    %v7263 = vld [vmem:[%s251 + $0x319] sm:$0xff]
    %v7264 = vld [vmem:[%s251 + $0x321] sm:$0xff]
    %v7265 = vld [vmem:[%s251 + $0x2] sm:$0xff]
    %v7266 = vld [vmem:[%s251 + $0xa] sm:$0xff]
    %v7267 = vld [vmem:[%s251 + $0x1a] sm:$0xff]
    %v7268 = vld [vmem:[%s251 + $0x22] sm:$0xff]
    %v7269 = vld [vmem:[%s251 + $0x32] sm:$0xff]
    %v7270 = vld [vmem:[%s251 + $0x3a] sm:$0xff]
    %v7271 = vld [vmem:[%s251 + $0x4a] sm:$0xff]
    %v7272 = vld [vmem:[%s251 + $0x52] sm:$0xff]
    %v7273 = vld [vmem:[%s251 + $0x62] sm:$0xff]
    %v7274 = vld [vmem:[%s251 + $0x6a] sm:$0xff]
    %v7275 = vld [vmem:[%s251 + $0x7a] sm:$0xff]
    %v7276 = vld [vmem:[%s251 + $0x82] sm:$0xff]
    %v7277 = vld [vmem:[%s251 + $0x92] sm:$0xff]
    %v7278 = vld [vmem:[%s251 + $0x9a] sm:$0xff]
    %v7279 = vld [vmem:[%s251 + $0xaa] sm:$0xff]
    %v7280 = vld [vmem:[%s251 + $0xb2] sm:$0xff]
    %v7281 = vld [vmem:[%s251 + $0xc2] sm:$0xff]
    %v7282 = vld [vmem:[%s251 + $0xca] sm:$0xff]
    %v7283 = vld [vmem:[%s251 + $0xda] sm:$0xff]
    %v7284 = vld [vmem:[%s251 + $0xe2] sm:$0xff]
    %v7285 = vld [vmem:[%s251 + $0xf2] sm:$0xff]
    %v7286 = vld [vmem:[%s251 + $0xfa] sm:$0xff]
    %v7287 = vld [vmem:[%s251 + $0x10a] sm:$0xff]
    %v7288 = vld [vmem:[%s251 + $0x112] sm:$0xff]
    %v7289 = vld [vmem:[%s251 + $0x122] sm:$0xff]
    %v7290 = vld [vmem:[%s251 + $0x12a] sm:$0xff]
    %v7291 = vld [vmem:[%s251 + $0x13a] sm:$0xff]
    %v7292 = vld [vmem:[%s251 + $0x142] sm:$0xff]
    %v7293 = vld [vmem:[%s251 + $0x152] sm:$0xff]
    %v7294 = vld [vmem:[%s251 + $0x15a] sm:$0xff]
    %v7295 = vld [vmem:[%s251 + $0x16a] sm:$0xff]
    %v7296 = vld [vmem:[%s251 + $0x172] sm:$0xff]
    %v7297 = vld [vmem:[%s251 + $0x1b2] sm:$0xff]
    %v7298 = vld [vmem:[%s251 + $0x1ba] sm:$0xff]
    %v7299 = vld [vmem:[%s251 + $0x1ca] sm:$0xff]
    %v7300 = vld [vmem:[%s251 + $0x1d2] sm:$0xff]
    %v7301 = vld [vmem:[%s251 + $0x1e2] sm:$0xff]
    %v7302 = vld [vmem:[%s251 + $0x1ea] sm:$0xff]
    %v7303 = vld [vmem:[%s251 + $0x1fa] sm:$0xff]
    %v7304 = vld [vmem:[%s251 + $0x202] sm:$0xff]
    %v7305 = vld [vmem:[%s251 + $0x212] sm:$0xff]
    %v7306 = vld [vmem:[%s251 + $0x21a] sm:$0xff]
    %v7307 = vld [vmem:[%s251 + $0x22a] sm:$0xff]
    %v7308 = vld [vmem:[%s251 + $0x232] sm:$0xff]
    %v7309 = vld [vmem:[%s251 + $0x242] sm:$0xff]
    %v7310 = vld [vmem:[%s251 + $0x24a] sm:$0xff]
    %v7311 = vld [vmem:[%s251 + $0x25a] sm:$0xff]
    %v7312 = vld [vmem:[%s251 + $0x262] sm:$0xff]
    %v7313 = vld [vmem:[%s251 + $0x272] sm:$0xff]
    %v7314 = vld [vmem:[%s251 + $0x27a] sm:$0xff]
    %v7315 = vld [vmem:[%s251 + $0x28a] sm:$0xff]
    %v7316 = vld [vmem:[%s251 + $0x292] sm:$0xff]
    %v7317 = vld [vmem:[%s251 + $0x2a2] sm:$0xff]
    %v7318 = vld [vmem:[%s251 + $0x2aa] sm:$0xff]
    %v7319 = vld [vmem:[%s251 + $0x2ba] sm:$0xff]
    %v7320 = vld [vmem:[%s251 + $0x2c2] sm:$0xff]
    %v7321 = vld [vmem:[%s251 + $0x2d2] sm:$0xff]
    %v7322 = vld [vmem:[%s251 + $0x2da] sm:$0xff]
    %v7323 = vld [vmem:[%s251 + $0x2ea] sm:$0xff]
    %v7324 = vld [vmem:[%s251 + $0x2f2] sm:$0xff]
    %v7325 = vld [vmem:[%s251 + $0x302] sm:$0xff]
    %v7326 = vld [vmem:[%s251 + $0x30a] sm:$0xff]
    %v7327 = vld [vmem:[%s251 + $0x31a] sm:$0xff]
    %v7328 = vld [vmem:[%s251 + $0x322] sm:$0xff]
    %7393 = vrot.lane.b32.xlu0 %v7201, 32
    %v7394 = vpop.permute.xlu0 %7393
    %7395 = vrot.lane.b32.xlu0 %v7202, 32
    %v7396 = vpop.permute.xlu0 %7395
    %7397 = vrot.lane.b32.xlu0 %v7203, 32
    %v7398 = vpop.permute.xlu0 %7397
    %7399 = vrot.lane.b32.xlu0 %v7204, 32
    %v7400 = vpop.permute.xlu0 %7399
    %7401 = vrot.lane.b32.xlu0 %v7205, 32
    %v7402 = vpop.permute.xlu0 %7401
    %7403 = vrot.lane.b32.xlu0 %v7206, 32
    %v7404 = vpop.permute.xlu0 %7403
    %7405 = vrot.lane.b32.xlu0 %v7207, 32
    %v7406 = vpop.permute.xlu0 %7405
    %7407 = vrot.lane.b32.xlu0 %v7208, 32
    %v7408 = vpop.permute.xlu0 %7407
    %7409 = vrot.lane.b32.xlu0 %v7209, 32
    %v7410 = vpop.permute.xlu0 %7409
    %7411 = vrot.lane.b32.xlu0 %v7210, 32
    %v7412 = vpop.permute.xlu0 %7411
    %7413 = vrot.lane.b32.xlu0 %v7211, 32
    %v7414 = vpop.permute.xlu0 %7413
    %7415 = vrot.lane.b32.xlu0 %v7212, 32
    %v7416 = vpop.permute.xlu0 %7415
    %7417 = vrot.lane.b32.xlu0 %v7213, 32
    %v7418 = vpop.permute.xlu0 %7417
    %7419 = vrot.lane.b32.xlu0 %v7214, 32
    %v7420 = vpop.permute.xlu0 %7419
    %7421 = vrot.lane.b32.xlu0 %v7215, 32
    %v7422 = vpop.permute.xlu0 %7421
    %7423 = vrot.lane.b32.xlu0 %v7216, 32
    %v7424 = vpop.permute.xlu0 %7423
    %7425 = vrot.lane.b32.xlu0 %v7217, 32
    %v7426 = vpop.permute.xlu0 %7425
    %7427 = vrot.lane.b32.xlu0 %v7218, 32
    %v7428 = vpop.permute.xlu0 %7427
    %7429 = vrot.lane.b32.xlu0 %v7219, 32
    %v7430 = vpop.permute.xlu0 %7429
    %7431 = vrot.lane.b32.xlu0 %v7220, 32
    %v7432 = vpop.permute.xlu0 %7431
    %7433 = vrot.lane.b32.xlu0 %v7221, 32
    %v7434 = vpop.permute.xlu0 %7433
    %7435 = vrot.lane.b32.xlu0 %v7222, 32
    %v7436 = vpop.permute.xlu0 %7435
    %7437 = vrot.lane.b32.xlu0 %v7223, 32
    %v7438 = vpop.permute.xlu0 %7437
    %7439 = vrot.lane.b32.xlu0 %v7224, 32
    %v7440 = vpop.permute.xlu0 %7439
    %7441 = vrot.lane.b32.xlu0 %v7225, 32
    %v7442 = vpop.permute.xlu0 %7441
    %7443 = vrot.lane.b32.xlu0 %v7226, 32
    %v7444 = vpop.permute.xlu0 %7443
    %7445 = vrot.lane.b32.xlu0 %v7227, 32
    %v7446 = vpop.permute.xlu0 %7445
    %7447 = vrot.lane.b32.xlu0 %v7228, 32
    %v7448 = vpop.permute.xlu0 %7447
    %7449 = vrot.lane.b32.xlu0 %v7229, 32
    %v7450 = vpop.permute.xlu0 %7449
    %7451 = vrot.lane.b32.xlu0 %v7230, 32
    %v7452 = vpop.permute.xlu0 %7451
    %7453 = vrot.lane.b32.xlu0 %v7231, 32
    %v7454 = vpop.permute.xlu0 %7453
    %7455 = vrot.lane.b32.xlu0 %v7232, 32
    %v7456 = vpop.permute.xlu0 %7455
    %7457 = vrot.lane.b32.xlu0 %v7233, 32
    %v7458 = vpop.permute.xlu0 %7457
    %7459 = vrot.lane.b32.xlu0 %v7234, 32
    %v7460 = vpop.permute.xlu0 %7459
    %7461 = vrot.lane.b32.xlu0 %v7235, 32
    %v7462 = vpop.permute.xlu0 %7461
    %7463 = vrot.lane.b32.xlu0 %v7236, 32
    %v7464 = vpop.permute.xlu0 %7463
    %7465 = vrot.lane.b32.xlu0 %v7237, 32
    %v7466 = vpop.permute.xlu0 %7465
    %7467 = vrot.lane.b32.xlu0 %v7238, 32
    %v7468 = vpop.permute.xlu0 %7467
    %7469 = vrot.lane.b32.xlu0 %v7239, 32
    %v7470 = vpop.permute.xlu0 %7469
    %7471 = vrot.lane.b32.xlu0 %v7240, 32
    %v7472 = vpop.permute.xlu0 %7471
    %7473 = vrot.lane.b32.xlu0 %v7241, 32
    %v7474 = vpop.permute.xlu0 %7473
    %7475 = vrot.lane.b32.xlu0 %v7242, 32
    %v7476 = vpop.permute.xlu0 %7475
    %7477 = vrot.lane.b32.xlu0 %v7243, 32
    %v7478 = vpop.permute.xlu0 %7477
    %7479 = vrot.lane.b32.xlu0 %v7244, 32
    %v7480 = vpop.permute.xlu0 %7479
    %7481 = vrot.lane.b32.xlu0 %v7245, 32
    %v7482 = vpop.permute.xlu0 %7481
    %7483 = vrot.lane.b32.xlu0 %v7246, 32
    %v7484 = vpop.permute.xlu0 %7483
    %7485 = vrot.lane.b32.xlu0 %v7247, 32
    %v7486 = vpop.permute.xlu0 %7485
    %7487 = vrot.lane.b32.xlu0 %v7248, 32
    %v7488 = vpop.permute.xlu0 %7487
    %7489 = vrot.lane.b32.xlu0 %v7249, 32
    %v7490 = vpop.permute.xlu0 %7489
    %7491 = vrot.lane.b32.xlu0 %v7250, 32
    %v7492 = vpop.permute.xlu0 %7491
    %7493 = vrot.lane.b32.xlu0 %v7251, 32
    %v7494 = vpop.permute.xlu0 %7493
    %7495 = vrot.lane.b32.xlu0 %v7252, 32
    %v7496 = vpop.permute.xlu0 %7495
    %7497 = vrot.lane.b32.xlu0 %v7253, 32
    %v7498 = vpop.permute.xlu0 %7497
    %7499 = vrot.lane.b32.xlu0 %v7254, 32
    %v7500 = vpop.permute.xlu0 %7499
    %7501 = vrot.lane.b32.xlu0 %v7255, 32
    %v7502 = vpop.permute.xlu0 %7501
    %7503 = vrot.lane.b32.xlu0 %v7256, 32
    %v7504 = vpop.permute.xlu0 %7503
    %7505 = vrot.lane.b32.xlu0 %v7257, 32
    %v7506 = vpop.permute.xlu0 %7505
    %7507 = vrot.lane.b32.xlu0 %v7258, 32
    %v7508 = vpop.permute.xlu0 %7507
    %7509 = vrot.lane.b32.xlu0 %v7259, 32
    %v7510 = vpop.permute.xlu0 %7509
    %7511 = vrot.lane.b32.xlu0 %v7260, 32
    %v7512 = vpop.permute.xlu0 %7511
    %7513 = vrot.lane.b32.xlu0 %v7261, 32
    %v7514 = vpop.permute.xlu0 %7513
    %7515 = vrot.lane.b32.xlu0 %v7262, 32
    %v7516 = vpop.permute.xlu0 %7515
    %7517 = vrot.lane.b32.xlu0 %v7263, 32
    %v7518 = vpop.permute.xlu0 %7517
    %7519 = vrot.lane.b32.xlu0 %v7264, 32
    %v7520 = vpop.permute.xlu0 %7519
    %7649 = vrot.lane.b32.xlu0 %v7265, 64
    %v7650 = vpop.permute.xlu0 %7649
    %7651 = vrot.lane.b32.xlu0 %v7266, 64
    %v7652 = vpop.permute.xlu0 %7651
    %7653 = vrot.lane.b32.xlu0 %v7267, 64
    %v7654 = vpop.permute.xlu0 %7653
    %7655 = vrot.lane.b32.xlu0 %v7268, 64
    %v7656 = vpop.permute.xlu0 %7655
    %7657 = vrot.lane.b32.xlu0 %v7269, 64
    %v7658 = vpop.permute.xlu0 %7657
    %7659 = vrot.lane.b32.xlu0 %v7270, 64
    %v7660 = vpop.permute.xlu0 %7659
    %7661 = vrot.lane.b32.xlu0 %v7271, 64
    %v7662 = vpop.permute.xlu0 %7661
    %7663 = vrot.lane.b32.xlu0 %v7272, 64
    %v7664 = vpop.permute.xlu0 %7663
    %7665 = vrot.lane.b32.xlu0 %v7273, 64
    %v7666 = vpop.permute.xlu0 %7665
    %7667 = vrot.lane.b32.xlu0 %v7274, 64
    %v7668 = vpop.permute.xlu0 %7667
    %7669 = vrot.lane.b32.xlu0 %v7275, 64
    %v7670 = vpop.permute.xlu0 %7669
    %7671 = vrot.lane.b32.xlu0 %v7276, 64
    %v7672 = vpop.permute.xlu0 %7671
    %7673 = vrot.lane.b32.xlu0 %v7277, 64
    %v7674 = vpop.permute.xlu0 %7673
    %7675 = vrot.lane.b32.xlu0 %v7278, 64
    %v7676 = vpop.permute.xlu0 %7675
    %7677 = vrot.lane.b32.xlu0 %v7279, 64
    %v7678 = vpop.permute.xlu0 %7677
    %7679 = vrot.lane.b32.xlu0 %v7280, 64
    %v7680 = vpop.permute.xlu0 %7679
    %7681 = vrot.lane.b32.xlu0 %v7281, 64
    %v7682 = vpop.permute.xlu0 %7681
    %7683 = vrot.lane.b32.xlu0 %v7282, 64
    %v7684 = vpop.permute.xlu0 %7683
    %7685 = vrot.lane.b32.xlu0 %v7283, 64
    %v7686 = vpop.permute.xlu0 %7685
    %7687 = vrot.lane.b32.xlu0 %v7284, 64
    %v7688 = vpop.permute.xlu0 %7687
    %7689 = vrot.lane.b32.xlu0 %v7285, 64
    %v7690 = vpop.permute.xlu0 %7689
    %7691 = vrot.lane.b32.xlu0 %v7286, 64
    %v7692 = vpop.permute.xlu0 %7691
    %7693 = vrot.lane.b32.xlu0 %v7287, 64
    %v7694 = vpop.permute.xlu0 %7693
    %7695 = vrot.lane.b32.xlu0 %v7288, 64
    %v7696 = vpop.permute.xlu0 %7695
    %7697 = vrot.lane.b32.xlu0 %v7289, 64
    %v7698 = vpop.permute.xlu0 %7697
    %7699 = vrot.lane.b32.xlu0 %v7290, 64
    %v7700 = vpop.permute.xlu0 %7699
    %7701 = vrot.lane.b32.xlu0 %v7291, 64
    %v7702 = vpop.permute.xlu0 %7701
    %7703 = vrot.lane.b32.xlu0 %v7292, 64
    %v7704 = vpop.permute.xlu0 %7703
    %7705 = vrot.lane.b32.xlu0 %v7293, 64
    %v7706 = vpop.permute.xlu0 %7705
    %7707 = vrot.lane.b32.xlu0 %v7294, 64
    %v7708 = vpop.permute.xlu0 %7707
    %7709 = vrot.lane.b32.xlu0 %v7295, 64
    %v7710 = vpop.permute.xlu0 %7709
    %7711 = vrot.lane.b32.xlu0 %v7296, 64
    %v7712 = vpop.permute.xlu0 %7711
    %7713 = vrot.lane.b32.xlu0 %v7297, 64
    %v7714 = vpop.permute.xlu0 %7713
    %7715 = vrot.lane.b32.xlu0 %v7298, 64
    %v7716 = vpop.permute.xlu0 %7715
    %7717 = vrot.lane.b32.xlu0 %v7299, 64
    %v7718 = vpop.permute.xlu0 %7717
    %7719 = vrot.lane.b32.xlu0 %v7300, 64
    %v7720 = vpop.permute.xlu0 %7719
    %7721 = vrot.lane.b32.xlu0 %v7301, 64
    %v7722 = vpop.permute.xlu0 %7721
    %7723 = vrot.lane.b32.xlu0 %v7302, 64
    %v7724 = vpop.permute.xlu0 %7723
    %7725 = vrot.lane.b32.xlu0 %v7303, 64
    %v7726 = vpop.permute.xlu0 %7725
    %7727 = vrot.lane.b32.xlu0 %v7304, 64
    %v7728 = vpop.permute.xlu0 %7727
    %7729 = vrot.lane.b32.xlu0 %v7305, 64
    %v7730 = vpop.permute.xlu0 %7729
    %7731 = vrot.lane.b32.xlu0 %v7306, 64
    %v7732 = vpop.permute.xlu0 %7731
    %7733 = vrot.lane.b32.xlu0 %v7307, 64
    %v7734 = vpop.permute.xlu0 %7733
    %7735 = vrot.lane.b32.xlu0 %v7308, 64
    %v7736 = vpop.permute.xlu0 %7735
    %7737 = vrot.lane.b32.xlu0 %v7309, 64
    %v7738 = vpop.permute.xlu0 %7737
    %7739 = vrot.lane.b32.xlu0 %v7310, 64
    %v7740 = vpop.permute.xlu0 %7739
    %7741 = vrot.lane.b32.xlu0 %v7311, 64
    %v7742 = vpop.permute.xlu0 %7741
    %7743 = vrot.lane.b32.xlu0 %v7312, 64
    %v7744 = vpop.permute.xlu0 %7743
    %7745 = vrot.lane.b32.xlu0 %v7313, 64
    %v7746 = vpop.permute.xlu0 %7745
    %7747 = vrot.lane.b32.xlu0 %v7314, 64
    %v7748 = vpop.permute.xlu0 %7747
    %7749 = vrot.lane.b32.xlu0 %v7315, 64
    %v7750 = vpop.permute.xlu0 %7749
    %7751 = vrot.lane.b32.xlu0 %v7316, 64
    %v7752 = vpop.permute.xlu0 %7751
    %7753 = vrot.lane.b32.xlu0 %v7317, 64
    %v7754 = vpop.permute.xlu0 %7753
    %7755 = vrot.lane.b32.xlu0 %v7318, 64
    %v7756 = vpop.permute.xlu0 %7755
    %7757 = vrot.lane.b32.xlu0 %v7319, 64
    %v7758 = vpop.permute.xlu0 %7757
    %7759 = vrot.lane.b32.xlu0 %v7320, 64
    %v7760 = vpop.permute.xlu0 %7759
    %7761 = vrot.lane.b32.xlu0 %v7321, 64
    %v7762 = vpop.permute.xlu0 %7761
    %7763 = vrot.lane.b32.xlu0 %v7322, 64
    %v7764 = vpop.permute.xlu0 %7763
    %7765 = vrot.lane.b32.xlu0 %v7323, 64
    %v7766 = vpop.permute.xlu0 %7765
    %7767 = vrot.lane.b32.xlu0 %v7324, 64
    %v7768 = vpop.permute.xlu0 %7767
    %7769 = vrot.lane.b32.xlu0 %v7325, 64
    %v7770 = vpop.permute.xlu0 %7769
    %7771 = vrot.lane.b32.xlu0 %v7326, 64
    %v7772 = vpop.permute.xlu0 %7771
    %7773 = vrot.lane.b32.xlu0 %v7327, 64
    %v7774 = vpop.permute.xlu0 %7773
    %7775 = vrot.lane.b32.xlu0 %v7328, 64
    %v7776 = vpop.permute.xlu0 %7775
    %v7841 = vsel %vm1020, %v7137, %v7394
    %v7842 = vsel %vm1020, %v7138, %v7396
    %v7843 = vsel %vm1020, %v7139, %v7398
    %v7844 = vsel %vm1020, %v7140, %v7400
    %v7845 = vsel %vm1020, %v7141, %v7402
    %v7846 = vsel %vm1020, %v7142, %v7404
    %v7847 = vsel %vm1020, %v7143, %v7406
    %v7848 = vsel %vm1020, %v7144, %v7408
    %v7849 = vsel %vm1020, %v7145, %v7410
    %v7850 = vsel %vm1020, %v7146, %v7412
    %v7851 = vsel %vm1020, %v7147, %v7414
    %v7852 = vsel %vm1020, %v7148, %v7416
    %v7853 = vsel %vm1020, %v7149, %v7418
    %v7854 = vsel %vm1020, %v7150, %v7420
    %v7855 = vsel %vm1020, %v7151, %v7422
    %v7856 = vsel %vm1020, %v7152, %v7424
    %v7857 = vsel %vm1020, %v7153, %v7426
    %v7858 = vsel %vm1020, %v7154, %v7428
    %v7859 = vsel %vm1020, %v7155, %v7430
    %v7860 = vsel %vm1020, %v7156, %v7432
    %v7861 = vsel %vm1020, %v7157, %v7434
    %v7862 = vsel %vm1020, %v7158, %v7436
    %v7863 = vsel %vm1020, %v7159, %v7438
    %v7864 = vsel %vm1020, %v7160, %v7440
    %v7865 = vsel %vm1020, %v7161, %v7442
    %v7866 = vsel %vm1020, %v7162, %v7444
    %v7867 = vsel %vm1020, %v7163, %v7446
    %v7868 = vsel %vm1020, %v7164, %v7448
    %v7869 = vsel %vm1020, %v7165, %v7450
    %v7870 = vsel %vm1020, %v7166, %v7452
    %v7871 = vsel %vm1020, %v7167, %v7454
    %v7872 = vsel %vm1020, %v7168, %v7456
    %v7873 = vsel %vm1020, %v7169, %v7458
    %v7874 = vsel %vm1020, %v7170, %v7460
    %v7875 = vsel %vm1020, %v7171, %v7462
    %v7876 = vsel %vm1020, %v7172, %v7464
    %v7877 = vsel %vm1020, %v7173, %v7466
    %v7878 = vsel %vm1020, %v7174, %v7468
    %v7879 = vsel %vm1020, %v7175, %v7470
    %v7880 = vsel %vm1020, %v7176, %v7472
    %v7881 = vsel %vm1020, %v7177, %v7474
    %v7882 = vsel %vm1020, %v7178, %v7476
    %v7883 = vsel %vm1020, %v7179, %v7478
    %v7884 = vsel %vm1020, %v7180, %v7480
    %v7885 = vsel %vm1020, %v7181, %v7482
    %v7886 = vsel %vm1020, %v7182, %v7484
    %v7887 = vsel %vm1020, %v7183, %v7486
    %v7888 = vsel %vm1020, %v7184, %v7488
    %v7889 = vsel %vm1020, %v7185, %v7490
    %v7890 = vsel %vm1020, %v7186, %v7492
    %v7891 = vsel %vm1020, %v7187, %v7494
    %v7892 = vsel %vm1020, %v7188, %v7496
    %v7893 = vsel %vm1020, %v7189, %v7498
    %v7894 = vsel %vm1020, %v7190, %v7500
    %v7895 = vsel %vm1020, %v7191, %v7502
    %v7896 = vsel %vm1020, %v7192, %v7504
    %v7897 = vsel %vm1020, %v7193, %v7506
    %v7898 = vsel %vm1020, %v7194, %v7508
    %v7899 = vsel %vm1020, %v7195, %v7510
    %v7900 = vsel %vm1020, %v7196, %v7512
    %v7901 = vsel %vm1020, %v7197, %v7514
    %v7902 = vsel %vm1020, %v7198, %v7516
    %v7903 = vsel %vm1020, %v7199, %v7518
    %v7904 = vsel %vm1020, %v7200, %v7520
    %v7905 = vsel %vm1085, %v7841, %v7650
    %v7906 = vsel %vm1085, %v7842, %v7652
    %v7907 = vsel %vm1085, %v7843, %v7654
    %v7908 = vsel %vm1085, %v7844, %v7656
    %v7909 = vsel %vm1085, %v7845, %v7658
    %v7910 = vsel %vm1085, %v7846, %v7660
    %v7911 = vsel %vm1085, %v7847, %v7662
    %v7912 = vsel %vm1085, %v7848, %v7664
    %v7913 = vsel %vm1085, %v7849, %v7666
    %v7914 = vsel %vm1085, %v7850, %v7668
    %v7915 = vsel %vm1085, %v7851, %v7670
    %v7916 = vsel %vm1085, %v7852, %v7672
    %v7917 = vsel %vm1085, %v7853, %v7674
    %v7918 = vsel %vm1085, %v7854, %v7676
    %v7919 = vsel %vm1085, %v7855, %v7678
    %v7920 = vsel %vm1085, %v7856, %v7680
    %v7921 = vsel %vm1085, %v7857, %v7682
    %v7922 = vsel %vm1085, %v7858, %v7684
    %v7923 = vsel %vm1085, %v7859, %v7686
    %v7924 = vsel %vm1085, %v7860, %v7688
    %v7925 = vsel %vm1085, %v7861, %v7690
    %v7926 = vsel %vm1085, %v7862, %v7692
    %v7927 = vsel %vm1085, %v7863, %v7694
    %v7928 = vsel %vm1085, %v7864, %v7696
    %v7929 = vsel %vm1085, %v7865, %v7698
    %v7930 = vsel %vm1085, %v7866, %v7700
    %v7931 = vsel %vm1085, %v7867, %v7702
    %v7932 = vsel %vm1085, %v7868, %v7704
    %v7933 = vsel %vm1085, %v7869, %v7706
    %v7934 = vsel %vm1085, %v7870, %v7708
    %v7935 = vsel %vm1085, %v7871, %v7710
    %v7936 = vsel %vm1085, %v7872, %v7712
    %v7937 = vsel %vm1085, %v7873, %v7714
    %v7938 = vsel %vm1085, %v7874, %v7716
    %v7939 = vsel %vm1085, %v7875, %v7718
    %v7940 = vsel %vm1085, %v7876, %v7720
    %v7941 = vsel %vm1085, %v7877, %v7722
    %v7942 = vsel %vm1085, %v7878, %v7724
    %v7943 = vsel %vm1085, %v7879, %v7726
    %v7944 = vsel %vm1085, %v7880, %v7728
    %v7945 = vsel %vm1085, %v7881, %v7730
    %v7946 = vsel %vm1085, %v7882, %v7732
    %v7947 = vsel %vm1085, %v7883, %v7734
    %v7948 = vsel %vm1085, %v7884, %v7736
    %v7949 = vsel %vm1085, %v7885, %v7738
    %v7950 = vsel %vm1085, %v7886, %v7740
    %v7951 = vsel %vm1085, %v7887, %v7742
    %v7952 = vsel %vm1085, %v7888, %v7744
    %v7953 = vsel %vm1085, %v7889, %v7746
    %v7954 = vsel %vm1085, %v7890, %v7748
    %v7955 = vsel %vm1085, %v7891, %v7750
    %v7956 = vsel %vm1085, %v7892, %v7752
    %v7957 = vsel %vm1085, %v7893, %v7754
    %v7958 = vsel %vm1085, %v7894, %v7756
    %v7959 = vsel %vm1085, %v7895, %v7758
    %v7960 = vsel %vm1085, %v7896, %v7760
    %v7961 = vsel %vm1085, %v7897, %v7762
    %v7962 = vsel %vm1085, %v7898, %v7764
    %v7963 = vsel %vm1085, %v7899, %v7766
    %v7964 = vsel %vm1085, %v7900, %v7768
    %v7965 = vsel %vm1085, %v7901, %v7770
    %v7966 = vsel %vm1085, %v7902, %v7772
    %v7967 = vsel %vm1085, %v7903, %v7774
    %v7968 = vsel %vm1085, %v7904, %v7776
    %v7969 = vsel %vm1150, %v7905, 0.0
    %v7970 = vsel %vm1150, %v7906, 0.0
    %v7971 = vsel %vm1150, %v7907, 0.0
    %v7972 = vsel %vm1150, %v7908, 0.0
    %v7973 = vsel %vm1150, %v7909, 0.0
    %v7974 = vsel %vm1150, %v7910, 0.0
    %v7975 = vsel %vm1150, %v7911, 0.0
    %v7976 = vsel %vm1150, %v7912, 0.0
    %v7977 = vsel %vm1150, %v7913, 0.0
    %v7978 = vsel %vm1150, %v7914, 0.0
    %v7979 = vsel %vm1150, %v7915, 0.0
    %v7980 = vsel %vm1150, %v7916, 0.0
    %v7981 = vsel %vm1150, %v7917, 0.0
    %v7982 = vsel %vm1150, %v7918, 0.0
    %v7983 = vsel %vm1150, %v7919, 0.0
    %v7984 = vsel %vm1150, %v7920, 0.0
    %v7985 = vsel %vm1150, %v7921, 0.0
    %v7986 = vsel %vm1150, %v7922, 0.0
    %v7987 = vsel %vm1150, %v7923, 0.0
    %v7988 = vsel %vm1150, %v7924, 0.0
    %v7989 = vsel %vm1150, %v7925, 0.0
    %v7990 = vsel %vm1150, %v7926, 0.0
    %v7991 = vsel %vm1150, %v7927, 0.0
    %v7992 = vsel %vm1150, %v7928, 0.0
    %v7993 = vsel %vm1150, %v7929, 0.0
    %v7994 = vsel %vm1150, %v7930, 0.0
    %v7995 = vsel %vm1150, %v7931, 0.0
    %v7996 = vsel %vm1150, %v7932, 0.0
    %v7997 = vsel %vm1150, %v7933, 0.0
    %v7998 = vsel %vm1150, %v7934, 0.0
    %v7999 = vsel %vm1150, %v7935, 0.0
    %v8000 = vsel %vm1150, %v7936, 0.0
    %v8001 = vsel %vm1150, %v7937, 0.0
    %v8002 = vsel %vm1150, %v7938, 0.0
    %v8003 = vsel %vm1150, %v7939, 0.0
    %v8004 = vsel %vm1150, %v7940, 0.0
    %v8005 = vsel %vm1150, %v7941, 0.0
    %v8006 = vsel %vm1150, %v7942, 0.0
    %v8007 = vsel %vm1150, %v7943, 0.0
    %v8008 = vsel %vm1150, %v7944, 0.0
    %v8009 = vsel %vm1150, %v7945, 0.0
    %v8010 = vsel %vm1150, %v7946, 0.0
    %v8011 = vsel %vm1150, %v7947, 0.0
    %v8012 = vsel %vm1150, %v7948, 0.0
    %v8013 = vsel %vm1150, %v7949, 0.0
    %v8014 = vsel %vm1150, %v7950, 0.0
    %v8015 = vsel %vm1150, %v7951, 0.0
    %v8016 = vsel %vm1150, %v7952, 0.0
    %v8017 = vsel %vm1150, %v7953, 0.0
    %v8018 = vsel %vm1150, %v7954, 0.0
    %v8019 = vsel %vm1150, %v7955, 0.0
    %v8020 = vsel %vm1150, %v7956, 0.0
    %v8021 = vsel %vm1150, %v7957, 0.0
    %v8022 = vsel %vm1150, %v7958, 0.0
    %v8023 = vsel %vm1150, %v7959, 0.0
    %v8024 = vsel %vm1150, %v7960, 0.0
    %v8025 = vsel %vm1150, %v7961, 0.0
    %v8026 = vsel %vm1150, %v7962, 0.0
    %v8027 = vsel %vm1150, %v7963, 0.0
    %v8028 = vsel %vm1150, %v7964, 0.0
    %v8029 = vsel %vm1150, %v7965, 0.0
    %v8030 = vsel %vm1150, %v7966, 0.0
    %v8031 = vsel %vm1150, %v7967, 0.0
    %v8032 = vsel %vm1150, %v7968, 0.0
    %v8033 = vpack.c.bf16 %v7970, %v7969
    %v8034 = vpack.c.bf16 %v7972, %v7971
    %v8035 = vpack.c.bf16 %v7974, %v7973
    %v8036 = vpack.c.bf16 %v7976, %v7975
    %v8037 = vpack.c.bf16 %v7978, %v7977
    %v8038 = vpack.c.bf16 %v7980, %v7979
    %v8039 = vpack.c.bf16 %v7982, %v7981
    %v8040 = vpack.c.bf16 %v7984, %v7983
    %v8041 = vpack.c.bf16 %v7986, %v7985
    %v8042 = vpack.c.bf16 %v7988, %v7987
    %v8043 = vpack.c.bf16 %v7990, %v7989
    %v8044 = vpack.c.bf16 %v7992, %v7991
    %v8045 = vpack.c.bf16 %v7994, %v7993
    %v8046 = vpack.c.bf16 %v7996, %v7995
    %v8047 = vpack.c.bf16 %v7998, %v7997
    %v8048 = vpack.c.bf16 %v8000, %v7999
    %v8049 = vpack.c.bf16 %v8002, %v8001
    %v8050 = vpack.c.bf16 %v8004, %v8003
    %v8051 = vpack.c.bf16 %v8006, %v8005
    %v8052 = vpack.c.bf16 %v8008, %v8007
    %v8053 = vpack.c.bf16 %v8010, %v8009
    %v8054 = vpack.c.bf16 %v8012, %v8011
    %v8055 = vpack.c.bf16 %v8014, %v8013
    %v8056 = vpack.c.bf16 %v8016, %v8015
    %v8057 = vpack.c.bf16 %v8018, %v8017
    %v8058 = vpack.c.bf16 %v8020, %v8019
    %v8059 = vpack.c.bf16 %v8022, %v8021
    %v8060 = vpack.c.bf16 %v8024, %v8023
    %v8061 = vpack.c.bf16 %v8026, %v8025
    %v8062 = vpack.c.bf16 %v8028, %v8027
    %v8063 = vpack.c.bf16 %v8030, %v8029
    %v8064 = vpack.c.bf16 %v8032, %v8031
    %v8097 = vunpack.c.l.b16 %v8033
    %v8098 = vunpack.c.h.b16 %v8033
    %v8099 = vunpack.c.l.b16 %v8034
    %v8100 = vunpack.c.h.b16 %v8034
    %v8101 = vunpack.c.l.b16 %v8035
    %v8102 = vunpack.c.h.b16 %v8035
    %v8103 = vunpack.c.l.b16 %v8036
    %v8104 = vunpack.c.h.b16 %v8036
    %v8105 = vunpack.c.l.b16 %v8037
    %v8106 = vunpack.c.h.b16 %v8037
    %v8107 = vunpack.c.l.b16 %v8038
    %v8108 = vunpack.c.h.b16 %v8038
    %v8109 = vunpack.c.l.b16 %v8039
    %v8110 = vunpack.c.h.b16 %v8039
    %v8111 = vunpack.c.l.b16 %v8040
    %v8112 = vunpack.c.h.b16 %v8040
    %v8113 = vunpack.c.l.b16 %v8041
    %v8114 = vunpack.c.h.b16 %v8041
    %v8115 = vunpack.c.l.b16 %v8042
    %v8116 = vunpack.c.h.b16 %v8042
    %v8117 = vunpack.c.l.b16 %v8043
    %v8118 = vunpack.c.h.b16 %v8043
    %v8119 = vunpack.c.l.b16 %v8044
    %v8120 = vunpack.c.h.b16 %v8044
    %v8121 = vunpack.c.l.b16 %v8045
    %v8122 = vunpack.c.h.b16 %v8045
    %v8123 = vunpack.c.l.b16 %v8046
    %v8124 = vunpack.c.h.b16 %v8046
    %v8125 = vunpack.c.l.b16 %v8047
    %v8126 = vunpack.c.h.b16 %v8047
    %v8127 = vunpack.c.l.b16 %v8048
    %v8128 = vunpack.c.h.b16 %v8048
    %v8129 = vunpack.c.l.b16 %v8049
    %v8130 = vunpack.c.h.b16 %v8049
    %v8131 = vunpack.c.l.b16 %v8050
    %v8132 = vunpack.c.h.b16 %v8050
    %v8133 = vunpack.c.l.b16 %v8051
    %v8134 = vunpack.c.h.b16 %v8051
    %v8135 = vunpack.c.l.b16 %v8052
    %v8136 = vunpack.c.h.b16 %v8052
    %v8137 = vunpack.c.l.b16 %v8053
    %v8138 = vunpack.c.h.b16 %v8053
    %v8139 = vunpack.c.l.b16 %v8054
    %v8140 = vunpack.c.h.b16 %v8054
    %v8141 = vunpack.c.l.b16 %v8055
    %v8142 = vunpack.c.h.b16 %v8055
    %v8143 = vunpack.c.l.b16 %v8056
    %v8144 = vunpack.c.h.b16 %v8056
    %v8145 = vunpack.c.l.b16 %v8057
    %v8146 = vunpack.c.h.b16 %v8057
    %v8147 = vunpack.c.l.b16 %v8058
    %v8148 = vunpack.c.h.b16 %v8058
    %v8149 = vunpack.c.l.b16 %v8059
    %v8150 = vunpack.c.h.b16 %v8059
    %v8151 = vunpack.c.l.b16 %v8060
    %v8152 = vunpack.c.h.b16 %v8060
    %v8153 = vunpack.c.l.b16 %v8061
    %v8154 = vunpack.c.h.b16 %v8061
    %v8155 = vunpack.c.l.b16 %v8062
    %v8156 = vunpack.c.h.b16 %v8062
    %v8157 = vunpack.c.l.b16 %v8063
    %v8158 = vunpack.c.h.b16 %v8063
    %v8159 = vunpack.c.l.b16 %v8064
    %v8160 = vunpack.c.h.b16 %v8064
    %v8161 = vpack.c.b16 %v8097, %v8097
    %v8162 = vpack.c.b16 %v8098, %v8098
    %v8163 = vpack.c.b16 %v8099, %v8099
    %v8164 = vpack.c.b16 %v8100, %v8100
    %v8165 = vpack.c.b16 %v8101, %v8101
    %v8166 = vpack.c.b16 %v8102, %v8102
    %v8167 = vpack.c.b16 %v8103, %v8103
    %v8168 = vpack.c.b16 %v8104, %v8104
    %v8169 = vpack.c.b16 %v8105, %v8105
    %v8170 = vpack.c.b16 %v8106, %v8106
    %v8171 = vpack.c.b16 %v8107, %v8107
    %v8172 = vpack.c.b16 %v8108, %v8108
    %v8173 = vpack.c.b16 %v8109, %v8109
    %v8174 = vpack.c.b16 %v8110, %v8110
    %v8175 = vpack.c.b16 %v8111, %v8111
    %v8176 = vpack.c.b16 %v8112, %v8112
    %v8177 = vpack.c.b16 %v8113, %v8113
    %v8178 = vpack.c.b16 %v8114, %v8114
    %v8179 = vpack.c.b16 %v8115, %v8115
    %v8180 = vpack.c.b16 %v8116, %v8116
    %v8181 = vpack.c.b16 %v8117, %v8117
    %v8182 = vpack.c.b16 %v8118, %v8118
    %v8183 = vpack.c.b16 %v8119, %v8119
    %v8184 = vpack.c.b16 %v8120, %v8120
    %v8185 = vpack.c.b16 %v8121, %v8121
    %v8186 = vpack.c.b16 %v8122, %v8122
    %v8187 = vpack.c.b16 %v8123, %v8123
    %v8188 = vpack.c.b16 %v8124, %v8124
    %v8189 = vpack.c.b16 %v8125, %v8125
    %v8190 = vpack.c.b16 %v8126, %v8126
    %v8191 = vpack.c.b16 %v8127, %v8127
    %v8192 = vpack.c.b16 %v8128, %v8128
    %v8193 = vpack.c.b16 %v8129, %v8129
    %v8194 = vpack.c.b16 %v8130, %v8130
    %v8195 = vpack.c.b16 %v8131, %v8131
    %v8196 = vpack.c.b16 %v8132, %v8132
    %v8197 = vpack.c.b16 %v8133, %v8133
    %v8198 = vpack.c.b16 %v8134, %v8134
    %v8199 = vpack.c.b16 %v8135, %v8135
    %v8200 = vpack.c.b16 %v8136, %v8136
    %v8201 = vpack.c.b16 %v8137, %v8137
    %v8202 = vpack.c.b16 %v8138, %v8138
    %v8203 = vpack.c.b16 %v8139, %v8139
    %v8204 = vpack.c.b16 %v8140, %v8140
    %v8205 = vpack.c.b16 %v8141, %v8141
    %v8206 = vpack.c.b16 %v8142, %v8142
    %v8207 = vpack.c.b16 %v8143, %v8143
    %v8208 = vpack.c.b16 %v8144, %v8144
    %v8209 = vpack.c.b16 %v8145, %v8145
    %v8210 = vpack.c.b16 %v8146, %v8146
    %v8211 = vpack.c.b16 %v8147, %v8147
    %v8212 = vpack.c.b16 %v8148, %v8148
    %v8213 = vpack.c.b16 %v8149, %v8149
    %v8214 = vpack.c.b16 %v8150, %v8150
    %v8215 = vpack.c.b16 %v8151, %v8151
    %v8216 = vpack.c.b16 %v8152, %v8152
    %v8217 = vpack.c.b16 %v8153, %v8153
    %v8218 = vpack.c.b16 %v8154, %v8154
    %v8219 = vpack.c.b16 %v8155, %v8155
    %v8220 = vpack.c.b16 %v8156, %v8156
    %v8221 = vpack.c.b16 %v8157, %v8157
    %v8222 = vpack.c.b16 %v8158, %v8158
    %v8223 = vpack.c.b16 %v8159, %v8159
    %v8224 = vpack.c.b16 %v8160, %v8160
    %8289 = vst [vmem:[#allocation3 + $0x4] sm:$0xf] %v8161
    %8290 = vst [vmem:[#allocation3 + $0x10] sm:$0xf] %v8162
    %8291 = vst [vmem:[#allocation3 + $0x1c] sm:$0xf] %v8163
    %8292 = vst [vmem:[#allocation3 + $0x28] sm:$0xf] %v8164
    %8293 = vst [vmem:[#allocation3 + $0x34] sm:$0xf] %v8165
    %8294 = vst [vmem:[#allocation3 + $0x40] sm:$0xf] %v8166
    %8295 = vst [vmem:[#allocation3 + $0x4c] sm:$0xf] %v8167
    %8296 = vst [vmem:[#allocation3 + $0x58] sm:$0xf] %v8168
    %8297 = vst [vmem:[#allocation3 + $0x64] sm:$0xf] %v8169
    %8298 = vst [vmem:[#allocation3 + $0x70] sm:$0xf] %v8170
    %8299 = vst [vmem:[#allocation3 + $0x7c] sm:$0xf] %v8171
    %8300 = vst [vmem:[#allocation3 + $0x88] sm:$0xf] %v8172
    %8301 = vst [vmem:[#allocation3 + $0x94] sm:$0xf] %v8173
    %8302 = vst [vmem:[#allocation3 + $0xa0] sm:$0xf] %v8174
    %8303 = vst [vmem:[#allocation3 + $0xac] sm:$0xf] %v8175
    %8304 = vst [vmem:[#allocation3 + $0xb8] sm:$0xf] %v8176
    %8305 = vst [vmem:[#allocation3 + $0xc4] sm:$0xf] %v8177
    %8306 = vst [vmem:[#allocation3 + $0xd0] sm:$0xf] %v8178
    %8307 = vst [vmem:[#allocation3 + $0xdc] sm:$0xf] %v8179
    %8308 = vst [vmem:[#allocation3 + $0xe8] sm:$0xf] %v8180
    %8309 = vst [vmem:[#allocation3 + $0xf4] sm:$0xf] %v8181
    %8310 = vst [vmem:[#allocation3 + $0x100] sm:$0xf] %v8182
    %8311 = vst [vmem:[#allocation3 + $0x10c] sm:$0xf] %v8183
    %8312 = vst [vmem:[#allocation3 + $0x118] sm:$0xf] %v8184
    %8313 = vst [vmem:[#allocation3 + $0x124] sm:$0xf] %v8185
    %8314 = vst [vmem:[#allocation3 + $0x130] sm:$0xf] %v8186
    %8315 = vst [vmem:[#allocation3 + $0x13c] sm:$0xf] %v8187
    %8316 = vst [vmem:[#allocation3 + $0x148] sm:$0xf] %v8188
    %8317 = vst [vmem:[#allocation3 + $0x154] sm:$0xf] %v8189
    %8318 = vst [vmem:[#allocation3 + $0x160] sm:$0xf] %v8190
    %8319 = vst [vmem:[#allocation3 + $0x16c] sm:$0xf] %v8191
    %8320 = vst [vmem:[#allocation3 + $0x178] sm:$0xf] %v8192
    %8321 = vst [vmem:[#allocation3 + $0x184] sm:$0xf] %v8193
    %8322 = vst [vmem:[#allocation3 + $0x190] sm:$0xf] %v8194
    %8323 = vst [vmem:[#allocation3 + $0x19c] sm:$0xf] %v8195
    %8324 = vst [vmem:[#allocation3 + $0x1a8] sm:$0xf] %v8196
    %8325 = vst [vmem:[#allocation3 + $0x1b4] sm:$0xf] %v8197
    %8326 = vst [vmem:[#allocation3 + $0x1c0] sm:$0xf] %v8198
    %8327 = vst [vmem:[#allocation3 + $0x1cc] sm:$0xf] %v8199
    %8328 = vst [vmem:[#allocation3 + $0x1d8] sm:$0xf] %v8200
    %8329 = vst [vmem:[#allocation3 + $0x1e4] sm:$0xf] %v8201
    %8330 = vst [vmem:[#allocation3 + $0x1f0] sm:$0xf] %v8202
    %8331 = vst [vmem:[#allocation3 + $0x1fc] sm:$0xf] %v8203
    %8332 = vst [vmem:[#allocation3 + $0x208] sm:$0xf] %v8204
    %8333 = vst [vmem:[#allocation3 + $0x214] sm:$0xf] %v8205
    %8334 = vst [vmem:[#allocation3 + $0x220] sm:$0xf] %v8206
    %8335 = vst [vmem:[#allocation3 + $0x22c] sm:$0xf] %v8207
    %8336 = vst [vmem:[#allocation3 + $0x238] sm:$0xf] %v8208
    %8337 = vst [vmem:[#allocation3 + $0x244] sm:$0xf] %v8209
    %8338 = vst [vmem:[#allocation3 + $0x250] sm:$0xf] %v8210
    %8339 = vst [vmem:[#allocation3 + $0x25c] sm:$0xf] %v8211
    %8340 = vst [vmem:[#allocation3 + $0x268] sm:$0xf] %v8212
    %8341 = vst [vmem:[#allocation3 + $0x274] sm:$0xf] %v8213
    %8342 = vst [vmem:[#allocation3 + $0x280] sm:$0xf] %v8214
    %8343 = vst [vmem:[#allocation3 + $0x28c] sm:$0xf] %v8215
    %8344 = vst [vmem:[#allocation3 + $0x298] sm:$0xf] %v8216
    %8345 = vst [vmem:[#allocation3 + $0x2a4] sm:$0xf] %v8217
    %8346 = vst [vmem:[#allocation3 + $0x2b0] sm:$0xf] %v8218
    %8347 = vst [vmem:[#allocation3 + $0x2bc] sm:$0xf] %v8219
    %8348 = vst [vmem:[#allocation3 + $0x2c8] sm:$0xf] %v8220
    %8349 = vst [vmem:[#allocation3 + $0x2d4] sm:$0xf] %v8221
    %8350 = vst [vmem:[#allocation3 + $0x2e0] sm:$0xf] %v8222
    %8351 = vst [vmem:[#allocation3 + $0x2ec] sm:$0xf] %v8223
    %8352 = vst [vmem:[#allocation3 + $0x2f8] sm:$0xf] %v8224
    %v8353 = vld [vmem:[%s2751] sm:$0xff]
    %v8354 = vld [vmem:[%s2751 + $0x8] sm:$0xff]
    %v8355 = vld [vmem:[%s2751 + $0x18] sm:$0xff]
    %v8356 = vld [vmem:[%s2751 + $0x20] sm:$0xff]
    %v8357 = vld [vmem:[%s2751 + $0x30] sm:$0xff]
    %v8358 = vld [vmem:[%s2751 + $0x38] sm:$0xff]
    %v8359 = vld [vmem:[%s2751 + $0x48] sm:$0xff]
    %v8360 = vld [vmem:[%s2751 + $0x50] sm:$0xff]
    %v8361 = vld [vmem:[%s2751 + $0x60] sm:$0xff]
    %v8362 = vld [vmem:[%s2751 + $0x68] sm:$0xff]
    %v8363 = vld [vmem:[%s2751 + $0x78] sm:$0xff]
    %v8364 = vld [vmem:[%s2751 + $0x80] sm:$0xff]
    %v8365 = vld [vmem:[%s2751 + $0x90] sm:$0xff]
    %v8366 = vld [vmem:[%s2751 + $0x98] sm:$0xff]
    %v8367 = vld [vmem:[%s2751 + $0xa8] sm:$0xff]
    %v8368 = vld [vmem:[%s2751 + $0xb0] sm:$0xff]
    %v8369 = vld [vmem:[%s2751 + $0xc0] sm:$0xff]
    %v8370 = vld [vmem:[%s2751 + $0xc8] sm:$0xff]
    %v8371 = vld [vmem:[%s2751 + $0xd8] sm:$0xff]
    %v8372 = vld [vmem:[%s2751 + $0xe0] sm:$0xff]
    %v8373 = vld [vmem:[%s2751 + $0xf0] sm:$0xff]
    %v8374 = vld [vmem:[%s2751 + $0xf8] sm:$0xff]
    %v8375 = vld [vmem:[%s2751 + $0x108] sm:$0xff]
    %v8376 = vld [vmem:[%s2751 + $0x110] sm:$0xff]
    %v8377 = vld [vmem:[%s2751 + $0x120] sm:$0xff]
    %v8378 = vld [vmem:[%s2751 + $0x128] sm:$0xff]
    %v8379 = vld [vmem:[%s2751 + $0x138] sm:$0xff]
    %v8380 = vld [vmem:[%s2751 + $0x140] sm:$0xff]
    %v8381 = vld [vmem:[%s2751 + $0x150] sm:$0xff]
    %v8382 = vld [vmem:[%s2751 + $0x158] sm:$0xff]
    %v8383 = vld [vmem:[%s2751 + $0x168] sm:$0xff]
    %v8384 = vld [vmem:[%s2751 + $0x170] sm:$0xff]
    %v8385 = vld [vmem:[%s2751 + $0x1b0] sm:$0xff]
    %v8386 = vld [vmem:[%s2751 + $0x1b8] sm:$0xff]
    %v8387 = vld [vmem:[%s2751 + $0x1c8] sm:$0xff]
    %v8388 = vld [vmem:[%s2751 + $0x1d0] sm:$0xff]
    %v8389 = vld [vmem:[%s2751 + $0x1e0] sm:$0xff]
    %v8390 = vld [vmem:[%s2751 + $0x1e8] sm:$0xff]
    %v8391 = vld [vmem:[%s2751 + $0x1f8] sm:$0xff]
    %v8392 = vld [vmem:[%s2751 + $0x200] sm:$0xff]
    %v8393 = vld [vmem:[%s2751 + $0x210] sm:$0xff]
    %v8394 = vld [vmem:[%s2751 + $0x218] sm:$0xff]
    %v8395 = vld [vmem:[%s2751 + $0x228] sm:$0xff]
    %v8396 = vld [vmem:[%s2751 + $0x230] sm:$0xff]
    %v8397 = vld [vmem:[%s2751 + $0x240] sm:$0xff]
    %v8398 = vld [vmem:[%s2751 + $0x248] sm:$0xff]
    %v8399 = vld [vmem:[%s2751 + $0x258] sm:$0xff]
    %v8400 = vld [vmem:[%s2751 + $0x260] sm:$0xff]
    %v8401 = vld [vmem:[%s2751 + $0x270] sm:$0xff]
    %v8402 = vld [vmem:[%s2751 + $0x278] sm:$0xff]
    %v8403 = vld [vmem:[%s2751 + $0x288] sm:$0xff]
    %v8404 = vld [vmem:[%s2751 + $0x290] sm:$0xff]
    %v8405 = vld [vmem:[%s2751 + $0x2a0] sm:$0xff]
    %v8406 = vld [vmem:[%s2751 + $0x2a8] sm:$0xff]
    %v8407 = vld [vmem:[%s2751 + $0x2b8] sm:$0xff]
    %v8408 = vld [vmem:[%s2751 + $0x2c0] sm:$0xff]
    %v8409 = vld [vmem:[%s2751 + $0x2d0] sm:$0xff]
    %v8410 = vld [vmem:[%s2751 + $0x2d8] sm:$0xff]
    %v8411 = vld [vmem:[%s2751 + $0x2e8] sm:$0xff]
    %v8412 = vld [vmem:[%s2751 + $0x2f0] sm:$0xff]
    %v8413 = vld [vmem:[%s2751 + $0x300] sm:$0xff]
    %v8414 = vld [vmem:[%s2751 + $0x308] sm:$0xff]
    %v8415 = vld [vmem:[%s2751 + $0x318] sm:$0xff]
    %v8416 = vld [vmem:[%s2751 + $0x320] sm:$0xff]
    %v8417 = vld [vmem:[%s2751 + $0x1] sm:$0xff]
    %v8418 = vld [vmem:[%s2751 + $0x9] sm:$0xff]
    %v8419 = vld [vmem:[%s2751 + $0x19] sm:$0xff]
    %v8420 = vld [vmem:[%s2751 + $0x21] sm:$0xff]
    %v8421 = vld [vmem:[%s2751 + $0x31] sm:$0xff]
    %v8422 = vld [vmem:[%s2751 + $0x39] sm:$0xff]
    %v8423 = vld [vmem:[%s2751 + $0x49] sm:$0xff]
    %v8424 = vld [vmem:[%s2751 + $0x51] sm:$0xff]
    %v8425 = vld [vmem:[%s2751 + $0x61] sm:$0xff]
    %v8426 = vld [vmem:[%s2751 + $0x69] sm:$0xff]
    %v8427 = vld [vmem:[%s2751 + $0x79] sm:$0xff]
    %v8428 = vld [vmem:[%s2751 + $0x81] sm:$0xff]
    %v8429 = vld [vmem:[%s2751 + $0x91] sm:$0xff]
    %v8430 = vld [vmem:[%s2751 + $0x99] sm:$0xff]
    %v8431 = vld [vmem:[%s2751 + $0xa9] sm:$0xff]
    %v8432 = vld [vmem:[%s2751 + $0xb1] sm:$0xff]
    %v8433 = vld [vmem:[%s2751 + $0xc1] sm:$0xff]
    %v8434 = vld [vmem:[%s2751 + $0xc9] sm:$0xff]
    %v8435 = vld [vmem:[%s2751 + $0xd9] sm:$0xff]
    %v8436 = vld [vmem:[%s2751 + $0xe1] sm:$0xff]
    %v8437 = vld [vmem:[%s2751 + $0xf1] sm:$0xff]
    %v8438 = vld [vmem:[%s2751 + $0xf9] sm:$0xff]
    %v8439 = vld [vmem:[%s2751 + $0x109] sm:$0xff]
    %v8440 = vld [vmem:[%s2751 + $0x111] sm:$0xff]
    %v8441 = vld [vmem:[%s2751 + $0x121] sm:$0xff]
    %v8442 = vld [vmem:[%s2751 + $0x129] sm:$0xff]
    %v8443 = vld [vmem:[%s2751 + $0x139] sm:$0xff]
    %v8444 = vld [vmem:[%s2751 + $0x141] sm:$0xff]
    %v8445 = vld [vmem:[%s2751 + $0x151] sm:$0xff]
    %v8446 = vld [vmem:[%s2751 + $0x159] sm:$0xff]
    %v8447 = vld [vmem:[%s2751 + $0x169] sm:$0xff]
    %v8448 = vld [vmem:[%s2751 + $0x171] sm:$0xff]
    %v8449 = vld [vmem:[%s2751 + $0x1b1] sm:$0xff]
    %v8450 = vld [vmem:[%s2751 + $0x1b9] sm:$0xff]
    %v8451 = vld [vmem:[%s2751 + $0x1c9] sm:$0xff]
    %v8452 = vld [vmem:[%s2751 + $0x1d1] sm:$0xff]
    %v8453 = vld [vmem:[%s2751 + $0x1e1] sm:$0xff]
    %v8454 = vld [vmem:[%s2751 + $0x1e9] sm:$0xff]
    %v8455 = vld [vmem:[%s2751 + $0x1f9] sm:$0xff]
    %v8456 = vld [vmem:[%s2751 + $0x201] sm:$0xff]
    %v8457 = vld [vmem:[%s2751 + $0x211] sm:$0xff]
    %v8458 = vld [vmem:[%s2751 + $0x219] sm:$0xff]
    %v8459 = vld [vmem:[%s2751 + $0x229] sm:$0xff]
    %v8460 = vld [vmem:[%s2751 + $0x231] sm:$0xff]
    %v8461 = vld [vmem:[%s2751 + $0x241] sm:$0xff]
    %v8462 = vld [vmem:[%s2751 + $0x249] sm:$0xff]
    %v8463 = vld [vmem:[%s2751 + $0x259] sm:$0xff]
    %v8464 = vld [vmem:[%s2751 + $0x261] sm:$0xff]
    %v8465 = vld [vmem:[%s2751 + $0x271] sm:$0xff]
    %v8466 = vld [vmem:[%s2751 + $0x279] sm:$0xff]
    %v8467 = vld [vmem:[%s2751 + $0x289] sm:$0xff]
    %v8468 = vld [vmem:[%s2751 + $0x291] sm:$0xff]
    %v8469 = vld [vmem:[%s2751 + $0x2a1] sm:$0xff]
    %v8470 = vld [vmem:[%s2751 + $0x2a9] sm:$0xff]
    %v8471 = vld [vmem:[%s2751 + $0x2b9] sm:$0xff]
    %v8472 = vld [vmem:[%s2751 + $0x2c1] sm:$0xff]
    %v8473 = vld [vmem:[%s2751 + $0x2d1] sm:$0xff]
    %v8474 = vld [vmem:[%s2751 + $0x2d9] sm:$0xff]
    %v8475 = vld [vmem:[%s2751 + $0x2e9] sm:$0xff]
    %v8476 = vld [vmem:[%s2751 + $0x2f1] sm:$0xff]
    %v8477 = vld [vmem:[%s2751 + $0x301] sm:$0xff]
    %v8478 = vld [vmem:[%s2751 + $0x309] sm:$0xff]
    %v8479 = vld [vmem:[%s2751 + $0x319] sm:$0xff]
    %v8480 = vld [vmem:[%s2751 + $0x321] sm:$0xff]
    %v8481 = vld [vmem:[%s2751 + $0x2] sm:$0xff]
    %v8482 = vld [vmem:[%s2751 + $0xa] sm:$0xff]
    %v8483 = vld [vmem:[%s2751 + $0x1a] sm:$0xff]
    %v8484 = vld [vmem:[%s2751 + $0x22] sm:$0xff]
    %v8485 = vld [vmem:[%s2751 + $0x32] sm:$0xff]
    %v8486 = vld [vmem:[%s2751 + $0x3a] sm:$0xff]
    %v8487 = vld [vmem:[%s2751 + $0x4a] sm:$0xff]
    %v8488 = vld [vmem:[%s2751 + $0x52] sm:$0xff]
    %v8489 = vld [vmem:[%s2751 + $0x62] sm:$0xff]
    %v8490 = vld [vmem:[%s2751 + $0x6a] sm:$0xff]
    %v8491 = vld [vmem:[%s2751 + $0x7a] sm:$0xff]
    %v8492 = vld [vmem:[%s2751 + $0x82] sm:$0xff]
    %v8493 = vld [vmem:[%s2751 + $0x92] sm:$0xff]
    %v8494 = vld [vmem:[%s2751 + $0x9a] sm:$0xff]
    %v8495 = vld [vmem:[%s2751 + $0xaa] sm:$0xff]
    %v8496 = vld [vmem:[%s2751 + $0xb2] sm:$0xff]
    %v8497 = vld [vmem:[%s2751 + $0xc2] sm:$0xff]
    %v8498 = vld [vmem:[%s2751 + $0xca] sm:$0xff]
    %v8499 = vld [vmem:[%s2751 + $0xda] sm:$0xff]
    %v8500 = vld [vmem:[%s2751 + $0xe2] sm:$0xff]
    %v8501 = vld [vmem:[%s2751 + $0xf2] sm:$0xff]
    %v8502 = vld [vmem:[%s2751 + $0xfa] sm:$0xff]
    %v8503 = vld [vmem:[%s2751 + $0x10a] sm:$0xff]
    %v8504 = vld [vmem:[%s2751 + $0x112] sm:$0xff]
    %v8505 = vld [vmem:[%s2751 + $0x122] sm:$0xff]
    %v8506 = vld [vmem:[%s2751 + $0x12a] sm:$0xff]
    %v8507 = vld [vmem:[%s2751 + $0x13a] sm:$0xff]
    %v8508 = vld [vmem:[%s2751 + $0x142] sm:$0xff]
    %v8509 = vld [vmem:[%s2751 + $0x152] sm:$0xff]
    %v8510 = vld [vmem:[%s2751 + $0x15a] sm:$0xff]
    %v8511 = vld [vmem:[%s2751 + $0x16a] sm:$0xff]
    %v8512 = vld [vmem:[%s2751 + $0x172] sm:$0xff]
    %v8513 = vld [vmem:[%s2751 + $0x1b2] sm:$0xff]
    %v8514 = vld [vmem:[%s2751 + $0x1ba] sm:$0xff]
    %v8515 = vld [vmem:[%s2751 + $0x1ca] sm:$0xff]
    %v8516 = vld [vmem:[%s2751 + $0x1d2] sm:$0xff]
    %v8517 = vld [vmem:[%s2751 + $0x1e2] sm:$0xff]
    %v8518 = vld [vmem:[%s2751 + $0x1ea] sm:$0xff]
    %v8519 = vld [vmem:[%s2751 + $0x1fa] sm:$0xff]
    %v8520 = vld [vmem:[%s2751 + $0x202] sm:$0xff]
    %v8521 = vld [vmem:[%s2751 + $0x212] sm:$0xff]
    %v8522 = vld [vmem:[%s2751 + $0x21a] sm:$0xff]
    %v8523 = vld [vmem:[%s2751 + $0x22a] sm:$0xff]
    %v8524 = vld [vmem:[%s2751 + $0x232] sm:$0xff]
    %v8525 = vld [vmem:[%s2751 + $0x242] sm:$0xff]
    %v8526 = vld [vmem:[%s2751 + $0x24a] sm:$0xff]
    %v8527 = vld [vmem:[%s2751 + $0x25a] sm:$0xff]
    %v8528 = vld [vmem:[%s2751 + $0x262] sm:$0xff]
    %v8529 = vld [vmem:[%s2751 + $0x272] sm:$0xff]
    %v8530 = vld [vmem:[%s2751 + $0x27a] sm:$0xff]
    %v8531 = vld [vmem:[%s2751 + $0x28a] sm:$0xff]
    %v8532 = vld [vmem:[%s2751 + $0x292] sm:$0xff]
    %v8533 = vld [vmem:[%s2751 + $0x2a2] sm:$0xff]
    %v8534 = vld [vmem:[%s2751 + $0x2aa] sm:$0xff]
    %v8535 = vld [vmem:[%s2751 + $0x2ba] sm:$0xff]
    %v8536 = vld [vmem:[%s2751 + $0x2c2] sm:$0xff]
    %v8537 = vld [vmem:[%s2751 + $0x2d2] sm:$0xff]
    %v8538 = vld [vmem:[%s2751 + $0x2da] sm:$0xff]
    %v8539 = vld [vmem:[%s2751 + $0x2ea] sm:$0xff]
    %v8540 = vld [vmem:[%s2751 + $0x2f2] sm:$0xff]
    %v8541 = vld [vmem:[%s2751 + $0x302] sm:$0xff]
    %v8542 = vld [vmem:[%s2751 + $0x30a] sm:$0xff]
    %v8543 = vld [vmem:[%s2751 + $0x31a] sm:$0xff]
    %v8544 = vld [vmem:[%s2751 + $0x322] sm:$0xff]
    %8609 = vrot.lane.b32.xlu0 %v8417, 32
    %v8610 = vpop.permute.xlu0 %8609
    %8611 = vrot.lane.b32.xlu0 %v8418, 32
    %v8612 = vpop.permute.xlu0 %8611
    %8613 = vrot.lane.b32.xlu0 %v8419, 32
    %v8614 = vpop.permute.xlu0 %8613
    %8615 = vrot.lane.b32.xlu0 %v8420, 32
    %v8616 = vpop.permute.xlu0 %8615
    %8617 = vrot.lane.b32.xlu0 %v8421, 32
    %v8618 = vpop.permute.xlu0 %8617
    %8619 = vrot.lane.b32.xlu0 %v8422, 32
    %v8620 = vpop.permute.xlu0 %8619
    %8621 = vrot.lane.b32.xlu0 %v8423, 32
    %v8622 = vpop.permute.xlu0 %8621
    %8623 = vrot.lane.b32.xlu0 %v8424, 32
    %v8624 = vpop.permute.xlu0 %8623
    %8625 = vrot.lane.b32.xlu0 %v8425, 32
    %v8626 = vpop.permute.xlu0 %8625
    %8627 = vrot.lane.b32.xlu0 %v8426, 32
    %v8628 = vpop.permute.xlu0 %8627
    %8629 = vrot.lane.b32.xlu0 %v8427, 32
    %v8630 = vpop.permute.xlu0 %8629
    %8631 = vrot.lane.b32.xlu0 %v8428, 32
    %v8632 = vpop.permute.xlu0 %8631
    %8633 = vrot.lane.b32.xlu0 %v8429, 32
    %v8634 = vpop.permute.xlu0 %8633
    %8635 = vrot.lane.b32.xlu0 %v8430, 32
    %v8636 = vpop.permute.xlu0 %8635
    %8637 = vrot.lane.b32.xlu0 %v8431, 32
    %v8638 = vpop.permute.xlu0 %8637
    %8639 = vrot.lane.b32.xlu0 %v8432, 32
    %v8640 = vpop.permute.xlu0 %8639
    %8641 = vrot.lane.b32.xlu0 %v8433, 32
    %v8642 = vpop.permute.xlu0 %8641
    %8643 = vrot.lane.b32.xlu0 %v8434, 32
    %v8644 = vpop.permute.xlu0 %8643
    %8645 = vrot.lane.b32.xlu0 %v8435, 32
    %v8646 = vpop.permute.xlu0 %8645
    %8647 = vrot.lane.b32.xlu0 %v8436, 32
    %v8648 = vpop.permute.xlu0 %8647
    %8649 = vrot.lane.b32.xlu0 %v8437, 32
    %v8650 = vpop.permute.xlu0 %8649
    %8651 = vrot.lane.b32.xlu0 %v8438, 32
    %v8652 = vpop.permute.xlu0 %8651
    %8653 = vrot.lane.b32.xlu0 %v8439, 32
    %v8654 = vpop.permute.xlu0 %8653
    %8655 = vrot.lane.b32.xlu0 %v8440, 32
    %v8656 = vpop.permute.xlu0 %8655
    %8657 = vrot.lane.b32.xlu0 %v8441, 32
    %v8658 = vpop.permute.xlu0 %8657
    %8659 = vrot.lane.b32.xlu0 %v8442, 32
    %v8660 = vpop.permute.xlu0 %8659
    %8661 = vrot.lane.b32.xlu0 %v8443, 32
    %v8662 = vpop.permute.xlu0 %8661
    %8663 = vrot.lane.b32.xlu0 %v8444, 32
    %v8664 = vpop.permute.xlu0 %8663
    %8665 = vrot.lane.b32.xlu0 %v8445, 32
    %v8666 = vpop.permute.xlu0 %8665
    %8667 = vrot.lane.b32.xlu0 %v8446, 32
    %v8668 = vpop.permute.xlu0 %8667
    %8669 = vrot.lane.b32.xlu0 %v8447, 32
    %v8670 = vpop.permute.xlu0 %8669
    %8671 = vrot.lane.b32.xlu0 %v8448, 32
    %v8672 = vpop.permute.xlu0 %8671
    %8673 = vrot.lane.b32.xlu0 %v8449, 32
    %v8674 = vpop.permute.xlu0 %8673
    %8675 = vrot.lane.b32.xlu0 %v8450, 32
    %v8676 = vpop.permute.xlu0 %8675
    %8677 = vrot.lane.b32.xlu0 %v8451, 32
    %v8678 = vpop.permute.xlu0 %8677
    %8679 = vrot.lane.b32.xlu0 %v8452, 32
    %v8680 = vpop.permute.xlu0 %8679
    %8681 = vrot.lane.b32.xlu0 %v8453, 32
    %v8682 = vpop.permute.xlu0 %8681
    %8683 = vrot.lane.b32.xlu0 %v8454, 32
    %v8684 = vpop.permute.xlu0 %8683
    %8685 = vrot.lane.b32.xlu0 %v8455, 32
    %v8686 = vpop.permute.xlu0 %8685
    %8687 = vrot.lane.b32.xlu0 %v8456, 32
    %v8688 = vpop.permute.xlu0 %8687
    %8689 = vrot.lane.b32.xlu0 %v8457, 32
    %v8690 = vpop.permute.xlu0 %8689
    %8691 = vrot.lane.b32.xlu0 %v8458, 32
    %v8692 = vpop.permute.xlu0 %8691
    %8693 = vrot.lane.b32.xlu0 %v8459, 32
    %v8694 = vpop.permute.xlu0 %8693
    %8695 = vrot.lane.b32.xlu0 %v8460, 32
    %v8696 = vpop.permute.xlu0 %8695
    %8697 = vrot.lane.b32.xlu0 %v8461, 32
    %v8698 = vpop.permute.xlu0 %8697
    %8699 = vrot.lane.b32.xlu0 %v8462, 32
    %v8700 = vpop.permute.xlu0 %8699
    %8701 = vrot.lane.b32.xlu0 %v8463, 32
    %v8702 = vpop.permute.xlu0 %8701
    %8703 = vrot.lane.b32.xlu0 %v8464, 32
    %v8704 = vpop.permute.xlu0 %8703
    %8705 = vrot.lane.b32.xlu0 %v8465, 32
    %v8706 = vpop.permute.xlu0 %8705
    %8707 = vrot.lane.b32.xlu0 %v8466, 32
    %v8708 = vpop.permute.xlu0 %8707
    %8709 = vrot.lane.b32.xlu0 %v8467, 32
    %v8710 = vpop.permute.xlu0 %8709
    %8711 = vrot.lane.b32.xlu0 %v8468, 32
    %v8712 = vpop.permute.xlu0 %8711
    %8713 = vrot.lane.b32.xlu0 %v8469, 32
    %v8714 = vpop.permute.xlu0 %8713
    %8715 = vrot.lane.b32.xlu0 %v8470, 32
    %v8716 = vpop.permute.xlu0 %8715
    %8717 = vrot.lane.b32.xlu0 %v8471, 32
    %v8718 = vpop.permute.xlu0 %8717
    %8719 = vrot.lane.b32.xlu0 %v8472, 32
    %v8720 = vpop.permute.xlu0 %8719
    %8721 = vrot.lane.b32.xlu0 %v8473, 32
    %v8722 = vpop.permute.xlu0 %8721
    %8723 = vrot.lane.b32.xlu0 %v8474, 32
    %v8724 = vpop.permute.xlu0 %8723
    %8725 = vrot.lane.b32.xlu0 %v8475, 32
    %v8726 = vpop.permute.xlu0 %8725
    %8727 = vrot.lane.b32.xlu0 %v8476, 32
    %v8728 = vpop.permute.xlu0 %8727
    %8729 = vrot.lane.b32.xlu0 %v8477, 32
    %v8730 = vpop.permute.xlu0 %8729
    %8731 = vrot.lane.b32.xlu0 %v8478, 32
    %v8732 = vpop.permute.xlu0 %8731
    %8733 = vrot.lane.b32.xlu0 %v8479, 32
    %v8734 = vpop.permute.xlu0 %8733
    %8735 = vrot.lane.b32.xlu0 %v8480, 32
    %v8736 = vpop.permute.xlu0 %8735
    %8865 = vrot.lane.b32.xlu0 %v8481, 64
    %v8866 = vpop.permute.xlu0 %8865
    %8867 = vrot.lane.b32.xlu0 %v8482, 64
    %v8868 = vpop.permute.xlu0 %8867
    %8869 = vrot.lane.b32.xlu0 %v8483, 64
    %v8870 = vpop.permute.xlu0 %8869
    %8871 = vrot.lane.b32.xlu0 %v8484, 64
    %v8872 = vpop.permute.xlu0 %8871
    %8873 = vrot.lane.b32.xlu0 %v8485, 64
    %v8874 = vpop.permute.xlu0 %8873
    %8875 = vrot.lane.b32.xlu0 %v8486, 64
    %v8876 = vpop.permute.xlu0 %8875
    %8877 = vrot.lane.b32.xlu0 %v8487, 64
    %v8878 = vpop.permute.xlu0 %8877
    %8879 = vrot.lane.b32.xlu0 %v8488, 64
    %v8880 = vpop.permute.xlu0 %8879
    %8881 = vrot.lane.b32.xlu0 %v8489, 64
    %v8882 = vpop.permute.xlu0 %8881
    %8883 = vrot.lane.b32.xlu0 %v8490, 64
    %v8884 = vpop.permute.xlu0 %8883
    %8885 = vrot.lane.b32.xlu0 %v8491, 64
    %v8886 = vpop.permute.xlu0 %8885
    %8887 = vrot.lane.b32.xlu0 %v8492, 64
    %v8888 = vpop.permute.xlu0 %8887
    %8889 = vrot.lane.b32.xlu0 %v8493, 64
    %v8890 = vpop.permute.xlu0 %8889
    %8891 = vrot.lane.b32.xlu0 %v8494, 64
    %v8892 = vpop.permute.xlu0 %8891
    %8893 = vrot.lane.b32.xlu0 %v8495, 64
    %v8894 = vpop.permute.xlu0 %8893
    %8895 = vrot.lane.b32.xlu0 %v8496, 64
    %v8896 = vpop.permute.xlu0 %8895
    %8897 = vrot.lane.b32.xlu0 %v8497, 64
    %v8898 = vpop.permute.xlu0 %8897
    %8899 = vrot.lane.b32.xlu0 %v8498, 64
    %v8900 = vpop.permute.xlu0 %8899
    %8901 = vrot.lane.b32.xlu0 %v8499, 64
    %v8902 = vpop.permute.xlu0 %8901
    %8903 = vrot.lane.b32.xlu0 %v8500, 64
    %v8904 = vpop.permute.xlu0 %8903
    %8905 = vrot.lane.b32.xlu0 %v8501, 64
    %v8906 = vpop.permute.xlu0 %8905
    %8907 = vrot.lane.b32.xlu0 %v8502, 64
    %v8908 = vpop.permute.xlu0 %8907
    %8909 = vrot.lane.b32.xlu0 %v8503, 64
    %v8910 = vpop.permute.xlu0 %8909
    %8911 = vrot.lane.b32.xlu0 %v8504, 64
    %v8912 = vpop.permute.xlu0 %8911
    %8913 = vrot.lane.b32.xlu0 %v8505, 64
    %v8914 = vpop.permute.xlu0 %8913
    %8915 = vrot.lane.b32.xlu0 %v8506, 64
    %v8916 = vpop.permute.xlu0 %8915
    %8917 = vrot.lane.b32.xlu0 %v8507, 64
    %v8918 = vpop.permute.xlu0 %8917
    %8919 = vrot.lane.b32.xlu0 %v8508, 64
    %v8920 = vpop.permute.xlu0 %8919
    %8921 = vrot.lane.b32.xlu0 %v8509, 64
    %v8922 = vpop.permute.xlu0 %8921
    %8923 = vrot.lane.b32.xlu0 %v8510, 64
    %v8924 = vpop.permute.xlu0 %8923
    %8925 = vrot.lane.b32.xlu0 %v8511, 64
    %v8926 = vpop.permute.xlu0 %8925
    %8927 = vrot.lane.b32.xlu0 %v8512, 64
    %v8928 = vpop.permute.xlu0 %8927
    %8929 = vrot.lane.b32.xlu0 %v8513, 64
    %v8930 = vpop.permute.xlu0 %8929
    %8931 = vrot.lane.b32.xlu0 %v8514, 64
    %v8932 = vpop.permute.xlu0 %8931
    %8933 = vrot.lane.b32.xlu0 %v8515, 64
    %v8934 = vpop.permute.xlu0 %8933
    %8935 = vrot.lane.b32.xlu0 %v8516, 64
    %v8936 = vpop.permute.xlu0 %8935
    %8937 = vrot.lane.b32.xlu0 %v8517, 64
    %v8938 = vpop.permute.xlu0 %8937
    %8939 = vrot.lane.b32.xlu0 %v8518, 64
    %v8940 = vpop.permute.xlu0 %8939
    %8941 = vrot.lane.b32.xlu0 %v8519, 64
    %v8942 = vpop.permute.xlu0 %8941
    %8943 = vrot.lane.b32.xlu0 %v8520, 64
    %v8944 = vpop.permute.xlu0 %8943
    %8945 = vrot.lane.b32.xlu0 %v8521, 64
    %v8946 = vpop.permute.xlu0 %8945
    %8947 = vrot.lane.b32.xlu0 %v8522, 64
    %v8948 = vpop.permute.xlu0 %8947
    %8949 = vrot.lane.b32.xlu0 %v8523, 64
    %v8950 = vpop.permute.xlu0 %8949
    %8951 = vrot.lane.b32.xlu0 %v8524, 64
    %v8952 = vpop.permute.xlu0 %8951
    %8953 = vrot.lane.b32.xlu0 %v8525, 64
    %v8954 = vpop.permute.xlu0 %8953
    %8955 = vrot.lane.b32.xlu0 %v8526, 64
    %v8956 = vpop.permute.xlu0 %8955
    %8957 = vrot.lane.b32.xlu0 %v8527, 64
    %v8958 = vpop.permute.xlu0 %8957
    %8959 = vrot.lane.b32.xlu0 %v8528, 64
    %v8960 = vpop.permute.xlu0 %8959
    %8961 = vrot.lane.b32.xlu0 %v8529, 64
    %v8962 = vpop.permute.xlu0 %8961
    %8963 = vrot.lane.b32.xlu0 %v8530, 64
    %v8964 = vpop.permute.xlu0 %8963
    %8965 = vrot.lane.b32.xlu0 %v8531, 64
    %v8966 = vpop.permute.xlu0 %8965
    %8967 = vrot.lane.b32.xlu0 %v8532, 64
    %v8968 = vpop.permute.xlu0 %8967
    %8969 = vrot.lane.b32.xlu0 %v8533, 64
    %v8970 = vpop.permute.xlu0 %8969
    %8971 = vrot.lane.b32.xlu0 %v8534, 64
    %v8972 = vpop.permute.xlu0 %8971
    %8973 = vrot.lane.b32.xlu0 %v8535, 64
    %v8974 = vpop.permute.xlu0 %8973
    %8975 = vrot.lane.b32.xlu0 %v8536, 64
    %v8976 = vpop.permute.xlu0 %8975
    %8977 = vrot.lane.b32.xlu0 %v8537, 64
    %v8978 = vpop.permute.xlu0 %8977
    %8979 = vrot.lane.b32.xlu0 %v8538, 64
    %v8980 = vpop.permute.xlu0 %8979
    %8981 = vrot.lane.b32.xlu0 %v8539, 64
    %v8982 = vpop.permute.xlu0 %8981
    %8983 = vrot.lane.b32.xlu0 %v8540, 64
    %v8984 = vpop.permute.xlu0 %8983
    %8985 = vrot.lane.b32.xlu0 %v8541, 64
    %v8986 = vpop.permute.xlu0 %8985
    %8987 = vrot.lane.b32.xlu0 %v8542, 64
    %v8988 = vpop.permute.xlu0 %8987
    %8989 = vrot.lane.b32.xlu0 %v8543, 64
    %v8990 = vpop.permute.xlu0 %8989
    %8991 = vrot.lane.b32.xlu0 %v8544, 64
    %v8992 = vpop.permute.xlu0 %8991
    %v9057 = vsel %vm1020, %v8353, %v8610
    %v9058 = vsel %vm1020, %v8354, %v8612
    %v9059 = vsel %vm1020, %v8355, %v8614
    %v9060 = vsel %vm1020, %v8356, %v8616
    %v9061 = vsel %vm1020, %v8357, %v8618
    %v9062 = vsel %vm1020, %v8358, %v8620
    %v9063 = vsel %vm1020, %v8359, %v8622
    %v9064 = vsel %vm1020, %v8360, %v8624
    %v9065 = vsel %vm1020, %v8361, %v8626
    %v9066 = vsel %vm1020, %v8362, %v8628
    %v9067 = vsel %vm1020, %v8363, %v8630
    %v9068 = vsel %vm1020, %v8364, %v8632
    %v9069 = vsel %vm1020, %v8365, %v8634
    %v9070 = vsel %vm1020, %v8366, %v8636
    %v9071 = vsel %vm1020, %v8367, %v8638
    %v9072 = vsel %vm1020, %v8368, %v8640
    %v9073 = vsel %vm1020, %v8369, %v8642
    %v9074 = vsel %vm1020, %v8370, %v8644
    %v9075 = vsel %vm1020, %v8371, %v8646
    %v9076 = vsel %vm1020, %v8372, %v8648
    %v9077 = vsel %vm1020, %v8373, %v8650
    %v9078 = vsel %vm1020, %v8374, %v8652
    %v9079 = vsel %vm1020, %v8375, %v8654
    %v9080 = vsel %vm1020, %v8376, %v8656
    %v9081 = vsel %vm1020, %v8377, %v8658
    %v9082 = vsel %vm1020, %v8378, %v8660
    %v9083 = vsel %vm1020, %v8379, %v8662
    %v9084 = vsel %vm1020, %v8380, %v8664
    %v9085 = vsel %vm1020, %v8381, %v8666
    %v9086 = vsel %vm1020, %v8382, %v8668
    %v9087 = vsel %vm1020, %v8383, %v8670
    %v9088 = vsel %vm1020, %v8384, %v8672
    %v9089 = vsel %vm1020, %v8385, %v8674
    %v9090 = vsel %vm1020, %v8386, %v8676
    %v9091 = vsel %vm1020, %v8387, %v8678
    %v9092 = vsel %vm1020, %v8388, %v8680
    %v9093 = vsel %vm1020, %v8389, %v8682
    %v9094 = vsel %vm1020, %v8390, %v8684
    %v9095 = vsel %vm1020, %v8391, %v8686
    %v9096 = vsel %vm1020, %v8392, %v8688
    %v9097 = vsel %vm1020, %v8393, %v8690
    %v9098 = vsel %vm1020, %v8394, %v8692
    %v9099 = vsel %vm1020, %v8395, %v8694
    %v9100 = vsel %vm1020, %v8396, %v8696
    %v9101 = vsel %vm1020, %v8397, %v8698
    %v9102 = vsel %vm1020, %v8398, %v8700
    %v9103 = vsel %vm1020, %v8399, %v8702
    %v9104 = vsel %vm1020, %v8400, %v8704
    %v9105 = vsel %vm1020, %v8401, %v8706
    %v9106 = vsel %vm1020, %v8402, %v8708
    %v9107 = vsel %vm1020, %v8403, %v8710
    %v9108 = vsel %vm1020, %v8404, %v8712
    %v9109 = vsel %vm1020, %v8405, %v8714
    %v9110 = vsel %vm1020, %v8406, %v8716
    %v9111 = vsel %vm1020, %v8407, %v8718
    %v9112 = vsel %vm1020, %v8408, %v8720
    %v9113 = vsel %vm1020, %v8409, %v8722
    %v9114 = vsel %vm1020, %v8410, %v8724
    %v9115 = vsel %vm1020, %v8411, %v8726
    %v9116 = vsel %vm1020, %v8412, %v8728
    %v9117 = vsel %vm1020, %v8413, %v8730
    %v9118 = vsel %vm1020, %v8414, %v8732
    %v9119 = vsel %vm1020, %v8415, %v8734
    %v9120 = vsel %vm1020, %v8416, %v8736
    %v9121 = vsel %vm1085, %v9057, %v8866
    %v9122 = vsel %vm1085, %v9058, %v8868
    %v9123 = vsel %vm1085, %v9059, %v8870
    %v9124 = vsel %vm1085, %v9060, %v8872
    %v9125 = vsel %vm1085, %v9061, %v8874
    %v9126 = vsel %vm1085, %v9062, %v8876
    %v9127 = vsel %vm1085, %v9063, %v8878
    %v9128 = vsel %vm1085, %v9064, %v8880
    %v9129 = vsel %vm1085, %v9065, %v8882
    %v9130 = vsel %vm1085, %v9066, %v8884
    %v9131 = vsel %vm1085, %v9067, %v8886
    %v9132 = vsel %vm1085, %v9068, %v8888
    %v9133 = vsel %vm1085, %v9069, %v8890
    %v9134 = vsel %vm1085, %v9070, %v8892
    %v9135 = vsel %vm1085, %v9071, %v8894
    %v9136 = vsel %vm1085, %v9072, %v8896
    %v9137 = vsel %vm1085, %v9073, %v8898
    %v9138 = vsel %vm1085, %v9074, %v8900
    %v9139 = vsel %vm1085, %v9075, %v8902
    %v9140 = vsel %vm1085, %v9076, %v8904
    %v9141 = vsel %vm1085, %v9077, %v8906
    %v9142 = vsel %vm1085, %v9078, %v8908
    %v9143 = vsel %vm1085, %v9079, %v8910
    %v9144 = vsel %vm1085, %v9080, %v8912
    %v9145 = vsel %vm1085, %v9081, %v8914
    %v9146 = vsel %vm1085, %v9082, %v8916
    %v9147 = vsel %vm1085, %v9083, %v8918
    %v9148 = vsel %vm1085, %v9084, %v8920
    %v9149 = vsel %vm1085, %v9085, %v8922
    %v9150 = vsel %vm1085, %v9086, %v8924
    %v9151 = vsel %vm1085, %v9087, %v8926
    %v9152 = vsel %vm1085, %v9088, %v8928
    %v9153 = vsel %vm1085, %v9089, %v8930
    %v9154 = vsel %vm1085, %v9090, %v8932
    %v9155 = vsel %vm1085, %v9091, %v8934
    %v9156 = vsel %vm1085, %v9092, %v8936
    %v9157 = vsel %vm1085, %v9093, %v8938
    %v9158 = vsel %vm1085, %v9094, %v8940
    %v9159 = vsel %vm1085, %v9095, %v8942
    %v9160 = vsel %vm1085, %v9096, %v8944
    %v9161 = vsel %vm1085, %v9097, %v8946
    %v9162 = vsel %vm1085, %v9098, %v8948
    %v9163 = vsel %vm1085, %v9099, %v8950
    %v9164 = vsel %vm1085, %v9100, %v8952
    %v9165 = vsel %vm1085, %v9101, %v8954
    %v9166 = vsel %vm1085, %v9102, %v8956
    %v9167 = vsel %vm1085, %v9103, %v8958
    %v9168 = vsel %vm1085, %v9104, %v8960
    %v9169 = vsel %vm1085, %v9105, %v8962
    %v9170 = vsel %vm1085, %v9106, %v8964
    %v9171 = vsel %vm1085, %v9107, %v8966
    %v9172 = vsel %vm1085, %v9108, %v8968
    %v9173 = vsel %vm1085, %v9109, %v8970
    %v9174 = vsel %vm1085, %v9110, %v8972
    %v9175 = vsel %vm1085, %v9111, %v8974
    %v9176 = vsel %vm1085, %v9112, %v8976
    %v9177 = vsel %vm1085, %v9113, %v8978
    %v9178 = vsel %vm1085, %v9114, %v8980
    %v9179 = vsel %vm1085, %v9115, %v8982
    %v9180 = vsel %vm1085, %v9116, %v8984
    %v9181 = vsel %vm1085, %v9117, %v8986
    %v9182 = vsel %vm1085, %v9118, %v8988
    %v9183 = vsel %vm1085, %v9119, %v8990
    %v9184 = vsel %vm1085, %v9120, %v8992
    %v9185 = vsel %vm1150, %v9121, 0.0
    %v9186 = vsel %vm1150, %v9122, 0.0
    %v9187 = vsel %vm1150, %v9123, 0.0
    %v9188 = vsel %vm1150, %v9124, 0.0
    %v9189 = vsel %vm1150, %v9125, 0.0
    %v9190 = vsel %vm1150, %v9126, 0.0
    %v9191 = vsel %vm1150, %v9127, 0.0
    %v9192 = vsel %vm1150, %v9128, 0.0
    %v9193 = vsel %vm1150, %v9129, 0.0
    %v9194 = vsel %vm1150, %v9130, 0.0
    %v9195 = vsel %vm1150, %v9131, 0.0
    %v9196 = vsel %vm1150, %v9132, 0.0
    %v9197 = vsel %vm1150, %v9133, 0.0
    %v9198 = vsel %vm1150, %v9134, 0.0
    %v9199 = vsel %vm1150, %v9135, 0.0
    %v9200 = vsel %vm1150, %v9136, 0.0
    %v9201 = vsel %vm1150, %v9137, 0.0
    %v9202 = vsel %vm1150, %v9138, 0.0
    %v9203 = vsel %vm1150, %v9139, 0.0
    %v9204 = vsel %vm1150, %v9140, 0.0
    %v9205 = vsel %vm1150, %v9141, 0.0
    %v9206 = vsel %vm1150, %v9142, 0.0
    %v9207 = vsel %vm1150, %v9143, 0.0
    %v9208 = vsel %vm1150, %v9144, 0.0
    %v9209 = vsel %vm1150, %v9145, 0.0
    %v9210 = vsel %vm1150, %v9146, 0.0
    %v9211 = vsel %vm1150, %v9147, 0.0
    %v9212 = vsel %vm1150, %v9148, 0.0
    %v9213 = vsel %vm1150, %v9149, 0.0
    %v9214 = vsel %vm1150, %v9150, 0.0
    %v9215 = vsel %vm1150, %v9151, 0.0
    %v9216 = vsel %vm1150, %v9152, 0.0
    %v9217 = vsel %vm1150, %v9153, 0.0
    %v9218 = vsel %vm1150, %v9154, 0.0
    %v9219 = vsel %vm1150, %v9155, 0.0
    %v9220 = vsel %vm1150, %v9156, 0.0
    %v9221 = vsel %vm1150, %v9157, 0.0
    %v9222 = vsel %vm1150, %v9158, 0.0
    %v9223 = vsel %vm1150, %v9159, 0.0
    %v9224 = vsel %vm1150, %v9160, 0.0
    %v9225 = vsel %vm1150, %v9161, 0.0
    %v9226 = vsel %vm1150, %v9162, 0.0
    %v9227 = vsel %vm1150, %v9163, 0.0
    %v9228 = vsel %vm1150, %v9164, 0.0
    %v9229 = vsel %vm1150, %v9165, 0.0
    %v9230 = vsel %vm1150, %v9166, 0.0
    %v9231 = vsel %vm1150, %v9167, 0.0
    %v9232 = vsel %vm1150, %v9168, 0.0
    %v9233 = vsel %vm1150, %v9169, 0.0
    %v9234 = vsel %vm1150, %v9170, 0.0
    %v9235 = vsel %vm1150, %v9171, 0.0
    %v9236 = vsel %vm1150, %v9172, 0.0
    %v9237 = vsel %vm1150, %v9173, 0.0
    %v9238 = vsel %vm1150, %v9174, 0.0
    %v9239 = vsel %vm1150, %v9175, 0.0
    %v9240 = vsel %vm1150, %v9176, 0.0
    %v9241 = vsel %vm1150, %v9177, 0.0
    %v9242 = vsel %vm1150, %v9178, 0.0
    %v9243 = vsel %vm1150, %v9179, 0.0
    %v9244 = vsel %vm1150, %v9180, 0.0
    %v9245 = vsel %vm1150, %v9181, 0.0
    %v9246 = vsel %vm1150, %v9182, 0.0
    %v9247 = vsel %vm1150, %v9183, 0.0
    %v9248 = vsel %vm1150, %v9184, 0.0
    %v9249 = vpack.c.bf16 %v9186, %v9185
    %v9250 = vpack.c.bf16 %v9188, %v9187
    %v9251 = vpack.c.bf16 %v9190, %v9189
    %v9252 = vpack.c.bf16 %v9192, %v9191
    %v9253 = vpack.c.bf16 %v9194, %v9193
    %v9254 = vpack.c.bf16 %v9196, %v9195
    %v9255 = vpack.c.bf16 %v9198, %v9197
    %v9256 = vpack.c.bf16 %v9200, %v9199
    %v9257 = vpack.c.bf16 %v9202, %v9201
    %v9258 = vpack.c.bf16 %v9204, %v9203
    %v9259 = vpack.c.bf16 %v9206, %v9205
    %v9260 = vpack.c.bf16 %v9208, %v9207
    %v9261 = vpack.c.bf16 %v9210, %v9209
    %v9262 = vpack.c.bf16 %v9212, %v9211
    %v9263 = vpack.c.bf16 %v9214, %v9213
    %v9264 = vpack.c.bf16 %v9216, %v9215
    %v9265 = vpack.c.bf16 %v9218, %v9217
    %v9266 = vpack.c.bf16 %v9220, %v9219
    %v9267 = vpack.c.bf16 %v9222, %v9221
    %v9268 = vpack.c.bf16 %v9224, %v9223
    %v9269 = vpack.c.bf16 %v9226, %v9225
    %v9270 = vpack.c.bf16 %v9228, %v9227
    %v9271 = vpack.c.bf16 %v9230, %v9229
    %v9272 = vpack.c.bf16 %v9232, %v9231
    %v9273 = vpack.c.bf16 %v9234, %v9233
    %v9274 = vpack.c.bf16 %v9236, %v9235
    %v9275 = vpack.c.bf16 %v9238, %v9237
    %v9276 = vpack.c.bf16 %v9240, %v9239
    %v9277 = vpack.c.bf16 %v9242, %v9241
    %v9278 = vpack.c.bf16 %v9244, %v9243
    %v9279 = vpack.c.bf16 %v9246, %v9245
    %v9280 = vpack.c.bf16 %v9248, %v9247
    %v9313 = vunpack.c.l.b16 %v9249
    %v9314 = vunpack.c.h.b16 %v9249
    %v9315 = vunpack.c.l.b16 %v9250
    %v9316 = vunpack.c.h.b16 %v9250
    %v9317 = vunpack.c.l.b16 %v9251
    %v9318 = vunpack.c.h.b16 %v9251
    %v9319 = vunpack.c.l.b16 %v9252
    %v9320 = vunpack.c.h.b16 %v9252
    %v9321 = vunpack.c.l.b16 %v9253
    %v9322 = vunpack.c.h.b16 %v9253
    %v9323 = vunpack.c.l.b16 %v9254
    %v9324 = vunpack.c.h.b16 %v9254
    %v9325 = vunpack.c.l.b16 %v9255
    %v9326 = vunpack.c.h.b16 %v9255
    %v9327 = vunpack.c.l.b16 %v9256
    %v9328 = vunpack.c.h.b16 %v9256
    %v9329 = vunpack.c.l.b16 %v9257
    %v9330 = vunpack.c.h.b16 %v9257
    %v9331 = vunpack.c.l.b16 %v9258
    %v9332 = vunpack.c.h.b16 %v9258
    %v9333 = vunpack.c.l.b16 %v9259
    %v9334 = vunpack.c.h.b16 %v9259
    %v9335 = vunpack.c.l.b16 %v9260
    %v9336 = vunpack.c.h.b16 %v9260
    %v9337 = vunpack.c.l.b16 %v9261
    %v9338 = vunpack.c.h.b16 %v9261
    %v9339 = vunpack.c.l.b16 %v9262
    %v9340 = vunpack.c.h.b16 %v9262
    %v9341 = vunpack.c.l.b16 %v9263
    %v9342 = vunpack.c.h.b16 %v9263
    %v9343 = vunpack.c.l.b16 %v9264
    %v9344 = vunpack.c.h.b16 %v9264
    %v9345 = vunpack.c.l.b16 %v9265
    %v9346 = vunpack.c.h.b16 %v9265
    %v9347 = vunpack.c.l.b16 %v9266
    %v9348 = vunpack.c.h.b16 %v9266
    %v9349 = vunpack.c.l.b16 %v9267
    %v9350 = vunpack.c.h.b16 %v9267
    %v9351 = vunpack.c.l.b16 %v9268
    %v9352 = vunpack.c.h.b16 %v9268
    %v9353 = vunpack.c.l.b16 %v9269
    %v9354 = vunpack.c.h.b16 %v9269
    %v9355 = vunpack.c.l.b16 %v9270
    %v9356 = vunpack.c.h.b16 %v9270
    %v9357 = vunpack.c.l.b16 %v9271
    %v9358 = vunpack.c.h.b16 %v9271
    %v9359 = vunpack.c.l.b16 %v9272
    %v9360 = vunpack.c.h.b16 %v9272
    %v9361 = vunpack.c.l.b16 %v9273
    %v9362 = vunpack.c.h.b16 %v9273
    %v9363 = vunpack.c.l.b16 %v9274
    %v9364 = vunpack.c.h.b16 %v9274
    %v9365 = vunpack.c.l.b16 %v9275
    %v9366 = vunpack.c.h.b16 %v9275
    %v9367 = vunpack.c.l.b16 %v9276
    %v9368 = vunpack.c.h.b16 %v9276
    %v9369 = vunpack.c.l.b16 %v9277
    %v9370 = vunpack.c.h.b16 %v9277
    %v9371 = vunpack.c.l.b16 %v9278
    %v9372 = vunpack.c.h.b16 %v9278
    %v9373 = vunpack.c.l.b16 %v9279
    %v9374 = vunpack.c.h.b16 %v9279
    %v9375 = vunpack.c.l.b16 %v9280
    %v9376 = vunpack.c.h.b16 %v9280
    %v9377 = vpack.c.b16 %v9313, %v9313
    %v9378 = vpack.c.b16 %v9314, %v9314
    %v9379 = vpack.c.b16 %v9315, %v9315
    %v9380 = vpack.c.b16 %v9316, %v9316
    %v9381 = vpack.c.b16 %v9317, %v9317
    %v9382 = vpack.c.b16 %v9318, %v9318
    %v9383 = vpack.c.b16 %v9319, %v9319
    %v9384 = vpack.c.b16 %v9320, %v9320
    %v9385 = vpack.c.b16 %v9321, %v9321
    %v9386 = vpack.c.b16 %v9322, %v9322
    %v9387 = vpack.c.b16 %v9323, %v9323
    %v9388 = vpack.c.b16 %v9324, %v9324
    %v9389 = vpack.c.b16 %v9325, %v9325
    %v9390 = vpack.c.b16 %v9326, %v9326
    %v9391 = vpack.c.b16 %v9327, %v9327
    %v9392 = vpack.c.b16 %v9328, %v9328
    %v9393 = vpack.c.b16 %v9329, %v9329
    %v9394 = vpack.c.b16 %v9330, %v9330
    %v9395 = vpack.c.b16 %v9331, %v9331
    %v9396 = vpack.c.b16 %v9332, %v9332
    %v9397 = vpack.c.b16 %v9333, %v9333
    %v9398 = vpack.c.b16 %v9334, %v9334
    %v9399 = vpack.c.b16 %v9335, %v9335
    %v9400 = vpack.c.b16 %v9336, %v9336
    %v9401 = vpack.c.b16 %v9337, %v9337
    %v9402 = vpack.c.b16 %v9338, %v9338
    %v9403 = vpack.c.b16 %v9339, %v9339
    %v9404 = vpack.c.b16 %v9340, %v9340
    %v9405 = vpack.c.b16 %v9341, %v9341
    %v9406 = vpack.c.b16 %v9342, %v9342
    %v9407 = vpack.c.b16 %v9343, %v9343
    %v9408 = vpack.c.b16 %v9344, %v9344
    %v9409 = vpack.c.b16 %v9345, %v9345
    %v9410 = vpack.c.b16 %v9346, %v9346
    %v9411 = vpack.c.b16 %v9347, %v9347
    %v9412 = vpack.c.b16 %v9348, %v9348
    %v9413 = vpack.c.b16 %v9349, %v9349
    %v9414 = vpack.c.b16 %v9350, %v9350
    %v9415 = vpack.c.b16 %v9351, %v9351
    %v9416 = vpack.c.b16 %v9352, %v9352
    %v9417 = vpack.c.b16 %v9353, %v9353
    %v9418 = vpack.c.b16 %v9354, %v9354
    %v9419 = vpack.c.b16 %v9355, %v9355
    %v9420 = vpack.c.b16 %v9356, %v9356
    %v9421 = vpack.c.b16 %v9357, %v9357
    %v9422 = vpack.c.b16 %v9358, %v9358
    %v9423 = vpack.c.b16 %v9359, %v9359
    %v9424 = vpack.c.b16 %v9360, %v9360
    %v9425 = vpack.c.b16 %v9361, %v9361
    %v9426 = vpack.c.b16 %v9362, %v9362
    %v9427 = vpack.c.b16 %v9363, %v9363
    %v9428 = vpack.c.b16 %v9364, %v9364
    %v9429 = vpack.c.b16 %v9365, %v9365
    %v9430 = vpack.c.b16 %v9366, %v9366
    %v9431 = vpack.c.b16 %v9367, %v9367
    %v9432 = vpack.c.b16 %v9368, %v9368
    %v9433 = vpack.c.b16 %v9369, %v9369
    %v9434 = vpack.c.b16 %v9370, %v9370
    %v9435 = vpack.c.b16 %v9371, %v9371
    %v9436 = vpack.c.b16 %v9372, %v9372
    %v9437 = vpack.c.b16 %v9373, %v9373
    %v9438 = vpack.c.b16 %v9374, %v9374
    %v9439 = vpack.c.b16 %v9375, %v9375
    %v9440 = vpack.c.b16 %v9376, %v9376
    %9505 = vst [vmem:[#allocation3 + $0x8] sm:$0xf] %v9377
    %9506 = vst [vmem:[#allocation3 + $0x14] sm:$0xf] %v9378
    %9507 = vst [vmem:[#allocation3 + $0x20] sm:$0xf] %v9379
    %9508 = vst [vmem:[#allocation3 + $0x2c] sm:$0xf] %v9380
    %9509 = vst [vmem:[#allocation3 + $0x38] sm:$0xf] %v9381
    %9510 = vst [vmem:[#allocation3 + $0x44] sm:$0xf] %v9382
    %9511 = vst [vmem:[#allocation3 + $0x50] sm:$0xf] %v9383
    %9512 = vst [vmem:[#allocation3 + $0x5c] sm:$0xf] %v9384
    %9513 = vst [vmem:[#allocation3 + $0x68] sm:$0xf] %v9385
    %9514 = vst [vmem:[#allocation3 + $0x74] sm:$0xf] %v9386
    %9515 = vst [vmem:[#allocation3 + $0x80] sm:$0xf] %v9387
    %9516 = vst [vmem:[#allocation3 + $0x8c] sm:$0xf] %v9388
    %9517 = vst [vmem:[#allocation3 + $0x98] sm:$0xf] %v9389
    %9518 = vst [vmem:[#allocation3 + $0xa4] sm:$0xf] %v9390
    %9519 = vst [vmem:[#allocation3 + $0xb0] sm:$0xf] %v9391
    %9520 = vst [vmem:[#allocation3 + $0xbc] sm:$0xf] %v9392
    %9521 = vst [vmem:[#allocation3 + $0xc8] sm:$0xf] %v9393
    %9522 = vst [vmem:[#allocation3 + $0xd4] sm:$0xf] %v9394
    %9523 = vst [vmem:[#allocation3 + $0xe0] sm:$0xf] %v9395
    %9524 = vst [vmem:[#allocation3 + $0xec] sm:$0xf] %v9396
    %9525 = vst [vmem:[#allocation3 + $0xf8] sm:$0xf] %v9397
    %9526 = vst [vmem:[#allocation3 + $0x104] sm:$0xf] %v9398
    %9527 = vst [vmem:[#allocation3 + $0x110] sm:$0xf] %v9399
    %9528 = vst [vmem:[#allocation3 + $0x11c] sm:$0xf] %v9400
    %9529 = vst [vmem:[#allocation3 + $0x128] sm:$0xf] %v9401
    %9530 = vst [vmem:[#allocation3 + $0x134] sm:$0xf] %v9402
    %9531 = vst [vmem:[#allocation3 + $0x140] sm:$0xf] %v9403
    %9532 = vst [vmem:[#allocation3 + $0x14c] sm:$0xf] %v9404
    %9533 = vst [vmem:[#allocation3 + $0x158] sm:$0xf] %v9405
    %9534 = vst [vmem:[#allocation3 + $0x164] sm:$0xf] %v9406
    %9535 = vst [vmem:[#allocation3 + $0x170] sm:$0xf] %v9407
    %9536 = vst [vmem:[#allocation3 + $0x17c] sm:$0xf] %v9408
    %9537 = vst [vmem:[#allocation3 + $0x188] sm:$0xf] %v9409
    %9538 = vst [vmem:[#allocation3 + $0x194] sm:$0xf] %v9410
    %9539 = vst [vmem:[#allocation3 + $0x1a0] sm:$0xf] %v9411
    %9540 = vst [vmem:[#allocation3 + $0x1ac] sm:$0xf] %v9412
    %9541 = vst [vmem:[#allocation3 + $0x1b8] sm:$0xf] %v9413
    %9542 = vst [vmem:[#allocation3 + $0x1c4] sm:$0xf] %v9414
    %9543 = vst [vmem:[#allocation3 + $0x1d0] sm:$0xf] %v9415
    %9544 = vst [vmem:[#allocation3 + $0x1dc] sm:$0xf] %v9416
    %9545 = vst [vmem:[#allocation3 + $0x1e8] sm:$0xf] %v9417
    %9546 = vst [vmem:[#allocation3 + $0x1f4] sm:$0xf] %v9418
    %9547 = vst [vmem:[#allocation3 + $0x200] sm:$0xf] %v9419
    %9548 = vst [vmem:[#allocation3 + $0x20c] sm:$0xf] %v9420
    %9549 = vst [vmem:[#allocation3 + $0x218] sm:$0xf] %v9421
    %9550 = vst [vmem:[#allocation3 + $0x224] sm:$0xf] %v9422
    %9551 = vst [vmem:[#allocation3 + $0x230] sm:$0xf] %v9423
    %9552 = vst [vmem:[#allocation3 + $0x23c] sm:$0xf] %v9424
    %9553 = vst [vmem:[#allocation3 + $0x248] sm:$0xf] %v9425
    %9554 = vst [vmem:[#allocation3 + $0x254] sm:$0xf] %v9426
    %9555 = vst [vmem:[#allocation3 + $0x260] sm:$0xf] %v9427
    %9556 = vst [vmem:[#allocation3 + $0x26c] sm:$0xf] %v9428
    %9557 = vst [vmem:[#allocation3 + $0x278] sm:$0xf] %v9429
    %9558 = vst [vmem:[#allocation3 + $0x284] sm:$0xf] %v9430
    %9559 = vst [vmem:[#allocation3 + $0x290] sm:$0xf] %v9431
    %9560 = vst [vmem:[#allocation3 + $0x29c] sm:$0xf] %v9432
    %9561 = vst [vmem:[#allocation3 + $0x2a8] sm:$0xf] %v9433
    %9562 = vst [vmem:[#allocation3 + $0x2b4] sm:$0xf] %v9434
    %9563 = vst [vmem:[#allocation3 + $0x2c0] sm:$0xf] %v9435
    %9564 = vst [vmem:[#allocation3 + $0x2cc] sm:$0xf] %v9436
    %9565 = vst [vmem:[#allocation3 + $0x2d8] sm:$0xf] %v9437
    %9566 = vst [vmem:[#allocation3 + $0x2e4] sm:$0xf] %v9438
    %9567 = vst [vmem:[#allocation3 + $0x2f0] sm:$0xf] %v9439
    %9568 = vst [vmem:[#allocation3 + $0x2fc] sm:$0xf] %v9440
    %v9569 = vld [vmem:[#allocation3] sm:$0xff]
    %v9570 = vld [vmem:[#allocation3 + $0x8] sm:$0xf]
    %v9571 = vld [vmem:[#allocation3 + $0xc] sm:$0xff]
    %v9572 = vld [vmem:[#allocation3 + $0x14] sm:$0xf]
    %v9573 = vld [vmem:[#allocation3 + $0x18] sm:$0xff]
    %v9574 = vld [vmem:[#allocation3 + $0x20] sm:$0xf]
    %v9575 = vld [vmem:[#allocation3 + $0x24] sm:$0xff]
    %v9576 = vld [vmem:[#allocation3 + $0x2c] sm:$0xf]
    %v9577 = vld [vmem:[#allocation3 + $0x30] sm:$0xff]
    %v9578 = vld [vmem:[#allocation3 + $0x38] sm:$0xf]
    %v9579 = vld [vmem:[#allocation3 + $0x3c] sm:$0xff]
    %v9580 = vld [vmem:[#allocation3 + $0x44] sm:$0xf]
    %v9581 = vld [vmem:[#allocation3 + $0x48] sm:$0xff]
    %v9582 = vld [vmem:[#allocation3 + $0x50] sm:$0xf]
    %v9583 = vld [vmem:[#allocation3 + $0x54] sm:$0xff]
    %v9584 = vld [vmem:[#allocation3 + $0x5c] sm:$0xf]
    %v9585 = vld [vmem:[#allocation3 + $0x60] sm:$0xff]
    %v9586 = vld [vmem:[#allocation3 + $0x68] sm:$0xf]
    %v9587 = vld [vmem:[#allocation3 + $0x6c] sm:$0xff]
    %v9588 = vld [vmem:[#allocation3 + $0x74] sm:$0xf]
    %v9589 = vld [vmem:[#allocation3 + $0x78] sm:$0xff]
    %v9590 = vld [vmem:[#allocation3 + $0x80] sm:$0xf]
    %v9591 = vld [vmem:[#allocation3 + $0x84] sm:$0xff]
    %v9592 = vld [vmem:[#allocation3 + $0x8c] sm:$0xf]
    %v9593 = vld [vmem:[#allocation3 + $0x90] sm:$0xff]
    %v9594 = vld [vmem:[#allocation3 + $0x98] sm:$0xf]
    %v9595 = vld [vmem:[#allocation3 + $0x9c] sm:$0xff]
    %v9596 = vld [vmem:[#allocation3 + $0xa4] sm:$0xf]
    %v9597 = vld [vmem:[#allocation3 + $0xa8] sm:$0xff]
    %v9598 = vld [vmem:[#allocation3 + $0xb0] sm:$0xf]
    %v9599 = vld [vmem:[#allocation3 + $0xb4] sm:$0xff]
    %v9600 = vld [vmem:[#allocation3 + $0xbc] sm:$0xf]
    %v9601 = vld [vmem:[#allocation3 + $0xc0] sm:$0xff]
    %v9602 = vld [vmem:[#allocation3 + $0xc8] sm:$0xf]
    %v9603 = vld [vmem:[#allocation3 + $0xcc] sm:$0xff]
    %v9604 = vld [vmem:[#allocation3 + $0xd4] sm:$0xf]
    %v9605 = vld [vmem:[#allocation3 + $0xd8] sm:$0xff]
    %v9606 = vld [vmem:[#allocation3 + $0xe0] sm:$0xf]
    %v9607 = vld [vmem:[#allocation3 + $0xe4] sm:$0xff]
    %v9608 = vld [vmem:[#allocation3 + $0xec] sm:$0xf]
    %v9609 = vld [vmem:[#allocation3 + $0xf0] sm:$0xff]
    %v9610 = vld [vmem:[#allocation3 + $0xf8] sm:$0xf]
    %v9611 = vld [vmem:[#allocation3 + $0xfc] sm:$0xff]
    %v9612 = vld [vmem:[#allocation3 + $0x104] sm:$0xf]
    %v9613 = vld [vmem:[#allocation3 + $0x108] sm:$0xff]
    %v9614 = vld [vmem:[#allocation3 + $0x110] sm:$0xf]
    %v9615 = vld [vmem:[#allocation3 + $0x114] sm:$0xff]
    %v9616 = vld [vmem:[#allocation3 + $0x11c] sm:$0xf]
    %v9617 = vld [vmem:[#allocation3 + $0x120] sm:$0xff]
    %v9618 = vld [vmem:[#allocation3 + $0x128] sm:$0xf]
    %v9619 = vld [vmem:[#allocation3 + $0x12c] sm:$0xff]
    %v9620 = vld [vmem:[#allocation3 + $0x134] sm:$0xf]
    %v9621 = vld [vmem:[#allocation3 + $0x138] sm:$0xff]
    %v9622 = vld [vmem:[#allocation3 + $0x140] sm:$0xf]
    %v9623 = vld [vmem:[#allocation3 + $0x144] sm:$0xff]
    %v9624 = vld [vmem:[#allocation3 + $0x14c] sm:$0xf]
    %v9625 = vld [vmem:[#allocation3 + $0x150] sm:$0xff]
    %v9626 = vld [vmem:[#allocation3 + $0x158] sm:$0xf]
    %v9627 = vld [vmem:[#allocation3 + $0x15c] sm:$0xff]
    %v9628 = vld [vmem:[#allocation3 + $0x164] sm:$0xf]
    %v9629 = vld [vmem:[#allocation3 + $0x168] sm:$0xff]
    %v9630 = vld [vmem:[#allocation3 + $0x170] sm:$0xf]
    %v9631 = vld [vmem:[#allocation3 + $0x174] sm:$0xff]
    %v9632 = vld [vmem:[#allocation3 + $0x17c] sm:$0xf]
    %v9633 = vld [vmem:[#allocation3 + $0x180] sm:$0xff]
    %v9634 = vld [vmem:[#allocation3 + $0x188] sm:$0xf]
    %v9635 = vld [vmem:[#allocation3 + $0x18c] sm:$0xff]
    %v9636 = vld [vmem:[#allocation3 + $0x194] sm:$0xf]
    %v9637 = vld [vmem:[#allocation3 + $0x198] sm:$0xff]
    %v9638 = vld [vmem:[#allocation3 + $0x1a0] sm:$0xf]
    %v9639 = vld [vmem:[#allocation3 + $0x1a4] sm:$0xff]
    %v9640 = vld [vmem:[#allocation3 + $0x1ac] sm:$0xf]
    %v9641 = vld [vmem:[#allocation3 + $0x1b0] sm:$0xff]
    %v9642 = vld [vmem:[#allocation3 + $0x1b8] sm:$0xf]
    %v9643 = vld [vmem:[#allocation3 + $0x1bc] sm:$0xff]
    %v9644 = vld [vmem:[#allocation3 + $0x1c4] sm:$0xf]
    %v9645 = vld [vmem:[#allocation3 + $0x1c8] sm:$0xff]
    %v9646 = vld [vmem:[#allocation3 + $0x1d0] sm:$0xf]
    %v9647 = vld [vmem:[#allocation3 + $0x1d4] sm:$0xff]
    %v9648 = vld [vmem:[#allocation3 + $0x1dc] sm:$0xf]
    %v9649 = vld [vmem:[#allocation3 + $0x1e0] sm:$0xff]
    %v9650 = vld [vmem:[#allocation3 + $0x1e8] sm:$0xf]
    %v9651 = vld [vmem:[#allocation3 + $0x1ec] sm:$0xff]
    %v9652 = vld [vmem:[#allocation3 + $0x1f4] sm:$0xf]
    %v9653 = vld [vmem:[#allocation3 + $0x1f8] sm:$0xff]
    %v9654 = vld [vmem:[#allocation3 + $0x200] sm:$0xf]
    %v9655 = vld [vmem:[#allocation3 + $0x204] sm:$0xff]
    %v9656 = vld [vmem:[#allocation3 + $0x20c] sm:$0xf]
    %v9657 = vld [vmem:[#allocation3 + $0x210] sm:$0xff]
    %v9658 = vld [vmem:[#allocation3 + $0x218] sm:$0xf]
    %v9659 = vld [vmem:[#allocation3 + $0x21c] sm:$0xff]
    %v9660 = vld [vmem:[#allocation3 + $0x224] sm:$0xf]
    %v9661 = vld [vmem:[#allocation3 + $0x228] sm:$0xff]
    %v9662 = vld [vmem:[#allocation3 + $0x230] sm:$0xf]
    %v9663 = vld [vmem:[#allocation3 + $0x234] sm:$0xff]
    %v9664 = vld [vmem:[#allocation3 + $0x23c] sm:$0xf]
    %v9665 = vld [vmem:[#allocation3 + $0x240] sm:$0xff]
    %v9666 = vld [vmem:[#allocation3 + $0x248] sm:$0xf]
    %v9667 = vld [vmem:[#allocation3 + $0x24c] sm:$0xff]
    %v9668 = vld [vmem:[#allocation3 + $0x254] sm:$0xf]
    %v9669 = vld [vmem:[#allocation3 + $0x258] sm:$0xff]
    %v9670 = vld [vmem:[#allocation3 + $0x260] sm:$0xf]
    %v9671 = vld [vmem:[#allocation3 + $0x264] sm:$0xff]
    %v9672 = vld [vmem:[#allocation3 + $0x26c] sm:$0xf]
    %v9673 = vld [vmem:[#allocation3 + $0x270] sm:$0xff]
    %v9674 = vld [vmem:[#allocation3 + $0x278] sm:$0xf]
    %v9675 = vld [vmem:[#allocation3 + $0x27c] sm:$0xff]
    %v9676 = vld [vmem:[#allocation3 + $0x284] sm:$0xf]
    %v9677 = vld [vmem:[#allocation3 + $0x288] sm:$0xff]
    %v9678 = vld [vmem:[#allocation3 + $0x290] sm:$0xf]
    %v9679 = vld [vmem:[#allocation3 + $0x294] sm:$0xff]
    %v9680 = vld [vmem:[#allocation3 + $0x29c] sm:$0xf]
    %v9681 = vld [vmem:[#allocation3 + $0x2a0] sm:$0xff]
    %v9682 = vld [vmem:[#allocation3 + $0x2a8] sm:$0xf]
    %v9683 = vld [vmem:[#allocation3 + $0x2ac] sm:$0xff]
    %v9684 = vld [vmem:[#allocation3 + $0x2b4] sm:$0xf]
    %v9685 = vld [vmem:[#allocation3 + $0x2b8] sm:$0xff]
    %v9686 = vld [vmem:[#allocation3 + $0x2c0] sm:$0xf]
    %v9687 = vld [vmem:[#allocation3 + $0x2c4] sm:$0xff]
    %v9688 = vld [vmem:[#allocation3 + $0x2cc] sm:$0xf]
    %v9689 = vld [vmem:[#allocation3 + $0x2d0] sm:$0xff]
    %v9690 = vld [vmem:[#allocation3 + $0x2d8] sm:$0xf]
    %v9691 = vld [vmem:[#allocation3 + $0x2dc] sm:$0xff]
    %v9692 = vld [vmem:[#allocation3 + $0x2e4] sm:$0xf]
    %v9693 = vld [vmem:[#allocation3 + $0x2e8] sm:$0xff]
    %v9694 = vld [vmem:[#allocation3 + $0x2f0] sm:$0xf]
    %v9695 = vld [vmem:[#allocation3 + $0x2f4] sm:$0xff]
    %v9696 = vld [vmem:[#allocation3 + $0x2fc] sm:$0xf]
    %v9697 = vld [vmem:[#allocation9] sm:$0xf]
    %v9698 = vld [vmem:[#allocation9 + $0x4] sm:$0xf]
    %v9699 = vld [vmem:[#allocation9 + $0x8] sm:$0xf]
    %v9700 = vld [vmem:[#allocation9 + $0xc] sm:$0xf]
    %v9701 = vld [vmem:[#allocation9 + $0x10] sm:$0xf]
    %v9702 = vld [vmem:[#allocation9 + $0x14] sm:$0xf]
    %v9703 = vld [vmem:[#allocation9 + $0x18] sm:$0xf]
    %v9704 = vld [vmem:[#allocation9 + $0x1c] sm:$0xf]
    %v9705 = vld [vmem:[#allocation9 + $0x20] sm:$0xf]
    %v9706 = vld [vmem:[#allocation9 + $0x24] sm:$0xf]
    %v9707 = vld [vmem:[#allocation9 + $0x28] sm:$0xf]
    %v9708 = vld [vmem:[#allocation9 + $0x2c] sm:$0xf]
    %v9709 = vld [vmem:[#allocation9 + $0x30] sm:$0xf]
    %v9710 = vld [vmem:[#allocation9 + $0x34] sm:$0xf]
    %v9711 = vld [vmem:[#allocation9 + $0x38] sm:$0xf]
    %v9712 = vld [vmem:[#allocation9 + $0x3c] sm:$0xf]
    %v9713 = vld [vmem:[#allocation9 + $0x40] sm:$0xf]
    %v9714 = vld [vmem:[#allocation9 + $0x44] sm:$0xf]
    %v9715 = vld [vmem:[#allocation9 + $0x48] sm:$0xf]
    %v9716 = vld [vmem:[#allocation9 + $0x4c] sm:$0xf]
    %v9717 = vld [vmem:[#allocation9 + $0x50] sm:$0xf]
    %v9718 = vld [vmem:[#allocation9 + $0x54] sm:$0xf]
    %v9719 = vld [vmem:[#allocation9 + $0x58] sm:$0xf]
    %v9720 = vld [vmem:[#allocation9 + $0x5c] sm:$0xf]
    %v9721 = vld [vmem:[#allocation9 + $0x60] sm:$0xf]
    %v9722 = vld [vmem:[#allocation9 + $0x64] sm:$0xf]
    %v9723 = vld [vmem:[#allocation9 + $0x68] sm:$0xf]
    %v9724 = vld [vmem:[#allocation9 + $0x6c] sm:$0xf]
    %v9725 = vld [vmem:[#allocation9 + $0x70] sm:$0xf]
    %v9726 = vld [vmem:[#allocation9 + $0x74] sm:$0xf]
    %v9727 = vld [vmem:[#allocation9 + $0x78] sm:$0xf]
    %v9728 = vld [vmem:[#allocation9 + $0x7c] sm:$0xf]
    %v9729 = vld [vmem:[#allocation9 + $0x80] sm:$0xf]
    %v9730 = vld [vmem:[#allocation9 + $0x84] sm:$0xf]
    %v9731 = vld [vmem:[#allocation9 + $0x88] sm:$0xf]
    %v9732 = vld [vmem:[#allocation9 + $0x8c] sm:$0xf]
    %v9733 = vld [vmem:[#allocation9 + $0x90] sm:$0xf]
    %v9734 = vld [vmem:[#allocation9 + $0x94] sm:$0xf]
    %v9735 = vld [vmem:[#allocation9 + $0x98] sm:$0xf]
    %v9736 = vld [vmem:[#allocation9 + $0x9c] sm:$0xf]
    %v9737 = vld [vmem:[#allocation9 + $0xa0] sm:$0xf]
    %v9738 = vld [vmem:[#allocation9 + $0xa4] sm:$0xf]
    %v9739 = vld [vmem:[#allocation9 + $0xa8] sm:$0xf]
    %v9740 = vld [vmem:[#allocation9 + $0xac] sm:$0xf]
    %v9741 = vld [vmem:[#allocation9 + $0xb0] sm:$0xf]
    %v9742 = vld [vmem:[#allocation9 + $0xb4] sm:$0xf]
    %v9743 = vld [vmem:[#allocation9 + $0xb8] sm:$0xf]
    %v9744 = vld [vmem:[#allocation9 + $0xbc] sm:$0xf]
    %v9873 = vunpack.c.l.b16 %v9569
    %v9874 = vunpack.c.h.b16 %v9569
    %v9875 = vunpack.c.l.b16 %v9570
    %v9876 = vunpack.c.l.b16 %v9571
    %v9877 = vunpack.c.h.b16 %v9571
    %v9878 = vunpack.c.l.b16 %v9572
    %v9879 = vunpack.c.l.b16 %v9573
    %v9880 = vunpack.c.h.b16 %v9573
    %v9881 = vunpack.c.l.b16 %v9574
    %v9882 = vunpack.c.l.b16 %v9575
    %v9883 = vunpack.c.h.b16 %v9575
    %v9884 = vunpack.c.l.b16 %v9576
    %v9885 = vunpack.c.l.b16 %v9577
    %v9886 = vunpack.c.h.b16 %v9577
    %v9887 = vunpack.c.l.b16 %v9578
    %v9888 = vunpack.c.l.b16 %v9579
    %v9889 = vunpack.c.h.b16 %v9579
    %v9890 = vunpack.c.l.b16 %v9580
    %v9891 = vunpack.c.l.b16 %v9581
    %v9892 = vunpack.c.h.b16 %v9581
    %v9893 = vunpack.c.l.b16 %v9582
    %v9894 = vunpack.c.l.b16 %v9583
    %v9895 = vunpack.c.h.b16 %v9583
    %v9896 = vunpack.c.l.b16 %v9584
    %v9897 = vunpack.c.l.b16 %v9585
    %v9898 = vunpack.c.h.b16 %v9585
    %v9899 = vunpack.c.l.b16 %v9586
    %v9900 = vunpack.c.l.b16 %v9587
    %v9901 = vunpack.c.h.b16 %v9587
    %v9902 = vunpack.c.l.b16 %v9588
    %v9903 = vunpack.c.l.b16 %v9589
    %v9904 = vunpack.c.h.b16 %v9589
    %v9905 = vunpack.c.l.b16 %v9590
    %v9906 = vunpack.c.l.b16 %v9591
    %v9907 = vunpack.c.h.b16 %v9591
    %v9908 = vunpack.c.l.b16 %v9592
    %v9909 = vunpack.c.l.b16 %v9593
    %v9910 = vunpack.c.h.b16 %v9593
    %v9911 = vunpack.c.l.b16 %v9594
    %v9912 = vunpack.c.l.b16 %v9595
    %v9913 = vunpack.c.h.b16 %v9595
    %v9914 = vunpack.c.l.b16 %v9596
    %v9915 = vunpack.c.l.b16 %v9597
    %v9916 = vunpack.c.h.b16 %v9597
    %v9917 = vunpack.c.l.b16 %v9598
    %v9918 = vunpack.c.l.b16 %v9599
    %v9919 = vunpack.c.h.b16 %v9599
    %v9920 = vunpack.c.l.b16 %v9600
    %v9921 = vunpack.c.l.b16 %v9601
    %v9922 = vunpack.c.h.b16 %v9601
    %v9923 = vunpack.c.l.b16 %v9602
    %v9924 = vunpack.c.l.b16 %v9603
    %v9925 = vunpack.c.h.b16 %v9603
    %v9926 = vunpack.c.l.b16 %v9604
    %v9927 = vunpack.c.l.b16 %v9605
    %v9928 = vunpack.c.h.b16 %v9605
    %v9929 = vunpack.c.l.b16 %v9606
    %v9930 = vunpack.c.l.b16 %v9607
    %v9931 = vunpack.c.h.b16 %v9607
    %v9932 = vunpack.c.l.b16 %v9608
    %v9933 = vunpack.c.l.b16 %v9609
    %v9934 = vunpack.c.h.b16 %v9609
    %v9935 = vunpack.c.l.b16 %v9610
    %v9936 = vunpack.c.l.b16 %v9611
    %v9937 = vunpack.c.h.b16 %v9611
    %v9938 = vunpack.c.l.b16 %v9612
    %v9939 = vunpack.c.l.b16 %v9613
    %v9940 = vunpack.c.h.b16 %v9613
    %v9941 = vunpack.c.l.b16 %v9614
    %v9942 = vunpack.c.l.b16 %v9615
    %v9943 = vunpack.c.h.b16 %v9615
    %v9944 = vunpack.c.l.b16 %v9616
    %v9945 = vunpack.c.l.b16 %v9617
    %v9946 = vunpack.c.h.b16 %v9617
    %v9947 = vunpack.c.l.b16 %v9618
    %v9948 = vunpack.c.l.b16 %v9619
    %v9949 = vunpack.c.h.b16 %v9619
    %v9950 = vunpack.c.l.b16 %v9620
    %v9951 = vunpack.c.l.b16 %v9621
    %v9952 = vunpack.c.h.b16 %v9621
    %v9953 = vunpack.c.l.b16 %v9622
    %v9954 = vunpack.c.l.b16 %v9623
    %v9955 = vunpack.c.h.b16 %v9623
    %v9956 = vunpack.c.l.b16 %v9624
    %v9957 = vunpack.c.l.b16 %v9625
    %v9958 = vunpack.c.h.b16 %v9625
    %v9959 = vunpack.c.l.b16 %v9626
    %v9960 = vunpack.c.l.b16 %v9627
    %v9961 = vunpack.c.h.b16 %v9627
    %v9962 = vunpack.c.l.b16 %v9628
    %v9963 = vunpack.c.l.b16 %v9629
    %v9964 = vunpack.c.h.b16 %v9629
    %v9965 = vunpack.c.l.b16 %v9630
    %v9966 = vunpack.c.l.b16 %v9631
    %v9967 = vunpack.c.h.b16 %v9631
    %v9968 = vunpack.c.l.b16 %v9632
    %v9969 = vunpack.c.l.b16 %v9633
    %v9970 = vunpack.c.h.b16 %v9633
    %v9971 = vunpack.c.l.b16 %v9634
    %v9972 = vunpack.c.l.b16 %v9635
    %v9973 = vunpack.c.h.b16 %v9635
    %v9974 = vunpack.c.l.b16 %v9636
    %v9975 = vunpack.c.l.b16 %v9637
    %v9976 = vunpack.c.h.b16 %v9637
    %v9977 = vunpack.c.l.b16 %v9638
    %v9978 = vunpack.c.l.b16 %v9639
    %v9979 = vunpack.c.h.b16 %v9639
    %v9980 = vunpack.c.l.b16 %v9640
    %v9981 = vunpack.c.l.b16 %v9641
    %v9982 = vunpack.c.h.b16 %v9641
    %v9983 = vunpack.c.l.b16 %v9642
    %v9984 = vunpack.c.l.b16 %v9643
    %v9985 = vunpack.c.h.b16 %v9643
    %v9986 = vunpack.c.l.b16 %v9644
    %v9987 = vunpack.c.l.b16 %v9645
    %v9988 = vunpack.c.h.b16 %v9645
    %v9989 = vunpack.c.l.b16 %v9646
    %v9990 = vunpack.c.l.b16 %v9647
    %v9991 = vunpack.c.h.b16 %v9647
    %v9992 = vunpack.c.l.b16 %v9648
    %v9993 = vunpack.c.l.b16 %v9649
    %v9994 = vunpack.c.h.b16 %v9649
    %v9995 = vunpack.c.l.b16 %v9650
    %v9996 = vunpack.c.l.b16 %v9651
    %v9997 = vunpack.c.h.b16 %v9651
    %v9998 = vunpack.c.l.b16 %v9652
    %v9999 = vunpack.c.l.b16 %v9653
    %v10000 = vunpack.c.h.b16 %v9653
    %v10001 = vunpack.c.l.b16 %v9654
    %v10002 = vunpack.c.l.b16 %v9655
    %v10003 = vunpack.c.h.b16 %v9655
    %v10004 = vunpack.c.l.b16 %v9656
    %v10005 = vunpack.c.l.b16 %v9657
    %v10006 = vunpack.c.h.b16 %v9657
    %v10007 = vunpack.c.l.b16 %v9658
    %v10008 = vunpack.c.l.b16 %v9659
    %v10009 = vunpack.c.h.b16 %v9659
    %v10010 = vunpack.c.l.b16 %v9660
    %v10011 = vunpack.c.l.b16 %v9661
    %v10012 = vunpack.c.h.b16 %v9661
    %v10013 = vunpack.c.l.b16 %v9662
    %v10014 = vunpack.c.l.b16 %v9663
    %v10015 = vunpack.c.h.b16 %v9663
    %v10016 = vunpack.c.l.b16 %v9664
    %v10017 = vunpack.c.l.b16 %v9665
    %v10018 = vunpack.c.h.b16 %v9665
    %v10019 = vunpack.c.l.b16 %v9666
    %v10020 = vunpack.c.l.b16 %v9667
    %v10021 = vunpack.c.h.b16 %v9667
    %v10022 = vunpack.c.l.b16 %v9668
    %v10023 = vunpack.c.l.b16 %v9669
    %v10024 = vunpack.c.h.b16 %v9669
    %v10025 = vunpack.c.l.b16 %v9670
    %v10026 = vunpack.c.l.b16 %v9671
    %v10027 = vunpack.c.h.b16 %v9671
    %v10028 = vunpack.c.l.b16 %v9672
    %v10029 = vunpack.c.l.b16 %v9673
    %v10030 = vunpack.c.h.b16 %v9673
    %v10031 = vunpack.c.l.b16 %v9674
    %v10032 = vunpack.c.l.b16 %v9675
    %v10033 = vunpack.c.h.b16 %v9675
    %v10034 = vunpack.c.l.b16 %v9676
    %v10035 = vunpack.c.l.b16 %v9677
    %v10036 = vunpack.c.h.b16 %v9677
    %v10037 = vunpack.c.l.b16 %v9678
    %v10038 = vunpack.c.l.b16 %v9679
    %v10039 = vunpack.c.h.b16 %v9679
    %v10040 = vunpack.c.l.b16 %v9680
    %v10041 = vunpack.c.l.b16 %v9681
    %v10042 = vunpack.c.h.b16 %v9681
    %v10043 = vunpack.c.l.b16 %v9682
    %v10044 = vunpack.c.l.b16 %v9683
    %v10045 = vunpack.c.h.b16 %v9683
    %v10046 = vunpack.c.l.b16 %v9684
    %v10047 = vunpack.c.l.b16 %v9685
    %v10048 = vunpack.c.h.b16 %v9685
    %v10049 = vunpack.c.l.b16 %v9686
    %v10050 = vunpack.c.l.b16 %v9687
    %v10051 = vunpack.c.h.b16 %v9687
    %v10052 = vunpack.c.l.b16 %v9688
    %v10053 = vunpack.c.l.b16 %v9689
    %v10054 = vunpack.c.h.b16 %v9689
    %v10055 = vunpack.c.l.b16 %v9690
    %v10056 = vunpack.c.l.b16 %v9691
    %v10057 = vunpack.c.h.b16 %v9691
    %v10058 = vunpack.c.l.b16 %v9692
    %v10059 = vunpack.c.l.b16 %v9693
    %v10060 = vunpack.c.h.b16 %v9693
    %v10061 = vunpack.c.l.b16 %v9694
    %v10062 = vunpack.c.l.b16 %v9695
    %v10063 = vunpack.c.h.b16 %v9695
    %v10064 = vunpack.c.l.b16 %v9696
    %v10065 = vpack.c.b16 %v9876, %v9873
    %v10066 = vpack.c.b16 %v9877, %v9874
    %v10067 = vpack.c.b16 %v9878, %v9875
    %v10068 = vpack.c.b16 %v9882, %v9879
    %v10069 = vpack.c.b16 %v9883, %v9880
    %v10070 = vpack.c.b16 %v9884, %v9881
    %v10071 = vpack.c.b16 %v9888, %v9885
    %v10072 = vpack.c.b16 %v9889, %v9886
    %v10073 = vpack.c.b16 %v9890, %v9887
    %v10074 = vpack.c.b16 %v9894, %v9891
    %v10075 = vpack.c.b16 %v9895, %v9892
    %v10076 = vpack.c.b16 %v9896, %v9893
    %v10077 = vpack.c.b16 %v9900, %v9897
    %v10078 = vpack.c.b16 %v9901, %v9898
    %v10079 = vpack.c.b16 %v9902, %v9899
    %v10080 = vpack.c.b16 %v9906, %v9903
    %v10081 = vpack.c.b16 %v9907, %v9904
    %v10082 = vpack.c.b16 %v9908, %v9905
    %v10083 = vpack.c.b16 %v9912, %v9909
    %v10084 = vpack.c.b16 %v9913, %v9910
    %v10085 = vpack.c.b16 %v9914, %v9911
    %v10086 = vpack.c.b16 %v9918, %v9915
    %v10087 = vpack.c.b16 %v9919, %v9916
    %v10088 = vpack.c.b16 %v9920, %v9917
    %v10089 = vpack.c.b16 %v9924, %v9921
    %v10090 = vpack.c.b16 %v9925, %v9922
    %v10091 = vpack.c.b16 %v9926, %v9923
    %v10092 = vpack.c.b16 %v9930, %v9927
    %v10093 = vpack.c.b16 %v9931, %v9928
    %v10094 = vpack.c.b16 %v9932, %v9929
    %v10095 = vpack.c.b16 %v9936, %v9933
    %v10096 = vpack.c.b16 %v9937, %v9934
    %v10097 = vpack.c.b16 %v9938, %v9935
    %v10098 = vpack.c.b16 %v9942, %v9939
    %v10099 = vpack.c.b16 %v9943, %v9940
    %v10100 = vpack.c.b16 %v9944, %v9941
    %v10101 = vpack.c.b16 %v9948, %v9945
    %v10102 = vpack.c.b16 %v9949, %v9946
    %v10103 = vpack.c.b16 %v9950, %v9947
    %v10104 = vpack.c.b16 %v9954, %v9951
    %v10105 = vpack.c.b16 %v9955, %v9952
    %v10106 = vpack.c.b16 %v9956, %v9953
    %v10107 = vpack.c.b16 %v9960, %v9957
    %v10108 = vpack.c.b16 %v9961, %v9958
    %v10109 = vpack.c.b16 %v9962, %v9959
    %v10110 = vpack.c.b16 %v9966, %v9963
    %v10111 = vpack.c.b16 %v9967, %v9964
    %v10112 = vpack.c.b16 %v9968, %v9965
    %v10113 = vpack.c.b16 %v9972, %v9969
    %v10114 = vpack.c.b16 %v9973, %v9970
    %v10115 = vpack.c.b16 %v9974, %v9971
    %v10116 = vpack.c.b16 %v9978, %v9975
    %v10117 = vpack.c.b16 %v9979, %v9976
    %v10118 = vpack.c.b16 %v9980, %v9977
    %v10119 = vpack.c.b16 %v9984, %v9981
    %v10120 = vpack.c.b16 %v9985, %v9982
    %v10121 = vpack.c.b16 %v9986, %v9983
    %v10122 = vpack.c.b16 %v9990, %v9987
    %v10123 = vpack.c.b16 %v9991, %v9988
    %v10124 = vpack.c.b16 %v9992, %v9989
    %v10125 = vpack.c.b16 %v9996, %v9993
    %v10126 = vpack.c.b16 %v9997, %v9994
    %v10127 = vpack.c.b16 %v9998, %v9995
    %v10128 = vpack.c.b16 %v10002, %v9999
    %v10129 = vpack.c.b16 %v10003, %v10000
    %v10130 = vpack.c.b16 %v10004, %v10001
    %v10131 = vpack.c.b16 %v10008, %v10005
    %v10132 = vpack.c.b16 %v10009, %v10006
    %v10133 = vpack.c.b16 %v10010, %v10007
    %v10134 = vpack.c.b16 %v10014, %v10011
    %v10135 = vpack.c.b16 %v10015, %v10012
    %v10136 = vpack.c.b16 %v10016, %v10013
    %v10137 = vpack.c.b16 %v10020, %v10017
    %v10138 = vpack.c.b16 %v10021, %v10018
    %v10139 = vpack.c.b16 %v10022, %v10019
    %v10140 = vpack.c.b16 %v10026, %v10023
    %v10141 = vpack.c.b16 %v10027, %v10024
    %v10142 = vpack.c.b16 %v10028, %v10025
    %v10143 = vpack.c.b16 %v10032, %v10029
    %v10144 = vpack.c.b16 %v10033, %v10030
    %v10145 = vpack.c.b16 %v10034, %v10031
    %v10146 = vpack.c.b16 %v10038, %v10035
    %v10147 = vpack.c.b16 %v10039, %v10036
    %v10148 = vpack.c.b16 %v10040, %v10037
    %v10149 = vpack.c.b16 %v10044, %v10041
    %v10150 = vpack.c.b16 %v10045, %v10042
    %v10151 = vpack.c.b16 %v10046, %v10043
    %v10152 = vpack.c.b16 %v10050, %v10047
    %v10153 = vpack.c.b16 %v10051, %v10048
    %v10154 = vpack.c.b16 %v10052, %v10049
    %v10155 = vpack.c.b16 %v10056, %v10053
    %v10156 = vpack.c.b16 %v10057, %v10054
    %v10157 = vpack.c.b16 %v10058, %v10055
    %v10158 = vpack.c.b16 %v10062, %v10059
    %v10159 = vpack.c.b16 %v10063, %v10060
    %v10160 = vpack.c.b16 %v10064, %v10061
    %v10305 = vunpack.c.l.b16 %v9697
    %v10306 = vunpack.c.l.b16 %v9698
    %v10307 = vunpack.c.l.b16 %v9699
    %v10308 = vunpack.c.l.b16 %v9700
    %v10309 = vunpack.c.l.b16 %v9701
    %v10310 = vunpack.c.l.b16 %v9702
    %v10311 = vunpack.c.l.b16 %v9703
    %v10312 = vunpack.c.l.b16 %v9704
    %v10313 = vunpack.c.l.b16 %v9705
    %v10314 = vunpack.c.l.b16 %v9706
    %v10315 = vunpack.c.l.b16 %v9707
    %v10316 = vunpack.c.l.b16 %v9708
    %v10317 = vunpack.c.l.b16 %v9709
    %v10318 = vunpack.c.l.b16 %v9710
    %v10319 = vunpack.c.l.b16 %v9711
    %v10320 = vunpack.c.l.b16 %v9712
    %v10321 = vunpack.c.l.b16 %v9713
    %v10322 = vunpack.c.l.b16 %v9714
    %v10323 = vunpack.c.l.b16 %v9715
    %v10324 = vunpack.c.l.b16 %v9716
    %v10325 = vunpack.c.l.b16 %v9717
    %v10326 = vunpack.c.l.b16 %v9718
    %v10327 = vunpack.c.l.b16 %v9719
    %v10328 = vunpack.c.l.b16 %v9720
    %v10329 = vunpack.c.l.b16 %v9721
    %v10330 = vunpack.c.l.b16 %v9722
    %v10331 = vunpack.c.l.b16 %v9723
    %v10332 = vunpack.c.l.b16 %v9724
    %v10333 = vunpack.c.l.b16 %v9725
    %v10334 = vunpack.c.l.b16 %v9726
    %v10335 = vunpack.c.l.b16 %v9727
    %v10336 = vunpack.c.l.b16 %v9728
    %v10337 = vunpack.c.l.b16 %v9729
    %v10338 = vunpack.c.l.b16 %v9730
    %v10339 = vunpack.c.l.b16 %v9731
    %v10340 = vunpack.c.l.b16 %v9732
    %v10341 = vunpack.c.l.b16 %v9733
    %v10342 = vunpack.c.l.b16 %v9734
    %v10343 = vunpack.c.l.b16 %v9735
    %v10344 = vunpack.c.l.b16 %v9736
    %v10345 = vunpack.c.l.b16 %v9737
    %v10346 = vunpack.c.l.b16 %v9738
    %v10347 = vunpack.c.l.b16 %v9739
    %v10348 = vunpack.c.l.b16 %v9740
    %v10349 = vunpack.c.l.b16 %v9741
    %v10350 = vunpack.c.l.b16 %v9742
    %v10351 = vunpack.c.l.b16 %v9743
    %v10352 = vunpack.c.l.b16 %v9744
    %v10353 = vpack.c.b16 %v10306, %v10305
    %v10354 = vpack.c.b16 %v10308, %v10307
    %v10355 = vpack.c.b16 %v10310, %v10309
    %v10356 = vpack.c.b16 %v10312, %v10311
    %v10357 = vpack.c.b16 %v10314, %v10313
    %v10358 = vpack.c.b16 %v10316, %v10315
    %v10359 = vpack.c.b16 %v10318, %v10317
    %v10360 = vpack.c.b16 %v10320, %v10319
    %v10361 = vpack.c.b16 %v10322, %v10321
    %v10362 = vpack.c.b16 %v10324, %v10323
    %v10363 = vpack.c.b16 %v10326, %v10325
    %v10364 = vpack.c.b16 %v10328, %v10327
    %v10365 = vpack.c.b16 %v10330, %v10329
    %v10366 = vpack.c.b16 %v10332, %v10331
    %v10367 = vpack.c.b16 %v10334, %v10333
    %v10368 = vpack.c.b16 %v10336, %v10335
    %v10369 = vpack.c.b16 %v10338, %v10337
    %v10370 = vpack.c.b16 %v10340, %v10339
    %v10371 = vpack.c.b16 %v10342, %v10341
    %v10372 = vpack.c.b16 %v10344, %v10343
    %v10373 = vpack.c.b16 %v10346, %v10345
    %v10374 = vpack.c.b16 %v10348, %v10347
    %v10375 = vpack.c.b16 %v10350, %v10349
    %v10376 = vpack.c.b16 %v10352, %v10351
    %10401 = vmatprep.subr.bf16.mxu0 0
    %10402 = vmatpush1.bf16.msra.mxu0 %v10360
    %10403 = vmatprep.subr.bf16.mxu0 0
    %10404 = vmatpush1.bf16.msra.mxu0 %v10359
    %10405 = vmatprep.subr.bf16.mxu0 0
    %10406 = vmatpush1.bf16.msra.mxu0 %v10358
    %10407 = vmatprep.subr.bf16.mxu0 0
    %10408 = vmatpush1.bf16.msra.mxu0 %v10357
    %10409 = vmatprep.subr.bf16.mxu0 0
    %10410 = vmatpush1.bf16.msra.mxu0 %v10356
    %10411 = vmatprep.subr.bf16.mxu0 0
    %10412 = vmatpush1.bf16.msra.mxu0 %v10355
    %10413 = vmatprep.subr.bf16.mxu0 0
    %10414 = vmatpush1.bf16.msra.mxu0 %v10354
    %10415 = vmatprep.subr.bf16.mxu0 0
    %10416 = vmatpush1.bf16.msra.mxu0 %v10353
    %10417 = vmatprep.subr.bf16.mxu0 0
    %10418 = vmatpush2.bf16.msra.mxu0 %v10368
    %10419 = vmatprep.subr.bf16.mxu0 0
    %10420 = vmatpush2.bf16.msra.mxu0 %v10367
    %10421 = vmatprep.subr.bf16.mxu0 0
    %10422 = vmatpush2.bf16.msra.mxu0 %v10366
    %10423 = vmatprep.subr.bf16.mxu0 0
    %10424 = vmatpush2.bf16.msra.mxu0 %v10365
    %10425 = vmatprep.subr.bf16.mxu0 0
    %10426 = vmatpush2.bf16.msra.mxu0 %v10364
    %10427 = vmatprep.subr.bf16.mxu0 0
    %10428 = vmatpush2.bf16.msra.mxu0 %v10363
    %10429 = vmatprep.subr.bf16.mxu0 0
    %10430 = vmatpush2.bf16.msra.mxu0 %v10362
    %10431 = vmatprep.subr.bf16.mxu0 0
    %10432 = vmatpush2.bf16.msra.mxu0 %v10361
    %10433 = vmatprep.mubr.bf16.mxu0 %v10066
    %10434 = vmatmul.mubr.bf16.gmra.mxu0 %v10065
    %v10435 = vpop.f32.mrf.mxu0
    %v10436 = vadd.f32 0.0, %v10435
    %v10437 = vpop.f32.mrf.mxu0
    %v10438 = vpop.f32.mrf.mxu0
    %v10439 = vadd.f32 0.0, %v10438
    %v10440 = vpop.f32.mrf.mxu0
    %10441 = vmatprep.mubr.bf16.mxu0 %v10069
    %10442 = vmatmul.mubr.bf16.gmra.mxu0 %v10068
    %v10443 = vpop.f32.mrf.mxu0
    %v10444 = vadd.f32 0.0, %v10443
    %v10445 = vpop.f32.mrf.mxu0
    %v10446 = vpop.f32.mrf.mxu0
    %v10447 = vadd.f32 0.0, %v10446
    %v10448 = vpop.f32.mrf.mxu0
    %10449 = vmatprep.mubr.bf16.mxu0 %v10072
    %10450 = vmatmul.mubr.bf16.gmra.mxu0 %v10071
    %v10451 = vpop.f32.mrf.mxu0
    %v10452 = vadd.f32 0.0, %v10451
    %v10453 = vpop.f32.mrf.mxu0
    %v10454 = vpop.f32.mrf.mxu0
    %v10455 = vadd.f32 0.0, %v10454
    %v10456 = vpop.f32.mrf.mxu0
    %10457 = vmatprep.mubr.bf16.mxu0 %v10075
    %10458 = vmatmul.mubr.bf16.gmra.mxu0 %v10074
    %v10459 = vpop.f32.mrf.mxu0
    %v10460 = vadd.f32 0.0, %v10459
    %v10461 = vpop.f32.mrf.mxu0
    %v10462 = vpop.f32.mrf.mxu0
    %v10463 = vadd.f32 0.0, %v10462
    %v10464 = vpop.f32.mrf.mxu0
    %10465 = vmatprep.mubr.bf16.mxu0 %v10078
    %10466 = vmatmul.mubr.bf16.gmra.mxu0 %v10077
    %v10467 = vpop.f32.mrf.mxu0
    %v10468 = vadd.f32 0.0, %v10467
    %v10469 = vpop.f32.mrf.mxu0
    %v10470 = vpop.f32.mrf.mxu0
    %v10471 = vadd.f32 0.0, %v10470
    %v10472 = vpop.f32.mrf.mxu0
    %10473 = vmatprep.mubr.bf16.mxu0 %v10081
    %10474 = vmatmul.mubr.bf16.gmra.mxu0 %v10080
    %v10475 = vpop.f32.mrf.mxu0
    %v10476 = vadd.f32 0.0, %v10475
    %v10477 = vpop.f32.mrf.mxu0
    %v10478 = vpop.f32.mrf.mxu0
    %v10479 = vadd.f32 0.0, %v10478
    %v10480 = vpop.f32.mrf.mxu0
    %10481 = vmatprep.mubr.bf16.mxu0 %v10084
    %10482 = vmatmul.mubr.bf16.gmra.mxu0 %v10083
    %v10483 = vpop.f32.mrf.mxu0
    %v10484 = vadd.f32 0.0, %v10483
    %v10485 = vpop.f32.mrf.mxu0
    %v10486 = vpop.f32.mrf.mxu0
    %v10487 = vadd.f32 0.0, %v10486
    %v10488 = vpop.f32.mrf.mxu0
    %10489 = vmatprep.mubr.bf16.mxu0 %v10087
    %10490 = vmatmul.mubr.bf16.gmra.mxu0 %v10086
    %v10491 = vpop.f32.mrf.mxu0
    %v10492 = vadd.f32 0.0, %v10491
    %v10493 = vpop.f32.mrf.mxu0
    %v10494 = vpop.f32.mrf.mxu0
    %v10495 = vadd.f32 0.0, %v10494
    %v10496 = vpop.f32.mrf.mxu0
    %10497 = vmatprep.mubr.bf16.mxu0 %v10090
    %10498 = vmatmul.mubr.bf16.gmra.mxu0 %v10089
    %v10499 = vpop.f32.mrf.mxu0
    %v10500 = vadd.f32 0.0, %v10499
    %v10501 = vpop.f32.mrf.mxu0
    %v10502 = vpop.f32.mrf.mxu0
    %v10503 = vadd.f32 0.0, %v10502
    %v10504 = vpop.f32.mrf.mxu0
    %10505 = vmatprep.mubr.bf16.mxu0 %v10093
    %10506 = vmatmul.mubr.bf16.gmra.mxu0 %v10092
    %v10507 = vpop.f32.mrf.mxu0
    %v10508 = vadd.f32 0.0, %v10507
    %v10509 = vpop.f32.mrf.mxu0
    %v10510 = vpop.f32.mrf.mxu0
    %v10511 = vadd.f32 0.0, %v10510
    %v10512 = vpop.f32.mrf.mxu0
    %10513 = vmatprep.mubr.bf16.mxu0 %v10096
    %10514 = vmatmul.mubr.bf16.gmra.mxu0 %v10095
    %v10515 = vpop.f32.mrf.mxu0
    %v10516 = vadd.f32 0.0, %v10515
    %v10517 = vpop.f32.mrf.mxu0
    %v10518 = vpop.f32.mrf.mxu0
    %v10519 = vadd.f32 0.0, %v10518
    %v10520 = vpop.f32.mrf.mxu0
    %10521 = vmatprep.mubr.bf16.mxu0 %v10099
    %10522 = vmatmul.mubr.bf16.gmra.mxu0 %v10098
    %v10523 = vpop.f32.mrf.mxu0
    %v10524 = vadd.f32 0.0, %v10523
    %v10525 = vpop.f32.mrf.mxu0
    %v10526 = vpop.f32.mrf.mxu0
    %v10527 = vadd.f32 0.0, %v10526
    %v10528 = vpop.f32.mrf.mxu0
    %10529 = vmatprep.mubr.bf16.mxu0 %v10102
    %10530 = vmatmul.mubr.bf16.gmra.mxu0 %v10101
    %v10531 = vpop.f32.mrf.mxu0
    %v10532 = vadd.f32 0.0, %v10531
    %v10533 = vpop.f32.mrf.mxu0
    %v10534 = vpop.f32.mrf.mxu0
    %v10535 = vadd.f32 0.0, %v10534
    %v10536 = vpop.f32.mrf.mxu0
    %10537 = vmatprep.mubr.bf16.mxu0 %v10105
    %10538 = vmatmul.mubr.bf16.gmra.mxu0 %v10104
    %v10539 = vpop.f32.mrf.mxu0
    %v10540 = vadd.f32 0.0, %v10539
    %v10541 = vpop.f32.mrf.mxu0
    %v10542 = vpop.f32.mrf.mxu0
    %v10543 = vadd.f32 0.0, %v10542
    %v10544 = vpop.f32.mrf.mxu0
    %10545 = vmatprep.mubr.bf16.mxu0 %v10108
    %10546 = vmatmul.mubr.bf16.gmra.mxu0 %v10107
    %v10547 = vpop.f32.mrf.mxu0
    %v10548 = vadd.f32 0.0, %v10547
    %v10549 = vpop.f32.mrf.mxu0
    %v10550 = vpop.f32.mrf.mxu0
    %v10551 = vadd.f32 0.0, %v10550
    %v10552 = vpop.f32.mrf.mxu0
    %10553 = vmatprep.mubr.bf16.mxu0 %v10111
    %10554 = vmatmul.mubr.bf16.gmra.mxu0 %v10110
    %v10555 = vpop.f32.mrf.mxu0
    %v10556 = vadd.f32 0.0, %v10555
    %v10557 = vpop.f32.mrf.mxu0
    %v10558 = vpop.f32.mrf.mxu0
    %v10559 = vadd.f32 0.0, %v10558
    %v10560 = vpop.f32.mrf.mxu0
    %10561 = vmatprep.mubr.bf16.mxu0 %v10114
    %10562 = vmatmul.mubr.bf16.gmra.mxu0 %v10113
    %v10563 = vpop.f32.mrf.mxu0
    %v10564 = vadd.f32 0.0, %v10563
    %v10565 = vpop.f32.mrf.mxu0
    %v10566 = vpop.f32.mrf.mxu0
    %v10567 = vadd.f32 0.0, %v10566
    %v10568 = vpop.f32.mrf.mxu0
    %10569 = vmatprep.mubr.bf16.mxu0 %v10117
    %10570 = vmatmul.mubr.bf16.gmra.mxu0 %v10116
    %v10571 = vpop.f32.mrf.mxu0
    %v10572 = vadd.f32 0.0, %v10571
    %v10573 = vpop.f32.mrf.mxu0
    %v10574 = vpop.f32.mrf.mxu0
    %v10575 = vadd.f32 0.0, %v10574
    %v10576 = vpop.f32.mrf.mxu0
    %10577 = vmatprep.mubr.bf16.mxu0 %v10120
    %10578 = vmatmul.mubr.bf16.gmra.mxu0 %v10119
    %v10579 = vpop.f32.mrf.mxu0
    %v10580 = vadd.f32 0.0, %v10579
    %v10581 = vpop.f32.mrf.mxu0
    %v10582 = vpop.f32.mrf.mxu0
    %v10583 = vadd.f32 0.0, %v10582
    %v10584 = vpop.f32.mrf.mxu0
    %10585 = vmatprep.mubr.bf16.mxu0 %v10123
    %10586 = vmatmul.mubr.bf16.gmra.mxu0 %v10122
    %v10587 = vpop.f32.mrf.mxu0
    %v10588 = vadd.f32 0.0, %v10587
    %v10589 = vpop.f32.mrf.mxu0
    %v10590 = vpop.f32.mrf.mxu0
    %v10591 = vadd.f32 0.0, %v10590
    %v10592 = vpop.f32.mrf.mxu0
    %10593 = vmatprep.mubr.bf16.mxu0 %v10126
    %10594 = vmatmul.mubr.bf16.gmra.mxu0 %v10125
    %v10595 = vpop.f32.mrf.mxu0
    %v10596 = vadd.f32 0.0, %v10595
    %v10597 = vpop.f32.mrf.mxu0
    %v10598 = vpop.f32.mrf.mxu0
    %v10599 = vadd.f32 0.0, %v10598
    %v10600 = vpop.f32.mrf.mxu0
    %10601 = vmatprep.mubr.bf16.mxu0 %v10129
    %10602 = vmatmul.mubr.bf16.gmra.mxu0 %v10128
    %v10603 = vpop.f32.mrf.mxu0
    %v10604 = vadd.f32 0.0, %v10603
    %v10605 = vpop.f32.mrf.mxu0
    %v10606 = vpop.f32.mrf.mxu0
    %v10607 = vadd.f32 0.0, %v10606
    %v10608 = vpop.f32.mrf.mxu0
    %10609 = vmatprep.mubr.bf16.mxu0 %v10132
    %10610 = vmatmul.mubr.bf16.gmra.mxu0 %v10131
    %v10611 = vpop.f32.mrf.mxu0
    %v10612 = vadd.f32 0.0, %v10611
    %v10613 = vpop.f32.mrf.mxu0
    %v10614 = vpop.f32.mrf.mxu0
    %v10615 = vadd.f32 0.0, %v10614
    %v10616 = vpop.f32.mrf.mxu0
    %10617 = vmatprep.mubr.bf16.mxu0 %v10135
    %10618 = vmatmul.mubr.bf16.gmra.mxu0 %v10134
    %v10619 = vpop.f32.mrf.mxu0
    %v10620 = vadd.f32 0.0, %v10619
    %v10621 = vpop.f32.mrf.mxu0
    %v10622 = vpop.f32.mrf.mxu0
    %v10623 = vadd.f32 0.0, %v10622
    %v10624 = vpop.f32.mrf.mxu0
    %10625 = vmatprep.mubr.bf16.mxu0 %v10138
    %10626 = vmatmul.mubr.bf16.gmra.mxu0 %v10137
    %v10627 = vpop.f32.mrf.mxu0
    %v10628 = vadd.f32 0.0, %v10627
    %v10629 = vpop.f32.mrf.mxu0
    %v10630 = vpop.f32.mrf.mxu0
    %v10631 = vadd.f32 0.0, %v10630
    %v10632 = vpop.f32.mrf.mxu0
    %10633 = vmatprep.mubr.bf16.mxu0 %v10141
    %10634 = vmatmul.mubr.bf16.gmra.mxu0 %v10140
    %v10635 = vpop.f32.mrf.mxu0
    %v10636 = vadd.f32 0.0, %v10635
    %v10637 = vpop.f32.mrf.mxu0
    %v10638 = vpop.f32.mrf.mxu0
    %v10639 = vadd.f32 0.0, %v10638
    %v10640 = vpop.f32.mrf.mxu0
    %10641 = vmatprep.mubr.bf16.mxu0 %v10144
    %10642 = vmatmul.mubr.bf16.gmra.mxu0 %v10143
    %v10643 = vpop.f32.mrf.mxu0
    %v10644 = vadd.f32 0.0, %v10643
    %v10645 = vpop.f32.mrf.mxu0
    %v10646 = vpop.f32.mrf.mxu0
    %v10647 = vadd.f32 0.0, %v10646
    %v10648 = vpop.f32.mrf.mxu0
    %10649 = vmatprep.mubr.bf16.mxu0 %v10147
    %10650 = vmatmul.mubr.bf16.gmra.mxu0 %v10146
    %v10651 = vpop.f32.mrf.mxu0
    %v10652 = vadd.f32 0.0, %v10651
    %v10653 = vpop.f32.mrf.mxu0
    %v10654 = vpop.f32.mrf.mxu0
    %v10655 = vadd.f32 0.0, %v10654
    %v10656 = vpop.f32.mrf.mxu0
    %10657 = vmatprep.mubr.bf16.mxu0 %v10150
    %10658 = vmatmul.mubr.bf16.gmra.mxu0 %v10149
    %v10659 = vpop.f32.mrf.mxu0
    %v10660 = vadd.f32 0.0, %v10659
    %v10661 = vpop.f32.mrf.mxu0
    %v10662 = vpop.f32.mrf.mxu0
    %v10663 = vadd.f32 0.0, %v10662
    %v10664 = vpop.f32.mrf.mxu0
    %10665 = vmatprep.mubr.bf16.mxu0 %v10153
    %10666 = vmatmul.mubr.bf16.gmra.mxu0 %v10152
    %v10667 = vpop.f32.mrf.mxu0
    %v10668 = vadd.f32 0.0, %v10667
    %v10669 = vpop.f32.mrf.mxu0
    %v10670 = vpop.f32.mrf.mxu0
    %v10671 = vadd.f32 0.0, %v10670
    %v10672 = vpop.f32.mrf.mxu0
    %10673 = vmatprep.mubr.bf16.mxu0 %v10156
    %10674 = vmatmul.mubr.bf16.gmra.mxu0 %v10155
    %v10675 = vpop.f32.mrf.mxu0
    %v10676 = vadd.f32 0.0, %v10675
    %v10677 = vpop.f32.mrf.mxu0
    %v10678 = vpop.f32.mrf.mxu0
    %v10679 = vadd.f32 0.0, %v10678
    %v10680 = vpop.f32.mrf.mxu0
    %10681 = vmatprep.mubr.bf16.mxu0 %v10159
    %10682 = vmatmul.mubr.bf16.gmra.mxu0 %v10158
    %v10683 = vpop.f32.mrf.mxu0
    %v10684 = vadd.f32 0.0, %v10683
    %v10685 = vpop.f32.mrf.mxu0
    %v10686 = vpop.f32.mrf.mxu0
    %v10687 = vadd.f32 0.0, %v10686
    %v10688 = vpop.f32.mrf.mxu0
    %10689 = vdwg.mxu0
    %10690 = vmatprep.subr.bf16.mxu0 0
    %10691 = vmatpush1.bf16.msra.mxu0 %v10376
    %10692 = vmatprep.subr.bf16.mxu0 0
    %10693 = vmatpush1.bf16.msra.mxu0 %v10375
    %10694 = vmatprep.subr.bf16.mxu0 0
    %10695 = vmatpush1.bf16.msra.mxu0 %v10374
    %10696 = vmatprep.subr.bf16.mxu0 0
    %10697 = vmatpush1.bf16.msra.mxu0 %v10373
    %10698 = vmatprep.subr.bf16.mxu0 0
    %10699 = vmatpush1.bf16.msra.mxu0 %v10372
    %10700 = vmatprep.subr.bf16.mxu0 0
    %10701 = vmatpush1.bf16.msra.mxu0 %v10371
    %10702 = vmatprep.subr.bf16.mxu0 0
    %10703 = vmatpush1.bf16.msra.mxu0 %v10370
    %10704 = vmatprep.subr.bf16.mxu0 0
    %10705 = vmatpush1.bf16.msra.mxu0 %v10369
    %10706 = vmatprep.subr.bf16.mxu0 0
    %10707 = vmatpush2.bf16.msra.mxu0 0
    %10708 = vmatprep.subr.bf16.mxu0 0
    %10709 = vmatpush2.bf16.msra.mxu0 0
    %10710 = vmatprep.subr.bf16.mxu0 0
    %10711 = vmatpush2.bf16.msra.mxu0 0
    %10712 = vmatprep.subr.bf16.mxu0 0
    %10713 = vmatpush2.bf16.msra.mxu0 0
    %10714 = vmatprep.subr.bf16.mxu0 0
    %10715 = vmatpush2.bf16.msra.mxu0 0
    %10716 = vmatprep.subr.bf16.mxu0 0
    %10717 = vmatpush2.bf16.msra.mxu0 0
    %10718 = vmatprep.subr.bf16.mxu0 0
    %10719 = vmatpush2.bf16.msra.mxu0 0
    %10720 = vmatprep.subr.bf16.mxu0 0
    %10721 = vmatpush2.bf16.msra.mxu0 0
    %10722 = vmatprep.mubr.bf16.mxu0 0
    %10723 = vmatmul.mubr.bf16.gmra.mxu0 %v10067
    %v10724 = vpop.f32.mrf.mxu0
    %v10725 = vadd.f32 %v10436, %v10724
    %v10726 = vpop.f32.mrf.mxu0
    %v10727 = vpop.f32.mrf.mxu0
    %v10728 = vadd.f32 %v10439, %v10727
    %v10729 = vpop.f32.mrf.mxu0
    %10730 = vmatprep.mubr.bf16.mxu0 0
    %10731 = vmatmul.mubr.bf16.gmra.mxu0 %v10070
    %v10732 = vpop.f32.mrf.mxu0
    %v10733 = vadd.f32 %v10444, %v10732
    %v10734 = vpop.f32.mrf.mxu0
    %v10735 = vpop.f32.mrf.mxu0
    %v10736 = vadd.f32 %v10447, %v10735
    %v10737 = vpop.f32.mrf.mxu0
    %10738 = vmatprep.mubr.bf16.mxu0 0
    %10739 = vmatmul.mubr.bf16.gmra.mxu0 %v10073
    %v10740 = vpop.f32.mrf.mxu0
    %v10741 = vadd.f32 %v10452, %v10740
    %v10742 = vpop.f32.mrf.mxu0
    %v10743 = vpop.f32.mrf.mxu0
    %v10744 = vadd.f32 %v10455, %v10743
    %v10745 = vpop.f32.mrf.mxu0
    %10746 = vmatprep.mubr.bf16.mxu0 0
    %10747 = vmatmul.mubr.bf16.gmra.mxu0 %v10076
    %v10748 = vpop.f32.mrf.mxu0
    %v10749 = vadd.f32 %v10460, %v10748
    %v10750 = vpop.f32.mrf.mxu0
    %v10751 = vpop.f32.mrf.mxu0
    %v10752 = vadd.f32 %v10463, %v10751
    %v10753 = vpop.f32.mrf.mxu0
    %10754 = vmatprep.mubr.bf16.mxu0 0
    %10755 = vmatmul.mubr.bf16.gmra.mxu0 %v10079
    %v10756 = vpop.f32.mrf.mxu0
    %v10757 = vadd.f32 %v10468, %v10756
    %v10758 = vpop.f32.mrf.mxu0
    %v10759 = vpop.f32.mrf.mxu0
    %v10760 = vadd.f32 %v10471, %v10759
    %v10761 = vpop.f32.mrf.mxu0
    %10762 = vmatprep.mubr.bf16.mxu0 0
    %10763 = vmatmul.mubr.bf16.gmra.mxu0 %v10082
    %v10764 = vpop.f32.mrf.mxu0
    %v10765 = vadd.f32 %v10476, %v10764
    %v10766 = vpop.f32.mrf.mxu0
    %v10767 = vpop.f32.mrf.mxu0
    %v10768 = vadd.f32 %v10479, %v10767
    %v10769 = vpop.f32.mrf.mxu0
    %10770 = vmatprep.mubr.bf16.mxu0 0
    %10771 = vmatmul.mubr.bf16.gmra.mxu0 %v10085
    %v10772 = vpop.f32.mrf.mxu0
    %v10773 = vadd.f32 %v10484, %v10772
    %v10774 = vpop.f32.mrf.mxu0
    %v10775 = vpop.f32.mrf.mxu0
    %v10776 = vadd.f32 %v10487, %v10775
    %v10777 = vpop.f32.mrf.mxu0
    %10778 = vmatprep.mubr.bf16.mxu0 0
    %10779 = vmatmul.mubr.bf16.gmra.mxu0 %v10088
    %v10780 = vpop.f32.mrf.mxu0
    %v10781 = vadd.f32 %v10492, %v10780
    %v10782 = vpop.f32.mrf.mxu0
    %v10783 = vpop.f32.mrf.mxu0
    %v10784 = vadd.f32 %v10495, %v10783
    %v10785 = vpop.f32.mrf.mxu0
    %10786 = vmatprep.mubr.bf16.mxu0 0
    %10787 = vmatmul.mubr.bf16.gmra.mxu0 %v10091
    %v10788 = vpop.f32.mrf.mxu0
    %v10789 = vadd.f32 %v10500, %v10788
    %v10790 = vpop.f32.mrf.mxu0
    %v10791 = vpop.f32.mrf.mxu0
    %v10792 = vadd.f32 %v10503, %v10791
    %v10793 = vpop.f32.mrf.mxu0
    %10794 = vmatprep.mubr.bf16.mxu0 0
    %10795 = vmatmul.mubr.bf16.gmra.mxu0 %v10094
    %v10796 = vpop.f32.mrf.mxu0
    %v10797 = vadd.f32 %v10508, %v10796
    %v10798 = vpop.f32.mrf.mxu0
    %v10799 = vpop.f32.mrf.mxu0
    %v10800 = vadd.f32 %v10511, %v10799
    %v10801 = vpop.f32.mrf.mxu0
    %10802 = vmatprep.mubr.bf16.mxu0 0
    %10803 = vmatmul.mubr.bf16.gmra.mxu0 %v10097
    %v10804 = vpop.f32.mrf.mxu0
    %v10805 = vadd.f32 %v10516, %v10804
    %v10806 = vpop.f32.mrf.mxu0
    %v10807 = vpop.f32.mrf.mxu0
    %v10808 = vadd.f32 %v10519, %v10807
    %v10809 = vpop.f32.mrf.mxu0
    %10810 = vmatprep.mubr.bf16.mxu0 0
    %10811 = vmatmul.mubr.bf16.gmra.mxu0 %v10100
    %v10812 = vpop.f32.mrf.mxu0
    %v10813 = vadd.f32 %v10524, %v10812
    %v10814 = vpop.f32.mrf.mxu0
    %v10815 = vpop.f32.mrf.mxu0
    %v10816 = vadd.f32 %v10527, %v10815
    %v10817 = vpop.f32.mrf.mxu0
    %10818 = vmatprep.mubr.bf16.mxu0 0
    %10819 = vmatmul.mubr.bf16.gmra.mxu0 %v10103
    %v10820 = vpop.f32.mrf.mxu0
    %v10821 = vadd.f32 %v10532, %v10820
    %v10822 = vpop.f32.mrf.mxu0
    %v10823 = vpop.f32.mrf.mxu0
    %v10824 = vadd.f32 %v10535, %v10823
    %v10825 = vpop.f32.mrf.mxu0
    %10826 = vmatprep.mubr.bf16.mxu0 0
    %10827 = vmatmul.mubr.bf16.gmra.mxu0 %v10106
    %v10828 = vpop.f32.mrf.mxu0
    %v10829 = vadd.f32 %v10540, %v10828
    %v10830 = vpop.f32.mrf.mxu0
    %v10831 = vpop.f32.mrf.mxu0
    %v10832 = vadd.f32 %v10543, %v10831
    %v10833 = vpop.f32.mrf.mxu0
    %10834 = vmatprep.mubr.bf16.mxu0 0
    %10835 = vmatmul.mubr.bf16.gmra.mxu0 %v10109
    %v10836 = vpop.f32.mrf.mxu0
    %v10837 = vadd.f32 %v10548, %v10836
    %v10838 = vpop.f32.mrf.mxu0
    %v10839 = vpop.f32.mrf.mxu0
    %v10840 = vadd.f32 %v10551, %v10839
    %v10841 = vpop.f32.mrf.mxu0
    %10842 = vmatprep.mubr.bf16.mxu0 0
    %10843 = vmatmul.mubr.bf16.gmra.mxu0 %v10112
    %v10844 = vpop.f32.mrf.mxu0
    %v10845 = vadd.f32 %v10556, %v10844
    %v10846 = vpop.f32.mrf.mxu0
    %v10847 = vpop.f32.mrf.mxu0
    %v10848 = vadd.f32 %v10559, %v10847
    %v10849 = vpop.f32.mrf.mxu0
    %10850 = vmatprep.mubr.bf16.mxu0 0
    %10851 = vmatmul.mubr.bf16.gmra.mxu0 %v10115
    %v10852 = vpop.f32.mrf.mxu0
    %v10853 = vadd.f32 %v10564, %v10852
    %v10854 = vpop.f32.mrf.mxu0
    %v10855 = vpop.f32.mrf.mxu0
    %v10856 = vadd.f32 %v10567, %v10855
    %v10857 = vpop.f32.mrf.mxu0
    %10858 = vmatprep.mubr.bf16.mxu0 0
    %10859 = vmatmul.mubr.bf16.gmra.mxu0 %v10118
    %v10860 = vpop.f32.mrf.mxu0
    %v10861 = vadd.f32 %v10572, %v10860
    %v10862 = vpop.f32.mrf.mxu0
    %v10863 = vpop.f32.mrf.mxu0
    %v10864 = vadd.f32 %v10575, %v10863
    %v10865 = vpop.f32.mrf.mxu0
    %10866 = vmatprep.mubr.bf16.mxu0 0
    %10867 = vmatmul.mubr.bf16.gmra.mxu0 %v10121
    %v10868 = vpop.f32.mrf.mxu0
    %v10869 = vadd.f32 %v10580, %v10868
    %v10870 = vpop.f32.mrf.mxu0
    %v10871 = vpop.f32.mrf.mxu0
    %v10872 = vadd.f32 %v10583, %v10871
    %v10873 = vpop.f32.mrf.mxu0
    %10874 = vmatprep.mubr.bf16.mxu0 0
    %10875 = vmatmul.mubr.bf16.gmra.mxu0 %v10124
    %v10876 = vpop.f32.mrf.mxu0
    %v10877 = vadd.f32 %v10588, %v10876
    %v10878 = vpop.f32.mrf.mxu0
    %v10879 = vpop.f32.mrf.mxu0
    %v10880 = vadd.f32 %v10591, %v10879
    %v10881 = vpop.f32.mrf.mxu0
    %10882 = vmatprep.mubr.bf16.mxu0 0
    %10883 = vmatmul.mubr.bf16.gmra.mxu0 %v10127
    %v10884 = vpop.f32.mrf.mxu0
    %v10885 = vadd.f32 %v10596, %v10884
    %v10886 = vpop.f32.mrf.mxu0
    %v10887 = vpop.f32.mrf.mxu0
    %v10888 = vadd.f32 %v10599, %v10887
    %v10889 = vpop.f32.mrf.mxu0
    %10890 = vmatprep.mubr.bf16.mxu0 0
    %10891 = vmatmul.mubr.bf16.gmra.mxu0 %v10130
    %v10892 = vpop.f32.mrf.mxu0
    %v10893 = vadd.f32 %v10604, %v10892
    %v10894 = vpop.f32.mrf.mxu0
    %v10895 = vpop.f32.mrf.mxu0
    %v10896 = vadd.f32 %v10607, %v10895
    %v10897 = vpop.f32.mrf.mxu0
    %10898 = vmatprep.mubr.bf16.mxu0 0
    %10899 = vmatmul.mubr.bf16.gmra.mxu0 %v10133
    %v10900 = vpop.f32.mrf.mxu0
    %v10901 = vadd.f32 %v10612, %v10900
    %v10902 = vpop.f32.mrf.mxu0
    %v10903 = vpop.f32.mrf.mxu0
    %v10904 = vadd.f32 %v10615, %v10903
    %v10905 = vpop.f32.mrf.mxu0
    %10906 = vmatprep.mubr.bf16.mxu0 0
    %10907 = vmatmul.mubr.bf16.gmra.mxu0 %v10136
    %v10908 = vpop.f32.mrf.mxu0
    %v10909 = vadd.f32 %v10620, %v10908
    %v10910 = vpop.f32.mrf.mxu0
    %v10911 = vpop.f32.mrf.mxu0
    %v10912 = vadd.f32 %v10623, %v10911
    %v10913 = vpop.f32.mrf.mxu0
    %10914 = vmatprep.mubr.bf16.mxu0 0
    %10915 = vmatmul.mubr.bf16.gmra.mxu0 %v10139
    %v10916 = vpop.f32.mrf.mxu0
    %v10917 = vadd.f32 %v10628, %v10916
    %v10918 = vpop.f32.mrf.mxu0
    %v10919 = vpop.f32.mrf.mxu0
    %v10920 = vadd.f32 %v10631, %v10919
    %v10921 = vpop.f32.mrf.mxu0
    %10922 = vmatprep.mubr.bf16.mxu0 0
    %10923 = vmatmul.mubr.bf16.gmra.mxu0 %v10142
    %v10924 = vpop.f32.mrf.mxu0
    %v10925 = vadd.f32 %v10636, %v10924
    %v10926 = vpop.f32.mrf.mxu0
    %v10927 = vpop.f32.mrf.mxu0
    %v10928 = vadd.f32 %v10639, %v10927
    %v10929 = vpop.f32.mrf.mxu0
    %10930 = vmatprep.mubr.bf16.mxu0 0
    %10931 = vmatmul.mubr.bf16.gmra.mxu0 %v10145
    %v10932 = vpop.f32.mrf.mxu0
    %v10933 = vadd.f32 %v10644, %v10932
    %v10934 = vpop.f32.mrf.mxu0
    %v10935 = vpop.f32.mrf.mxu0
    %v10936 = vadd.f32 %v10647, %v10935
    %v10937 = vpop.f32.mrf.mxu0
    %10938 = vmatprep.mubr.bf16.mxu0 0
    %10939 = vmatmul.mubr.bf16.gmra.mxu0 %v10148
    %v10940 = vpop.f32.mrf.mxu0
    %v10941 = vadd.f32 %v10652, %v10940
    %v10942 = vpop.f32.mrf.mxu0
    %v10943 = vpop.f32.mrf.mxu0
    %v10944 = vadd.f32 %v10655, %v10943
    %v10945 = vpop.f32.mrf.mxu0
    %10946 = vmatprep.mubr.bf16.mxu0 0
    %10947 = vmatmul.mubr.bf16.gmra.mxu0 %v10151
    %v10948 = vpop.f32.mrf.mxu0
    %v10949 = vadd.f32 %v10660, %v10948
    %v10950 = vpop.f32.mrf.mxu0
    %v10951 = vpop.f32.mrf.mxu0
    %v10952 = vadd.f32 %v10663, %v10951
    %v10953 = vpop.f32.mrf.mxu0
    %10954 = vmatprep.mubr.bf16.mxu0 0
    %10955 = vmatmul.mubr.bf16.gmra.mxu0 %v10154
    %v10956 = vpop.f32.mrf.mxu0
    %v10957 = vadd.f32 %v10668, %v10956
    %v10958 = vpop.f32.mrf.mxu0
    %v10959 = vpop.f32.mrf.mxu0
    %v10960 = vadd.f32 %v10671, %v10959
    %v10961 = vpop.f32.mrf.mxu0
    %10962 = vmatprep.mubr.bf16.mxu0 0
    %10963 = vmatmul.mubr.bf16.gmra.mxu0 %v10157
    %v10964 = vpop.f32.mrf.mxu0
    %v10965 = vadd.f32 %v10676, %v10964
    %v10966 = vpop.f32.mrf.mxu0
    %v10967 = vpop.f32.mrf.mxu0
    %v10968 = vadd.f32 %v10679, %v10967
    %v10969 = vpop.f32.mrf.mxu0
    %10970 = vmatprep.mubr.bf16.mxu0 0
    %10971 = vmatmul.mubr.bf16.gmra.mxu0 %v10160
    %v10972 = vpop.f32.mrf.mxu0
    %v10973 = vadd.f32 %v10684, %v10972
    %v10974 = vpop.f32.mrf.mxu0
    %v10975 = vpop.f32.mrf.mxu0
    %v10976 = vadd.f32 %v10687, %v10975
    %v10977 = vpop.f32.mrf.mxu0
    %10978 = vdwg.mxu0
    %v10979 = vadd.f32 %v10725, %v10728
    %v10980 = vadd.f32 %v10979, %v10733
    %v10981 = vadd.f32 %v10980, %v10736
    %v10982 = vadd.f32 %v10981, %v10741
    %v10983 = vadd.f32 %v10982, %v10744
    %v10984 = vadd.f32 %v10983, %v10749
    %v10985 = vadd.f32 %v10984, %v10752
    %v10986 = vadd.f32 %v10985, %v10757
    %v10987 = vadd.f32 %v10986, %v10760
    %v10988 = vadd.f32 %v10987, %v10765
    %v10989 = vadd.f32 %v10988, %v10768
    %v10990 = vadd.f32 %v10989, %v10773
    %v10991 = vadd.f32 %v10990, %v10776
    %v10992 = vadd.f32 %v10991, %v10781
    %v10993 = vadd.f32 %v10992, %v10784
    %v10994 = vadd.f32 %v10993, %v10789
    %v10995 = vadd.f32 %v10994, %v10792
    %v10996 = vadd.f32 %v10995, %v10797
    %v10997 = vadd.f32 %v10996, %v10800
    %v10998 = vadd.f32 %v10997, %v10805
    %v10999 = vadd.f32 %v10998, %v10808
    %v11000 = vadd.f32 %v10999, %v10813
    %v11001 = vadd.f32 %v11000, %v10816
    %v11002 = vadd.f32 %v11001, %v10821
    %v11003 = vadd.f32 %v11002, %v10824
    %v11004 = vadd.f32 %v11003, %v10829
    %v11005 = vadd.f32 %v11004, %v10832
    %v11006 = vadd.f32 %v11005, %v10837
    %v11007 = vadd.f32 %v11006, %v10840
    %v11008 = vadd.f32 %v11007, %v10845
    %v11009 = vadd.f32 %v11008, %v10848
    %v11010 = vadd.f32 %v11009, %v10853
    %v11011 = vadd.f32 %v11010, %v10856
    %v11012 = vadd.f32 %v11011, %v10861
    %v11013 = vadd.f32 %v11012, %v10864
    %v11014 = vadd.f32 %v11013, %v10869
    %v11015 = vadd.f32 %v11014, %v10872
    %v11016 = vadd.f32 %v11015, %v10877
    %v11017 = vadd.f32 %v11016, %v10880
    %v11018 = vadd.f32 %v11017, %v10885
    %v11019 = vadd.f32 %v11018, %v10888
    %v11020 = vadd.f32 %v11019, %v10893
    %v11021 = vadd.f32 %v11020, %v10896
    %v11022 = vadd.f32 %v11021, %v10901
    %v11023 = vadd.f32 %v11022, %v10904
    %v11024 = vadd.f32 %v11023, %v10909
    %v11025 = vadd.f32 %v11024, %v10912
    %v11026 = vadd.f32 %v11025, %v10917
    %v11027 = vadd.f32 %v11026, %v10920
    %v11028 = vadd.f32 %v11027, %v10925
    %v11029 = vadd.f32 %v11028, %v10928
    %v11030 = vadd.f32 %v11029, %v10933
    %v11031 = vadd.f32 %v11030, %v10936
    %v11032 = vadd.f32 %v11031, %v10941
    %v11033 = vadd.f32 %v11032, %v10944
    %v11034 = vadd.f32 %v11033, %v10949
    %v11035 = vadd.f32 %v11034, %v10952
    %v11036 = vadd.f32 %v11035, %v10957
    %v11037 = vadd.f32 %v11036, %v10960
    %v11038 = vadd.f32 %v11037, %v10965
    %v11039 = vadd.f32 %v11038, %v10968
    %v11040 = vadd.f32 %v11039, %v10973
    %v11041 = vadd.f32 %v11040, %v10976
    %v11042 = vrot.slane %v11041, 4
    %v11043 = vadd.f32 %v11041, %v11042
    %v11044 = vrot.slane %v11043, 2
    %v11045 = vadd.f32 %v11043, %v11044
    %v11046 = vrot.slane %v11045, 1
    %v11047 = vadd.f32 %v11045, %v11046
    %v11048 = vmul.f32 %v11047, 0.001953125
    %v11049 = vsub.f32 %v10725, %v11048
    %v11050 = vsub.f32 %v10728, %v11048
    %v11051 = vsub.f32 %v10733, %v11048
    %v11052 = vsub.f32 %v10736, %v11048
    %v11053 = vsub.f32 %v10741, %v11048
    %v11054 = vsub.f32 %v10744, %v11048
    %v11055 = vsub.f32 %v10749, %v11048
    %v11056 = vsub.f32 %v10752, %v11048
    %v11057 = vsub.f32 %v10757, %v11048
    %v11058 = vsub.f32 %v10760, %v11048
    %v11059 = vsub.f32 %v10765, %v11048
    %v11060 = vsub.f32 %v10768, %v11048
    %v11061 = vsub.f32 %v10773, %v11048
    %v11062 = vsub.f32 %v10776, %v11048
    %v11063 = vsub.f32 %v10781, %v11048
    %v11064 = vsub.f32 %v10784, %v11048
    %v11065 = vsub.f32 %v10789, %v11048
    %v11066 = vsub.f32 %v10792, %v11048
    %v11067 = vsub.f32 %v10797, %v11048
    %v11068 = vsub.f32 %v10800, %v11048
    %v11069 = vsub.f32 %v10805, %v11048
    %v11070 = vsub.f32 %v10808, %v11048
    %v11071 = vsub.f32 %v10813, %v11048
    %v11072 = vsub.f32 %v10816, %v11048
    %v11073 = vsub.f32 %v10821, %v11048
    %v11074 = vsub.f32 %v10824, %v11048
    %v11075 = vsub.f32 %v10829, %v11048
    %v11076 = vsub.f32 %v10832, %v11048
    %v11077 = vsub.f32 %v10837, %v11048
    %v11078 = vsub.f32 %v10840, %v11048
    %v11079 = vsub.f32 %v10845, %v11048
    %v11080 = vsub.f32 %v10848, %v11048
    %v11081 = vsub.f32 %v10853, %v11048
    %v11082 = vsub.f32 %v10856, %v11048
    %v11083 = vsub.f32 %v10861, %v11048
    %v11084 = vsub.f32 %v10864, %v11048
    %v11085 = vsub.f32 %v10869, %v11048
    %v11086 = vsub.f32 %v10872, %v11048
    %v11087 = vsub.f32 %v10877, %v11048
    %v11088 = vsub.f32 %v10880, %v11048
    %v11089 = vsub.f32 %v10885, %v11048
    %v11090 = vsub.f32 %v10888, %v11048
    %v11091 = vsub.f32 %v10893, %v11048
    %v11092 = vsub.f32 %v10896, %v11048
    %v11093 = vsub.f32 %v10901, %v11048
    %v11094 = vsub.f32 %v10904, %v11048
    %v11095 = vsub.f32 %v10909, %v11048
    %v11096 = vsub.f32 %v10912, %v11048
    %v11097 = vsub.f32 %v10917, %v11048
    %v11098 = vsub.f32 %v10920, %v11048
    %v11099 = vsub.f32 %v10925, %v11048
    %v11100 = vsub.f32 %v10928, %v11048
    %v11101 = vsub.f32 %v10933, %v11048
    %v11102 = vsub.f32 %v10936, %v11048
    %v11103 = vsub.f32 %v10941, %v11048
    %v11104 = vsub.f32 %v10944, %v11048
    %v11105 = vsub.f32 %v10949, %v11048
    %v11106 = vsub.f32 %v10952, %v11048
    %v11107 = vsub.f32 %v10957, %v11048
    %v11108 = vsub.f32 %v10960, %v11048
    %v11109 = vsub.f32 %v10965, %v11048
    %v11110 = vsub.f32 %v10968, %v11048
    %v11111 = vsub.f32 %v10973, %v11048
    %v11112 = vsub.f32 %v10976, %v11048
    %v11113 = vmul.f32 %v11049, %v11049
    %v11114 = vmul.f32 %v11050, %v11050
    %v11115 = vmul.f32 %v11051, %v11051
    %v11116 = vmul.f32 %v11052, %v11052
    %v11117 = vmul.f32 %v11053, %v11053
    %v11118 = vmul.f32 %v11054, %v11054
    %v11119 = vmul.f32 %v11055, %v11055
    %v11120 = vmul.f32 %v11056, %v11056
    %v11121 = vmul.f32 %v11057, %v11057
    %v11122 = vmul.f32 %v11058, %v11058
    %v11123 = vmul.f32 %v11059, %v11059
    %v11124 = vmul.f32 %v11060, %v11060
    %v11125 = vmul.f32 %v11061, %v11061
    %v11126 = vmul.f32 %v11062, %v11062
    %v11127 = vmul.f32 %v11063, %v11063
    %v11128 = vmul.f32 %v11064, %v11064
    %v11129 = vmul.f32 %v11065, %v11065
    %v11130 = vmul.f32 %v11066, %v11066
    %v11131 = vmul.f32 %v11067, %v11067
    %v11132 = vmul.f32 %v11068, %v11068
    %v11133 = vmul.f32 %v11069, %v11069
    %v11134 = vmul.f32 %v11070, %v11070
    %v11135 = vmul.f32 %v11071, %v11071
    %v11136 = vmul.f32 %v11072, %v11072
    %v11137 = vmul.f32 %v11073, %v11073
    %v11138 = vmul.f32 %v11074, %v11074
    %v11139 = vmul.f32 %v11075, %v11075
    %v11140 = vmul.f32 %v11076, %v11076
    %v11141 = vmul.f32 %v11077, %v11077
    %v11142 = vmul.f32 %v11078, %v11078
    %v11143 = vmul.f32 %v11079, %v11079
    %v11144 = vmul.f32 %v11080, %v11080
    %v11145 = vmul.f32 %v11081, %v11081
    %v11146 = vmul.f32 %v11082, %v11082
    %v11147 = vmul.f32 %v11083, %v11083
    %v11148 = vmul.f32 %v11084, %v11084
    %v11149 = vmul.f32 %v11085, %v11085
    %v11150 = vmul.f32 %v11086, %v11086
    %v11151 = vmul.f32 %v11087, %v11087
    %v11152 = vmul.f32 %v11088, %v11088
    %v11153 = vmul.f32 %v11089, %v11089
    %v11154 = vmul.f32 %v11090, %v11090
    %v11155 = vmul.f32 %v11091, %v11091
    %v11156 = vmul.f32 %v11092, %v11092
    %v11157 = vmul.f32 %v11093, %v11093
    %v11158 = vmul.f32 %v11094, %v11094
    %v11159 = vmul.f32 %v11095, %v11095
    %v11160 = vmul.f32 %v11096, %v11096
    %v11161 = vmul.f32 %v11097, %v11097
    %v11162 = vmul.f32 %v11098, %v11098
    %v11163 = vmul.f32 %v11099, %v11099
    %v11164 = vmul.f32 %v11100, %v11100
    %v11165 = vmul.f32 %v11101, %v11101
    %v11166 = vmul.f32 %v11102, %v11102
    %v11167 = vmul.f32 %v11103, %v11103
    %v11168 = vmul.f32 %v11104, %v11104
    %v11169 = vmul.f32 %v11105, %v11105
    %v11170 = vmul.f32 %v11106, %v11106
    %v11171 = vmul.f32 %v11107, %v11107
    %v11172 = vmul.f32 %v11108, %v11108
    %v11173 = vmul.f32 %v11109, %v11109
    %v11174 = vmul.f32 %v11110, %v11110
    %v11175 = vmul.f32 %v11111, %v11111
    %v11176 = vmul.f32 %v11112, %v11112
    %v11177 = vadd.f32 %v11113, %v11114
    %v11178 = vadd.f32 %v11177, %v11115
    %v11179 = vadd.f32 %v11178, %v11116
    %v11180 = vadd.f32 %v11179, %v11117
    %v11181 = vadd.f32 %v11180, %v11118
    %v11182 = vadd.f32 %v11181, %v11119
    %v11183 = vadd.f32 %v11182, %v11120
    %v11184 = vadd.f32 %v11183, %v11121
    %v11185 = vadd.f32 %v11184, %v11122
    %v11186 = vadd.f32 %v11185, %v11123
    %v11187 = vadd.f32 %v11186, %v11124
    %v11188 = vadd.f32 %v11187, %v11125
    %v11189 = vadd.f32 %v11188, %v11126
    %v11190 = vadd.f32 %v11189, %v11127
    %v11191 = vadd.f32 %v11190, %v11128
    %v11192 = vadd.f32 %v11191, %v11129
    %v11193 = vadd.f32 %v11192, %v11130
    %v11194 = vadd.f32 %v11193, %v11131
    %v11195 = vadd.f32 %v11194, %v11132
    %v11196 = vadd.f32 %v11195, %v11133
    %v11197 = vadd.f32 %v11196, %v11134
    %v11198 = vadd.f32 %v11197, %v11135
    %v11199 = vadd.f32 %v11198, %v11136
    %v11200 = vadd.f32 %v11199, %v11137
    %v11201 = vadd.f32 %v11200, %v11138
    %v11202 = vadd.f32 %v11201, %v11139
    %v11203 = vadd.f32 %v11202, %v11140
    %v11204 = vadd.f32 %v11203, %v11141
    %v11205 = vadd.f32 %v11204, %v11142
    %v11206 = vadd.f32 %v11205, %v11143
    %v11207 = vadd.f32 %v11206, %v11144
    %v11208 = vadd.f32 %v11207, %v11145
    %v11209 = vadd.f32 %v11208, %v11146
    %v11210 = vadd.f32 %v11209, %v11147
    %v11211 = vadd.f32 %v11210, %v11148
    %v11212 = vadd.f32 %v11211, %v11149
    %v11213 = vadd.f32 %v11212, %v11150
    %v11214 = vadd.f32 %v11213, %v11151
    %v11215 = vadd.f32 %v11214, %v11152
    %v11216 = vadd.f32 %v11215, %v11153
    %v11217 = vadd.f32 %v11216, %v11154
    %v11218 = vadd.f32 %v11217, %v11155
    %v11219 = vadd.f32 %v11218, %v11156
    %v11220 = vadd.f32 %v11219, %v11157
    %v11221 = vadd.f32 %v11220, %v11158
    %v11222 = vadd.f32 %v11221, %v11159
    %v11223 = vadd.f32 %v11222, %v11160
    %v11224 = vadd.f32 %v11223, %v11161
    %v11225 = vadd.f32 %v11224, %v11162
    %v11226 = vadd.f32 %v11225, %v11163
    %v11227 = vadd.f32 %v11226, %v11164
    %v11228 = vadd.f32 %v11227, %v11165
    %v11229 = vadd.f32 %v11228, %v11166
    %v11230 = vadd.f32 %v11229, %v11167
    %v11231 = vadd.f32 %v11230, %v11168
    %v11232 = vadd.f32 %v11231, %v11169
    %v11233 = vadd.f32 %v11232, %v11170
    %v11234 = vadd.f32 %v11233, %v11171
    %v11235 = vadd.f32 %v11234, %v11172
    %v11236 = vadd.f32 %v11235, %v11173
    %v11237 = vadd.f32 %v11236, %v11174
    %v11238 = vadd.f32 %v11237, %v11175
    %v11239 = vadd.f32 %v11238, %v11176
    %v11240 = vrot.slane %v11239, 4
    %v11241 = vadd.f32 %v11239, %v11240
    %v11242 = vrot.slane %v11241, 2
    %v11243 = vadd.f32 %v11241, %v11242
    %v11244 = vrot.slane %v11243, 1
    %v11245 = vadd.f32 %v11243, %v11244
    %v11246 = vmul.f32 %v11245, 0.001953125
    %v11247 = vld [vmem:[%s5] sm:$0x1]
    %v11248 = vadd.f32 %v11246, 1e-05
    %v11249 = vrsqrt.pop %v11248
    %v11250 = vmul.f32 %v11247, %v11249
    %v11251 = vld [vmem:[%s6] sm:$0x1]
    %v11252 = vmul.f32 %v11048, %v11250
    %v11253 = vsub.f32 %v11251, %v11252
    %v11254 = vrot.slane %v11009, 4
    %v11255 = vadd.f32 %v11009, %v11254
    %v11256 = vrot.slane %v11255, 2
    %v11257 = vadd.f32 %v11255, %v11256
    %v11258 = vrot.slane %v11257, 1
    %v11259 = vadd.f32 %v11257, %v11258
    %v11260 = vadd.f32 %v10853, %v10856
    %v11261 = vadd.f32 %v11260, %v10861
    %v11262 = vadd.f32 %v11261, %v10864
    %v11263 = vadd.f32 %v11262, %v10869
    %v11264 = vadd.f32 %v11263, %v10872
    %v11265 = vadd.f32 %v11264, %v10877
    %v11266 = vadd.f32 %v11265, %v10880
    %v11267 = vadd.f32 %v11266, %v10885
    %v11268 = vadd.f32 %v11267, %v10888
    %v11269 = vadd.f32 %v11268, %v10893
    %v11270 = vadd.f32 %v11269, %v10896
    %v11271 = vadd.f32 %v11270, %v10901
    %v11272 = vadd.f32 %v11271, %v10904
    %v11273 = vadd.f32 %v11272, %v10909
    %v11274 = vadd.f32 %v11273, %v10912
    %v11275 = vadd.f32 %v11274, %v10917
    %v11276 = vadd.f32 %v11275, %v10920
    %v11277 = vadd.f32 %v11276, %v10925
    %v11278 = vadd.f32 %v11277, %v10928
    %v11279 = vadd.f32 %v11278, %v10933
    %v11280 = vadd.f32 %v11279, %v10936
    %v11281 = vadd.f32 %v11280, %v10941
    %v11282 = vadd.f32 %v11281, %v10944
    %v11283 = vadd.f32 %v11282, %v10949
    %v11284 = vadd.f32 %v11283, %v10952
    %v11285 = vadd.f32 %v11284, %v10957
    %v11286 = vadd.f32 %v11285, %v10960
    %v11287 = vadd.f32 %v11286, %v10965
    %v11288 = vadd.f32 %v11287, %v10968
    %v11289 = vadd.f32 %v11288, %v10973
    %v11290 = vadd.f32 %v11289, %v10976
    %v11291 = vrot.slane %v11290, 4
    %v11292 = vadd.f32 %v11290, %v11291
    %v11293 = vrot.slane %v11292, 2
    %v11294 = vadd.f32 %v11292, %v11293
    %v11295 = vrot.slane %v11294, 1
    %v11296 = vadd.f32 %v11294, %v11295
    %v11297 = vmul.f32 %v11259, 0.00390625
    %v11298 = vmul.f32 %v11296, 0.00390625
    %v11300 = vlaneseq
    %v11301 = vshrl.u32 %v11300, 7
    %v11302 = vsub.s32 0, %v11301
    %v11303 = vrot.slane %v11250, %v11302
    %v11305 = vmul.f32 %v11297, %v11303
    %v11306 = vmul.f32 %v11298, %v11303
    %v11308 = vlaneseq
    %v11309 = vshrl.u32 %v11308, 7
    %v11310 = vsub.s32 0, %v11309
    %v11311 = vrot.slane %v11253, %v11310
    %v11313 = vadd.f32 %v11305, %v11311
    %v11314 = vadd.f32 %v11306, %v11311
    %v11315 = vld [vmem:[#allocation10] sm:$0xff]
    %v11316 = vld [vmem:[#allocation10 + $0x8] sm:$0xff]
    %v11317 = vld [vmem:[#allocation10 + $0x10] sm:$0xff]
    %v11318 = vld [vmem:[#allocation10 + $0x18] sm:$0xff]
    %v11319 = vld [vmem:[#allocation10 + $0x20] sm:$0xff]
    %v11320 = vld [vmem:[#allocation10 + $0x28] sm:$0xff]
    %v11321 = vld [vmem:[#allocation10 + $0x30] sm:$0xff]
    %v11322 = vld [vmem:[#allocation10 + $0x38] sm:$0xff]
    %v11323 = vld [vmem:[#allocation10 + $0x40] sm:$0xff]
    %v11324 = vld [vmem:[#allocation10 + $0x48] sm:$0xff]
    %v11325 = vld [vmem:[#allocation10 + $0x50] sm:$0xff]
    %v11326 = vld [vmem:[#allocation10 + $0x58] sm:$0xff]
    %v11327 = vld [vmem:[#allocation10 + $0x60] sm:$0xff]
    %v11328 = vld [vmem:[#allocation10 + $0x68] sm:$0xff]
    %v11329 = vld [vmem:[#allocation10 + $0x70] sm:$0xff]
    %v11330 = vld [vmem:[#allocation10 + $0x78] sm:$0xff]
    %v11333 = vrot.slane %v11314, 7
    %vm11334 = vcmask 1041409
    %v11335 = vsel %vm11334, %v11333, %v11313
    %11337 = vmatprep.subr.mxu0 0.0
    %11338 = vmatpush1.msra.mxu0 %v11330
    %11339 = vmatprep.subr.mxu0 0.0
    %11340 = vmatpush1.msra.mxu0 %v11329
    %11341 = vmatprep.subr.mxu0 0.0
    %11342 = vmatpush1.msra.mxu0 %v11328
    %11343 = vmatprep.subr.mxu0 0.0
    %11344 = vmatpush1.msra.mxu0 %v11327
    %11345 = vmatprep.subr.mxu0 0.0
    %11346 = vmatpush1.msra.mxu0 %v11326
    %11347 = vmatprep.subr.mxu0 0.0
    %11348 = vmatpush1.msra.mxu0 %v11325
    %11349 = vmatprep.subr.mxu0 0.0
    %11350 = vmatpush1.msra.mxu0 %v11324
    %11351 = vmatprep.subr.mxu0 0.0
    %11352 = vmatpush1.msra.mxu0 %v11323
    %11353 = vmatprep.subr.mxu0 0.0
    %11354 = vmatpush1.msra.mxu0 %v11322
    %11355 = vmatprep.subr.mxu0 0.0
    %11356 = vmatpush1.msra.mxu0 %v11321
    %11357 = vmatprep.subr.mxu0 0.0
    %11358 = vmatpush1.msra.mxu0 %v11320
    %11359 = vmatprep.subr.mxu0 0.0
    %11360 = vmatpush1.msra.mxu0 %v11319
    %11361 = vmatprep.subr.mxu0 0.0
    %11362 = vmatpush1.msra.mxu0 %v11318
    %11363 = vmatprep.subr.mxu0 0.0
    %11364 = vmatpush1.msra.mxu0 %v11317
    %11365 = vmatprep.subr.mxu0 0.0
    %11366 = vmatpush1.msra.mxu0 %v11316
    %11367 = vmatprep.subr.mxu0 0.0
    %11368 = vmatpush1.msra.mxu0 %v11315
    %11369 = vmatprep.subr.mxu0 0.0
    %11370 = vmatpush2.msra.mxu0 0.0
    %11371 = vmatprep.subr.mxu0 0.0
    %11372 = vmatpush2.msra.mxu0 0.0
    %11373 = vmatprep.subr.mxu0 0.0
    %11374 = vmatpush2.msra.mxu0 0.0
    %11375 = vmatprep.subr.mxu0 0.0
    %11376 = vmatpush2.msra.mxu0 0.0
    %11377 = vmatprep.subr.mxu0 0.0
    %11378 = vmatpush2.msra.mxu0 0.0
    %11379 = vmatprep.subr.mxu0 0.0
    %11380 = vmatpush2.msra.mxu0 0.0
    %11381 = vmatprep.subr.mxu0 0.0
    %11382 = vmatpush2.msra.mxu0 0.0
    %11383 = vmatprep.subr.mxu0 0.0
    %11384 = vmatpush2.msra.mxu0 0.0
    %11385 = vmatprep.subr.mxu0 0.0
    %11386 = vmatpush2.msra.mxu0 0.0
    %11387 = vmatprep.subr.mxu0 0.0
    %11388 = vmatpush2.msra.mxu0 0.0
    %11389 = vmatprep.subr.mxu0 0.0
    %11390 = vmatpush2.msra.mxu0 0.0
    %11391 = vmatprep.subr.mxu0 0.0
    %11392 = vmatpush2.msra.mxu0 0.0
    %11393 = vmatprep.subr.mxu0 0.0
    %11394 = vmatpush2.msra.mxu0 0.0
    %11395 = vmatprep.subr.mxu0 0.0
    %11396 = vmatpush2.msra.mxu0 0.0
    %11397 = vmatprep.subr.mxu0 0.0
    %11398 = vmatpush2.msra.mxu0 0.0
    %11399 = vmatprep.subr.mxu0 0.0
    %11400 = vmatpush2.msra.mxu0 0.0
    %11401 = vmatprep.mubr.f32.mxu0 0.0
    %11402 = vmatmul.mubr.f32.gmra.mxu0 %v11335
    %v11403 = vpop.f32.mrf.mxu0
    %v11404 = vadd.f32 0.0, %v11403
    %v11405 = vpop.f32.mrf.mxu0
    %11406 = vdwg.mxu0
    %v11407 = vmax.f32 %v11404, 0.0
    %v11408 = vld [vmem:[#allocation12] sm:$0xff]
    %v11409 = vld [vmem:[#allocation12 + $0x8] sm:$0xff]
    %v11410 = vld [vmem:[#allocation12 + $0x10] sm:$0xff]
    %v11411 = vld [vmem:[#allocation12 + $0x18] sm:$0xff]
    %v11412 = vld [vmem:[#allocation12 + $0x20] sm:$0xff]
    %v11413 = vld [vmem:[#allocation12 + $0x28] sm:$0xff]
    %v11414 = vld [vmem:[#allocation12 + $0x30] sm:$0xff]
    %v11415 = vld [vmem:[#allocation12 + $0x38] sm:$0xff]
    %v11416 = vld [vmem:[#allocation12 + $0x40] sm:$0xff]
    %v11417 = vld [vmem:[#allocation12 + $0x48] sm:$0xff]
    %v11418 = vld [vmem:[#allocation12 + $0x50] sm:$0xff]
    %v11419 = vld [vmem:[#allocation12 + $0x58] sm:$0xff]
    %v11420 = vld [vmem:[#allocation12 + $0x60] sm:$0xff]
    %v11421 = vld [vmem:[#allocation12 + $0x68] sm:$0xff]
    %v11422 = vld [vmem:[#allocation12 + $0x70] sm:$0xff]
    %v11423 = vld [vmem:[#allocation12 + $0x78] sm:$0xff]
    %11424 = vmatprep.subr.mxu0 0.0
    %11425 = vmatpush1.msra.mxu0 %v11423
    %11426 = vmatprep.subr.mxu0 0.0
    %11427 = vmatpush1.msra.mxu0 %v11422
    %11428 = vmatprep.subr.mxu0 0.0
    %11429 = vmatpush1.msra.mxu0 %v11421
    %11430 = vmatprep.subr.mxu0 0.0
    %11431 = vmatpush1.msra.mxu0 %v11420
    %11432 = vmatprep.subr.mxu0 0.0
    %11433 = vmatpush1.msra.mxu0 %v11419
    %11434 = vmatprep.subr.mxu0 0.0
    %11435 = vmatpush1.msra.mxu0 %v11418
    %11436 = vmatprep.subr.mxu0 0.0
    %11437 = vmatpush1.msra.mxu0 %v11417
    %11438 = vmatprep.subr.mxu0 0.0
    %11439 = vmatpush1.msra.mxu0 %v11416
    %11440 = vmatprep.subr.mxu0 0.0
    %11441 = vmatpush1.msra.mxu0 %v11415
    %11442 = vmatprep.subr.mxu0 0.0
    %11443 = vmatpush1.msra.mxu0 %v11414
    %11444 = vmatprep.subr.mxu0 0.0
    %11445 = vmatpush1.msra.mxu0 %v11413
    %11446 = vmatprep.subr.mxu0 0.0
    %11447 = vmatpush1.msra.mxu0 %v11412
    %11448 = vmatprep.subr.mxu0 0.0
    %11449 = vmatpush1.msra.mxu0 %v11411
    %11450 = vmatprep.subr.mxu0 0.0
    %11451 = vmatpush1.msra.mxu0 %v11410
    %11452 = vmatprep.subr.mxu0 0.0
    %11453 = vmatpush1.msra.mxu0 %v11409
    %11454 = vmatprep.subr.mxu0 0.0
    %11455 = vmatpush1.msra.mxu0 %v11408
    %11456 = vmatprep.subr.mxu0 0.0
    %11457 = vmatpush2.msra.mxu0 0.0
    %11458 = vmatprep.subr.mxu0 0.0
    %11459 = vmatpush2.msra.mxu0 0.0
    %11460 = vmatprep.subr.mxu0 0.0
    %11461 = vmatpush2.msra.mxu0 0.0
    %11462 = vmatprep.subr.mxu0 0.0
    %11463 = vmatpush2.msra.mxu0 0.0
    %11464 = vmatprep.subr.mxu0 0.0
    %11465 = vmatpush2.msra.mxu0 0.0
    %11466 = vmatprep.subr.mxu0 0.0
    %11467 = vmatpush2.msra.mxu0 0.0
    %11468 = vmatprep.subr.mxu0 0.0
    %11469 = vmatpush2.msra.mxu0 0.0
    %11470 = vmatprep.subr.mxu0 0.0
    %11471 = vmatpush2.msra.mxu0 0.0
    %11472 = vmatprep.subr.mxu0 0.0
    %11473 = vmatpush2.msra.mxu0 0.0
    %11474 = vmatprep.subr.mxu0 0.0
    %11475 = vmatpush2.msra.mxu0 0.0
    %11476 = vmatprep.subr.mxu0 0.0
    %11477 = vmatpush2.msra.mxu0 0.0
    %11478 = vmatprep.subr.mxu0 0.0
    %11479 = vmatpush2.msra.mxu0 0.0
    %11480 = vmatprep.subr.mxu0 0.0
    %11481 = vmatpush2.msra.mxu0 0.0
    %11482 = vmatprep.subr.mxu0 0.0
    %11483 = vmatpush2.msra.mxu0 0.0
    %11484 = vmatprep.subr.mxu0 0.0
    %11485 = vmatpush2.msra.mxu0 0.0
    %11486 = vmatprep.subr.mxu0 0.0
    %11487 = vmatpush2.msra.mxu0 0.0
    %11488 = vmatprep.mubr.f32.mxu0 0.0
    %11489 = vmatmul.mubr.f32.gmra.mxu0 %v11407
    %v11490 = vpop.f32.mrf.mxu0
    %v11491 = vadd.f32 0.0, %v11490
    %v11492 = vpop.f32.mrf.mxu0
    %11493 = vdwg.mxu0
    %v11494 = vxor.u32 %v11491, 2147483648
    %v11495 = vmul.f32 %v11494, 1.442695
    %v11496 = vpow.pop %v11495
    %v11497 = vadd.f32 %v11496, 1.0
    %v11498 = vrcp.pop %v11497
    %v11499 = vmul.f32 1.0, %v11498
    %v11500 = vmul.f32 %v11499, %v11303
    %v11503 = vunpack.c.l.s4 1966171168
    %v11504 = vunpack.c.0.s8 %v11503
    %v11505 = vlaneseq
    %v11506 = vshrl.u32 %v11505, 7
    %v11507 = vsub.s32 %v11504, %v11506
    %v11508 = vrot.slane %v11500, %v11507
    %v11509 = vcombine.high %v11508, %v11508
    %v11511 = vunpack.c.l.s4 1966171168
    %v11512 = vunpack.c.0.s8 %v11511
    %v11513 = vlaneseq
    %v11514 = vshrl.u32 %v11513, 7
    %v11515 = vsub.s32 %v11512, %v11514
    %v11516 = vrot.slane %v11508, %v11515
    %v11518 = vunpack.c.l.s4 1966171168
    %v11519 = vunpack.c.0.s8 %v11518
    %v11520 = vlaneseq
    %v11521 = vshrl.u32 %v11520, 7
    %v11522 = vsub.s32 %v11519, %v11521
    %v11523 = vrot.slane %v11509, %v11522
    %v11524 = vmul.f32 %v11499, %v11311
    %v11527 = vunpack.c.l.s4 1966171168
    %v11528 = vunpack.c.0.s8 %v11527
    %v11529 = vlaneseq
    %v11530 = vshrl.u32 %v11529, 7
    %v11531 = vsub.s32 %v11528, %v11530
    %v11532 = vrot.slane %v11524, %v11531
    %v11533 = vcombine.high %v11532, %v11532
    %v11535 = vunpack.c.l.s4 1966171168
    %v11536 = vunpack.c.0.s8 %v11535
    %v11537 = vlaneseq
    %v11538 = vshrl.u32 %v11537, 7
    %v11539 = vsub.s32 %v11536, %v11538
    %v11540 = vrot.slane %v11532, %v11539
    %v11542 = vunpack.c.l.s4 1966171168
    %v11543 = vunpack.c.0.s8 %v11542
    %v11544 = vlaneseq
    %v11545 = vshrl.u32 %v11544, 7
    %v11546 = vsub.s32 %v11543, %v11545
    %v11547 = vrot.slane %v11533, %v11546
    %v11548 = vlaneseq
    %v11549 = vshrl.u32 %v11548, 7
    %v11550 = vsub.s32 0, %v11549
    %v11551 = vrot.slane %v11516, %v11550
    %v11552 = vlaneseq
    %v11553 = vshrl.u32 %v11552, 7
    %v11554 = vsub.s32 0, %v11553
    %v11555 = vrot.slane %v11523, %v11554
    %v11558 = vmul.f32 %v10725, %v11551
    %v11559 = vmul.f32 %v10728, %v11551
    %v11560 = vmul.f32 %v10733, %v11551
    %v11561 = vmul.f32 %v10736, %v11551
    %v11562 = vmul.f32 %v10741, %v11551
    %v11563 = vmul.f32 %v10744, %v11551
    %v11564 = vmul.f32 %v10749, %v11551
    %v11565 = vmul.f32 %v10752, %v11551
    %v11566 = vmul.f32 %v10757, %v11551
    %v11567 = vmul.f32 %v10760, %v11551
    %v11568 = vmul.f32 %v10765, %v11551
    %v11569 = vmul.f32 %v10768, %v11551
    %v11570 = vmul.f32 %v10773, %v11551
    %v11571 = vmul.f32 %v10776, %v11551
    %v11572 = vmul.f32 %v10781, %v11551
    %v11573 = vmul.f32 %v10784, %v11551
    %v11574 = vmul.f32 %v10789, %v11551
    %v11575 = vmul.f32 %v10792, %v11551
    %v11576 = vmul.f32 %v10797, %v11551
    %v11577 = vmul.f32 %v10800, %v11551
    %v11578 = vmul.f32 %v10805, %v11551
    %v11579 = vmul.f32 %v10808, %v11551
    %v11580 = vmul.f32 %v10813, %v11551
    %v11581 = vmul.f32 %v10816, %v11551
    %v11582 = vmul.f32 %v10821, %v11551
    %v11583 = vmul.f32 %v10824, %v11551
    %v11584 = vmul.f32 %v10829, %v11551
    %v11585 = vmul.f32 %v10832, %v11551
    %v11586 = vmul.f32 %v10837, %v11551
    %v11587 = vmul.f32 %v10840, %v11551
    %v11588 = vmul.f32 %v10845, %v11551
    %v11589 = vmul.f32 %v10848, %v11551
    %v11590 = vmul.f32 %v10853, %v11555
    %v11591 = vmul.f32 %v10856, %v11555
    %v11592 = vmul.f32 %v10861, %v11555
    %v11593 = vmul.f32 %v10864, %v11555
    %v11594 = vmul.f32 %v10869, %v11555
    %v11595 = vmul.f32 %v10872, %v11555
    %v11596 = vmul.f32 %v10877, %v11555
    %v11597 = vmul.f32 %v10880, %v11555
    %v11598 = vmul.f32 %v10885, %v11555
    %v11599 = vmul.f32 %v10888, %v11555
    %v11600 = vmul.f32 %v10893, %v11555
    %v11601 = vmul.f32 %v10896, %v11555
    %v11602 = vmul.f32 %v10901, %v11555
    %v11603 = vmul.f32 %v10904, %v11555
    %v11604 = vmul.f32 %v10909, %v11555
    %v11605 = vmul.f32 %v10912, %v11555
    %v11606 = vmul.f32 %v10917, %v11555
    %v11607 = vmul.f32 %v10920, %v11555
    %v11608 = vmul.f32 %v10925, %v11555
    %v11609 = vmul.f32 %v10928, %v11555
    %v11610 = vmul.f32 %v10933, %v11555
    %v11611 = vmul.f32 %v10936, %v11555
    %v11612 = vmul.f32 %v10941, %v11555
    %v11613 = vmul.f32 %v10944, %v11555
    %v11614 = vmul.f32 %v10949, %v11555
    %v11615 = vmul.f32 %v10952, %v11555
    %v11616 = vmul.f32 %v10957, %v11555
    %v11617 = vmul.f32 %v10960, %v11555
    %v11618 = vmul.f32 %v10965, %v11555
    %v11619 = vmul.f32 %v10968, %v11555
    %v11620 = vmul.f32 %v10973, %v11555
    %v11621 = vmul.f32 %v10976, %v11555
    %v11622 = vld [vmem:[#allocation4] sm:$0xff]
    %v11623 = vld [vmem:[#allocation4 + $0x8] sm:$0xff]
    %v11624 = vld [vmem:[#allocation4 + $0x10] sm:$0xff]
    %v11625 = vld [vmem:[#allocation4 + $0x18] sm:$0xff]
    %v11626 = vld [vmem:[#allocation4 + $0x20] sm:$0xff]
    %v11627 = vld [vmem:[#allocation4 + $0x28] sm:$0xff]
    %v11628 = vld [vmem:[#allocation4 + $0x30] sm:$0xff]
    %v11629 = vld [vmem:[#allocation4 + $0x38] sm:$0xff]
    %v11630 = vld [vmem:[#allocation4 + $0x40] sm:$0xff]
    %v11631 = vld [vmem:[#allocation4 + $0x48] sm:$0xff]
    %v11632 = vld [vmem:[#allocation4 + $0x50] sm:$0xff]
    %v11633 = vld [vmem:[#allocation4 + $0x58] sm:$0xff]
    %v11634 = vld [vmem:[#allocation4 + $0x60] sm:$0xff]
    %v11635 = vld [vmem:[#allocation4 + $0x68] sm:$0xff]
    %v11636 = vld [vmem:[#allocation4 + $0x70] sm:$0xff]
    %v11637 = vld [vmem:[#allocation4 + $0x78] sm:$0xff]
    %v11638 = vld [vmem:[#allocation4 + $0x80] sm:$0xff]
    %v11639 = vld [vmem:[#allocation4 + $0x88] sm:$0xff]
    %v11640 = vld [vmem:[#allocation4 + $0x90] sm:$0xff]
    %v11641 = vld [vmem:[#allocation4 + $0x98] sm:$0xff]
    %v11642 = vld [vmem:[#allocation4 + $0xa0] sm:$0xff]
    %v11643 = vld [vmem:[#allocation4 + $0xa8] sm:$0xff]
    %v11644 = vld [vmem:[#allocation4 + $0xb0] sm:$0xff]
    %v11645 = vld [vmem:[#allocation4 + $0xb8] sm:$0xff]
    %v11646 = vld [vmem:[#allocation4 + $0xc0] sm:$0xff]
    %v11647 = vld [vmem:[#allocation4 + $0xc8] sm:$0xff]
    %v11648 = vld [vmem:[#allocation4 + $0xd0] sm:$0xff]
    %v11649 = vld [vmem:[#allocation4 + $0xd8] sm:$0xff]
    %v11650 = vld [vmem:[#allocation4 + $0xe0] sm:$0xff]
    %v11651 = vld [vmem:[#allocation4 + $0xe8] sm:$0xff]
    %v11652 = vld [vmem:[#allocation4 + $0xf0] sm:$0xff]
    %v11653 = vld [vmem:[#allocation4 + $0xf8] sm:$0xff]
    %v11654 = vld [vmem:[#allocation4 + $0x100] sm:$0xff]
    %v11655 = vld [vmem:[#allocation4 + $0x108] sm:$0xff]
    %v11656 = vld [vmem:[#allocation4 + $0x110] sm:$0xff]
    %v11657 = vld [vmem:[#allocation4 + $0x118] sm:$0xff]
    %v11658 = vld [vmem:[#allocation4 + $0x120] sm:$0xff]
    %v11659 = vld [vmem:[#allocation4 + $0x128] sm:$0xff]
    %v11660 = vld [vmem:[#allocation4 + $0x130] sm:$0xff]
    %v11661 = vld [vmem:[#allocation4 + $0x138] sm:$0xff]
    %v11662 = vld [vmem:[#allocation4 + $0x140] sm:$0xff]
    %v11663 = vld [vmem:[#allocation4 + $0x148] sm:$0xff]
    %v11664 = vld [vmem:[#allocation4 + $0x150] sm:$0xff]
    %v11665 = vld [vmem:[#allocation4 + $0x158] sm:$0xff]
    %v11666 = vld [vmem:[#allocation4 + $0x160] sm:$0xff]
    %v11667 = vld [vmem:[#allocation4 + $0x168] sm:$0xff]
    %v11668 = vld [vmem:[#allocation4 + $0x170] sm:$0xff]
    %v11669 = vld [vmem:[#allocation4 + $0x178] sm:$0xff]
    %v11670 = vld [vmem:[#allocation4 + $0x180] sm:$0xff]
    %v11671 = vld [vmem:[#allocation4 + $0x188] sm:$0xff]
    %v11672 = vld [vmem:[#allocation4 + $0x190] sm:$0xff]
    %v11673 = vld [vmem:[#allocation4 + $0x198] sm:$0xff]
    %v11674 = vld [vmem:[#allocation4 + $0x1a0] sm:$0xff]
    %v11675 = vld [vmem:[#allocation4 + $0x1a8] sm:$0xff]
    %v11676 = vld [vmem:[#allocation4 + $0x1b0] sm:$0xff]
    %v11677 = vld [vmem:[#allocation4 + $0x1b8] sm:$0xff]
    %v11678 = vld [vmem:[#allocation4 + $0x1c0] sm:$0xff]
    %v11679 = vld [vmem:[#allocation4 + $0x1c8] sm:$0xff]
    %v11680 = vld [vmem:[#allocation4 + $0x1d0] sm:$0xff]
    %v11681 = vld [vmem:[#allocation4 + $0x1d8] sm:$0xff]
    %v11682 = vld [vmem:[#allocation4 + $0x1e0] sm:$0xff]
    %v11683 = vld [vmem:[#allocation4 + $0x1e8] sm:$0xff]
    %v11684 = vld [vmem:[#allocation4 + $0x1f0] sm:$0xff]
    %v11685 = vld [vmem:[#allocation4 + $0x1f8] sm:$0xff]
    %v11686 = vlaneseq
    %v11687 = vshrl.u32 %v11686, 7
    %v11688 = vsub.s32 0, %v11687
    %v11689 = vrot.slane %v11540, %v11688
    %v11690 = vlaneseq
    %v11691 = vshrl.u32 %v11690, 7
    %v11692 = vsub.s32 0, %v11691
    %v11693 = vrot.slane %v11547, %v11692
    %v11696 = vadd.f32 %v11689, %v11622
    %v11697 = vadd.f32 %v11689, %v11623
    %v11698 = vadd.f32 %v11689, %v11624
    %v11699 = vadd.f32 %v11689, %v11625
    %v11700 = vadd.f32 %v11689, %v11626
    %v11701 = vadd.f32 %v11689, %v11627
    %v11702 = vadd.f32 %v11689, %v11628
    %v11703 = vadd.f32 %v11689, %v11629
    %v11704 = vadd.f32 %v11689, %v11630
    %v11705 = vadd.f32 %v11689, %v11631
    %v11706 = vadd.f32 %v11689, %v11632
    %v11707 = vadd.f32 %v11689, %v11633
    %v11708 = vadd.f32 %v11689, %v11634
    %v11709 = vadd.f32 %v11689, %v11635
    %v11710 = vadd.f32 %v11689, %v11636
    %v11711 = vadd.f32 %v11689, %v11637
    %v11712 = vadd.f32 %v11689, %v11638
    %v11713 = vadd.f32 %v11689, %v11639
    %v11714 = vadd.f32 %v11689, %v11640
    %v11715 = vadd.f32 %v11689, %v11641
    %v11716 = vadd.f32 %v11689, %v11642
    %v11717 = vadd.f32 %v11689, %v11643
    %v11718 = vadd.f32 %v11689, %v11644
    %v11719 = vadd.f32 %v11689, %v11645
    %v11720 = vadd.f32 %v11689, %v11646
    %v11721 = vadd.f32 %v11689, %v11647
    %v11722 = vadd.f32 %v11689, %v11648
    %v11723 = vadd.f32 %v11689, %v11649
    %v11724 = vadd.f32 %v11689, %v11650
    %v11725 = vadd.f32 %v11689, %v11651
    %v11726 = vadd.f32 %v11689, %v11652
    %v11727 = vadd.f32 %v11689, %v11653
    %v11728 = vadd.f32 %v11693, %v11654
    %v11729 = vadd.f32 %v11693, %v11655
    %v11730 = vadd.f32 %v11693, %v11656
    %v11731 = vadd.f32 %v11693, %v11657
    %v11732 = vadd.f32 %v11693, %v11658
    %v11733 = vadd.f32 %v11693, %v11659
    %v11734 = vadd.f32 %v11693, %v11660
    %v11735 = vadd.f32 %v11693, %v11661
    %v11736 = vadd.f32 %v11693, %v11662
    %v11737 = vadd.f32 %v11693, %v11663
    %v11738 = vadd.f32 %v11693, %v11664
    %v11739 = vadd.f32 %v11693, %v11665
    %v11740 = vadd.f32 %v11693, %v11666
    %v11741 = vadd.f32 %v11693, %v11667
    %v11742 = vadd.f32 %v11693, %v11668
    %v11743 = vadd.f32 %v11693, %v11669
    %v11744 = vadd.f32 %v11693, %v11670
    %v11745 = vadd.f32 %v11693, %v11671
    %v11746 = vadd.f32 %v11693, %v11672
    %v11747 = vadd.f32 %v11693, %v11673
    %v11748 = vadd.f32 %v11693, %v11674
    %v11749 = vadd.f32 %v11693, %v11675
    %v11750 = vadd.f32 %v11693, %v11676
    %v11751 = vadd.f32 %v11693, %v11677
    %v11752 = vadd.f32 %v11693, %v11678
    %v11753 = vadd.f32 %v11693, %v11679
    %v11754 = vadd.f32 %v11693, %v11680
    %v11755 = vadd.f32 %v11693, %v11681
    %v11756 = vadd.f32 %v11693, %v11682
    %v11757 = vadd.f32 %v11693, %v11683
    %v11758 = vadd.f32 %v11693, %v11684
    %v11759 = vadd.f32 %v11693, %v11685
    %v11760 = vadd.f32 %v11558, %v11696
    %v11761 = vadd.f32 %v11559, %v11697
    %v11762 = vadd.f32 %v11560, %v11698
    %v11763 = vadd.f32 %v11561, %v11699
    %v11764 = vadd.f32 %v11562, %v11700
    %v11765 = vadd.f32 %v11563, %v11701
    %v11766 = vadd.f32 %v11564, %v11702
    %v11767 = vadd.f32 %v11565, %v11703
    %v11768 = vadd.f32 %v11566, %v11704
    %v11769 = vadd.f32 %v11567, %v11705
    %v11770 = vadd.f32 %v11568, %v11706
    %v11771 = vadd.f32 %v11569, %v11707
    %v11772 = vadd.f32 %v11570, %v11708
    %v11773 = vadd.f32 %v11571, %v11709
    %v11774 = vadd.f32 %v11572, %v11710
    %v11775 = vadd.f32 %v11573, %v11711
    %v11776 = vadd.f32 %v11574, %v11712
    %v11777 = vadd.f32 %v11575, %v11713
    %v11778 = vadd.f32 %v11576, %v11714
    %v11779 = vadd.f32 %v11577, %v11715
    %v11780 = vadd.f32 %v11578, %v11716
    %v11781 = vadd.f32 %v11579, %v11717
    %v11782 = vadd.f32 %v11580, %v11718
    %v11783 = vadd.f32 %v11581, %v11719
    %v11784 = vadd.f32 %v11582, %v11720
    %v11785 = vadd.f32 %v11583, %v11721
    %v11786 = vadd.f32 %v11584, %v11722
    %v11787 = vadd.f32 %v11585, %v11723
    %v11788 = vadd.f32 %v11586, %v11724
    %v11789 = vadd.f32 %v11587, %v11725
    %v11790 = vadd.f32 %v11588, %v11726
    %v11791 = vadd.f32 %v11589, %v11727
    %v11792 = vadd.f32 %v11590, %v11728
    %v11793 = vadd.f32 %v11591, %v11729
    %v11794 = vadd.f32 %v11592, %v11730
    %v11795 = vadd.f32 %v11593, %v11731
    %v11796 = vadd.f32 %v11594, %v11732
    %v11797 = vadd.f32 %v11595, %v11733
    %v11798 = vadd.f32 %v11596, %v11734
    %v11799 = vadd.f32 %v11597, %v11735
    %v11800 = vadd.f32 %v11598, %v11736
    %v11801 = vadd.f32 %v11599, %v11737
    %v11802 = vadd.f32 %v11600, %v11738
    %v11803 = vadd.f32 %v11601, %v11739
    %v11804 = vadd.f32 %v11602, %v11740
    %v11805 = vadd.f32 %v11603, %v11741
    %v11806 = vadd.f32 %v11604, %v11742
    %v11807 = vadd.f32 %v11605, %v11743
    %v11808 = vadd.f32 %v11606, %v11744
    %v11809 = vadd.f32 %v11607, %v11745
    %v11810 = vadd.f32 %v11608, %v11746
    %v11811 = vadd.f32 %v11609, %v11747
    %v11812 = vadd.f32 %v11610, %v11748
    %v11813 = vadd.f32 %v11611, %v11749
    %v11814 = vadd.f32 %v11612, %v11750
    %v11815 = vadd.f32 %v11613, %v11751
    %v11816 = vadd.f32 %v11614, %v11752
    %v11817 = vadd.f32 %v11615, %v11753
    %v11818 = vadd.f32 %v11616, %v11754
    %v11819 = vadd.f32 %v11617, %v11755
    %v11820 = vadd.f32 %v11618, %v11756
    %v11821 = vadd.f32 %v11619, %v11757
    %v11822 = vadd.f32 %v11620, %v11758
    %v11823 = vadd.f32 %v11621, %v11759
    %v11824 = vmax.f32 %v11760, 0.0
    %v11825 = vmax.f32 %v11761, 0.0
    %v11826 = vmax.f32 %v11762, 0.0
    %v11827 = vmax.f32 %v11763, 0.0
    %v11828 = vmax.f32 %v11764, 0.0
    %v11829 = vmax.f32 %v11765, 0.0
    %v11830 = vmax.f32 %v11766, 0.0
    %v11831 = vmax.f32 %v11767, 0.0
    %v11832 = vmax.f32 %v11768, 0.0
    %v11833 = vmax.f32 %v11769, 0.0
    %v11834 = vmax.f32 %v11770, 0.0
    %v11835 = vmax.f32 %v11771, 0.0
    %v11836 = vmax.f32 %v11772, 0.0
    %v11837 = vmax.f32 %v11773, 0.0
    %v11838 = vmax.f32 %v11774, 0.0
    %v11839 = vmax.f32 %v11775, 0.0
    %v11840 = vmax.f32 %v11776, 0.0
    %v11841 = vmax.f32 %v11777, 0.0
    %v11842 = vmax.f32 %v11778, 0.0
    %v11843 = vmax.f32 %v11779, 0.0
    %v11844 = vmax.f32 %v11780, 0.0
    %v11845 = vmax.f32 %v11781, 0.0
    %v11846 = vmax.f32 %v11782, 0.0
    %v11847 = vmax.f32 %v11783, 0.0
    %v11848 = vmax.f32 %v11784, 0.0
    %v11849 = vmax.f32 %v11785, 0.0
    %v11850 = vmax.f32 %v11786, 0.0
    %v11851 = vmax.f32 %v11787, 0.0
    %v11852 = vmax.f32 %v11788, 0.0
    %v11853 = vmax.f32 %v11789, 0.0
    %v11854 = vmax.f32 %v11790, 0.0
    %v11855 = vmax.f32 %v11791, 0.0
    %v11856 = vmax.f32 %v11792, 0.0
    %v11857 = vmax.f32 %v11793, 0.0
    %v11858 = vmax.f32 %v11794, 0.0
    %v11859 = vmax.f32 %v11795, 0.0
    %v11860 = vmax.f32 %v11796, 0.0
    %v11861 = vmax.f32 %v11797, 0.0
    %v11862 = vmax.f32 %v11798, 0.0
    %v11863 = vmax.f32 %v11799, 0.0
    %v11864 = vmax.f32 %v11800, 0.0
    %v11865 = vmax.f32 %v11801, 0.0
    %v11866 = vmax.f32 %v11802, 0.0
    %v11867 = vmax.f32 %v11803, 0.0
    %v11868 = vmax.f32 %v11804, 0.0
    %v11869 = vmax.f32 %v11805, 0.0
    %v11870 = vmax.f32 %v11806, 0.0
    %v11871 = vmax.f32 %v11807, 0.0
    %v11872 = vmax.f32 %v11808, 0.0
    %v11873 = vmax.f32 %v11809, 0.0
    %v11874 = vmax.f32 %v11810, 0.0
    %v11875 = vmax.f32 %v11811, 0.0
    %v11876 = vmax.f32 %v11812, 0.0
    %v11877 = vmax.f32 %v11813, 0.0
    %v11878 = vmax.f32 %v11814, 0.0
    %v11879 = vmax.f32 %v11815, 0.0
    %v11880 = vmax.f32 %v11816, 0.0
    %v11881 = vmax.f32 %v11817, 0.0
    %v11882 = vmax.f32 %v11818, 0.0
    %v11883 = vmax.f32 %v11819, 0.0
    %v11884 = vmax.f32 %v11820, 0.0
    %v11885 = vmax.f32 %v11821, 0.0
    %v11886 = vmax.f32 %v11822, 0.0
    %v11887 = vmax.f32 %v11823, 0.0
    %11888 = vst [vmem:[#allocation13] sm:$0xff] %v11824
    %11889 = vst [vmem:[#allocation13 + $0x8] sm:$0xff] %v11825
    %11890 = vst [vmem:[#allocation13 + $0x10] sm:$0xff] %v11826
    %11891 = vst [vmem:[#allocation13 + $0x18] sm:$0xff] %v11827
    %11892 = vst [vmem:[#allocation13 + $0x20] sm:$0xff] %v11828
    %11893 = vst [vmem:[#allocation13 + $0x28] sm:$0xff] %v11829
    %11894 = vst [vmem:[#allocation13 + $0x30] sm:$0xff] %v11830
    %11895 = vst [vmem:[#allocation13 + $0x38] sm:$0xff] %v11831
    %11896 = vst [vmem:[#allocation13 + $0x40] sm:$0xff] %v11832
    %11897 = vst [vmem:[#allocation13 + $0x48] sm:$0xff] %v11833
    %11898 = vst [vmem:[#allocation13 + $0x50] sm:$0xff] %v11834
    %11899 = vst [vmem:[#allocation13 + $0x58] sm:$0xff] %v11835
    %11900 = vst [vmem:[#allocation13 + $0x60] sm:$0xff] %v11836
    %11901 = vst [vmem:[#allocation13 + $0x68] sm:$0xff] %v11837
    %11902 = vst [vmem:[#allocation13 + $0x70] sm:$0xff] %v11838
    %11903 = vst [vmem:[#allocation13 + $0x78] sm:$0xff] %v11839
    %11904 = vst [vmem:[#allocation13 + $0x80] sm:$0xff] %v11840
    %11905 = vst [vmem:[#allocation13 + $0x88] sm:$0xff] %v11841
    %11906 = vst [vmem:[#allocation13 + $0x90] sm:$0xff] %v11842
    %11907 = vst [vmem:[#allocation13 + $0x98] sm:$0xff] %v11843
    %11908 = vst [vmem:[#allocation13 + $0xa0] sm:$0xff] %v11844
    %11909 = vst [vmem:[#allocation13 + $0xa8] sm:$0xff] %v11845
    %11910 = vst [vmem:[#allocation13 + $0xb0] sm:$0xff] %v11846
    %11911 = vst [vmem:[#allocation13 + $0xb8] sm:$0xff] %v11847
    %11912 = vst [vmem:[#allocation13 + $0xc0] sm:$0xff] %v11848
    %11913 = vst [vmem:[#allocation13 + $0xc8] sm:$0xff] %v11849
    %11914 = vst [vmem:[#allocation13 + $0xd0] sm:$0xff] %v11850
    %11915 = vst [vmem:[#allocation13 + $0xd8] sm:$0xff] %v11851
    %11916 = vst [vmem:[#allocation13 + $0xe0] sm:$0xff] %v11852
    %11917 = vst [vmem:[#allocation13 + $0xe8] sm:$0xff] %v11853
    %11918 = vst [vmem:[#allocation13 + $0xf0] sm:$0xff] %v11854
    %11919 = vst [vmem:[#allocation13 + $0xf8] sm:$0xff] %v11855
    %11920 = vst [vmem:[#allocation13 + $0x100] sm:$0xff] %v11856
    %11921 = vst [vmem:[#allocation13 + $0x108] sm:$0xff] %v11857
    %11922 = vst [vmem:[#allocation13 + $0x110] sm:$0xff] %v11858
    %11923 = vst [vmem:[#allocation13 + $0x118] sm:$0xff] %v11859
    %11924 = vst [vmem:[#allocation13 + $0x120] sm:$0xff] %v11860
    %11925 = vst [vmem:[#allocation13 + $0x128] sm:$0xff] %v11861
    %11926 = vst [vmem:[#allocation13 + $0x130] sm:$0xff] %v11862
    %11927 = vst [vmem:[#allocation13 + $0x138] sm:$0xff] %v11863
    %11928 = vst [vmem:[#allocation13 + $0x140] sm:$0xff] %v11864
    %11929 = vst [vmem:[#allocation13 + $0x148] sm:$0xff] %v11865
    %11930 = vst [vmem:[#allocation13 + $0x150] sm:$0xff] %v11866
    %11931 = vst [vmem:[#allocation13 + $0x158] sm:$0xff] %v11867
    %11932 = vst [vmem:[#allocation13 + $0x160] sm:$0xff] %v11868
    %11933 = vst [vmem:[#allocation13 + $0x168] sm:$0xff] %v11869
    %11934 = vst [vmem:[#allocation13 + $0x170] sm:$0xff] %v11870
    %11935 = vst [vmem:[#allocation13 + $0x178] sm:$0xff] %v11871
    %11936 = vst [vmem:[#allocation13 + $0x180] sm:$0xff] %v11872
    %11937 = vst [vmem:[#allocation13 + $0x188] sm:$0xff] %v11873
    %11938 = vst [vmem:[#allocation13 + $0x190] sm:$0xff] %v11874
    %11939 = vst [vmem:[#allocation13 + $0x198] sm:$0xff] %v11875
    %11940 = vst [vmem:[#allocation13 + $0x1a0] sm:$0xff] %v11876
    %11941 = vst [vmem:[#allocation13 + $0x1a8] sm:$0xff] %v11877
    %11942 = vst [vmem:[#allocation13 + $0x1b0] sm:$0xff] %v11878
    %11943 = vst [vmem:[#allocation13 + $0x1b8] sm:$0xff] %v11879
    %11944 = vst [vmem:[#allocation13 + $0x1c0] sm:$0xff] %v11880
    %11945 = vst [vmem:[#allocation13 + $0x1c8] sm:$0xff] %v11881
    %11946 = vst [vmem:[#allocation13 + $0x1d0] sm:$0xff] %v11882
    %11947 = vst [vmem:[#allocation13 + $0x1d8] sm:$0xff] %v11883
    %11948 = vst [vmem:[#allocation13 + $0x1e0] sm:$0xff] %v11884
    %11949 = vst [vmem:[#allocation13 + $0x1e8] sm:$0xff] %v11885
    %11950 = vst [vmem:[#allocation13 + $0x1f0] sm:$0xff] %v11886
    %11951 = vst [vmem:[#allocation13 + $0x1f8] sm:$0xff] %v11887
    // Predicated region
    $region58: #{tpu_custom_call.1} parent=1 // pred_check
      _
    $region59: #{tpu_custom_call.1} parent=1 // pred_check_branch
      %11953 = sbr.rel (0) target = $region61
    $region60: #{tpu_custom_call.1} parent=1 // pred_region
      %s11955 = ssub.s32 8192, 8192
      %11956 = vsyncadd [#allocation6], %s11955
      %s11957 = sshll.u32 [#allocation13], 4
      %s11958 = int_to_ptr.vmem [resolvable:$true] %s11957
      %11963 = dma.vmem_to_hbm [thread:$0]  %s11958, 8192, %s9, [#allocation6], 128, 128, 8
    $region61: #{tpu_custom_call.1} parent=1 // pred_fallthru
      _
    // Predicated region
    $region62: #{tpu_custom_call.1} parent=1 // pred_check
      _
    $region63: #{tpu_custom_call.1} parent=1 // pred_check_branch
      %11965 = sbr.rel (0) target = $region65
    $region64: #{tpu_custom_call.1} parent=1 // pred_region
      %11966 = dma.done [#allocation6], 8192
    $region65: #{tpu_custom_call.1} parent=1 // pred_fallthru
      _
    %11967 = vsyncpa [#allocation5], 1
    %11968 = vsyncpa [#allocation8], 1
    %11969 = vsyncpa [#allocation11], 1
    %11970 = vsyncpa [#allocation6], 1

</llo_original>
